<compile_context>
chip_gen: v5e
topology: v5e:2x2
jax: 0.10.0
libtpu: 0.0.40
codegen_flags: <defaults>
</compile_context>

<pallas_src>
import functools

import jax
import jax.numpy as jnp
from jax.experimental import pallas as pl
from jax.experimental.pallas import tpu as pltpu

HIDDEN = 1024
OUT_PAD = 128  # pad the 1-wide fc3 output to a full lane width


def _round_up(n, m):
    return ((n + m - 1) // m) * m


def _keep_mask(shape, seed, salt, row_offset):
    """Bernoulli(0.5) keep-mask from a stateless int32 hash of the global index.

    Pure VPU integer ops (iota / mul / xor / logical shift), so it lowers on
    Mosaic TPU and in interpret mode alike, and the mask for a given element
    does not depend on how N was tiled across the grid.
    """
    rows = jax.lax.broadcasted_iota(jnp.int32, shape, 0) + row_offset
    cols = jax.lax.broadcasted_iota(jnp.int32, shape, 1)
    h = rows * jnp.int32(shape[1]) + cols
    h = h + seed * jnp.int32(7919) + jnp.int32(salt * 104729)
    # Thomas-Wang-style int32 finalizer (logical shifts, wrap-around multiply).
    h = (h ^ jax.lax.shift_right_logical(h, jnp.int32(16))) * jnp.int32(0x045D9F3B)
    h = (h ^ jax.lax.shift_right_logical(h, jnp.int32(16))) * jnp.int32(0x045D9F3B)
    h = h ^ jax.lax.shift_right_logical(h, jnp.int32(16))
    return h < 0  # sign bit ~ Bernoulli(0.5)


def _dropout_half(h, seed, salt, row_offset):
    """Inverted dropout with p=0.5: keep -> 2*h, drop -> 0 (single select)."""
    keep = _keep_mask(h.shape, seed, salt, row_offset)
    return jnp.where(keep, h + h, 0.0)


def _da_ins_head_kernel(seed_ref, x_ref, w1_ref, b1_ref, w2_ref, b2_ref,
                        w3_ref, b3_ref, o_ref, *, training):
    """fc1 -> relu -> dropout -> fc2 -> relu -> dropout -> fc3 for one row-tile."""
    tm = x_ref.shape[0]
    row0 = pl.program_id(0) * tm  # global row offset of this tile
    x = x_ref[...]  # [tm, C] bf16

    # fc1 + ReLU (bf16 MXU matmul, f32 accumulate, f32 epilogue)
    h = jnp.dot(x, w1_ref[...], preferred_element_type=jnp.float32) + b1_ref[...]
    h = jnp.maximum(h, 0.0)

    if training:
        seed = seed_ref[0]
        h = _dropout_half(h, seed, 1, row0)

    # fc2 + ReLU
    h = jnp.dot(h.astype(jnp.bfloat16), w2_ref[...],
                preferred_element_type=jnp.float32) + b2_ref[...]
    h = jnp.maximum(h, 0.0)

    if training:
        h = _dropout_half(h, seed, 2, row0)

    # fc3, zero-padded to 128 output lanes; only column 0 is meaningful.
    o_ref[...] = (jnp.dot(h.astype(jnp.bfloat16), w3_ref[...],
                          preferred_element_type=jnp.float32) + b3_ref[...])


def init_da_ins_head_params(in_channels, key):
    """Deterministic init matching DAInsHead.__init__ (normal std, zero bias)."""
    k1, k2, k3 = jax.random.split(key, 3)
    # Stored transposed: [in, out]
    w1_t = 0.01 * jax.random.normal(k1, (in_channels, HIDDEN), jnp.float32)
    b1 = jnp.zeros((1, HIDDEN), jnp.float32)
    w2_t = 0.01 * jax.random.normal(k2, (HIDDEN, HIDDEN), jnp.float32)
    b2 = jnp.zeros((1, HIDDEN), jnp.float32)
    w3_t = 0.05 * jax.random.normal(k3, (HIDDEN, 1), jnp.float32)
    b3 = jnp.zeros((1, 1), jnp.float32)
    return dict(w1_t=w1_t, b1=b1, w2_t=w2_t, b2=b2, w3_t=w3_t, b3=b3)


def da_ins_head(x, params, *, training=False, seed=0, tm=512):
    """x: [N, in_channels] float32 -> [N, 1] float32."""
    n, c = x.shape

    # Row tile: multiple of 128 (full MXU rows), shrunk for tiny batches.
    tm = _round_up(max(tm, 128), 128)
    tm = min(tm, _round_up(n, 128))
    n_pad = _round_up(n, tm)
    grid = (n_pad // tm,)

    # bf16 operands for the MXU; biases stay f32 (f32 accumulate + epilogue).
    x_bf = x.astype(jnp.bfloat16)
    if n_pad != n:
        x_bf = jnp.pad(x_bf, ((0, n_pad - n), (0, 0)))
    w1 = params["w1_t"].astype(jnp.bfloat16)
    w2 = params["w2_t"].astype(jnp.bfloat16)
    w3_pad = jnp.zeros((HIDDEN, OUT_PAD), jnp.bfloat16).at[:, :1].set(
        params["w3_t"].astype(jnp.bfloat16))
    b3_pad = jnp.zeros((1, OUT_PAD), jnp.float32).at[:, :1].set(params["b3"])
    seed_arr = jnp.asarray([seed], dtype=jnp.int32)

    kernel = functools.partial(_da_ins_head_kernel, training=training)
    const2 = lambda i: (0, 0)  # weights/biases: same block every step -> resident

    out_padded = pl.pallas_call(
        kernel,
        out_shape=jax.ShapeDtypeStruct((n_pad, OUT_PAD), jnp.float32),
        grid=grid,
        in_specs=[
            pl.BlockSpec(memory_space=pltpu.MemorySpace.SMEM),   # seed scalar
            pl.BlockSpec((tm, c), lambda i: (i, 0)),             # x row-tile
            pl.BlockSpec((c, HIDDEN), const2),                   # w1 (resident)
            pl.BlockSpec((1, HIDDEN), const2),                   # b1
            pl.BlockSpec((HIDDEN, HIDDEN), const2),              # w2 (resident)
            pl.BlockSpec((1, HIDDEN), const2),                   # b2
            pl.BlockSpec((HIDDEN, OUT_PAD), const2),             # w3 (padded)
            pl.BlockSpec((1, OUT_PAD), const2),                  # b3 (padded)
        ],
        out_specs=pl.BlockSpec((tm, OUT_PAD), lambda i: (i, 0)),
        compiler_params=pltpu.CompilerParams(
            dimension_semantics=("parallel",),        # shard N-tiles on v7x's 2 TCs
            vmem_limit_bytes=32 * 1024 * 1024,        # safe on v5e/v6e/v7x
        ),
    )(seed_arr, x_bf, w1, params["b1"], w2, params["b2"], w3_pad, b3_pad)

    return out_padded[:n, :1]


def da_ins_head_ref(x, params):
    """Pure-JAX eval-mode reference with matching bf16-matmul / f32-accum numerics."""
    bf = jnp.bfloat16
    h = jnp.dot(x.astype(bf), params["w1_t"].astype(bf),
                preferred_element_type=jnp.float32) + params["b1"]
    h = jnp.maximum(h, 0.0)
    h = jnp.dot(h.astype(bf), params["w2_t"].astype(bf),
                preferred_element_type=jnp.float32) + params["b2"]
    h = jnp.maximum(h, 0.0)
    return jnp.dot(h.astype(bf), params["w3_t"].astype(bf),
                   preferred_element_type=jnp.float32) + params["b3"]


if __name__ == "__main__":
    key = jax.random.PRNGKey(0)
    k_param, k_x, k_x2 = jax.random.split(key, 3)

    in_channels = 32
    batch = 8  # number of instance (ROI) feature vectors

    params = init_da_ins_head_params(in_channels, k_param)
    x = jax.random.normal(k_x, (batch, in_channels), jnp.float32)

    # Eval-mode forward (dropout identity), single small tile.
    out = jax.block_until_ready(da_ins_head(x, params, training=False))
    ref = da_ins_head_ref(x, params)
    assert out.shape == (batch, 1), out.shape
    assert jnp.allclose(out, ref, atol=2e-3, rtol=2e-2), (out, ref)

    # Eval-mode forward on a ragged batch that exercises the multi-tile grid.
    x_big = jax.random.normal(k_x2, (300, in_channels), jnp.float32)
    out_big = jax.block_until_ready(da_ins_head(x_big, params, training=False, tm=256))
    ref_big = da_ins_head_ref(x_big, params)
    assert out_big.shape == (300, 1), out_big.shape
    assert jnp.allclose(out_big, ref_big, atol=2e-3, rtol=2e-2)

    # Training-mode forward (in-kernel counter-based dropout) — runs and is finite.
    out_train = jax.block_until_ready(da_ins_head(x, params, training=True, seed=123))
    assert out_train.shape == (batch, 1)
    assert bool(jnp.all(jnp.isfinite(out_train)))

    print("KERNEL_OK")
</pallas_src>

<mosaic_0001>
module attributes {stable_mosaic.version = 11 : i64} {
  func.func @_da_ins_head_kernel(%arg0: i32, %arg1: memref<1xi32, #tpu.memory_space<smem>>, %arg2: memref<128x32xbf16, #tpu.memory_space<vmem>>, %arg3: memref<32x1024xbf16, #tpu.memory_space<vmem>>, %arg4: memref<1x1024xf32, #tpu.memory_space<vmem>>, %arg5: memref<1024x1024xbf16, #tpu.memory_space<vmem>>, %arg6: memref<1x1024xf32, #tpu.memory_space<vmem>>, %arg7: memref<1024x128xbf16, #tpu.memory_space<vmem>>, %arg8: memref<1x128xf32, #tpu.memory_space<vmem>>, %arg9: memref<128x128xf32, #tpu.memory_space<vmem>>) attributes {dimension_semantics = [#tpu.dimension_semantics<parallel>], iteration_bounds = array<i64: 1>, scalar_prefetch = 0 : i64, scratch_operands = 0 : i64, tpu.core_type = #tpu.core_type<tc>, window_params = [{transform_indices = @transform_0, window_bounds = array<i64: 1>}, {transform_indices = @transform_1, window_bounds = array<i64: 128, 32>}, {pipeline_mode = #tpu.pipeline_mode<synchronous>, transform_indices = @transform_2, window_bounds = array<i64: 32, 1024>}, {pipeline_mode = #tpu.pipeline_mode<synchronous>, transform_indices = @transform_3, window_bounds = array<i64: 1, 1024>}, {pipeline_mode = #tpu.pipeline_mode<synchronous>, transform_indices = @transform_4, window_bounds = array<i64: 1024, 1024>}, {pipeline_mode = #tpu.pipeline_mode<synchronous>, transform_indices = @transform_5, window_bounds = array<i64: 1, 1024>}, {pipeline_mode = #tpu.pipeline_mode<synchronous>, transform_indices = @transform_6, window_bounds = array<i64: 1024, 128>}, {pipeline_mode = #tpu.pipeline_mode<synchronous>, transform_indices = @transform_7, window_bounds = array<i64: 1, 128>}, {transform_indices = @transform_8, window_bounds = array<i64: 128, 128>}]} {
    %c0 = arith.constant 0 : index
    %c0_0 = arith.constant 0 : index
    %0 = vector.load %arg2[%c0, %c0_0] : memref<128x32xbf16, #tpu.memory_space<vmem>>, vector<128x32xbf16>
    %c0_1 = arith.constant 0 : index
    %c0_2 = arith.constant 0 : index
    %1 = vector.load %arg3[%c0_1, %c0_2] : memref<32x1024xbf16, #tpu.memory_space<vmem>>, vector<32x1024xbf16>
    %cst = arith.constant dense<0.000000e+00> : vector<128x1024xf32>
    %2 = tpu.matmul %0, %1, %cst {dimension_numbers = #tpu.dot_dimension_numbers<[1], [0], [0], [1], [0, 0, 1, 1], [], []>} : vector<128x32xbf16>, vector<32x1024xbf16>, vector<128x1024xf32> -> vector<128x1024xf32>
    %c0_3 = arith.constant 0 : index
    %c0_4 = arith.constant 0 : index
    %3 = vector.load %arg4[%c0_3, %c0_4] : memref<1x1024xf32, #tpu.memory_space<vmem>>, vector<1x1024xf32>
    %4 = vector.broadcast %3 : vector<1x1024xf32> to vector<128x1024xf32>
    %5 = arith.addf %2, %4 : vector<128x1024xf32>
    %cst_5 = arith.constant 0.000000e+00 : f32
    %6 = vector.broadcast %cst_5 : f32 to vector<128x1024xf32>
    %7 = arith.maximumf %5, %6 : vector<128x1024xf32>
    %8 = arith.truncf %7 : vector<128x1024xf32> to vector<128x1024xbf16>
    %c0_6 = arith.constant 0 : index
    %c0_7 = arith.constant 0 : index
    %9 = vector.load %arg5[%c0_6, %c0_7] : memref<1024x1024xbf16, #tpu.memory_space<vmem>>, vector<1024x1024xbf16>
    %cst_8 = arith.constant dense<0.000000e+00> : vector<128x1024xf32>
    %10 = tpu.matmul %8, %9, %cst_8 {dimension_numbers = #tpu.dot_dimension_numbers<[1], [0], [0], [1], [0, 0, 1, 1], [], []>} : vector<128x1024xbf16>, vector<1024x1024xbf16>, vector<128x1024xf32> -> vector<128x1024xf32>
    %c0_9 = arith.constant 0 : index
    %c0_10 = arith.constant 0 : index
    %11 = vector.load %arg6[%c0_9, %c0_10] : memref<1x1024xf32, #tpu.memory_space<vmem>>, vector<1x1024xf32>
    %12 = vector.broadcast %11 : vector<1x1024xf32> to vector<128x1024xf32>
    %13 = arith.addf %10, %12 : vector<128x1024xf32>
    %cst_11 = arith.constant 0.000000e+00 : f32
    %14 = vector.broadcast %cst_11 : f32 to vector<128x1024xf32>
    %15 = arith.maximumf %13, %14 : vector<128x1024xf32>
    %16 = arith.truncf %15 : vector<128x1024xf32> to vector<128x1024xbf16>
    %c0_12 = arith.constant 0 : index
    %c0_13 = arith.constant 0 : index
    %17 = vector.load %arg7[%c0_12, %c0_13] : memref<1024x128xbf16, #tpu.memory_space<vmem>>, vector<1024x128xbf16>
    %cst_14 = arith.constant dense<0.000000e+00> : vector<128x128xf32>
    %18 = tpu.matmul %16, %17, %cst_14 {dimension_numbers = #tpu.dot_dimension_numbers<[1], [0], [0], [1], [0, 0, 1, 1], [], []>} : vector<128x1024xbf16>, vector<1024x128xbf16>, vector<128x128xf32> -> vector<128x128xf32>
    %c0_15 = arith.constant 0 : index
    %c0_16 = arith.constant 0 : index
    %19 = vector.load %arg8[%c0_15, %c0_16] : memref<1x128xf32, #tpu.memory_space<vmem>>, vector<1x128xf32>
    %20 = vector.broadcast %19 : vector<1x128xf32> to vector<128x128xf32>
    %21 = arith.addf %18, %20 : vector<128x128xf32>
    %c0_17 = arith.constant 0 : index
    %c0_18 = arith.constant 0 : index
    %22 = vector.load %arg9[%c0_17, %c0_18] : memref<128x128xf32, #tpu.memory_space<vmem>>, vector<128x128xf32>
    tpu.vector_store %arg9[%c0_17, %c0_18], %21 {strides = array<i32>} : memref<128x128xf32, #tpu.memory_space<vmem>>, vector<128x128xf32>,
    return
  }
  func.func @transform_0(%arg0: i32) -> i32 {
    %c0_i32 = arith.constant 0 : i32
    %c0_i32_0 = arith.constant 0 : i32
    return %c0_i32 : i32
  }
  func.func @transform_1(%arg0: i32) -> (i32, i32) {
    %c0_i32 = arith.constant 0 : i32
    %c0_i32_0 = arith.constant 0 : i32
    return %arg0, %c0_i32 : i32, i32
  }
  func.func @transform_2(%arg0: i32) -> (i32, i32) {
    %c0_i32 = arith.constant 0 : i32
    %c0_i32_0 = arith.constant 0 : i32
    %c0_i32_1 = arith.constant 0 : i32
    return %c0_i32, %c0_i32_0 : i32, i32
  }
  func.func @transform_3(%arg0: i32) -> (i32, i32) {
    %c0_i32 = arith.constant 0 : i32
    %c0_i32_0 = arith.constant 0 : i32
    %c0_i32_1 = arith.constant 0 : i32
    return %c0_i32, %c0_i32_0 : i32, i32
  }
  func.func @transform_4(%arg0: i32) -> (i32, i32) {
    %c0_i32 = arith.constant 0 : i32
    %c0_i32_0 = arith.constant 0 : i32
    %c0_i32_1 = arith.constant 0 : i32
    return %c0_i32, %c0_i32_0 : i32, i32
  }
  func.func @transform_5(%arg0: i32) -> (i32, i32) {
    %c0_i32 = arith.constant 0 : i32
    %c0_i32_0 = arith.constant 0 : i32
    %c0_i32_1 = arith.constant 0 : i32
    return %c0_i32, %c0_i32_0 : i32, i32
  }
  func.func @transform_6(%arg0: i32) -> (i32, i32) {
    %c0_i32 = arith.constant 0 : i32
    %c0_i32_0 = arith.constant 0 : i32
    %c0_i32_1 = arith.constant 0 : i32
    return %c0_i32, %c0_i32_0 : i32, i32
  }
  func.func @transform_7(%arg0: i32) -> (i32, i32) {
    %c0_i32 = arith.constant 0 : i32
    %c0_i32_0 = arith.constant 0 : i32
    %c0_i32_1 = arith.constant 0 : i32
    return %c0_i32, %c0_i32_0 : i32, i32
  }
  func.func @transform_8(%arg0: i32) -> (i32, i32) {
    %c0_i32 = arith.constant 0 : i32
    %c0_i32_0 = arith.constant 0 : i32
    return %arg0, %c0_i32 : i32, i32
  }
}

</mosaic_0001>

<llo_original>
// kernel: tpu_custom_call.1
$region0: #{tpu_custom_call.1}
  #allocation0 [shape = 'u32[]', space=smem, size = 0x4, offset = 0x4, fixed_abs, tag = 'smem constant byte address 0x4 - core index']
  #allocation1 [shape = 'u32[72,128]{1,0:T(1,128)}', space=vmem, size = 0x9000, scoped, tag = 'internal scratch']
  #allocation2 [shape = 's32[1]{0:T(128)S(6)}', space=smem, size = 0x200, scoped, tag = 'scoped memory for tpu_custom_call.1']
  %s0 = inlined_call_operand.<no memory space> [shape: s32[1], index: 0, kind: input, shape index: {}]
  %s1 = inlined_call_operand.vmem [shape: bf16[128,32], index: 1, kind: input, shape index: {}]
  %s2 = inlined_call_operand.hbm [shape: bf16[32,1024], index: 2, kind: input, shape index: {}]
  %s3 = inlined_call_operand.hbm [shape: f32[1,1024], index: 3, kind: input, shape index: {}]
  %s4 = inlined_call_operand.hbm [shape: bf16[1024,1024], index: 4, kind: input, shape index: {}]
  %s5 = inlined_call_operand.hbm [shape: f32[1,1024], index: 5, kind: input, shape index: {}]
  %s6 = inlined_call_operand.hbm [shape: bf16[1024,128], index: 6, kind: input, shape index: {}]
  %s7 = inlined_call_operand.hbm [shape: f32[1,128], index: 7, kind: input, shape index: {}]
  %s8 = inlined_call_operand.hbm [shape: f32[128,128], index: 8, kind: output, shape index: {}]
  %s9 = sld [smem:[#allocation0]]
  $region66: #{tpu_custom_call.1} parent=0
    _
  %s11 = ssub.s32 1, %s9
  %s12 = scalar_select 0, %s11, %s9
  %13 = sst [smem:[#allocation2]] %s0
  $region1: #{tpu_custom_call.1} parent=0
    #allocation3 [shape = 'u8[65536]{0}', space=vmem, size = 0x10000, scoped, tag = 'input window, operand 2, single buffered']
    #allocation4 [shape = 's32[1]{0}', space=sflag, size = 0x4, scoped, tag = 'scoped memory for tpu_custom_call.1']
    #allocation5 [shape = 's32[1]{0}', space=sflag, size = 0x4, scoped, tag = 'scoped memory for tpu_custom_call.1']
    #allocation6 [shape = 'u8[4096]{0}', space=vmem, size = 0x1000, scoped, tag = 'input window, operand 3, single buffered']
    #allocation7 [shape = 's32[1]{0}', space=sflag, size = 0x4, scoped, tag = 'scoped memory for tpu_custom_call.1']
    #allocation8 [shape = 'u8[2097152]{0}', space=vmem, size = 0x200000, scoped, tag = 'input window, operand 4, single buffered']
    #allocation9 [shape = 'u8[4096]{0}', space=vmem, size = 0x1000, scoped, tag = 'input window, operand 5, single buffered']
    #allocation10 [shape = 's32[1]{0}', space=sflag, size = 0x4, scoped, tag = 'scoped memory for tpu_custom_call.1']
    #allocation11 [shape = 'u8[262144]{0}', space=vmem, size = 0x40000, scoped, tag = 'input window, operand 6, single buffered']
    #allocation12 [shape = 'u8[512]{0}', space=vmem, size = 0x400, scoped, tag = 'input window, operand 7, single buffered']
    #allocation13 [shape = 's32[1]{0}', space=sflag, size = 0x4, scoped, tag = 'scoped memory for tpu_custom_call.1']
    #allocation14 [shape = 'u8[65536]{0}', space=vmem, size = 0x10000, scoped, tag = 'output window, operand 0, single buffered']
    %14 = vsyncpa [#allocation4], 0
    %15 = vsyncpa [#allocation7], 0
    %16 = vsyncpa [#allocation10], 0
    %17 = vsyncpa [#allocation13], 0
    %18 = vsyncpa [#allocation5], 0
    // Predicated region
    $region2: #{tpu_custom_call.1} parent=1 // pred_check
      _
    $region3: #{tpu_custom_call.1} parent=1 // pred_check_branch
      %20 = sbr.rel (0) target = $region5
    $region4: #{tpu_custom_call.1} parent=1 // pred_region
      _
    $region5: #{tpu_custom_call.1} parent=1 // pred_fallthru
      _
    // Predicated region
    $region6: #{tpu_custom_call.1} parent=1 // pred_check
      _
    $region7: #{tpu_custom_call.1} parent=1 // pred_check_branch
      %22 = sbr.rel (0) target = $region9
    $region8: #{tpu_custom_call.1} parent=1 // pred_region
      _
    $region9: #{tpu_custom_call.1} parent=1 // pred_fallthru
      _
    // Predicated region
    $region10: #{tpu_custom_call.1} parent=1 // pred_check
      _
    $region11: #{tpu_custom_call.1} parent=1 // pred_check_branch
      %24 = sbr.rel (0) target = $region13
    $region12: #{tpu_custom_call.1} parent=1 // pred_region
      %26 = vsyncadd [#allocation4], 0
      %s27 = sshll.u32 %s2, 4
      %s28 = int_to_ptr.hbm [resolvable:$true] %s27
      %s29 = sshll.u32 [#allocation3], 4
      %s30 = int_to_ptr.vmem [resolvable:$true] %s29
      %35 = dma.hbm_to_vmem [thread:$0]  %s28, 2048, %s30, [#allocation4], 512, 512, 32
    $region13: #{tpu_custom_call.1} parent=1 // pred_fallthru
      _
    // Predicated region
    $region14: #{tpu_custom_call.1} parent=1 // pred_check
      _
    $region15: #{tpu_custom_call.1} parent=1 // pred_check_branch
      %37 = sbr.rel (0) target = $region17
    $region16: #{tpu_custom_call.1} parent=1 // pred_region
      %39 = vsyncadd [#allocation7], 0
      %s41 = sshll.u32 %s3, 4
      %s42 = int_to_ptr.hbm [resolvable:$true] %s41
      %s43 = sshll.u32 [#allocation6], 4
      %s44 = int_to_ptr.vmem [resolvable:$true] %s43
      %46 = dma.hbm_to_vmem [thread:$0]  %s42, 128, %s44, [#allocation7]
    $region17: #{tpu_custom_call.1} parent=1 // pred_fallthru
      _
    // Predicated region
    $region18: #{tpu_custom_call.1} parent=1 // pred_check
      _
    $region19: #{tpu_custom_call.1} parent=1 // pred_check_branch
      %48 = sbr.rel (0) target = $region21
    $region20: #{tpu_custom_call.1} parent=1 // pred_region
      %50 = vsyncadd [#allocation7], 0
      %s51 = sshll.u32 %s4, 4
      %s52 = int_to_ptr.hbm [resolvable:$true] %s51
      %s53 = sshll.u32 [#allocation8], 4
      %s54 = int_to_ptr.vmem [resolvable:$true] %s53
      %59 = dma.hbm_to_vmem [thread:$0]  %s52, 65536, %s54, [#allocation7], 512, 512, 32
    $region21: #{tpu_custom_call.1} parent=1 // pred_fallthru
      _
    // Predicated region
    $region22: #{tpu_custom_call.1} parent=1 // pred_check
      _
    $region23: #{tpu_custom_call.1} parent=1 // pred_check_branch
      %61 = sbr.rel (0) target = $region25
    $region24: #{tpu_custom_call.1} parent=1 // pred_region
      %63 = vsyncadd [#allocation10], 0
      %s65 = sshll.u32 %s5, 4
      %s66 = int_to_ptr.hbm [resolvable:$true] %s65
      %s67 = sshll.u32 [#allocation9], 4
      %s68 = int_to_ptr.vmem [resolvable:$true] %s67
      %70 = dma.hbm_to_vmem [thread:$0]  %s66, 128, %s68, [#allocation10]
    $region25: #{tpu_custom_call.1} parent=1 // pred_fallthru
      _
    // Predicated region
    $region26: #{tpu_custom_call.1} parent=1 // pred_check
      _
    $region27: #{tpu_custom_call.1} parent=1 // pred_check_branch
      %72 = sbr.rel (0) target = $region29
    $region28: #{tpu_custom_call.1} parent=1 // pred_region
      %74 = vsyncadd [#allocation10], 0
      %s75 = sshll.u32 %s6, 4
      %s76 = int_to_ptr.hbm [resolvable:$true] %s75
      %s77 = sshll.u32 [#allocation11], 4
      %s78 = int_to_ptr.vmem [resolvable:$true] %s77
      %83 = dma.hbm_to_vmem [thread:$0]  %s76, 8192, %s78, [#allocation10], 64, 64, 4
    $region29: #{tpu_custom_call.1} parent=1 // pred_fallthru
      _
    // Predicated region
    $region30: #{tpu_custom_call.1} parent=1 // pred_check
      _
    $region31: #{tpu_custom_call.1} parent=1 // pred_check_branch
      %85 = sbr.rel (0) target = $region33
    $region32: #{tpu_custom_call.1} parent=1 // pred_region
      %87 = vsyncadd [#allocation13], 0
      %s89 = sshll.u32 %s7, 4
      %s90 = int_to_ptr.hbm [resolvable:$true] %s89
      %s91 = sshll.u32 [#allocation12], 4
      %s92 = int_to_ptr.vmem [resolvable:$true] %s91
      %94 = dma.hbm_to_vmem [thread:$0]  %s90, 16, %s92, [#allocation13]
    $region33: #{tpu_custom_call.1} parent=1 // pred_fallthru
      _
    // Predicated region
    $region34: #{tpu_custom_call.1} parent=1 // pred_check
      _
    $region35: #{tpu_custom_call.1} parent=1 // pred_check_branch
      %96 = sbr.rel (0) target = $region37
    $region36: #{tpu_custom_call.1} parent=1 // pred_region
      %98 = dma.done [#allocation4], 2048
    $region37: #{tpu_custom_call.1} parent=1 // pred_fallthru
      _
    // Predicated region
    $region38: #{tpu_custom_call.1} parent=1 // pred_check
      _
    $region39: #{tpu_custom_call.1} parent=1 // pred_check_branch
      %100 = sbr.rel (0) target = $region41
    $region40: #{tpu_custom_call.1} parent=1 // pred_region
      %102 = dma.done [#allocation7], 128
    $region41: #{tpu_custom_call.1} parent=1 // pred_fallthru
      _
    // Predicated region
    $region42: #{tpu_custom_call.1} parent=1 // pred_check
      _
    $region43: #{tpu_custom_call.1} parent=1 // pred_check_branch
      %104 = sbr.rel (0) target = $region45
    $region44: #{tpu_custom_call.1} parent=1 // pred_region
      %106 = dma.done [#allocation7], 65536
    $region45: #{tpu_custom_call.1} parent=1 // pred_fallthru
      _
    // Predicated region
    $region46: #{tpu_custom_call.1} parent=1 // pred_check
      _
    $region47: #{tpu_custom_call.1} parent=1 // pred_check_branch
      %108 = sbr.rel (0) target = $region49
    $region48: #{tpu_custom_call.1} parent=1 // pred_region
      %110 = dma.done [#allocation10], 128
    $region49: #{tpu_custom_call.1} parent=1 // pred_fallthru
      _
    // Predicated region
    $region50: #{tpu_custom_call.1} parent=1 // pred_check
      _
    $region51: #{tpu_custom_call.1} parent=1 // pred_check_branch
      %112 = sbr.rel (0) target = $region53
    $region52: #{tpu_custom_call.1} parent=1 // pred_region
      %114 = dma.done [#allocation10], 8192
    $region53: #{tpu_custom_call.1} parent=1 // pred_fallthru
      _
    // Predicated region
    $region54: #{tpu_custom_call.1} parent=1 // pred_check
      _
    $region55: #{tpu_custom_call.1} parent=1 // pred_check_branch
      %116 = sbr.rel (0) target = $region57
    $region56: #{tpu_custom_call.1} parent=1 // pred_region
      %118 = dma.done [#allocation13], 16
    $region57: #{tpu_custom_call.1} parent=1 // pred_fallthru
      _
    %v120 = vld [vmem:[%s1] sm:$0xf]
    %v121 = vld [vmem:[%s1 + $0x4] sm:$0xf]
    %v122 = vld [vmem:[%s1 + $0x8] sm:$0xf]
    %v123 = vld [vmem:[%s1 + $0xc] sm:$0xf]
    %v124 = vld [vmem:[%s1 + $0x10] sm:$0xf]
    %v125 = vld [vmem:[%s1 + $0x14] sm:$0xf]
    %v126 = vld [vmem:[%s1 + $0x18] sm:$0xf]
    %v127 = vld [vmem:[%s1 + $0x1c] sm:$0xf]
    %v128 = vld [vmem:[%s1 + $0x20] sm:$0xf]
    %v129 = vld [vmem:[%s1 + $0x24] sm:$0xf]
    %v130 = vld [vmem:[%s1 + $0x28] sm:$0xf]
    %v131 = vld [vmem:[%s1 + $0x2c] sm:$0xf]
    %v132 = vld [vmem:[%s1 + $0x30] sm:$0xf]
    %v133 = vld [vmem:[%s1 + $0x34] sm:$0xf]
    %v134 = vld [vmem:[%s1 + $0x38] sm:$0xf]
    %v135 = vld [vmem:[%s1 + $0x3c] sm:$0xf]
    %v136 = vld [vmem:[#allocation3] sm:$0xff]
    %v137 = vld [vmem:[#allocation3 + $0x8] sm:$0xff]
    %v138 = vld [vmem:[#allocation3 + $0x10] sm:$0xff]
    %v139 = vld [vmem:[#allocation3 + $0x18] sm:$0xff]
    %v140 = vld [vmem:[#allocation3 + $0x20] sm:$0xff]
    %v141 = vld [vmem:[#allocation3 + $0x28] sm:$0xff]
    %v142 = vld [vmem:[#allocation3 + $0x30] sm:$0xff]
    %v143 = vld [vmem:[#allocation3 + $0x38] sm:$0xff]
    %v144 = vld [vmem:[#allocation3 + $0x40] sm:$0xff]
    %v145 = vld [vmem:[#allocation3 + $0x48] sm:$0xff]
    %v146 = vld [vmem:[#allocation3 + $0x50] sm:$0xff]
    %v147 = vld [vmem:[#allocation3 + $0x58] sm:$0xff]
    %v148 = vld [vmem:[#allocation3 + $0x60] sm:$0xff]
    %v149 = vld [vmem:[#allocation3 + $0x68] sm:$0xff]
    %v150 = vld [vmem:[#allocation3 + $0x70] sm:$0xff]
    %v151 = vld [vmem:[#allocation3 + $0x78] sm:$0xff]
    %v152 = vld [vmem:[#allocation6] sm:$0xff]
    %v154 = vperm.slane %v152, 0
    %v155 = vperm.slane %v152, 1
    %v156 = vperm.slane %v152, 2
    %v157 = vperm.slane %v152, 3
    %v158 = vperm.slane %v152, 4
    %v159 = vperm.slane %v152, 5
    %v160 = vperm.slane %v152, 6
    %v161 = vperm.slane %v152, 7
    %v186 = vunpack.c.l.b16 %v120
    %v187 = vunpack.c.l.b16 %v121
    %v188 = vunpack.c.l.b16 %v122
    %v189 = vunpack.c.l.b16 %v123
    %v190 = vunpack.c.l.b16 %v124
    %v191 = vunpack.c.l.b16 %v125
    %v192 = vunpack.c.l.b16 %v126
    %v193 = vunpack.c.l.b16 %v127
    %v194 = vunpack.c.l.b16 %v128
    %v195 = vunpack.c.l.b16 %v129
    %v196 = vunpack.c.l.b16 %v130
    %v197 = vunpack.c.l.b16 %v131
    %v198 = vunpack.c.l.b16 %v132
    %v199 = vunpack.c.l.b16 %v133
    %v200 = vunpack.c.l.b16 %v134
    %v201 = vunpack.c.l.b16 %v135
    %v202 = vpack.c.b16 %v187, %v186
    %v203 = vpack.c.b16 %v189, %v188
    %v204 = vpack.c.b16 %v191, %v190
    %v205 = vpack.c.b16 %v193, %v192
    %v206 = vpack.c.b16 %v195, %v194
    %v207 = vpack.c.b16 %v197, %v196
    %v208 = vpack.c.b16 %v199, %v198
    %v209 = vpack.c.b16 %v201, %v200
    %v226 = vunpack.c.l.b16 %v136
    %v227 = vunpack.c.h.b16 %v136
    %v228 = vunpack.c.l.b16 %v137
    %v229 = vunpack.c.h.b16 %v137
    %v230 = vunpack.c.l.b16 %v138
    %v231 = vunpack.c.h.b16 %v138
    %v232 = vunpack.c.l.b16 %v139
    %v233 = vunpack.c.h.b16 %v139
    %v234 = vunpack.c.l.b16 %v140
    %v235 = vunpack.c.h.b16 %v140
    %v236 = vunpack.c.l.b16 %v141
    %v237 = vunpack.c.h.b16 %v141
    %v238 = vunpack.c.l.b16 %v142
    %v239 = vunpack.c.h.b16 %v142
    %v240 = vunpack.c.l.b16 %v143
    %v241 = vunpack.c.h.b16 %v143
    %v242 = vunpack.c.l.b16 %v144
    %v243 = vunpack.c.h.b16 %v144
    %v244 = vunpack.c.l.b16 %v145
    %v245 = vunpack.c.h.b16 %v145
    %v246 = vunpack.c.l.b16 %v146
    %v247 = vunpack.c.h.b16 %v146
    %v248 = vunpack.c.l.b16 %v147
    %v249 = vunpack.c.h.b16 %v147
    %v250 = vunpack.c.l.b16 %v148
    %v251 = vunpack.c.h.b16 %v148
    %v252 = vunpack.c.l.b16 %v149
    %v253 = vunpack.c.h.b16 %v149
    %v254 = vunpack.c.l.b16 %v150
    %v255 = vunpack.c.h.b16 %v150
    %v256 = vunpack.c.l.b16 %v151
    %v257 = vunpack.c.h.b16 %v151
    %v258 = vpack.c.b16 %v234, %v226
    %v259 = vpack.c.b16 %v235, %v227
    %v260 = vpack.c.b16 %v236, %v228
    %v261 = vpack.c.b16 %v237, %v229
    %v262 = vpack.c.b16 %v238, %v230
    %v263 = vpack.c.b16 %v239, %v231
    %v264 = vpack.c.b16 %v240, %v232
    %v265 = vpack.c.b16 %v241, %v233
    %v266 = vpack.c.b16 %v250, %v242
    %v267 = vpack.c.b16 %v251, %v243
    %v268 = vpack.c.b16 %v252, %v244
    %v269 = vpack.c.b16 %v253, %v245
    %v270 = vpack.c.b16 %v254, %v246
    %v271 = vpack.c.b16 %v255, %v247
    %v272 = vpack.c.b16 %v256, %v248
    %v273 = vpack.c.b16 %v257, %v249
    %vm290 = vcmask 261120
    %v292 = vsel %vm290, %v202, 0
    %v295 = vsel %vm290, %v203, 0
    %v298 = vsel %vm290, %v204, 0
    %v301 = vsel %vm290, %v205, 0
    %v304 = vsel %vm290, %v206, 0
    %v307 = vsel %vm290, %v207, 0
    %v310 = vsel %vm290, %v208, 0
    %v313 = vsel %vm290, %v209, 0
    %315 = vmatpush.bf16.msra.mxu0 0
    %316 = vmatpush.bf16.msra.mxu0 0
    %317 = vmatpush.bf16.msra.mxu0 0
    %318 = vmatpush.bf16.msra.mxu0 0
    %319 = vmatpush.bf16.msra.mxu0 0
    %320 = vmatpush.bf16.msra.mxu0 0
    %321 = vmatpush.bf16.msra.mxu0 %v266
    %322 = vmatpush.bf16.msra.mxu0 %v258
    %323 = vmatmul.bf16.gmra.mxu0 %v292
    %v324 = vpop.f32.mrf.mxu0
    %v325 = vadd.f32 %v154, %v324
    %v326 = vpop.f32.mrf.mxu0
    %v327 = vadd.f32 %v154, %v326
    %328 = vmatmul.bf16.gmra.mxu0 %v295
    %v329 = vpop.f32.mrf.mxu0
    %v330 = vadd.f32 %v154, %v329
    %v331 = vpop.f32.mrf.mxu0
    %v332 = vadd.f32 %v154, %v331
    %333 = vmatmul.bf16.gmra.mxu0 %v298
    %v334 = vpop.f32.mrf.mxu0
    %v335 = vadd.f32 %v154, %v334
    %v336 = vpop.f32.mrf.mxu0
    %v337 = vadd.f32 %v154, %v336
    %338 = vmatmul.bf16.gmra.mxu0 %v301
    %v339 = vpop.f32.mrf.mxu0
    %v340 = vadd.f32 %v154, %v339
    %v341 = vpop.f32.mrf.mxu0
    %v342 = vadd.f32 %v154, %v341
    %343 = vmatmul.bf16.gmra.mxu0 %v304
    %v344 = vpop.f32.mrf.mxu0
    %v345 = vadd.f32 %v154, %v344
    %v346 = vpop.f32.mrf.mxu0
    %v347 = vadd.f32 %v154, %v346
    %348 = vmatmul.bf16.gmra.mxu0 %v307
    %v349 = vpop.f32.mrf.mxu0
    %v350 = vadd.f32 %v154, %v349
    %v351 = vpop.f32.mrf.mxu0
    %v352 = vadd.f32 %v154, %v351
    %353 = vmatmul.bf16.gmra.mxu0 %v310
    %v354 = vpop.f32.mrf.mxu0
    %v355 = vadd.f32 %v154, %v354
    %v356 = vpop.f32.mrf.mxu0
    %v357 = vadd.f32 %v154, %v356
    %358 = vmatmul.bf16.gmra.mxu0 %v313
    %v359 = vpop.f32.mrf.mxu0
    %v360 = vadd.f32 %v154, %v359
    %v361 = vpop.f32.mrf.mxu0
    %v362 = vadd.f32 %v154, %v361
    %363 = vdwg.mxu0
    %364 = vmatpush.bf16.msra.mxu0 0
    %365 = vmatpush.bf16.msra.mxu0 0
    %366 = vmatpush.bf16.msra.mxu0 0
    %367 = vmatpush.bf16.msra.mxu0 0
    %368 = vmatpush.bf16.msra.mxu0 0
    %369 = vmatpush.bf16.msra.mxu0 0
    %370 = vmatpush.bf16.msra.mxu0 %v267
    %371 = vmatpush.bf16.msra.mxu0 %v259
    %372 = vmatmul.bf16.gmra.mxu0 %v292
    %v373 = vpop.f32.mrf.mxu0
    %v374 = vadd.f32 %v155, %v373
    %v375 = vpop.f32.mrf.mxu0
    %v376 = vadd.f32 %v155, %v375
    %377 = vmatmul.bf16.gmra.mxu0 %v295
    %v378 = vpop.f32.mrf.mxu0
    %v379 = vadd.f32 %v155, %v378
    %v380 = vpop.f32.mrf.mxu0
    %v381 = vadd.f32 %v155, %v380
    %382 = vmatmul.bf16.gmra.mxu0 %v298
    %v383 = vpop.f32.mrf.mxu0
    %v384 = vadd.f32 %v155, %v383
    %v385 = vpop.f32.mrf.mxu0
    %v386 = vadd.f32 %v155, %v385
    %387 = vmatmul.bf16.gmra.mxu0 %v301
    %v388 = vpop.f32.mrf.mxu0
    %v389 = vadd.f32 %v155, %v388
    %v390 = vpop.f32.mrf.mxu0
    %v391 = vadd.f32 %v155, %v390
    %392 = vmatmul.bf16.gmra.mxu0 %v304
    %v393 = vpop.f32.mrf.mxu0
    %v394 = vadd.f32 %v155, %v393
    %v395 = vpop.f32.mrf.mxu0
    %v396 = vadd.f32 %v155, %v395
    %397 = vmatmul.bf16.gmra.mxu0 %v307
    %v398 = vpop.f32.mrf.mxu0
    %v399 = vadd.f32 %v155, %v398
    %v400 = vpop.f32.mrf.mxu0
    %v401 = vadd.f32 %v155, %v400
    %402 = vmatmul.bf16.gmra.mxu0 %v310
    %v403 = vpop.f32.mrf.mxu0
    %v404 = vadd.f32 %v155, %v403
    %v405 = vpop.f32.mrf.mxu0
    %v406 = vadd.f32 %v155, %v405
    %407 = vmatmul.bf16.gmra.mxu0 %v313
    %v408 = vpop.f32.mrf.mxu0
    %v409 = vadd.f32 %v155, %v408
    %v410 = vpop.f32.mrf.mxu0
    %v411 = vadd.f32 %v155, %v410
    %412 = vdwg.mxu0
    %413 = vmatpush.bf16.msra.mxu0 0
    %414 = vmatpush.bf16.msra.mxu0 0
    %415 = vmatpush.bf16.msra.mxu0 0
    %416 = vmatpush.bf16.msra.mxu0 0
    %417 = vmatpush.bf16.msra.mxu0 0
    %418 = vmatpush.bf16.msra.mxu0 0
    %419 = vmatpush.bf16.msra.mxu0 %v268
    %420 = vmatpush.bf16.msra.mxu0 %v260
    %421 = vmatmul.bf16.gmra.mxu0 %v292
    %v422 = vpop.f32.mrf.mxu0
    %v423 = vadd.f32 %v156, %v422
    %v424 = vpop.f32.mrf.mxu0
    %v425 = vadd.f32 %v156, %v424
    %426 = vmatmul.bf16.gmra.mxu0 %v295
    %v427 = vpop.f32.mrf.mxu0
    %v428 = vadd.f32 %v156, %v427
    %v429 = vpop.f32.mrf.mxu0
    %v430 = vadd.f32 %v156, %v429
    %431 = vmatmul.bf16.gmra.mxu0 %v298
    %v432 = vpop.f32.mrf.mxu0
    %v433 = vadd.f32 %v156, %v432
    %v434 = vpop.f32.mrf.mxu0
    %v435 = vadd.f32 %v156, %v434
    %436 = vmatmul.bf16.gmra.mxu0 %v301
    %v437 = vpop.f32.mrf.mxu0
    %v438 = vadd.f32 %v156, %v437
    %v439 = vpop.f32.mrf.mxu0
    %v440 = vadd.f32 %v156, %v439
    %441 = vmatmul.bf16.gmra.mxu0 %v304
    %v442 = vpop.f32.mrf.mxu0
    %v443 = vadd.f32 %v156, %v442
    %v444 = vpop.f32.mrf.mxu0
    %v445 = vadd.f32 %v156, %v444
    %446 = vmatmul.bf16.gmra.mxu0 %v307
    %v447 = vpop.f32.mrf.mxu0
    %v448 = vadd.f32 %v156, %v447
    %v449 = vpop.f32.mrf.mxu0
    %v450 = vadd.f32 %v156, %v449
    %451 = vmatmul.bf16.gmra.mxu0 %v310
    %v452 = vpop.f32.mrf.mxu0
    %v453 = vadd.f32 %v156, %v452
    %v454 = vpop.f32.mrf.mxu0
    %v455 = vadd.f32 %v156, %v454
    %456 = vmatmul.bf16.gmra.mxu0 %v313
    %v457 = vpop.f32.mrf.mxu0
    %v458 = vadd.f32 %v156, %v457
    %v459 = vpop.f32.mrf.mxu0
    %v460 = vadd.f32 %v156, %v459
    %461 = vdwg.mxu0
    %462 = vmatpush.bf16.msra.mxu0 0
    %463 = vmatpush.bf16.msra.mxu0 0
    %464 = vmatpush.bf16.msra.mxu0 0
    %465 = vmatpush.bf16.msra.mxu0 0
    %466 = vmatpush.bf16.msra.mxu0 0
    %467 = vmatpush.bf16.msra.mxu0 0
    %468 = vmatpush.bf16.msra.mxu0 %v269
    %469 = vmatpush.bf16.msra.mxu0 %v261
    %470 = vmatmul.bf16.gmra.mxu0 %v292
    %v471 = vpop.f32.mrf.mxu0
    %v472 = vadd.f32 %v157, %v471
    %v473 = vpop.f32.mrf.mxu0
    %v474 = vadd.f32 %v157, %v473
    %475 = vmatmul.bf16.gmra.mxu0 %v295
    %v476 = vpop.f32.mrf.mxu0
    %v477 = vadd.f32 %v157, %v476
    %v478 = vpop.f32.mrf.mxu0
    %v479 = vadd.f32 %v157, %v478
    %480 = vmatmul.bf16.gmra.mxu0 %v298
    %v481 = vpop.f32.mrf.mxu0
    %v482 = vadd.f32 %v157, %v481
    %v483 = vpop.f32.mrf.mxu0
    %v484 = vadd.f32 %v157, %v483
    %485 = vmatmul.bf16.gmra.mxu0 %v301
    %v486 = vpop.f32.mrf.mxu0
    %v487 = vadd.f32 %v157, %v486
    %v488 = vpop.f32.mrf.mxu0
    %v489 = vadd.f32 %v157, %v488
    %490 = vmatmul.bf16.gmra.mxu0 %v304
    %v491 = vpop.f32.mrf.mxu0
    %v492 = vadd.f32 %v157, %v491
    %v493 = vpop.f32.mrf.mxu0
    %v494 = vadd.f32 %v157, %v493
    %495 = vmatmul.bf16.gmra.mxu0 %v307
    %v496 = vpop.f32.mrf.mxu0
    %v497 = vadd.f32 %v157, %v496
    %v498 = vpop.f32.mrf.mxu0
    %v499 = vadd.f32 %v157, %v498
    %500 = vmatmul.bf16.gmra.mxu0 %v310
    %v501 = vpop.f32.mrf.mxu0
    %v502 = vadd.f32 %v157, %v501
    %v503 = vpop.f32.mrf.mxu0
    %v504 = vadd.f32 %v157, %v503
    %505 = vmatmul.bf16.gmra.mxu0 %v313
    %v506 = vpop.f32.mrf.mxu0
    %v507 = vadd.f32 %v157, %v506
    %v508 = vpop.f32.mrf.mxu0
    %v509 = vadd.f32 %v157, %v508
    %510 = vdwg.mxu0
    %511 = vmatpush.bf16.msra.mxu0 0
    %512 = vmatpush.bf16.msra.mxu0 0
    %513 = vmatpush.bf16.msra.mxu0 0
    %514 = vmatpush.bf16.msra.mxu0 0
    %515 = vmatpush.bf16.msra.mxu0 0
    %516 = vmatpush.bf16.msra.mxu0 0
    %517 = vmatpush.bf16.msra.mxu0 %v270
    %518 = vmatpush.bf16.msra.mxu0 %v262
    %519 = vmatmul.bf16.gmra.mxu0 %v292
    %v520 = vpop.f32.mrf.mxu0
    %v521 = vadd.f32 %v158, %v520
    %v522 = vpop.f32.mrf.mxu0
    %v523 = vadd.f32 %v158, %v522
    %524 = vmatmul.bf16.gmra.mxu0 %v295
    %v525 = vpop.f32.mrf.mxu0
    %v526 = vadd.f32 %v158, %v525
    %v527 = vpop.f32.mrf.mxu0
    %v528 = vadd.f32 %v158, %v527
    %529 = vmatmul.bf16.gmra.mxu0 %v298
    %v530 = vpop.f32.mrf.mxu0
    %v531 = vadd.f32 %v158, %v530
    %v532 = vpop.f32.mrf.mxu0
    %v533 = vadd.f32 %v158, %v532
    %534 = vmatmul.bf16.gmra.mxu0 %v301
    %v535 = vpop.f32.mrf.mxu0
    %v536 = vadd.f32 %v158, %v535
    %v537 = vpop.f32.mrf.mxu0
    %v538 = vadd.f32 %v158, %v537
    %539 = vmatmul.bf16.gmra.mxu0 %v304
    %v540 = vpop.f32.mrf.mxu0
    %v541 = vadd.f32 %v158, %v540
    %v542 = vpop.f32.mrf.mxu0
    %v543 = vadd.f32 %v158, %v542
    %544 = vmatmul.bf16.gmra.mxu0 %v307
    %v545 = vpop.f32.mrf.mxu0
    %v546 = vadd.f32 %v158, %v545
    %v547 = vpop.f32.mrf.mxu0
    %v548 = vadd.f32 %v158, %v547
    %549 = vmatmul.bf16.gmra.mxu0 %v310
    %v550 = vpop.f32.mrf.mxu0
    %v551 = vadd.f32 %v158, %v550
    %v552 = vpop.f32.mrf.mxu0
    %v553 = vadd.f32 %v158, %v552
    %554 = vmatmul.bf16.gmra.mxu0 %v313
    %v555 = vpop.f32.mrf.mxu0
    %v556 = vadd.f32 %v158, %v555
    %v557 = vpop.f32.mrf.mxu0
    %v558 = vadd.f32 %v158, %v557
    %559 = vdwg.mxu0
    %560 = vmatpush.bf16.msra.mxu0 0
    %561 = vmatpush.bf16.msra.mxu0 0
    %562 = vmatpush.bf16.msra.mxu0 0
    %563 = vmatpush.bf16.msra.mxu0 0
    %564 = vmatpush.bf16.msra.mxu0 0
    %565 = vmatpush.bf16.msra.mxu0 0
    %566 = vmatpush.bf16.msra.mxu0 %v271
    %567 = vmatpush.bf16.msra.mxu0 %v263
    %568 = vmatmul.bf16.gmra.mxu0 %v292
    %v569 = vpop.f32.mrf.mxu0
    %v570 = vadd.f32 %v159, %v569
    %v571 = vpop.f32.mrf.mxu0
    %v572 = vadd.f32 %v159, %v571
    %573 = vmatmul.bf16.gmra.mxu0 %v295
    %v574 = vpop.f32.mrf.mxu0
    %v575 = vadd.f32 %v159, %v574
    %v576 = vpop.f32.mrf.mxu0
    %v577 = vadd.f32 %v159, %v576
    %578 = vmatmul.bf16.gmra.mxu0 %v298
    %v579 = vpop.f32.mrf.mxu0
    %v580 = vadd.f32 %v159, %v579
    %v581 = vpop.f32.mrf.mxu0
    %v582 = vadd.f32 %v159, %v581
    %583 = vmatmul.bf16.gmra.mxu0 %v301
    %v584 = vpop.f32.mrf.mxu0
    %v585 = vadd.f32 %v159, %v584
    %v586 = vpop.f32.mrf.mxu0
    %v587 = vadd.f32 %v159, %v586
    %588 = vmatmul.bf16.gmra.mxu0 %v304
    %v589 = vpop.f32.mrf.mxu0
    %v590 = vadd.f32 %v159, %v589
    %v591 = vpop.f32.mrf.mxu0
    %v592 = vadd.f32 %v159, %v591
    %593 = vmatmul.bf16.gmra.mxu0 %v307
    %v594 = vpop.f32.mrf.mxu0
    %v595 = vadd.f32 %v159, %v594
    %v596 = vpop.f32.mrf.mxu0
    %v597 = vadd.f32 %v159, %v596
    %598 = vmatmul.bf16.gmra.mxu0 %v310
    %v599 = vpop.f32.mrf.mxu0
    %v600 = vadd.f32 %v159, %v599
    %v601 = vpop.f32.mrf.mxu0
    %v602 = vadd.f32 %v159, %v601
    %603 = vmatmul.bf16.gmra.mxu0 %v313
    %v604 = vpop.f32.mrf.mxu0
    %v605 = vadd.f32 %v159, %v604
    %v606 = vpop.f32.mrf.mxu0
    %v607 = vadd.f32 %v159, %v606
    %608 = vdwg.mxu0
    %609 = vmatpush.bf16.msra.mxu0 0
    %610 = vmatpush.bf16.msra.mxu0 0
    %611 = vmatpush.bf16.msra.mxu0 0
    %612 = vmatpush.bf16.msra.mxu0 0
    %613 = vmatpush.bf16.msra.mxu0 0
    %614 = vmatpush.bf16.msra.mxu0 0
    %615 = vmatpush.bf16.msra.mxu0 %v272
    %616 = vmatpush.bf16.msra.mxu0 %v264
    %617 = vmatmul.bf16.gmra.mxu0 %v292
    %v618 = vpop.f32.mrf.mxu0
    %v619 = vadd.f32 %v160, %v618
    %v620 = vpop.f32.mrf.mxu0
    %v621 = vadd.f32 %v160, %v620
    %622 = vmatmul.bf16.gmra.mxu0 %v295
    %v623 = vpop.f32.mrf.mxu0
    %v624 = vadd.f32 %v160, %v623
    %v625 = vpop.f32.mrf.mxu0
    %v626 = vadd.f32 %v160, %v625
    %627 = vmatmul.bf16.gmra.mxu0 %v298
    %v628 = vpop.f32.mrf.mxu0
    %v629 = vadd.f32 %v160, %v628
    %v630 = vpop.f32.mrf.mxu0
    %v631 = vadd.f32 %v160, %v630
    %632 = vmatmul.bf16.gmra.mxu0 %v301
    %v633 = vpop.f32.mrf.mxu0
    %v634 = vadd.f32 %v160, %v633
    %v635 = vpop.f32.mrf.mxu0
    %v636 = vadd.f32 %v160, %v635
    %637 = vmatmul.bf16.gmra.mxu0 %v304
    %v638 = vpop.f32.mrf.mxu0
    %v639 = vadd.f32 %v160, %v638
    %v640 = vpop.f32.mrf.mxu0
    %v641 = vadd.f32 %v160, %v640
    %642 = vmatmul.bf16.gmra.mxu0 %v307
    %v643 = vpop.f32.mrf.mxu0
    %v644 = vadd.f32 %v160, %v643
    %v645 = vpop.f32.mrf.mxu0
    %v646 = vadd.f32 %v160, %v645
    %647 = vmatmul.bf16.gmra.mxu0 %v310
    %v648 = vpop.f32.mrf.mxu0
    %v649 = vadd.f32 %v160, %v648
    %v650 = vpop.f32.mrf.mxu0
    %v651 = vadd.f32 %v160, %v650
    %652 = vmatmul.bf16.gmra.mxu0 %v313
    %v653 = vpop.f32.mrf.mxu0
    %v654 = vadd.f32 %v160, %v653
    %v655 = vpop.f32.mrf.mxu0
    %v656 = vadd.f32 %v160, %v655
    %657 = vdwg.mxu0
    %658 = vmatpush.bf16.msra.mxu0 0
    %659 = vmatpush.bf16.msra.mxu0 0
    %660 = vmatpush.bf16.msra.mxu0 0
    %661 = vmatpush.bf16.msra.mxu0 0
    %662 = vmatpush.bf16.msra.mxu0 0
    %663 = vmatpush.bf16.msra.mxu0 0
    %664 = vmatpush.bf16.msra.mxu0 %v273
    %665 = vmatpush.bf16.msra.mxu0 %v265
    %666 = vmatmul.bf16.gmra.mxu0 %v292
    %v667 = vpop.f32.mrf.mxu0
    %v668 = vadd.f32 %v161, %v667
    %v669 = vpop.f32.mrf.mxu0
    %v670 = vadd.f32 %v161, %v669
    %671 = vmatmul.bf16.gmra.mxu0 %v295
    %v672 = vpop.f32.mrf.mxu0
    %v673 = vadd.f32 %v161, %v672
    %v674 = vpop.f32.mrf.mxu0
    %v675 = vadd.f32 %v161, %v674
    %676 = vmatmul.bf16.gmra.mxu0 %v298
    %v677 = vpop.f32.mrf.mxu0
    %v678 = vadd.f32 %v161, %v677
    %v679 = vpop.f32.mrf.mxu0
    %v680 = vadd.f32 %v161, %v679
    %681 = vmatmul.bf16.gmra.mxu0 %v301
    %v682 = vpop.f32.mrf.mxu0
    %v683 = vadd.f32 %v161, %v682
    %v684 = vpop.f32.mrf.mxu0
    %v685 = vadd.f32 %v161, %v684
    %686 = vmatmul.bf16.gmra.mxu0 %v304
    %v687 = vpop.f32.mrf.mxu0
    %v688 = vadd.f32 %v161, %v687
    %v689 = vpop.f32.mrf.mxu0
    %v690 = vadd.f32 %v161, %v689
    %691 = vmatmul.bf16.gmra.mxu0 %v307
    %v692 = vpop.f32.mrf.mxu0
    %v693 = vadd.f32 %v161, %v692
    %v694 = vpop.f32.mrf.mxu0
    %v695 = vadd.f32 %v161, %v694
    %696 = vmatmul.bf16.gmra.mxu0 %v310
    %v697 = vpop.f32.mrf.mxu0
    %v698 = vadd.f32 %v161, %v697
    %v699 = vpop.f32.mrf.mxu0
    %v700 = vadd.f32 %v161, %v699
    %701 = vmatmul.bf16.gmra.mxu0 %v313
    %v702 = vpop.f32.mrf.mxu0
    %v703 = vadd.f32 %v161, %v702
    %v704 = vpop.f32.mrf.mxu0
    %v705 = vadd.f32 %v161, %v704
    %706 = vdwg.mxu0
    %v707 = vmax.f32 %v325, 0.0
    %v708 = vmax.f32 %v374, 0.0
    %v709 = vmax.f32 %v423, 0.0
    %v710 = vmax.f32 %v472, 0.0
    %v711 = vmax.f32 %v521, 0.0
    %v712 = vmax.f32 %v570, 0.0
    %v713 = vmax.f32 %v619, 0.0
    %v714 = vmax.f32 %v668, 0.0
    %v715 = vmax.f32 %v327, 0.0
    %v716 = vmax.f32 %v376, 0.0
    %v717 = vmax.f32 %v425, 0.0
    %v718 = vmax.f32 %v474, 0.0
    %v719 = vmax.f32 %v523, 0.0
    %v720 = vmax.f32 %v572, 0.0
    %v721 = vmax.f32 %v621, 0.0
    %v722 = vmax.f32 %v670, 0.0
    %v723 = vmax.f32 %v330, 0.0
    %v724 = vmax.f32 %v379, 0.0
    %v725 = vmax.f32 %v428, 0.0
    %v726 = vmax.f32 %v477, 0.0
    %v727 = vmax.f32 %v526, 0.0
    %v728 = vmax.f32 %v575, 0.0
    %v729 = vmax.f32 %v624, 0.0
    %v730 = vmax.f32 %v673, 0.0
    %v731 = vmax.f32 %v332, 0.0
    %v732 = vmax.f32 %v381, 0.0
    %v733 = vmax.f32 %v430, 0.0
    %v734 = vmax.f32 %v479, 0.0
    %v735 = vmax.f32 %v528, 0.0
    %v736 = vmax.f32 %v577, 0.0
    %v737 = vmax.f32 %v626, 0.0
    %v738 = vmax.f32 %v675, 0.0
    %v739 = vmax.f32 %v335, 0.0
    %v740 = vmax.f32 %v384, 0.0
    %v741 = vmax.f32 %v433, 0.0
    %v742 = vmax.f32 %v482, 0.0
    %v743 = vmax.f32 %v531, 0.0
    %v744 = vmax.f32 %v580, 0.0
    %v745 = vmax.f32 %v629, 0.0
    %v746 = vmax.f32 %v678, 0.0
    %v747 = vmax.f32 %v337, 0.0
    %v748 = vmax.f32 %v386, 0.0
    %v749 = vmax.f32 %v435, 0.0
    %v750 = vmax.f32 %v484, 0.0
    %v751 = vmax.f32 %v533, 0.0
    %v752 = vmax.f32 %v582, 0.0
    %v753 = vmax.f32 %v631, 0.0
    %v754 = vmax.f32 %v680, 0.0
    %v755 = vmax.f32 %v340, 0.0
    %v756 = vmax.f32 %v389, 0.0
    %v757 = vmax.f32 %v438, 0.0
    %v758 = vmax.f32 %v487, 0.0
    %v759 = vmax.f32 %v536, 0.0
    %v760 = vmax.f32 %v585, 0.0
    %v761 = vmax.f32 %v634, 0.0
    %v762 = vmax.f32 %v683, 0.0
    %v763 = vmax.f32 %v342, 0.0
    %v764 = vmax.f32 %v391, 0.0
    %v765 = vmax.f32 %v440, 0.0
    %v766 = vmax.f32 %v489, 0.0
    %v767 = vmax.f32 %v538, 0.0
    %v768 = vmax.f32 %v587, 0.0
    %v769 = vmax.f32 %v636, 0.0
    %v770 = vmax.f32 %v685, 0.0
    %v771 = vmax.f32 %v345, 0.0
    %v772 = vmax.f32 %v394, 0.0
    %v773 = vmax.f32 %v443, 0.0
    %v774 = vmax.f32 %v492, 0.0
    %v775 = vmax.f32 %v541, 0.0
    %v776 = vmax.f32 %v590, 0.0
    %v777 = vmax.f32 %v639, 0.0
    %v778 = vmax.f32 %v688, 0.0
    %v779 = vmax.f32 %v347, 0.0
    %v780 = vmax.f32 %v396, 0.0
    %v781 = vmax.f32 %v445, 0.0
    %v782 = vmax.f32 %v494, 0.0
    %v783 = vmax.f32 %v543, 0.0
    %v784 = vmax.f32 %v592, 0.0
    %v785 = vmax.f32 %v641, 0.0
    %v786 = vmax.f32 %v690, 0.0
    %v787 = vmax.f32 %v350, 0.0
    %v788 = vmax.f32 %v399, 0.0
    %v789 = vmax.f32 %v448, 0.0
    %v790 = vmax.f32 %v497, 0.0
    %v791 = vmax.f32 %v546, 0.0
    %v792 = vmax.f32 %v595, 0.0
    %v793 = vmax.f32 %v644, 0.0
    %v794 = vmax.f32 %v693, 0.0
    %v795 = vmax.f32 %v352, 0.0
    %v796 = vmax.f32 %v401, 0.0
    %v797 = vmax.f32 %v450, 0.0
    %v798 = vmax.f32 %v499, 0.0
    %v799 = vmax.f32 %v548, 0.0
    %v800 = vmax.f32 %v597, 0.0
    %v801 = vmax.f32 %v646, 0.0
    %v802 = vmax.f32 %v695, 0.0
    %v803 = vmax.f32 %v355, 0.0
    %v804 = vmax.f32 %v404, 0.0
    %v805 = vmax.f32 %v453, 0.0
    %v806 = vmax.f32 %v502, 0.0
    %v807 = vmax.f32 %v551, 0.0
    %v808 = vmax.f32 %v600, 0.0
    %v809 = vmax.f32 %v649, 0.0
    %v810 = vmax.f32 %v698, 0.0
    %v811 = vmax.f32 %v357, 0.0
    %v812 = vmax.f32 %v406, 0.0
    %v813 = vmax.f32 %v455, 0.0
    %v814 = vmax.f32 %v504, 0.0
    %v815 = vmax.f32 %v553, 0.0
    %v816 = vmax.f32 %v602, 0.0
    %v817 = vmax.f32 %v651, 0.0
    %v818 = vmax.f32 %v700, 0.0
    %v819 = vmax.f32 %v360, 0.0
    %v820 = vmax.f32 %v409, 0.0
    %v821 = vmax.f32 %v458, 0.0
    %v822 = vmax.f32 %v507, 0.0
    %v823 = vmax.f32 %v556, 0.0
    %v824 = vmax.f32 %v605, 0.0
    %v825 = vmax.f32 %v654, 0.0
    %v826 = vmax.f32 %v703, 0.0
    %v827 = vmax.f32 %v362, 0.0
    %v828 = vmax.f32 %v411, 0.0
    %v829 = vmax.f32 %v460, 0.0
    %v830 = vmax.f32 %v509, 0.0
    %v831 = vmax.f32 %v558, 0.0
    %v832 = vmax.f32 %v607, 0.0
    %v833 = vmax.f32 %v656, 0.0
    %v834 = vmax.f32 %v705, 0.0
    %v835 = vpack.c.bf16 %v715, %v707
    %v836 = vpack.c.bf16 %v716, %v708
    %v837 = vpack.c.bf16 %v717, %v709
    %v838 = vpack.c.bf16 %v718, %v710
    %v839 = vpack.c.bf16 %v719, %v711
    %v840 = vpack.c.bf16 %v720, %v712
    %v841 = vpack.c.bf16 %v721, %v713
    %v842 = vpack.c.bf16 %v722, %v714
    %v843 = vpack.c.bf16 %v731, %v723
    %v844 = vpack.c.bf16 %v732, %v724
    %v845 = vpack.c.bf16 %v733, %v725
    %v846 = vpack.c.bf16 %v734, %v726
    %v847 = vpack.c.bf16 %v735, %v727
    %v848 = vpack.c.bf16 %v736, %v728
    %v849 = vpack.c.bf16 %v737, %v729
    %v850 = vpack.c.bf16 %v738, %v730
    %v851 = vpack.c.bf16 %v747, %v739
    %v852 = vpack.c.bf16 %v748, %v740
    %v853 = vpack.c.bf16 %v749, %v741
    %v854 = vpack.c.bf16 %v750, %v742
    %v855 = vpack.c.bf16 %v751, %v743
    %v856 = vpack.c.bf16 %v752, %v744
    %v857 = vpack.c.bf16 %v753, %v745
    %v858 = vpack.c.bf16 %v754, %v746
    %v859 = vpack.c.bf16 %v763, %v755
    %v860 = vpack.c.bf16 %v764, %v756
    %v861 = vpack.c.bf16 %v765, %v757
    %v862 = vpack.c.bf16 %v766, %v758
    %v863 = vpack.c.bf16 %v767, %v759
    %v864 = vpack.c.bf16 %v768, %v760
    %v865 = vpack.c.bf16 %v769, %v761
    %v866 = vpack.c.bf16 %v770, %v762
    %v867 = vpack.c.bf16 %v779, %v771
    %v868 = vpack.c.bf16 %v780, %v772
    %v869 = vpack.c.bf16 %v781, %v773
    %v870 = vpack.c.bf16 %v782, %v774
    %v871 = vpack.c.bf16 %v783, %v775
    %v872 = vpack.c.bf16 %v784, %v776
    %v873 = vpack.c.bf16 %v785, %v777
    %v874 = vpack.c.bf16 %v786, %v778
    %v875 = vpack.c.bf16 %v795, %v787
    %v876 = vpack.c.bf16 %v796, %v788
    %v877 = vpack.c.bf16 %v797, %v789
    %v878 = vpack.c.bf16 %v798, %v790
    %v879 = vpack.c.bf16 %v799, %v791
    %v880 = vpack.c.bf16 %v800, %v792
    %v881 = vpack.c.bf16 %v801, %v793
    %v882 = vpack.c.bf16 %v802, %v794
    %v883 = vpack.c.bf16 %v811, %v803
    %v884 = vpack.c.bf16 %v812, %v804
    %v885 = vpack.c.bf16 %v813, %v805
    %v886 = vpack.c.bf16 %v814, %v806
    %v887 = vpack.c.bf16 %v815, %v807
    %v888 = vpack.c.bf16 %v816, %v808
    %v889 = vpack.c.bf16 %v817, %v809
    %v890 = vpack.c.bf16 %v818, %v810
    %v891 = vpack.c.bf16 %v827, %v819
    %v892 = vpack.c.bf16 %v828, %v820
    %v893 = vpack.c.bf16 %v829, %v821
    %v894 = vpack.c.bf16 %v830, %v822
    %v895 = vpack.c.bf16 %v831, %v823
    %v896 = vpack.c.bf16 %v832, %v824
    %v897 = vpack.c.bf16 %v833, %v825
    %v898 = vpack.c.bf16 %v834, %v826
    %v899 = vld [vmem:[#allocation8] sm:$0xff]
    %v900 = vld [vmem:[#allocation8 + $0x8] sm:$0xff]
    %v901 = vld [vmem:[#allocation8 + $0x10] sm:$0xff]
    %v902 = vld [vmem:[#allocation8 + $0x18] sm:$0xff]
    %v903 = vld [vmem:[#allocation8 + $0x20] sm:$0xff]
    %v904 = vld [vmem:[#allocation8 + $0x28] sm:$0xff]
    %v905 = vld [vmem:[#allocation8 + $0x30] sm:$0xff]
    %v906 = vld [vmem:[#allocation8 + $0x38] sm:$0xff]
    %v907 = vld [vmem:[#allocation8 + $0x40] sm:$0xff]
    %v908 = vld [vmem:[#allocation8 + $0x48] sm:$0xff]
    %v909 = vld [vmem:[#allocation8 + $0x50] sm:$0xff]
    %v910 = vld [vmem:[#allocation8 + $0x58] sm:$0xff]
    %v911 = vld [vmem:[#allocation8 + $0x60] sm:$0xff]
    %v912 = vld [vmem:[#allocation8 + $0x68] sm:$0xff]
    %v913 = vld [vmem:[#allocation8 + $0x70] sm:$0xff]
    %v914 = vld [vmem:[#allocation8 + $0x78] sm:$0xff]
    %v915 = vld [vmem:[#allocation8 + $0x80] sm:$0xff]
    %v916 = vld [vmem:[#allocation8 + $0x88] sm:$0xff]
    %v917 = vld [vmem:[#allocation8 + $0x90] sm:$0xff]
    %v918 = vld [vmem:[#allocation8 + $0x98] sm:$0xff]
    %v919 = vld [vmem:[#allocation8 + $0xa0] sm:$0xff]
    %v920 = vld [vmem:[#allocation8 + $0xa8] sm:$0xff]
    %v921 = vld [vmem:[#allocation8 + $0xb0] sm:$0xff]
    %v922 = vld [vmem:[#allocation8 + $0xb8] sm:$0xff]
    %v923 = vld [vmem:[#allocation8 + $0xc0] sm:$0xff]
    %v924 = vld [vmem:[#allocation8 + $0xc8] sm:$0xff]
    %v925 = vld [vmem:[#allocation8 + $0xd0] sm:$0xff]
    %v926 = vld [vmem:[#allocation8 + $0xd8] sm:$0xff]
    %v927 = vld [vmem:[#allocation8 + $0xe0] sm:$0xff]
    %v928 = vld [vmem:[#allocation8 + $0xe8] sm:$0xff]
    %v929 = vld [vmem:[#allocation8 + $0xf0] sm:$0xff]
    %v930 = vld [vmem:[#allocation8 + $0xf8] sm:$0xff]
    %v931 = vld [vmem:[#allocation8 + $0x100] sm:$0xff]
    %v932 = vld [vmem:[#allocation8 + $0x108] sm:$0xff]
    %v933 = vld [vmem:[#allocation8 + $0x110] sm:$0xff]
    %v934 = vld [vmem:[#allocation8 + $0x118] sm:$0xff]
    %v935 = vld [vmem:[#allocation8 + $0x120] sm:$0xff]
    %v936 = vld [vmem:[#allocation8 + $0x128] sm:$0xff]
    %v937 = vld [vmem:[#allocation8 + $0x130] sm:$0xff]
    %v938 = vld [vmem:[#allocation8 + $0x138] sm:$0xff]
    %v939 = vld [vmem:[#allocation8 + $0x140] sm:$0xff]
    %v940 = vld [vmem:[#allocation8 + $0x148] sm:$0xff]
    %v941 = vld [vmem:[#allocation8 + $0x150] sm:$0xff]
    %v942 = vld [vmem:[#allocation8 + $0x158] sm:$0xff]
    %v943 = vld [vmem:[#allocation8 + $0x160] sm:$0xff]
    %v944 = vld [vmem:[#allocation8 + $0x168] sm:$0xff]
    %v945 = vld [vmem:[#allocation8 + $0x170] sm:$0xff]
    %v946 = vld [vmem:[#allocation8 + $0x178] sm:$0xff]
    %v947 = vld [vmem:[#allocation8 + $0x180] sm:$0xff]
    %v948 = vld [vmem:[#allocation8 + $0x188] sm:$0xff]
    %v949 = vld [vmem:[#allocation8 + $0x190] sm:$0xff]
    %v950 = vld [vmem:[#allocation8 + $0x198] sm:$0xff]
    %v951 = vld [vmem:[#allocation8 + $0x1a0] sm:$0xff]
    %v952 = vld [vmem:[#allocation8 + $0x1a8] sm:$0xff]
    %v953 = vld [vmem:[#allocation8 + $0x1b0] sm:$0xff]
    %v954 = vld [vmem:[#allocation8 + $0x1b8] sm:$0xff]
    %v955 = vld [vmem:[#allocation8 + $0x1c0] sm:$0xff]
    %v956 = vld [vmem:[#allocation8 + $0x1c8] sm:$0xff]
    %v957 = vld [vmem:[#allocation8 + $0x1d0] sm:$0xff]
    %v958 = vld [vmem:[#allocation8 + $0x1d8] sm:$0xff]
    %v959 = vld [vmem:[#allocation8 + $0x1e0] sm:$0xff]
    %v960 = vld [vmem:[#allocation8 + $0x1e8] sm:$0xff]
    %v961 = vld [vmem:[#allocation8 + $0x1f0] sm:$0xff]
    %v962 = vld [vmem:[#allocation8 + $0x1f8] sm:$0xff]
    %v963 = vld [vmem:[#allocation8 + $0x200] sm:$0xff]
    %v964 = vld [vmem:[#allocation8 + $0x208] sm:$0xff]
    %v965 = vld [vmem:[#allocation8 + $0x210] sm:$0xff]
    %v966 = vld [vmem:[#allocation8 + $0x218] sm:$0xff]
    %v967 = vld [vmem:[#allocation8 + $0x220] sm:$0xff]
    %v968 = vld [vmem:[#allocation8 + $0x228] sm:$0xff]
    %v969 = vld [vmem:[#allocation8 + $0x230] sm:$0xff]
    %v970 = vld [vmem:[#allocation8 + $0x238] sm:$0xff]
    %v971 = vld [vmem:[#allocation8 + $0x240] sm:$0xff]
    %v972 = vld [vmem:[#allocation8 + $0x248] sm:$0xff]
    %v973 = vld [vmem:[#allocation8 + $0x250] sm:$0xff]
    %v974 = vld [vmem:[#allocation8 + $0x258] sm:$0xff]
    %v975 = vld [vmem:[#allocation8 + $0x260] sm:$0xff]
    %v976 = vld [vmem:[#allocation8 + $0x268] sm:$0xff]
    %v977 = vld [vmem:[#allocation8 + $0x270] sm:$0xff]
    %v978 = vld [vmem:[#allocation8 + $0x278] sm:$0xff]
    %v979 = vld [vmem:[#allocation8 + $0x280] sm:$0xff]
    %v980 = vld [vmem:[#allocation8 + $0x288] sm:$0xff]
    %v981 = vld [vmem:[#allocation8 + $0x290] sm:$0xff]
    %v982 = vld [vmem:[#allocation8 + $0x298] sm:$0xff]
    %v983 = vld [vmem:[#allocation8 + $0x2a0] sm:$0xff]
    %v984 = vld [vmem:[#allocation8 + $0x2a8] sm:$0xff]
    %v985 = vld [vmem:[#allocation8 + $0x2b0] sm:$0xff]
    %v986 = vld [vmem:[#allocation8 + $0x2b8] sm:$0xff]
    %v987 = vld [vmem:[#allocation8 + $0x2c0] sm:$0xff]
    %v988 = vld [vmem:[#allocation8 + $0x2c8] sm:$0xff]
    %v989 = vld [vmem:[#allocation8 + $0x2d0] sm:$0xff]
    %v990 = vld [vmem:[#allocation8 + $0x2d8] sm:$0xff]
    %v991 = vld [vmem:[#allocation8 + $0x2e0] sm:$0xff]
    %v992 = vld [vmem:[#allocation8 + $0x2e8] sm:$0xff]
    %v993 = vld [vmem:[#allocation8 + $0x2f0] sm:$0xff]
    %v994 = vld [vmem:[#allocation8 + $0x2f8] sm:$0xff]
    %v995 = vld [vmem:[#allocation8 + $0x300] sm:$0xff]
    %v996 = vld [vmem:[#allocation8 + $0x308] sm:$0xff]
    %v997 = vld [vmem:[#allocation8 + $0x310] sm:$0xff]
    %v998 = vld [vmem:[#allocation8 + $0x318] sm:$0xff]
    %v999 = vld [vmem:[#allocation8 + $0x320] sm:$0xff]
    %v1000 = vld [vmem:[#allocation8 + $0x328] sm:$0xff]
    %v1001 = vld [vmem:[#allocation8 + $0x330] sm:$0xff]
    %v1002 = vld [vmem:[#allocation8 + $0x338] sm:$0xff]
    %v1003 = vld [vmem:[#allocation8 + $0x340] sm:$0xff]
    %v1004 = vld [vmem:[#allocation8 + $0x348] sm:$0xff]
    %v1005 = vld [vmem:[#allocation8 + $0x350] sm:$0xff]
    %v1006 = vld [vmem:[#allocation8 + $0x358] sm:$0xff]
    %v1007 = vld [vmem:[#allocation8 + $0x360] sm:$0xff]
    %v1008 = vld [vmem:[#allocation8 + $0x368] sm:$0xff]
    %v1009 = vld [vmem:[#allocation8 + $0x370] sm:$0xff]
    %v1010 = vld [vmem:[#allocation8 + $0x378] sm:$0xff]
    %v1011 = vld [vmem:[#allocation8 + $0x380] sm:$0xff]
    %v1012 = vld [vmem:[#allocation8 + $0x388] sm:$0xff]
    %v1013 = vld [vmem:[#allocation8 + $0x390] sm:$0xff]
    %v1014 = vld [vmem:[#allocation8 + $0x398] sm:$0xff]
    %v1015 = vld [vmem:[#allocation8 + $0x3a0] sm:$0xff]
    %v1016 = vld [vmem:[#allocation8 + $0x3a8] sm:$0xff]
    %v1017 = vld [vmem:[#allocation8 + $0x3b0] sm:$0xff]
    %v1018 = vld [vmem:[#allocation8 + $0x3b8] sm:$0xff]
    %v1019 = vld [vmem:[#allocation8 + $0x3c0] sm:$0xff]
    %v1020 = vld [vmem:[#allocation8 + $0x3c8] sm:$0xff]
    %v1021 = vld [vmem:[#allocation8 + $0x3d0] sm:$0xff]
    %v1022 = vld [vmem:[#allocation8 + $0x3d8] sm:$0xff]
    %v1023 = vld [vmem:[#allocation8 + $0x3e0] sm:$0xff]
    %v1024 = vld [vmem:[#allocation8 + $0x3e8] sm:$0xff]
    %v1025 = vld [vmem:[#allocation8 + $0x3f0] sm:$0xff]
    %v1026 = vld [vmem:[#allocation8 + $0x3f8] sm:$0xff]
    %v1027 = vld [vmem:[#allocation8 + $0x400] sm:$0xff]
    %v1028 = vld [vmem:[#allocation8 + $0x408] sm:$0xff]
    %v1029 = vld [vmem:[#allocation8 + $0x410] sm:$0xff]
    %v1030 = vld [vmem:[#allocation8 + $0x418] sm:$0xff]
    %v1031 = vld [vmem:[#allocation8 + $0x420] sm:$0xff]
    %v1032 = vld [vmem:[#allocation8 + $0x428] sm:$0xff]
    %v1033 = vld [vmem:[#allocation8 + $0x430] sm:$0xff]
    %v1034 = vld [vmem:[#allocation8 + $0x438] sm:$0xff]
    %v1035 = vld [vmem:[#allocation8 + $0x440] sm:$0xff]
    %v1036 = vld [vmem:[#allocation8 + $0x448] sm:$0xff]
    %v1037 = vld [vmem:[#allocation8 + $0x450] sm:$0xff]
    %v1038 = vld [vmem:[#allocation8 + $0x458] sm:$0xff]
    %v1039 = vld [vmem:[#allocation8 + $0x460] sm:$0xff]
    %v1040 = vld [vmem:[#allocation8 + $0x468] sm:$0xff]
    %v1041 = vld [vmem:[#allocation8 + $0x470] sm:$0xff]
    %v1042 = vld [vmem:[#allocation8 + $0x478] sm:$0xff]
    %v1043 = vld [vmem:[#allocation8 + $0x480] sm:$0xff]
    %v1044 = vld [vmem:[#allocation8 + $0x488] sm:$0xff]
    %v1045 = vld [vmem:[#allocation8 + $0x490] sm:$0xff]
    %v1046 = vld [vmem:[#allocation8 + $0x498] sm:$0xff]
    %v1047 = vld [vmem:[#allocation8 + $0x4a0] sm:$0xff]
    %v1048 = vld [vmem:[#allocation8 + $0x4a8] sm:$0xff]
    %v1049 = vld [vmem:[#allocation8 + $0x4b0] sm:$0xff]
    %v1050 = vld [vmem:[#allocation8 + $0x4b8] sm:$0xff]
    %v1051 = vld [vmem:[#allocation8 + $0x4c0] sm:$0xff]
    %v1052 = vld [vmem:[#allocation8 + $0x4c8] sm:$0xff]
    %v1053 = vld [vmem:[#allocation8 + $0x4d0] sm:$0xff]
    %v1054 = vld [vmem:[#allocation8 + $0x4d8] sm:$0xff]
    %v1055 = vld [vmem:[#allocation8 + $0x4e0] sm:$0xff]
    %v1056 = vld [vmem:[#allocation8 + $0x4e8] sm:$0xff]
    %v1057 = vld [vmem:[#allocation8 + $0x4f0] sm:$0xff]
    %v1058 = vld [vmem:[#allocation8 + $0x4f8] sm:$0xff]
    %v1059 = vld [vmem:[#allocation8 + $0x500] sm:$0xff]
    %v1060 = vld [vmem:[#allocation8 + $0x508] sm:$0xff]
    %v1061 = vld [vmem:[#allocation8 + $0x510] sm:$0xff]
    %v1062 = vld [vmem:[#allocation8 + $0x518] sm:$0xff]
    %v1063 = vld [vmem:[#allocation8 + $0x520] sm:$0xff]
    %v1064 = vld [vmem:[#allocation8 + $0x528] sm:$0xff]
    %v1065 = vld [vmem:[#allocation8 + $0x530] sm:$0xff]
    %v1066 = vld [vmem:[#allocation8 + $0x538] sm:$0xff]
    %v1067 = vld [vmem:[#allocation8 + $0x540] sm:$0xff]
    %v1068 = vld [vmem:[#allocation8 + $0x548] sm:$0xff]
    %v1069 = vld [vmem:[#allocation8 + $0x550] sm:$0xff]
    %v1070 = vld [vmem:[#allocation8 + $0x558] sm:$0xff]
    %v1071 = vld [vmem:[#allocation8 + $0x560] sm:$0xff]
    %v1072 = vld [vmem:[#allocation8 + $0x568] sm:$0xff]
    %v1073 = vld [vmem:[#allocation8 + $0x570] sm:$0xff]
    %v1074 = vld [vmem:[#allocation8 + $0x578] sm:$0xff]
    %v1075 = vld [vmem:[#allocation8 + $0x580] sm:$0xff]
    %v1076 = vld [vmem:[#allocation8 + $0x588] sm:$0xff]
    %v1077 = vld [vmem:[#allocation8 + $0x590] sm:$0xff]
    %v1078 = vld [vmem:[#allocation8 + $0x598] sm:$0xff]
    %v1079 = vld [vmem:[#allocation8 + $0x5a0] sm:$0xff]
    %v1080 = vld [vmem:[#allocation8 + $0x5a8] sm:$0xff]
    %v1081 = vld [vmem:[#allocation8 + $0x5b0] sm:$0xff]
    %v1082 = vld [vmem:[#allocation8 + $0x5b8] sm:$0xff]
    %v1083 = vld [vmem:[#allocation8 + $0x5c0] sm:$0xff]
    %v1084 = vld [vmem:[#allocation8 + $0x5c8] sm:$0xff]
    %v1085 = vld [vmem:[#allocation8 + $0x5d0] sm:$0xff]
    %v1086 = vld [vmem:[#allocation8 + $0x5d8] sm:$0xff]
    %v1087 = vld [vmem:[#allocation8 + $0x5e0] sm:$0xff]
    %v1088 = vld [vmem:[#allocation8 + $0x5e8] sm:$0xff]
    %v1089 = vld [vmem:[#allocation8 + $0x5f0] sm:$0xff]
    %v1090 = vld [vmem:[#allocation8 + $0x5f8] sm:$0xff]
    %v1091 = vld [vmem:[#allocation8 + $0x600] sm:$0xff]
    %v1092 = vld [vmem:[#allocation8 + $0x608] sm:$0xff]
    %v1093 = vld [vmem:[#allocation8 + $0x610] sm:$0xff]
    %v1094 = vld [vmem:[#allocation8 + $0x618] sm:$0xff]
    %v1095 = vld [vmem:[#allocation8 + $0x620] sm:$0xff]
    %v1096 = vld [vmem:[#allocation8 + $0x628] sm:$0xff]
    %v1097 = vld [vmem:[#allocation8 + $0x630] sm:$0xff]
    %v1098 = vld [vmem:[#allocation8 + $0x638] sm:$0xff]
    %v1099 = vld [vmem:[#allocation8 + $0x640] sm:$0xff]
    %v1100 = vld [vmem:[#allocation8 + $0x648] sm:$0xff]
    %v1101 = vld [vmem:[#allocation8 + $0x650] sm:$0xff]
    %v1102 = vld [vmem:[#allocation8 + $0x658] sm:$0xff]
    %v1103 = vld [vmem:[#allocation8 + $0x660] sm:$0xff]
    %v1104 = vld [vmem:[#allocation8 + $0x668] sm:$0xff]
    %v1105 = vld [vmem:[#allocation8 + $0x670] sm:$0xff]
    %v1106 = vld [vmem:[#allocation8 + $0x678] sm:$0xff]
    %v1107 = vld [vmem:[#allocation8 + $0x680] sm:$0xff]
    %v1108 = vld [vmem:[#allocation8 + $0x688] sm:$0xff]
    %v1109 = vld [vmem:[#allocation8 + $0x690] sm:$0xff]
    %v1110 = vld [vmem:[#allocation8 + $0x698] sm:$0xff]
    %v1111 = vld [vmem:[#allocation8 + $0x6a0] sm:$0xff]
    %v1112 = vld [vmem:[#allocation8 + $0x6a8] sm:$0xff]
    %v1113 = vld [vmem:[#allocation8 + $0x6b0] sm:$0xff]
    %v1114 = vld [vmem:[#allocation8 + $0x6b8] sm:$0xff]
    %v1115 = vld [vmem:[#allocation8 + $0x6c0] sm:$0xff]
    %v1116 = vld [vmem:[#allocation8 + $0x6c8] sm:$0xff]
    %v1117 = vld [vmem:[#allocation8 + $0x6d0] sm:$0xff]
    %v1118 = vld [vmem:[#allocation8 + $0x6d8] sm:$0xff]
    %v1119 = vld [vmem:[#allocation8 + $0x6e0] sm:$0xff]
    %v1120 = vld [vmem:[#allocation8 + $0x6e8] sm:$0xff]
    %v1121 = vld [vmem:[#allocation8 + $0x6f0] sm:$0xff]
    %v1122 = vld [vmem:[#allocation8 + $0x6f8] sm:$0xff]
    %v1123 = vld [vmem:[#allocation8 + $0x700] sm:$0xff]
    %v1124 = vld [vmem:[#allocation8 + $0x708] sm:$0xff]
    %v1125 = vld [vmem:[#allocation8 + $0x710] sm:$0xff]
    %v1126 = vld [vmem:[#allocation8 + $0x718] sm:$0xff]
    %v1127 = vld [vmem:[#allocation8 + $0x720] sm:$0xff]
    %v1128 = vld [vmem:[#allocation8 + $0x728] sm:$0xff]
    %v1129 = vld [vmem:[#allocation8 + $0x730] sm:$0xff]
    %v1130 = vld [vmem:[#allocation8 + $0x738] sm:$0xff]
    %v1131 = vld [vmem:[#allocation8 + $0x740] sm:$0xff]
    %v1132 = vld [vmem:[#allocation8 + $0x748] sm:$0xff]
    %v1133 = vld [vmem:[#allocation8 + $0x750] sm:$0xff]
    %v1134 = vld [vmem:[#allocation8 + $0x758] sm:$0xff]
    %v1135 = vld [vmem:[#allocation8 + $0x760] sm:$0xff]
    %v1136 = vld [vmem:[#allocation8 + $0x768] sm:$0xff]
    %v1137 = vld [vmem:[#allocation8 + $0x770] sm:$0xff]
    %v1138 = vld [vmem:[#allocation8 + $0x778] sm:$0xff]
    %v1139 = vld [vmem:[#allocation8 + $0x780] sm:$0xff]
    %v1140 = vld [vmem:[#allocation8 + $0x788] sm:$0xff]
    %v1141 = vld [vmem:[#allocation8 + $0x790] sm:$0xff]
    %v1142 = vld [vmem:[#allocation8 + $0x798] sm:$0xff]
    %v1143 = vld [vmem:[#allocation8 + $0x7a0] sm:$0xff]
    %v1144 = vld [vmem:[#allocation8 + $0x7a8] sm:$0xff]
    %v1145 = vld [vmem:[#allocation8 + $0x7b0] sm:$0xff]
    %v1146 = vld [vmem:[#allocation8 + $0x7b8] sm:$0xff]
    %v1147 = vld [vmem:[#allocation8 + $0x7c0] sm:$0xff]
    %v1148 = vld [vmem:[#allocation8 + $0x7c8] sm:$0xff]
    %v1149 = vld [vmem:[#allocation8 + $0x7d0] sm:$0xff]
    %v1150 = vld [vmem:[#allocation8 + $0x7d8] sm:$0xff]
    %v1151 = vld [vmem:[#allocation8 + $0x7e0] sm:$0xff]
    %v1152 = vld [vmem:[#allocation8 + $0x7e8] sm:$0xff]
    %v1153 = vld [vmem:[#allocation8 + $0x7f0] sm:$0xff]
    %v1154 = vld [vmem:[#allocation8 + $0x7f8] sm:$0xff]
    %v1155 = vld [vmem:[#allocation8 + $0x800] sm:$0xff]
    %v1156 = vld [vmem:[#allocation8 + $0x808] sm:$0xff]
    %v1157 = vld [vmem:[#allocation8 + $0x810] sm:$0xff]
    %v1158 = vld [vmem:[#allocation8 + $0x818] sm:$0xff]
    %v1159 = vld [vmem:[#allocation8 + $0x820] sm:$0xff]
    %v1160 = vld [vmem:[#allocation8 + $0x828] sm:$0xff]
    %v1161 = vld [vmem:[#allocation8 + $0x830] sm:$0xff]
    %v1162 = vld [vmem:[#allocation8 + $0x838] sm:$0xff]
    %v1163 = vld [vmem:[#allocation8 + $0x840] sm:$0xff]
    %v1164 = vld [vmem:[#allocation8 + $0x848] sm:$0xff]
    %v1165 = vld [vmem:[#allocation8 + $0x850] sm:$0xff]
    %v1166 = vld [vmem:[#allocation8 + $0x858] sm:$0xff]
    %v1167 = vld [vmem:[#allocation8 + $0x860] sm:$0xff]
    %v1168 = vld [vmem:[#allocation8 + $0x868] sm:$0xff]
    %v1169 = vld [vmem:[#allocation8 + $0x870] sm:$0xff]
    %v1170 = vld [vmem:[#allocation8 + $0x878] sm:$0xff]
    %v1171 = vld [vmem:[#allocation8 + $0x880] sm:$0xff]
    %v1172 = vld [vmem:[#allocation8 + $0x888] sm:$0xff]
    %v1173 = vld [vmem:[#allocation8 + $0x890] sm:$0xff]
    %v1174 = vld [vmem:[#allocation8 + $0x898] sm:$0xff]
    %v1175 = vld [vmem:[#allocation8 + $0x8a0] sm:$0xff]
    %v1176 = vld [vmem:[#allocation8 + $0x8a8] sm:$0xff]
    %v1177 = vld [vmem:[#allocation8 + $0x8b0] sm:$0xff]
    %v1178 = vld [vmem:[#allocation8 + $0x8b8] sm:$0xff]
    %v1179 = vld [vmem:[#allocation8 + $0x8c0] sm:$0xff]
    %v1180 = vld [vmem:[#allocation8 + $0x8c8] sm:$0xff]
    %v1181 = vld [vmem:[#allocation8 + $0x8d0] sm:$0xff]
    %v1182 = vld [vmem:[#allocation8 + $0x8d8] sm:$0xff]
    %v1183 = vld [vmem:[#allocation8 + $0x8e0] sm:$0xff]
    %v1184 = vld [vmem:[#allocation8 + $0x8e8] sm:$0xff]
    %v1185 = vld [vmem:[#allocation8 + $0x8f0] sm:$0xff]
    %v1186 = vld [vmem:[#allocation8 + $0x8f8] sm:$0xff]
    %v1187 = vld [vmem:[#allocation8 + $0x900] sm:$0xff]
    %v1188 = vld [vmem:[#allocation8 + $0x908] sm:$0xff]
    %v1189 = vld [vmem:[#allocation8 + $0x910] sm:$0xff]
    %v1190 = vld [vmem:[#allocation8 + $0x918] sm:$0xff]
    %v1191 = vld [vmem:[#allocation8 + $0x920] sm:$0xff]
    %v1192 = vld [vmem:[#allocation8 + $0x928] sm:$0xff]
    %v1193 = vld [vmem:[#allocation8 + $0x930] sm:$0xff]
    %v1194 = vld [vmem:[#allocation8 + $0x938] sm:$0xff]
    %v1195 = vld [vmem:[#allocation8 + $0x940] sm:$0xff]
    %v1196 = vld [vmem:[#allocation8 + $0x948] sm:$0xff]
    %v1197 = vld [vmem:[#allocation8 + $0x950] sm:$0xff]
    %v1198 = vld [vmem:[#allocation8 + $0x958] sm:$0xff]
    %v1199 = vld [vmem:[#allocation8 + $0x960] sm:$0xff]
    %v1200 = vld [vmem:[#allocation8 + $0x968] sm:$0xff]
    %v1201 = vld [vmem:[#allocation8 + $0x970] sm:$0xff]
    %v1202 = vld [vmem:[#allocation8 + $0x978] sm:$0xff]
    %v1203 = vld [vmem:[#allocation8 + $0x980] sm:$0xff]
    %v1204 = vld [vmem:[#allocation8 + $0x988] sm:$0xff]
    %v1205 = vld [vmem:[#allocation8 + $0x990] sm:$0xff]
    %v1206 = vld [vmem:[#allocation8 + $0x998] sm:$0xff]
    %v1207 = vld [vmem:[#allocation8 + $0x9a0] sm:$0xff]
    %v1208 = vld [vmem:[#allocation8 + $0x9a8] sm:$0xff]
    %v1209 = vld [vmem:[#allocation8 + $0x9b0] sm:$0xff]
    %v1210 = vld [vmem:[#allocation8 + $0x9b8] sm:$0xff]
    %v1211 = vld [vmem:[#allocation8 + $0x9c0] sm:$0xff]
    %v1212 = vld [vmem:[#allocation8 + $0x9c8] sm:$0xff]
    %v1213 = vld [vmem:[#allocation8 + $0x9d0] sm:$0xff]
    %v1214 = vld [vmem:[#allocation8 + $0x9d8] sm:$0xff]
    %v1215 = vld [vmem:[#allocation8 + $0x9e0] sm:$0xff]
    %v1216 = vld [vmem:[#allocation8 + $0x9e8] sm:$0xff]
    %v1217 = vld [vmem:[#allocation8 + $0x9f0] sm:$0xff]
    %v1218 = vld [vmem:[#allocation8 + $0x9f8] sm:$0xff]
    %v1219 = vld [vmem:[#allocation8 + $0xa00] sm:$0xff]
    %v1220 = vld [vmem:[#allocation8 + $0xa08] sm:$0xff]
    %v1221 = vld [vmem:[#allocation8 + $0xa10] sm:$0xff]
    %v1222 = vld [vmem:[#allocation8 + $0xa18] sm:$0xff]
    %v1223 = vld [vmem:[#allocation8 + $0xa20] sm:$0xff]
    %v1224 = vld [vmem:[#allocation8 + $0xa28] sm:$0xff]
    %v1225 = vld [vmem:[#allocation8 + $0xa30] sm:$0xff]
    %v1226 = vld [vmem:[#allocation8 + $0xa38] sm:$0xff]
    %v1227 = vld [vmem:[#allocation8 + $0xa40] sm:$0xff]
    %v1228 = vld [vmem:[#allocation8 + $0xa48] sm:$0xff]
    %v1229 = vld [vmem:[#allocation8 + $0xa50] sm:$0xff]
    %v1230 = vld [vmem:[#allocation8 + $0xa58] sm:$0xff]
    %v1231 = vld [vmem:[#allocation8 + $0xa60] sm:$0xff]
    %v1232 = vld [vmem:[#allocation8 + $0xa68] sm:$0xff]
    %v1233 = vld [vmem:[#allocation8 + $0xa70] sm:$0xff]
    %v1234 = vld [vmem:[#allocation8 + $0xa78] sm:$0xff]
    %v1235 = vld [vmem:[#allocation8 + $0xa80] sm:$0xff]
    %v1236 = vld [vmem:[#allocation8 + $0xa88] sm:$0xff]
    %v1237 = vld [vmem:[#allocation8 + $0xa90] sm:$0xff]
    %v1238 = vld [vmem:[#allocation8 + $0xa98] sm:$0xff]
    %v1239 = vld [vmem:[#allocation8 + $0xaa0] sm:$0xff]
    %v1240 = vld [vmem:[#allocation8 + $0xaa8] sm:$0xff]
    %v1241 = vld [vmem:[#allocation8 + $0xab0] sm:$0xff]
    %v1242 = vld [vmem:[#allocation8 + $0xab8] sm:$0xff]
    %v1243 = vld [vmem:[#allocation8 + $0xac0] sm:$0xff]
    %v1244 = vld [vmem:[#allocation8 + $0xac8] sm:$0xff]
    %v1245 = vld [vmem:[#allocation8 + $0xad0] sm:$0xff]
    %v1246 = vld [vmem:[#allocation8 + $0xad8] sm:$0xff]
    %v1247 = vld [vmem:[#allocation8 + $0xae0] sm:$0xff]
    %v1248 = vld [vmem:[#allocation8 + $0xae8] sm:$0xff]
    %v1249 = vld [vmem:[#allocation8 + $0xaf0] sm:$0xff]
    %v1250 = vld [vmem:[#allocation8 + $0xaf8] sm:$0xff]
    %v1251 = vld [vmem:[#allocation8 + $0xb00] sm:$0xff]
    %v1252 = vld [vmem:[#allocation8 + $0xb08] sm:$0xff]
    %v1253 = vld [vmem:[#allocation8 + $0xb10] sm:$0xff]
    %v1254 = vld [vmem:[#allocation8 + $0xb18] sm:$0xff]
    %v1255 = vld [vmem:[#allocation8 + $0xb20] sm:$0xff]
    %v1256 = vld [vmem:[#allocation8 + $0xb28] sm:$0xff]
    %v1257 = vld [vmem:[#allocation8 + $0xb30] sm:$0xff]
    %v1258 = vld [vmem:[#allocation8 + $0xb38] sm:$0xff]
    %v1259 = vld [vmem:[#allocation8 + $0xb40] sm:$0xff]
    %v1260 = vld [vmem:[#allocation8 + $0xb48] sm:$0xff]
    %v1261 = vld [vmem:[#allocation8 + $0xb50] sm:$0xff]
    %v1262 = vld [vmem:[#allocation8 + $0xb58] sm:$0xff]
    %v1263 = vld [vmem:[#allocation8 + $0xb60] sm:$0xff]
    %v1264 = vld [vmem:[#allocation8 + $0xb68] sm:$0xff]
    %v1265 = vld [vmem:[#allocation8 + $0xb70] sm:$0xff]
    %v1266 = vld [vmem:[#allocation8 + $0xb78] sm:$0xff]
    %v1267 = vld [vmem:[#allocation8 + $0xb80] sm:$0xff]
    %v1268 = vld [vmem:[#allocation8 + $0xb88] sm:$0xff]
    %v1269 = vld [vmem:[#allocation8 + $0xb90] sm:$0xff]
    %v1270 = vld [vmem:[#allocation8 + $0xb98] sm:$0xff]
    %v1271 = vld [vmem:[#allocation8 + $0xba0] sm:$0xff]
    %v1272 = vld [vmem:[#allocation8 + $0xba8] sm:$0xff]
    %v1273 = vld [vmem:[#allocation8 + $0xbb0] sm:$0xff]
    %v1274 = vld [vmem:[#allocation8 + $0xbb8] sm:$0xff]
    %v1275 = vld [vmem:[#allocation8 + $0xbc0] sm:$0xff]
    %v1276 = vld [vmem:[#allocation8 + $0xbc8] sm:$0xff]
    %v1277 = vld [vmem:[#allocation8 + $0xbd0] sm:$0xff]
    %v1278 = vld [vmem:[#allocation8 + $0xbd8] sm:$0xff]
    %v1279 = vld [vmem:[#allocation8 + $0xbe0] sm:$0xff]
    %v1280 = vld [vmem:[#allocation8 + $0xbe8] sm:$0xff]
    %v1281 = vld [vmem:[#allocation8 + $0xbf0] sm:$0xff]
    %v1282 = vld [vmem:[#allocation8 + $0xbf8] sm:$0xff]
    %v1283 = vld [vmem:[#allocation8 + $0xc00] sm:$0xff]
    %v1284 = vld [vmem:[#allocation8 + $0xc08] sm:$0xff]
    %v1285 = vld [vmem:[#allocation8 + $0xc10] sm:$0xff]
    %v1286 = vld [vmem:[#allocation8 + $0xc18] sm:$0xff]
    %v1287 = vld [vmem:[#allocation8 + $0xc20] sm:$0xff]
    %v1288 = vld [vmem:[#allocation8 + $0xc28] sm:$0xff]
    %v1289 = vld [vmem:[#allocation8 + $0xc30] sm:$0xff]
    %v1290 = vld [vmem:[#allocation8 + $0xc38] sm:$0xff]
    %v1291 = vld [vmem:[#allocation8 + $0xc40] sm:$0xff]
    %v1292 = vld [vmem:[#allocation8 + $0xc48] sm:$0xff]
    %v1293 = vld [vmem:[#allocation8 + $0xc50] sm:$0xff]
    %v1294 = vld [vmem:[#allocation8 + $0xc58] sm:$0xff]
    %v1295 = vld [vmem:[#allocation8 + $0xc60] sm:$0xff]
    %v1296 = vld [vmem:[#allocation8 + $0xc68] sm:$0xff]
    %v1297 = vld [vmem:[#allocation8 + $0xc70] sm:$0xff]
    %v1298 = vld [vmem:[#allocation8 + $0xc78] sm:$0xff]
    %v1299 = vld [vmem:[#allocation8 + $0xc80] sm:$0xff]
    %v1300 = vld [vmem:[#allocation8 + $0xc88] sm:$0xff]
    %v1301 = vld [vmem:[#allocation8 + $0xc90] sm:$0xff]
    %v1302 = vld [vmem:[#allocation8 + $0xc98] sm:$0xff]
    %v1303 = vld [vmem:[#allocation8 + $0xca0] sm:$0xff]
    %v1304 = vld [vmem:[#allocation8 + $0xca8] sm:$0xff]
    %v1305 = vld [vmem:[#allocation8 + $0xcb0] sm:$0xff]
    %v1306 = vld [vmem:[#allocation8 + $0xcb8] sm:$0xff]
    %v1307 = vld [vmem:[#allocation8 + $0xcc0] sm:$0xff]
    %v1308 = vld [vmem:[#allocation8 + $0xcc8] sm:$0xff]
    %v1309 = vld [vmem:[#allocation8 + $0xcd0] sm:$0xff]
    %v1310 = vld [vmem:[#allocation8 + $0xcd8] sm:$0xff]
    %v1311 = vld [vmem:[#allocation8 + $0xce0] sm:$0xff]
    %v1312 = vld [vmem:[#allocation8 + $0xce8] sm:$0xff]
    %v1313 = vld [vmem:[#allocation8 + $0xcf0] sm:$0xff]
    %v1314 = vld [vmem:[#allocation8 + $0xcf8] sm:$0xff]
    %v1315 = vld [vmem:[#allocation8 + $0xd00] sm:$0xff]
    %v1316 = vld [vmem:[#allocation8 + $0xd08] sm:$0xff]
    %v1317 = vld [vmem:[#allocation8 + $0xd10] sm:$0xff]
    %v1318 = vld [vmem:[#allocation8 + $0xd18] sm:$0xff]
    %v1319 = vld [vmem:[#allocation8 + $0xd20] sm:$0xff]
    %v1320 = vld [vmem:[#allocation8 + $0xd28] sm:$0xff]
    %v1321 = vld [vmem:[#allocation8 + $0xd30] sm:$0xff]
    %v1322 = vld [vmem:[#allocation8 + $0xd38] sm:$0xff]
    %v1323 = vld [vmem:[#allocation8 + $0xd40] sm:$0xff]
    %v1324 = vld [vmem:[#allocation8 + $0xd48] sm:$0xff]
    %v1325 = vld [vmem:[#allocation8 + $0xd50] sm:$0xff]
    %v1326 = vld [vmem:[#allocation8 + $0xd58] sm:$0xff]
    %v1327 = vld [vmem:[#allocation8 + $0xd60] sm:$0xff]
    %v1328 = vld [vmem:[#allocation8 + $0xd68] sm:$0xff]
    %v1329 = vld [vmem:[#allocation8 + $0xd70] sm:$0xff]
    %v1330 = vld [vmem:[#allocation8 + $0xd78] sm:$0xff]
    %v1331 = vld [vmem:[#allocation8 + $0xd80] sm:$0xff]
    %v1332 = vld [vmem:[#allocation8 + $0xd88] sm:$0xff]
    %v1333 = vld [vmem:[#allocation8 + $0xd90] sm:$0xff]
    %v1334 = vld [vmem:[#allocation8 + $0xd98] sm:$0xff]
    %v1335 = vld [vmem:[#allocation8 + $0xda0] sm:$0xff]
    %v1336 = vld [vmem:[#allocation8 + $0xda8] sm:$0xff]
    %v1337 = vld [vmem:[#allocation8 + $0xdb0] sm:$0xff]
    %v1338 = vld [vmem:[#allocation8 + $0xdb8] sm:$0xff]
    %v1339 = vld [vmem:[#allocation8 + $0xdc0] sm:$0xff]
    %v1340 = vld [vmem:[#allocation8 + $0xdc8] sm:$0xff]
    %v1341 = vld [vmem:[#allocation8 + $0xdd0] sm:$0xff]
    %v1342 = vld [vmem:[#allocation8 + $0xdd8] sm:$0xff]
    %v1343 = vld [vmem:[#allocation8 + $0xde0] sm:$0xff]
    %v1344 = vld [vmem:[#allocation8 + $0xde8] sm:$0xff]
    %v1345 = vld [vmem:[#allocation8 + $0xdf0] sm:$0xff]
    %v1346 = vld [vmem:[#allocation8 + $0xdf8] sm:$0xff]
    %v1347 = vld [vmem:[#allocation8 + $0xe00] sm:$0xff]
    %v1348 = vld [vmem:[#allocation8 + $0xe08] sm:$0xff]
    %v1349 = vld [vmem:[#allocation8 + $0xe10] sm:$0xff]
    %v1350 = vld [vmem:[#allocation8 + $0xe18] sm:$0xff]
    %v1351 = vld [vmem:[#allocation8 + $0xe20] sm:$0xff]
    %v1352 = vld [vmem:[#allocation8 + $0xe28] sm:$0xff]
    %v1353 = vld [vmem:[#allocation8 + $0xe30] sm:$0xff]
    %v1354 = vld [vmem:[#allocation8 + $0xe38] sm:$0xff]
    %v1355 = vld [vmem:[#allocation8 + $0xe40] sm:$0xff]
    %v1356 = vld [vmem:[#allocation8 + $0xe48] sm:$0xff]
    %v1357 = vld [vmem:[#allocation8 + $0xe50] sm:$0xff]
    %v1358 = vld [vmem:[#allocation8 + $0xe58] sm:$0xff]
    %v1359 = vld [vmem:[#allocation8 + $0xe60] sm:$0xff]
    %v1360 = vld [vmem:[#allocation8 + $0xe68] sm:$0xff]
    %v1361 = vld [vmem:[#allocation8 + $0xe70] sm:$0xff]
    %v1362 = vld [vmem:[#allocation8 + $0xe78] sm:$0xff]
    %v1363 = vld [vmem:[#allocation8 + $0xe80] sm:$0xff]
    %v1364 = vld [vmem:[#allocation8 + $0xe88] sm:$0xff]
    %v1365 = vld [vmem:[#allocation8 + $0xe90] sm:$0xff]
    %v1366 = vld [vmem:[#allocation8 + $0xe98] sm:$0xff]
    %v1367 = vld [vmem:[#allocation8 + $0xea0] sm:$0xff]
    %v1368 = vld [vmem:[#allocation8 + $0xea8] sm:$0xff]
    %v1369 = vld [vmem:[#allocation8 + $0xeb0] sm:$0xff]
    %v1370 = vld [vmem:[#allocation8 + $0xeb8] sm:$0xff]
    %v1371 = vld [vmem:[#allocation8 + $0xec0] sm:$0xff]
    %v1372 = vld [vmem:[#allocation8 + $0xec8] sm:$0xff]
    %v1373 = vld [vmem:[#allocation8 + $0xed0] sm:$0xff]
    %v1374 = vld [vmem:[#allocation8 + $0xed8] sm:$0xff]
    %v1375 = vld [vmem:[#allocation8 + $0xee0] sm:$0xff]
    %v1376 = vld [vmem:[#allocation8 + $0xee8] sm:$0xff]
    %v1377 = vld [vmem:[#allocation8 + $0xef0] sm:$0xff]
    %v1378 = vld [vmem:[#allocation8 + $0xef8] sm:$0xff]
    %v1379 = vld [vmem:[#allocation8 + $0xf00] sm:$0xff]
    %v1380 = vld [vmem:[#allocation8 + $0xf08] sm:$0xff]
    %v1381 = vld [vmem:[#allocation8 + $0xf10] sm:$0xff]
    %v1382 = vld [vmem:[#allocation8 + $0xf18] sm:$0xff]
    %v1383 = vld [vmem:[#allocation8 + $0xf20] sm:$0xff]
    %v1384 = vld [vmem:[#allocation8 + $0xf28] sm:$0xff]
    %v1385 = vld [vmem:[#allocation8 + $0xf30] sm:$0xff]
    %v1386 = vld [vmem:[#allocation8 + $0xf38] sm:$0xff]
    %v1387 = vld [vmem:[#allocation8 + $0xf40] sm:$0xff]
    %v1388 = vld [vmem:[#allocation8 + $0xf48] sm:$0xff]
    %v1389 = vld [vmem:[#allocation8 + $0xf50] sm:$0xff]
    %v1390 = vld [vmem:[#allocation8 + $0xf58] sm:$0xff]
    %v1391 = vld [vmem:[#allocation8 + $0xf60] sm:$0xff]
    %v1392 = vld [vmem:[#allocation8 + $0xf68] sm:$0xff]
    %v1393 = vld [vmem:[#allocation8 + $0xf70] sm:$0xff]
    %v1394 = vld [vmem:[#allocation8 + $0xf78] sm:$0xff]
    %v1395 = vld [vmem:[#allocation8 + $0xf80] sm:$0xff]
    %v1396 = vld [vmem:[#allocation8 + $0xf88] sm:$0xff]
    %v1397 = vld [vmem:[#allocation8 + $0xf90] sm:$0xff]
    %v1398 = vld [vmem:[#allocation8 + $0xf98] sm:$0xff]
    %v1399 = vld [vmem:[#allocation8 + $0xfa0] sm:$0xff]
    %v1400 = vld [vmem:[#allocation8 + $0xfa8] sm:$0xff]
    %v1401 = vld [vmem:[#allocation8 + $0xfb0] sm:$0xff]
    %v1402 = vld [vmem:[#allocation8 + $0xfb8] sm:$0xff]
    %v1403 = vld [vmem:[#allocation8 + $0xfc0] sm:$0xff]
    %v1404 = vld [vmem:[#allocation8 + $0xfc8] sm:$0xff]
    %v1405 = vld [vmem:[#allocation8 + $0xfd0] sm:$0xff]
    %v1406 = vld [vmem:[#allocation8 + $0xfd8] sm:$0xff]
    %v1407 = vld [vmem:[#allocation8 + $0xfe0] sm:$0xff]
    %v1408 = vld [vmem:[#allocation8 + $0xfe8] sm:$0xff]
    %v1409 = vld [vmem:[#allocation8 + $0xff0] sm:$0xff]
    %v1410 = vld [vmem:[#allocation8 + $0xff8] sm:$0xff]
    %v1411 = vld [vmem:[#allocation9] sm:$0xff]
    %v1413 = vperm.slane %v1411, 0
    %v1414 = vperm.slane %v1411, 1
    %v1415 = vperm.slane %v1411, 2
    %v1416 = vperm.slane %v1411, 3
    %v1417 = vperm.slane %v1411, 4
    %v1418 = vperm.slane %v1411, 5
    %v1419 = vperm.slane %v1411, 6
    %v1420 = vperm.slane %v1411, 7
    %v1941 = vunpack.c.l.b16 %v899
    %v1942 = vunpack.c.h.b16 %v899
    %v1943 = vunpack.c.l.b16 %v900
    %v1944 = vunpack.c.h.b16 %v900
    %v1945 = vunpack.c.l.b16 %v901
    %v1946 = vunpack.c.h.b16 %v901
    %v1947 = vunpack.c.l.b16 %v902
    %v1948 = vunpack.c.h.b16 %v902
    %v1949 = vunpack.c.l.b16 %v903
    %v1950 = vunpack.c.h.b16 %v903
    %v1951 = vunpack.c.l.b16 %v904
    %v1952 = vunpack.c.h.b16 %v904
    %v1953 = vunpack.c.l.b16 %v905
    %v1954 = vunpack.c.h.b16 %v905
    %v1955 = vunpack.c.l.b16 %v906
    %v1956 = vunpack.c.h.b16 %v906
    %v1957 = vunpack.c.l.b16 %v907
    %v1958 = vunpack.c.h.b16 %v907
    %v1959 = vunpack.c.l.b16 %v908
    %v1960 = vunpack.c.h.b16 %v908
    %v1961 = vunpack.c.l.b16 %v909
    %v1962 = vunpack.c.h.b16 %v909
    %v1963 = vunpack.c.l.b16 %v910
    %v1964 = vunpack.c.h.b16 %v910
    %v1965 = vunpack.c.l.b16 %v911
    %v1966 = vunpack.c.h.b16 %v911
    %v1967 = vunpack.c.l.b16 %v912
    %v1968 = vunpack.c.h.b16 %v912
    %v1969 = vunpack.c.l.b16 %v913
    %v1970 = vunpack.c.h.b16 %v913
    %v1971 = vunpack.c.l.b16 %v914
    %v1972 = vunpack.c.h.b16 %v914
    %v1973 = vunpack.c.l.b16 %v915
    %v1974 = vunpack.c.h.b16 %v915
    %v1975 = vunpack.c.l.b16 %v916
    %v1976 = vunpack.c.h.b16 %v916
    %v1977 = vunpack.c.l.b16 %v917
    %v1978 = vunpack.c.h.b16 %v917
    %v1979 = vunpack.c.l.b16 %v918
    %v1980 = vunpack.c.h.b16 %v918
    %v1981 = vunpack.c.l.b16 %v919
    %v1982 = vunpack.c.h.b16 %v919
    %v1983 = vunpack.c.l.b16 %v920
    %v1984 = vunpack.c.h.b16 %v920
    %v1985 = vunpack.c.l.b16 %v921
    %v1986 = vunpack.c.h.b16 %v921
    %v1987 = vunpack.c.l.b16 %v922
    %v1988 = vunpack.c.h.b16 %v922
    %v1989 = vunpack.c.l.b16 %v923
    %v1990 = vunpack.c.h.b16 %v923
    %v1991 = vunpack.c.l.b16 %v924
    %v1992 = vunpack.c.h.b16 %v924
    %v1993 = vunpack.c.l.b16 %v925
    %v1994 = vunpack.c.h.b16 %v925
    %v1995 = vunpack.c.l.b16 %v926
    %v1996 = vunpack.c.h.b16 %v926
    %v1997 = vunpack.c.l.b16 %v927
    %v1998 = vunpack.c.h.b16 %v927
    %v1999 = vunpack.c.l.b16 %v928
    %v2000 = vunpack.c.h.b16 %v928
    %v2001 = vunpack.c.l.b16 %v929
    %v2002 = vunpack.c.h.b16 %v929
    %v2003 = vunpack.c.l.b16 %v930
    %v2004 = vunpack.c.h.b16 %v930
    %v2005 = vunpack.c.l.b16 %v931
    %v2006 = vunpack.c.h.b16 %v931
    %v2007 = vunpack.c.l.b16 %v932
    %v2008 = vunpack.c.h.b16 %v932
    %v2009 = vunpack.c.l.b16 %v933
    %v2010 = vunpack.c.h.b16 %v933
    %v2011 = vunpack.c.l.b16 %v934
    %v2012 = vunpack.c.h.b16 %v934
    %v2013 = vunpack.c.l.b16 %v935
    %v2014 = vunpack.c.h.b16 %v935
    %v2015 = vunpack.c.l.b16 %v936
    %v2016 = vunpack.c.h.b16 %v936
    %v2017 = vunpack.c.l.b16 %v937
    %v2018 = vunpack.c.h.b16 %v937
    %v2019 = vunpack.c.l.b16 %v938
    %v2020 = vunpack.c.h.b16 %v938
    %v2021 = vunpack.c.l.b16 %v939
    %v2022 = vunpack.c.h.b16 %v939
    %v2023 = vunpack.c.l.b16 %v940
    %v2024 = vunpack.c.h.b16 %v940
    %v2025 = vunpack.c.l.b16 %v941
    %v2026 = vunpack.c.h.b16 %v941
    %v2027 = vunpack.c.l.b16 %v942
    %v2028 = vunpack.c.h.b16 %v942
    %v2029 = vunpack.c.l.b16 %v943
    %v2030 = vunpack.c.h.b16 %v943
    %v2031 = vunpack.c.l.b16 %v944
    %v2032 = vunpack.c.h.b16 %v944
    %v2033 = vunpack.c.l.b16 %v945
    %v2034 = vunpack.c.h.b16 %v945
    %v2035 = vunpack.c.l.b16 %v946
    %v2036 = vunpack.c.h.b16 %v946
    %v2037 = vunpack.c.l.b16 %v947
    %v2038 = vunpack.c.h.b16 %v947
    %v2039 = vunpack.c.l.b16 %v948
    %v2040 = vunpack.c.h.b16 %v948
    %v2041 = vunpack.c.l.b16 %v949
    %v2042 = vunpack.c.h.b16 %v949
    %v2043 = vunpack.c.l.b16 %v950
    %v2044 = vunpack.c.h.b16 %v950
    %v2045 = vunpack.c.l.b16 %v951
    %v2046 = vunpack.c.h.b16 %v951
    %v2047 = vunpack.c.l.b16 %v952
    %v2048 = vunpack.c.h.b16 %v952
    %v2049 = vunpack.c.l.b16 %v953
    %v2050 = vunpack.c.h.b16 %v953
    %v2051 = vunpack.c.l.b16 %v954
    %v2052 = vunpack.c.h.b16 %v954
    %v2053 = vunpack.c.l.b16 %v955
    %v2054 = vunpack.c.h.b16 %v955
    %v2055 = vunpack.c.l.b16 %v956
    %v2056 = vunpack.c.h.b16 %v956
    %v2057 = vunpack.c.l.b16 %v957
    %v2058 = vunpack.c.h.b16 %v957
    %v2059 = vunpack.c.l.b16 %v958
    %v2060 = vunpack.c.h.b16 %v958
    %v2061 = vunpack.c.l.b16 %v959
    %v2062 = vunpack.c.h.b16 %v959
    %v2063 = vunpack.c.l.b16 %v960
    %v2064 = vunpack.c.h.b16 %v960
    %v2065 = vunpack.c.l.b16 %v961
    %v2066 = vunpack.c.h.b16 %v961
    %v2067 = vunpack.c.l.b16 %v962
    %v2068 = vunpack.c.h.b16 %v962
    %v2069 = vunpack.c.l.b16 %v963
    %v2070 = vunpack.c.h.b16 %v963
    %v2071 = vunpack.c.l.b16 %v964
    %v2072 = vunpack.c.h.b16 %v964
    %v2073 = vunpack.c.l.b16 %v965
    %v2074 = vunpack.c.h.b16 %v965
    %v2075 = vunpack.c.l.b16 %v966
    %v2076 = vunpack.c.h.b16 %v966
    %v2077 = vunpack.c.l.b16 %v967
    %v2078 = vunpack.c.h.b16 %v967
    %v2079 = vunpack.c.l.b16 %v968
    %v2080 = vunpack.c.h.b16 %v968
    %v2081 = vunpack.c.l.b16 %v969
    %v2082 = vunpack.c.h.b16 %v969
    %v2083 = vunpack.c.l.b16 %v970
    %v2084 = vunpack.c.h.b16 %v970
    %v2085 = vunpack.c.l.b16 %v971
    %v2086 = vunpack.c.h.b16 %v971
    %v2087 = vunpack.c.l.b16 %v972
    %v2088 = vunpack.c.h.b16 %v972
    %v2089 = vunpack.c.l.b16 %v973
    %v2090 = vunpack.c.h.b16 %v973
    %v2091 = vunpack.c.l.b16 %v974
    %v2092 = vunpack.c.h.b16 %v974
    %v2093 = vunpack.c.l.b16 %v975
    %v2094 = vunpack.c.h.b16 %v975
    %v2095 = vunpack.c.l.b16 %v976
    %v2096 = vunpack.c.h.b16 %v976
    %v2097 = vunpack.c.l.b16 %v977
    %v2098 = vunpack.c.h.b16 %v977
    %v2099 = vunpack.c.l.b16 %v978
    %v2100 = vunpack.c.h.b16 %v978
    %v2101 = vunpack.c.l.b16 %v979
    %v2102 = vunpack.c.h.b16 %v979
    %v2103 = vunpack.c.l.b16 %v980
    %v2104 = vunpack.c.h.b16 %v980
    %v2105 = vunpack.c.l.b16 %v981
    %v2106 = vunpack.c.h.b16 %v981
    %v2107 = vunpack.c.l.b16 %v982
    %v2108 = vunpack.c.h.b16 %v982
    %v2109 = vunpack.c.l.b16 %v983
    %v2110 = vunpack.c.h.b16 %v983
    %v2111 = vunpack.c.l.b16 %v984
    %v2112 = vunpack.c.h.b16 %v984
    %v2113 = vunpack.c.l.b16 %v985
    %v2114 = vunpack.c.h.b16 %v985
    %v2115 = vunpack.c.l.b16 %v986
    %v2116 = vunpack.c.h.b16 %v986
    %v2117 = vunpack.c.l.b16 %v987
    %v2118 = vunpack.c.h.b16 %v987
    %v2119 = vunpack.c.l.b16 %v988
    %v2120 = vunpack.c.h.b16 %v988
    %v2121 = vunpack.c.l.b16 %v989
    %v2122 = vunpack.c.h.b16 %v989
    %v2123 = vunpack.c.l.b16 %v990
    %v2124 = vunpack.c.h.b16 %v990
    %v2125 = vunpack.c.l.b16 %v991
    %v2126 = vunpack.c.h.b16 %v991
    %v2127 = vunpack.c.l.b16 %v992
    %v2128 = vunpack.c.h.b16 %v992
    %v2129 = vunpack.c.l.b16 %v993
    %v2130 = vunpack.c.h.b16 %v993
    %v2131 = vunpack.c.l.b16 %v994
    %v2132 = vunpack.c.h.b16 %v994
    %v2133 = vunpack.c.l.b16 %v995
    %v2134 = vunpack.c.h.b16 %v995
    %v2135 = vunpack.c.l.b16 %v996
    %v2136 = vunpack.c.h.b16 %v996
    %v2137 = vunpack.c.l.b16 %v997
    %v2138 = vunpack.c.h.b16 %v997
    %v2139 = vunpack.c.l.b16 %v998
    %v2140 = vunpack.c.h.b16 %v998
    %v2141 = vunpack.c.l.b16 %v999
    %v2142 = vunpack.c.h.b16 %v999
    %v2143 = vunpack.c.l.b16 %v1000
    %v2144 = vunpack.c.h.b16 %v1000
    %v2145 = vunpack.c.l.b16 %v1001
    %v2146 = vunpack.c.h.b16 %v1001
    %v2147 = vunpack.c.l.b16 %v1002
    %v2148 = vunpack.c.h.b16 %v1002
    %v2149 = vunpack.c.l.b16 %v1003
    %v2150 = vunpack.c.h.b16 %v1003
    %v2151 = vunpack.c.l.b16 %v1004
    %v2152 = vunpack.c.h.b16 %v1004
    %v2153 = vunpack.c.l.b16 %v1005
    %v2154 = vunpack.c.h.b16 %v1005
    %v2155 = vunpack.c.l.b16 %v1006
    %v2156 = vunpack.c.h.b16 %v1006
    %v2157 = vunpack.c.l.b16 %v1007
    %v2158 = vunpack.c.h.b16 %v1007
    %v2159 = vunpack.c.l.b16 %v1008
    %v2160 = vunpack.c.h.b16 %v1008
    %v2161 = vunpack.c.l.b16 %v1009
    %v2162 = vunpack.c.h.b16 %v1009
    %v2163 = vunpack.c.l.b16 %v1010
    %v2164 = vunpack.c.h.b16 %v1010
    %v2165 = vunpack.c.l.b16 %v1011
    %v2166 = vunpack.c.h.b16 %v1011
    %v2167 = vunpack.c.l.b16 %v1012
    %v2168 = vunpack.c.h.b16 %v1012
    %v2169 = vunpack.c.l.b16 %v1013
    %v2170 = vunpack.c.h.b16 %v1013
    %v2171 = vunpack.c.l.b16 %v1014
    %v2172 = vunpack.c.h.b16 %v1014
    %v2173 = vunpack.c.l.b16 %v1015
    %v2174 = vunpack.c.h.b16 %v1015
    %v2175 = vunpack.c.l.b16 %v1016
    %v2176 = vunpack.c.h.b16 %v1016
    %v2177 = vunpack.c.l.b16 %v1017
    %v2178 = vunpack.c.h.b16 %v1017
    %v2179 = vunpack.c.l.b16 %v1018
    %v2180 = vunpack.c.h.b16 %v1018
    %v2181 = vunpack.c.l.b16 %v1019
    %v2182 = vunpack.c.h.b16 %v1019
    %v2183 = vunpack.c.l.b16 %v1020
    %v2184 = vunpack.c.h.b16 %v1020
    %v2185 = vunpack.c.l.b16 %v1021
    %v2186 = vunpack.c.h.b16 %v1021
    %v2187 = vunpack.c.l.b16 %v1022
    %v2188 = vunpack.c.h.b16 %v1022
    %v2189 = vunpack.c.l.b16 %v1023
    %v2190 = vunpack.c.h.b16 %v1023
    %v2191 = vunpack.c.l.b16 %v1024
    %v2192 = vunpack.c.h.b16 %v1024
    %v2193 = vunpack.c.l.b16 %v1025
    %v2194 = vunpack.c.h.b16 %v1025
    %v2195 = vunpack.c.l.b16 %v1026
    %v2196 = vunpack.c.h.b16 %v1026
    %v2197 = vunpack.c.l.b16 %v1027
    %v2198 = vunpack.c.h.b16 %v1027
    %v2199 = vunpack.c.l.b16 %v1028
    %v2200 = vunpack.c.h.b16 %v1028
    %v2201 = vunpack.c.l.b16 %v1029
    %v2202 = vunpack.c.h.b16 %v1029
    %v2203 = vunpack.c.l.b16 %v1030
    %v2204 = vunpack.c.h.b16 %v1030
    %v2205 = vunpack.c.l.b16 %v1031
    %v2206 = vunpack.c.h.b16 %v1031
    %v2207 = vunpack.c.l.b16 %v1032
    %v2208 = vunpack.c.h.b16 %v1032
    %v2209 = vunpack.c.l.b16 %v1033
    %v2210 = vunpack.c.h.b16 %v1033
    %v2211 = vunpack.c.l.b16 %v1034
    %v2212 = vunpack.c.h.b16 %v1034
    %v2213 = vunpack.c.l.b16 %v1035
    %v2214 = vunpack.c.h.b16 %v1035
    %v2215 = vunpack.c.l.b16 %v1036
    %v2216 = vunpack.c.h.b16 %v1036
    %v2217 = vunpack.c.l.b16 %v1037
    %v2218 = vunpack.c.h.b16 %v1037
    %v2219 = vunpack.c.l.b16 %v1038
    %v2220 = vunpack.c.h.b16 %v1038
    %v2221 = vunpack.c.l.b16 %v1039
    %v2222 = vunpack.c.h.b16 %v1039
    %v2223 = vunpack.c.l.b16 %v1040
    %v2224 = vunpack.c.h.b16 %v1040
    %v2225 = vunpack.c.l.b16 %v1041
    %v2226 = vunpack.c.h.b16 %v1041
    %v2227 = vunpack.c.l.b16 %v1042
    %v2228 = vunpack.c.h.b16 %v1042
    %v2229 = vunpack.c.l.b16 %v1043
    %v2230 = vunpack.c.h.b16 %v1043
    %v2231 = vunpack.c.l.b16 %v1044
    %v2232 = vunpack.c.h.b16 %v1044
    %v2233 = vunpack.c.l.b16 %v1045
    %v2234 = vunpack.c.h.b16 %v1045
    %v2235 = vunpack.c.l.b16 %v1046
    %v2236 = vunpack.c.h.b16 %v1046
    %v2237 = vunpack.c.l.b16 %v1047
    %v2238 = vunpack.c.h.b16 %v1047
    %v2239 = vunpack.c.l.b16 %v1048
    %v2240 = vunpack.c.h.b16 %v1048
    %v2241 = vunpack.c.l.b16 %v1049
    %v2242 = vunpack.c.h.b16 %v1049
    %v2243 = vunpack.c.l.b16 %v1050
    %v2244 = vunpack.c.h.b16 %v1050
    %v2245 = vunpack.c.l.b16 %v1051
    %v2246 = vunpack.c.h.b16 %v1051
    %v2247 = vunpack.c.l.b16 %v1052
    %v2248 = vunpack.c.h.b16 %v1052
    %v2249 = vunpack.c.l.b16 %v1053
    %v2250 = vunpack.c.h.b16 %v1053
    %v2251 = vunpack.c.l.b16 %v1054
    %v2252 = vunpack.c.h.b16 %v1054
    %v2253 = vunpack.c.l.b16 %v1055
    %v2254 = vunpack.c.h.b16 %v1055
    %v2255 = vunpack.c.l.b16 %v1056
    %v2256 = vunpack.c.h.b16 %v1056
    %v2257 = vunpack.c.l.b16 %v1057
    %v2258 = vunpack.c.h.b16 %v1057
    %v2259 = vunpack.c.l.b16 %v1058
    %v2260 = vunpack.c.h.b16 %v1058
    %v2261 = vunpack.c.l.b16 %v1059
    %v2262 = vunpack.c.h.b16 %v1059
    %v2263 = vunpack.c.l.b16 %v1060
    %v2264 = vunpack.c.h.b16 %v1060
    %v2265 = vunpack.c.l.b16 %v1061
    %v2266 = vunpack.c.h.b16 %v1061
    %v2267 = vunpack.c.l.b16 %v1062
    %v2268 = vunpack.c.h.b16 %v1062
    %v2269 = vunpack.c.l.b16 %v1063
    %v2270 = vunpack.c.h.b16 %v1063
    %v2271 = vunpack.c.l.b16 %v1064
    %v2272 = vunpack.c.h.b16 %v1064
    %v2273 = vunpack.c.l.b16 %v1065
    %v2274 = vunpack.c.h.b16 %v1065
    %v2275 = vunpack.c.l.b16 %v1066
    %v2276 = vunpack.c.h.b16 %v1066
    %v2277 = vunpack.c.l.b16 %v1067
    %v2278 = vunpack.c.h.b16 %v1067
    %v2279 = vunpack.c.l.b16 %v1068
    %v2280 = vunpack.c.h.b16 %v1068
    %v2281 = vunpack.c.l.b16 %v1069
    %v2282 = vunpack.c.h.b16 %v1069
    %v2283 = vunpack.c.l.b16 %v1070
    %v2284 = vunpack.c.h.b16 %v1070
    %v2285 = vunpack.c.l.b16 %v1071
    %v2286 = vunpack.c.h.b16 %v1071
    %v2287 = vunpack.c.l.b16 %v1072
    %v2288 = vunpack.c.h.b16 %v1072
    %v2289 = vunpack.c.l.b16 %v1073
    %v2290 = vunpack.c.h.b16 %v1073
    %v2291 = vunpack.c.l.b16 %v1074
    %v2292 = vunpack.c.h.b16 %v1074
    %v2293 = vunpack.c.l.b16 %v1075
    %v2294 = vunpack.c.h.b16 %v1075
    %v2295 = vunpack.c.l.b16 %v1076
    %v2296 = vunpack.c.h.b16 %v1076
    %v2297 = vunpack.c.l.b16 %v1077
    %v2298 = vunpack.c.h.b16 %v1077
    %v2299 = vunpack.c.l.b16 %v1078
    %v2300 = vunpack.c.h.b16 %v1078
    %v2301 = vunpack.c.l.b16 %v1079
    %v2302 = vunpack.c.h.b16 %v1079
    %v2303 = vunpack.c.l.b16 %v1080
    %v2304 = vunpack.c.h.b16 %v1080
    %v2305 = vunpack.c.l.b16 %v1081
    %v2306 = vunpack.c.h.b16 %v1081
    %v2307 = vunpack.c.l.b16 %v1082
    %v2308 = vunpack.c.h.b16 %v1082
    %v2309 = vunpack.c.l.b16 %v1083
    %v2310 = vunpack.c.h.b16 %v1083
    %v2311 = vunpack.c.l.b16 %v1084
    %v2312 = vunpack.c.h.b16 %v1084
    %v2313 = vunpack.c.l.b16 %v1085
    %v2314 = vunpack.c.h.b16 %v1085
    %v2315 = vunpack.c.l.b16 %v1086
    %v2316 = vunpack.c.h.b16 %v1086
    %v2317 = vunpack.c.l.b16 %v1087
    %v2318 = vunpack.c.h.b16 %v1087
    %v2319 = vunpack.c.l.b16 %v1088
    %v2320 = vunpack.c.h.b16 %v1088
    %v2321 = vunpack.c.l.b16 %v1089
    %v2322 = vunpack.c.h.b16 %v1089
    %v2323 = vunpack.c.l.b16 %v1090
    %v2324 = vunpack.c.h.b16 %v1090
    %v2325 = vunpack.c.l.b16 %v1091
    %v2326 = vunpack.c.h.b16 %v1091
    %v2327 = vunpack.c.l.b16 %v1092
    %v2328 = vunpack.c.h.b16 %v1092
    %v2329 = vunpack.c.l.b16 %v1093
    %v2330 = vunpack.c.h.b16 %v1093
    %v2331 = vunpack.c.l.b16 %v1094
    %v2332 = vunpack.c.h.b16 %v1094
    %v2333 = vunpack.c.l.b16 %v1095
    %v2334 = vunpack.c.h.b16 %v1095
    %v2335 = vunpack.c.l.b16 %v1096
    %v2336 = vunpack.c.h.b16 %v1096
    %v2337 = vunpack.c.l.b16 %v1097
    %v2338 = vunpack.c.h.b16 %v1097
    %v2339 = vunpack.c.l.b16 %v1098
    %v2340 = vunpack.c.h.b16 %v1098
    %v2341 = vunpack.c.l.b16 %v1099
    %v2342 = vunpack.c.h.b16 %v1099
    %v2343 = vunpack.c.l.b16 %v1100
    %v2344 = vunpack.c.h.b16 %v1100
    %v2345 = vunpack.c.l.b16 %v1101
    %v2346 = vunpack.c.h.b16 %v1101
    %v2347 = vunpack.c.l.b16 %v1102
    %v2348 = vunpack.c.h.b16 %v1102
    %v2349 = vunpack.c.l.b16 %v1103
    %v2350 = vunpack.c.h.b16 %v1103
    %v2351 = vunpack.c.l.b16 %v1104
    %v2352 = vunpack.c.h.b16 %v1104
    %v2353 = vunpack.c.l.b16 %v1105
    %v2354 = vunpack.c.h.b16 %v1105
    %v2355 = vunpack.c.l.b16 %v1106
    %v2356 = vunpack.c.h.b16 %v1106
    %v2357 = vunpack.c.l.b16 %v1107
    %v2358 = vunpack.c.h.b16 %v1107
    %v2359 = vunpack.c.l.b16 %v1108
    %v2360 = vunpack.c.h.b16 %v1108
    %v2361 = vunpack.c.l.b16 %v1109
    %v2362 = vunpack.c.h.b16 %v1109
    %v2363 = vunpack.c.l.b16 %v1110
    %v2364 = vunpack.c.h.b16 %v1110
    %v2365 = vunpack.c.l.b16 %v1111
    %v2366 = vunpack.c.h.b16 %v1111
    %v2367 = vunpack.c.l.b16 %v1112
    %v2368 = vunpack.c.h.b16 %v1112
    %v2369 = vunpack.c.l.b16 %v1113
    %v2370 = vunpack.c.h.b16 %v1113
    %v2371 = vunpack.c.l.b16 %v1114
    %v2372 = vunpack.c.h.b16 %v1114
    %v2373 = vunpack.c.l.b16 %v1115
    %v2374 = vunpack.c.h.b16 %v1115
    %v2375 = vunpack.c.l.b16 %v1116
    %v2376 = vunpack.c.h.b16 %v1116
    %v2377 = vunpack.c.l.b16 %v1117
    %v2378 = vunpack.c.h.b16 %v1117
    %v2379 = vunpack.c.l.b16 %v1118
    %v2380 = vunpack.c.h.b16 %v1118
    %v2381 = vunpack.c.l.b16 %v1119
    %v2382 = vunpack.c.h.b16 %v1119
    %v2383 = vunpack.c.l.b16 %v1120
    %v2384 = vunpack.c.h.b16 %v1120
    %v2385 = vunpack.c.l.b16 %v1121
    %v2386 = vunpack.c.h.b16 %v1121
    %v2387 = vunpack.c.l.b16 %v1122
    %v2388 = vunpack.c.h.b16 %v1122
    %v2389 = vunpack.c.l.b16 %v1123
    %v2390 = vunpack.c.h.b16 %v1123
    %v2391 = vunpack.c.l.b16 %v1124
    %v2392 = vunpack.c.h.b16 %v1124
    %v2393 = vunpack.c.l.b16 %v1125
    %v2394 = vunpack.c.h.b16 %v1125
    %v2395 = vunpack.c.l.b16 %v1126
    %v2396 = vunpack.c.h.b16 %v1126
    %v2397 = vunpack.c.l.b16 %v1127
    %v2398 = vunpack.c.h.b16 %v1127
    %v2399 = vunpack.c.l.b16 %v1128
    %v2400 = vunpack.c.h.b16 %v1128
    %v2401 = vunpack.c.l.b16 %v1129
    %v2402 = vunpack.c.h.b16 %v1129
    %v2403 = vunpack.c.l.b16 %v1130
    %v2404 = vunpack.c.h.b16 %v1130
    %v2405 = vunpack.c.l.b16 %v1131
    %v2406 = vunpack.c.h.b16 %v1131
    %v2407 = vunpack.c.l.b16 %v1132
    %v2408 = vunpack.c.h.b16 %v1132
    %v2409 = vunpack.c.l.b16 %v1133
    %v2410 = vunpack.c.h.b16 %v1133
    %v2411 = vunpack.c.l.b16 %v1134
    %v2412 = vunpack.c.h.b16 %v1134
    %v2413 = vunpack.c.l.b16 %v1135
    %v2414 = vunpack.c.h.b16 %v1135
    %v2415 = vunpack.c.l.b16 %v1136
    %v2416 = vunpack.c.h.b16 %v1136
    %v2417 = vunpack.c.l.b16 %v1137
    %v2418 = vunpack.c.h.b16 %v1137
    %v2419 = vunpack.c.l.b16 %v1138
    %v2420 = vunpack.c.h.b16 %v1138
    %v2421 = vunpack.c.l.b16 %v1139
    %v2422 = vunpack.c.h.b16 %v1139
    %v2423 = vunpack.c.l.b16 %v1140
    %v2424 = vunpack.c.h.b16 %v1140
    %v2425 = vunpack.c.l.b16 %v1141
    %v2426 = vunpack.c.h.b16 %v1141
    %v2427 = vunpack.c.l.b16 %v1142
    %v2428 = vunpack.c.h.b16 %v1142
    %v2429 = vunpack.c.l.b16 %v1143
    %v2430 = vunpack.c.h.b16 %v1143
    %v2431 = vunpack.c.l.b16 %v1144
    %v2432 = vunpack.c.h.b16 %v1144
    %v2433 = vunpack.c.l.b16 %v1145
    %v2434 = vunpack.c.h.b16 %v1145
    %v2435 = vunpack.c.l.b16 %v1146
    %v2436 = vunpack.c.h.b16 %v1146
    %v2437 = vunpack.c.l.b16 %v1147
    %v2438 = vunpack.c.h.b16 %v1147
    %v2439 = vunpack.c.l.b16 %v1148
    %v2440 = vunpack.c.h.b16 %v1148
    %v2441 = vunpack.c.l.b16 %v1149
    %v2442 = vunpack.c.h.b16 %v1149
    %v2443 = vunpack.c.l.b16 %v1150
    %v2444 = vunpack.c.h.b16 %v1150
    %v2445 = vunpack.c.l.b16 %v1151
    %v2446 = vunpack.c.h.b16 %v1151
    %v2447 = vunpack.c.l.b16 %v1152
    %v2448 = vunpack.c.h.b16 %v1152
    %v2449 = vunpack.c.l.b16 %v1153
    %v2450 = vunpack.c.h.b16 %v1153
    %v2451 = vunpack.c.l.b16 %v1154
    %v2452 = vunpack.c.h.b16 %v1154
    %v2453 = vunpack.c.l.b16 %v1155
    %v2454 = vunpack.c.h.b16 %v1155
    %v2455 = vunpack.c.l.b16 %v1156
    %v2456 = vunpack.c.h.b16 %v1156
    %v2457 = vunpack.c.l.b16 %v1157
    %v2458 = vunpack.c.h.b16 %v1157
    %v2459 = vunpack.c.l.b16 %v1158
    %v2460 = vunpack.c.h.b16 %v1158
    %v2461 = vunpack.c.l.b16 %v1159
    %v2462 = vunpack.c.h.b16 %v1159
    %v2463 = vunpack.c.l.b16 %v1160
    %v2464 = vunpack.c.h.b16 %v1160
    %v2465 = vunpack.c.l.b16 %v1161
    %v2466 = vunpack.c.h.b16 %v1161
    %v2467 = vunpack.c.l.b16 %v1162
    %v2468 = vunpack.c.h.b16 %v1162
    %v2469 = vunpack.c.l.b16 %v1163
    %v2470 = vunpack.c.h.b16 %v1163
    %v2471 = vunpack.c.l.b16 %v1164
    %v2472 = vunpack.c.h.b16 %v1164
    %v2473 = vunpack.c.l.b16 %v1165
    %v2474 = vunpack.c.h.b16 %v1165
    %v2475 = vunpack.c.l.b16 %v1166
    %v2476 = vunpack.c.h.b16 %v1166
    %v2477 = vunpack.c.l.b16 %v1167
    %v2478 = vunpack.c.h.b16 %v1167
    %v2479 = vunpack.c.l.b16 %v1168
    %v2480 = vunpack.c.h.b16 %v1168
    %v2481 = vunpack.c.l.b16 %v1169
    %v2482 = vunpack.c.h.b16 %v1169
    %v2483 = vunpack.c.l.b16 %v1170
    %v2484 = vunpack.c.h.b16 %v1170
    %v2485 = vunpack.c.l.b16 %v1171
    %v2486 = vunpack.c.h.b16 %v1171
    %v2487 = vunpack.c.l.b16 %v1172
    %v2488 = vunpack.c.h.b16 %v1172
    %v2489 = vunpack.c.l.b16 %v1173
    %v2490 = vunpack.c.h.b16 %v1173
    %v2491 = vunpack.c.l.b16 %v1174
    %v2492 = vunpack.c.h.b16 %v1174
    %v2493 = vunpack.c.l.b16 %v1175
    %v2494 = vunpack.c.h.b16 %v1175
    %v2495 = vunpack.c.l.b16 %v1176
    %v2496 = vunpack.c.h.b16 %v1176
    %v2497 = vunpack.c.l.b16 %v1177
    %v2498 = vunpack.c.h.b16 %v1177
    %v2499 = vunpack.c.l.b16 %v1178
    %v2500 = vunpack.c.h.b16 %v1178
    %v2501 = vunpack.c.l.b16 %v1179
    %v2502 = vunpack.c.h.b16 %v1179
    %v2503 = vunpack.c.l.b16 %v1180
    %v2504 = vunpack.c.h.b16 %v1180
    %v2505 = vunpack.c.l.b16 %v1181
    %v2506 = vunpack.c.h.b16 %v1181
    %v2507 = vunpack.c.l.b16 %v1182
    %v2508 = vunpack.c.h.b16 %v1182
    %v2509 = vunpack.c.l.b16 %v1183
    %v2510 = vunpack.c.h.b16 %v1183
    %v2511 = vunpack.c.l.b16 %v1184
    %v2512 = vunpack.c.h.b16 %v1184
    %v2513 = vunpack.c.l.b16 %v1185
    %v2514 = vunpack.c.h.b16 %v1185
    %v2515 = vunpack.c.l.b16 %v1186
    %v2516 = vunpack.c.h.b16 %v1186
    %v2517 = vunpack.c.l.b16 %v1187
    %v2518 = vunpack.c.h.b16 %v1187
    %v2519 = vunpack.c.l.b16 %v1188
    %v2520 = vunpack.c.h.b16 %v1188
    %v2521 = vunpack.c.l.b16 %v1189
    %v2522 = vunpack.c.h.b16 %v1189
    %v2523 = vunpack.c.l.b16 %v1190
    %v2524 = vunpack.c.h.b16 %v1190
    %v2525 = vunpack.c.l.b16 %v1191
    %v2526 = vunpack.c.h.b16 %v1191
    %v2527 = vunpack.c.l.b16 %v1192
    %v2528 = vunpack.c.h.b16 %v1192
    %v2529 = vunpack.c.l.b16 %v1193
    %v2530 = vunpack.c.h.b16 %v1193
    %v2531 = vunpack.c.l.b16 %v1194
    %v2532 = vunpack.c.h.b16 %v1194
    %v2533 = vunpack.c.l.b16 %v1195
    %v2534 = vunpack.c.h.b16 %v1195
    %v2535 = vunpack.c.l.b16 %v1196
    %v2536 = vunpack.c.h.b16 %v1196
    %v2537 = vunpack.c.l.b16 %v1197
    %v2538 = vunpack.c.h.b16 %v1197
    %v2539 = vunpack.c.l.b16 %v1198
    %v2540 = vunpack.c.h.b16 %v1198
    %v2541 = vunpack.c.l.b16 %v1199
    %v2542 = vunpack.c.h.b16 %v1199
    %v2543 = vunpack.c.l.b16 %v1200
    %v2544 = vunpack.c.h.b16 %v1200
    %v2545 = vunpack.c.l.b16 %v1201
    %v2546 = vunpack.c.h.b16 %v1201
    %v2547 = vunpack.c.l.b16 %v1202
    %v2548 = vunpack.c.h.b16 %v1202
    %v2549 = vunpack.c.l.b16 %v1203
    %v2550 = vunpack.c.h.b16 %v1203
    %v2551 = vunpack.c.l.b16 %v1204
    %v2552 = vunpack.c.h.b16 %v1204
    %v2553 = vunpack.c.l.b16 %v1205
    %v2554 = vunpack.c.h.b16 %v1205
    %v2555 = vunpack.c.l.b16 %v1206
    %v2556 = vunpack.c.h.b16 %v1206
    %v2557 = vunpack.c.l.b16 %v1207
    %v2558 = vunpack.c.h.b16 %v1207
    %v2559 = vunpack.c.l.b16 %v1208
    %v2560 = vunpack.c.h.b16 %v1208
    %v2561 = vunpack.c.l.b16 %v1209
    %v2562 = vunpack.c.h.b16 %v1209
    %v2563 = vunpack.c.l.b16 %v1210
    %v2564 = vunpack.c.h.b16 %v1210
    %v2565 = vunpack.c.l.b16 %v1211
    %v2566 = vunpack.c.h.b16 %v1211
    %v2567 = vunpack.c.l.b16 %v1212
    %v2568 = vunpack.c.h.b16 %v1212
    %v2569 = vunpack.c.l.b16 %v1213
    %v2570 = vunpack.c.h.b16 %v1213
    %v2571 = vunpack.c.l.b16 %v1214
    %v2572 = vunpack.c.h.b16 %v1214
    %v2573 = vunpack.c.l.b16 %v1215
    %v2574 = vunpack.c.h.b16 %v1215
    %v2575 = vunpack.c.l.b16 %v1216
    %v2576 = vunpack.c.h.b16 %v1216
    %v2577 = vunpack.c.l.b16 %v1217
    %v2578 = vunpack.c.h.b16 %v1217
    %v2579 = vunpack.c.l.b16 %v1218
    %v2580 = vunpack.c.h.b16 %v1218
    %v2581 = vunpack.c.l.b16 %v1219
    %v2582 = vunpack.c.h.b16 %v1219
    %v2583 = vunpack.c.l.b16 %v1220
    %v2584 = vunpack.c.h.b16 %v1220
    %v2585 = vunpack.c.l.b16 %v1221
    %v2586 = vunpack.c.h.b16 %v1221
    %v2587 = vunpack.c.l.b16 %v1222
    %v2588 = vunpack.c.h.b16 %v1222
    %v2589 = vunpack.c.l.b16 %v1223
    %v2590 = vunpack.c.h.b16 %v1223
    %v2591 = vunpack.c.l.b16 %v1224
    %v2592 = vunpack.c.h.b16 %v1224
    %v2593 = vunpack.c.l.b16 %v1225
    %v2594 = vunpack.c.h.b16 %v1225
    %v2595 = vunpack.c.l.b16 %v1226
    %v2596 = vunpack.c.h.b16 %v1226
    %v2597 = vunpack.c.l.b16 %v1227
    %v2598 = vunpack.c.h.b16 %v1227
    %v2599 = vunpack.c.l.b16 %v1228
    %v2600 = vunpack.c.h.b16 %v1228
    %v2601 = vunpack.c.l.b16 %v1229
    %v2602 = vunpack.c.h.b16 %v1229
    %v2603 = vunpack.c.l.b16 %v1230
    %v2604 = vunpack.c.h.b16 %v1230
    %v2605 = vunpack.c.l.b16 %v1231
    %v2606 = vunpack.c.h.b16 %v1231
    %v2607 = vunpack.c.l.b16 %v1232
    %v2608 = vunpack.c.h.b16 %v1232
    %v2609 = vunpack.c.l.b16 %v1233
    %v2610 = vunpack.c.h.b16 %v1233
    %v2611 = vunpack.c.l.b16 %v1234
    %v2612 = vunpack.c.h.b16 %v1234
    %v2613 = vunpack.c.l.b16 %v1235
    %v2614 = vunpack.c.h.b16 %v1235
    %v2615 = vunpack.c.l.b16 %v1236
    %v2616 = vunpack.c.h.b16 %v1236
    %v2617 = vunpack.c.l.b16 %v1237
    %v2618 = vunpack.c.h.b16 %v1237
    %v2619 = vunpack.c.l.b16 %v1238
    %v2620 = vunpack.c.h.b16 %v1238
    %v2621 = vunpack.c.l.b16 %v1239
    %v2622 = vunpack.c.h.b16 %v1239
    %v2623 = vunpack.c.l.b16 %v1240
    %v2624 = vunpack.c.h.b16 %v1240
    %v2625 = vunpack.c.l.b16 %v1241
    %v2626 = vunpack.c.h.b16 %v1241
    %v2627 = vunpack.c.l.b16 %v1242
    %v2628 = vunpack.c.h.b16 %v1242
    %v2629 = vunpack.c.l.b16 %v1243
    %v2630 = vunpack.c.h.b16 %v1243
    %v2631 = vunpack.c.l.b16 %v1244
    %v2632 = vunpack.c.h.b16 %v1244
    %v2633 = vunpack.c.l.b16 %v1245
    %v2634 = vunpack.c.h.b16 %v1245
    %v2635 = vunpack.c.l.b16 %v1246
    %v2636 = vunpack.c.h.b16 %v1246
    %v2637 = vunpack.c.l.b16 %v1247
    %v2638 = vunpack.c.h.b16 %v1247
    %v2639 = vunpack.c.l.b16 %v1248
    %v2640 = vunpack.c.h.b16 %v1248
    %v2641 = vunpack.c.l.b16 %v1249
    %v2642 = vunpack.c.h.b16 %v1249
    %v2643 = vunpack.c.l.b16 %v1250
    %v2644 = vunpack.c.h.b16 %v1250
    %v2645 = vunpack.c.l.b16 %v1251
    %v2646 = vunpack.c.h.b16 %v1251
    %v2647 = vunpack.c.l.b16 %v1252
    %v2648 = vunpack.c.h.b16 %v1252
    %v2649 = vunpack.c.l.b16 %v1253
    %v2650 = vunpack.c.h.b16 %v1253
    %v2651 = vunpack.c.l.b16 %v1254
    %v2652 = vunpack.c.h.b16 %v1254
    %v2653 = vunpack.c.l.b16 %v1255
    %v2654 = vunpack.c.h.b16 %v1255
    %v2655 = vunpack.c.l.b16 %v1256
    %v2656 = vunpack.c.h.b16 %v1256
    %v2657 = vunpack.c.l.b16 %v1257
    %v2658 = vunpack.c.h.b16 %v1257
    %v2659 = vunpack.c.l.b16 %v1258
    %v2660 = vunpack.c.h.b16 %v1258
    %v2661 = vunpack.c.l.b16 %v1259
    %v2662 = vunpack.c.h.b16 %v1259
    %v2663 = vunpack.c.l.b16 %v1260
    %v2664 = vunpack.c.h.b16 %v1260
    %v2665 = vunpack.c.l.b16 %v1261
    %v2666 = vunpack.c.h.b16 %v1261
    %v2667 = vunpack.c.l.b16 %v1262
    %v2668 = vunpack.c.h.b16 %v1262
    %v2669 = vunpack.c.l.b16 %v1263
    %v2670 = vunpack.c.h.b16 %v1263
    %v2671 = vunpack.c.l.b16 %v1264
    %v2672 = vunpack.c.h.b16 %v1264
    %v2673 = vunpack.c.l.b16 %v1265
    %v2674 = vunpack.c.h.b16 %v1265
    %v2675 = vunpack.c.l.b16 %v1266
    %v2676 = vunpack.c.h.b16 %v1266
    %v2677 = vunpack.c.l.b16 %v1267
    %v2678 = vunpack.c.h.b16 %v1267
    %v2679 = vunpack.c.l.b16 %v1268
    %v2680 = vunpack.c.h.b16 %v1268
    %v2681 = vunpack.c.l.b16 %v1269
    %v2682 = vunpack.c.h.b16 %v1269
    %v2683 = vunpack.c.l.b16 %v1270
    %v2684 = vunpack.c.h.b16 %v1270
    %v2685 = vunpack.c.l.b16 %v1271
    %v2686 = vunpack.c.h.b16 %v1271
    %v2687 = vunpack.c.l.b16 %v1272
    %v2688 = vunpack.c.h.b16 %v1272
    %v2689 = vunpack.c.l.b16 %v1273
    %v2690 = vunpack.c.h.b16 %v1273
    %v2691 = vunpack.c.l.b16 %v1274
    %v2692 = vunpack.c.h.b16 %v1274
    %v2693 = vunpack.c.l.b16 %v1275
    %v2694 = vunpack.c.h.b16 %v1275
    %v2695 = vunpack.c.l.b16 %v1276
    %v2696 = vunpack.c.h.b16 %v1276
    %v2697 = vunpack.c.l.b16 %v1277
    %v2698 = vunpack.c.h.b16 %v1277
    %v2699 = vunpack.c.l.b16 %v1278
    %v2700 = vunpack.c.h.b16 %v1278
    %v2701 = vunpack.c.l.b16 %v1279
    %v2702 = vunpack.c.h.b16 %v1279
    %v2703 = vunpack.c.l.b16 %v1280
    %v2704 = vunpack.c.h.b16 %v1280
    %v2705 = vunpack.c.l.b16 %v1281
    %v2706 = vunpack.c.h.b16 %v1281
    %v2707 = vunpack.c.l.b16 %v1282
    %v2708 = vunpack.c.h.b16 %v1282
    %v2709 = vunpack.c.l.b16 %v1283
    %v2710 = vunpack.c.h.b16 %v1283
    %v2711 = vunpack.c.l.b16 %v1284
    %v2712 = vunpack.c.h.b16 %v1284
    %v2713 = vunpack.c.l.b16 %v1285
    %v2714 = vunpack.c.h.b16 %v1285
    %v2715 = vunpack.c.l.b16 %v1286
    %v2716 = vunpack.c.h.b16 %v1286
    %v2717 = vunpack.c.l.b16 %v1287
    %v2718 = vunpack.c.h.b16 %v1287
    %v2719 = vunpack.c.l.b16 %v1288
    %v2720 = vunpack.c.h.b16 %v1288
    %v2721 = vunpack.c.l.b16 %v1289
    %v2722 = vunpack.c.h.b16 %v1289
    %v2723 = vunpack.c.l.b16 %v1290
    %v2724 = vunpack.c.h.b16 %v1290
    %v2725 = vunpack.c.l.b16 %v1291
    %v2726 = vunpack.c.h.b16 %v1291
    %v2727 = vunpack.c.l.b16 %v1292
    %v2728 = vunpack.c.h.b16 %v1292
    %v2729 = vunpack.c.l.b16 %v1293
    %v2730 = vunpack.c.h.b16 %v1293
    %v2731 = vunpack.c.l.b16 %v1294
    %v2732 = vunpack.c.h.b16 %v1294
    %v2733 = vunpack.c.l.b16 %v1295
    %v2734 = vunpack.c.h.b16 %v1295
    %v2735 = vunpack.c.l.b16 %v1296
    %v2736 = vunpack.c.h.b16 %v1296
    %v2737 = vunpack.c.l.b16 %v1297
    %v2738 = vunpack.c.h.b16 %v1297
    %v2739 = vunpack.c.l.b16 %v1298
    %v2740 = vunpack.c.h.b16 %v1298
    %v2741 = vunpack.c.l.b16 %v1299
    %v2742 = vunpack.c.h.b16 %v1299
    %v2743 = vunpack.c.l.b16 %v1300
    %v2744 = vunpack.c.h.b16 %v1300
    %v2745 = vunpack.c.l.b16 %v1301
    %v2746 = vunpack.c.h.b16 %v1301
    %v2747 = vunpack.c.l.b16 %v1302
    %v2748 = vunpack.c.h.b16 %v1302
    %v2749 = vunpack.c.l.b16 %v1303
    %v2750 = vunpack.c.h.b16 %v1303
    %v2751 = vunpack.c.l.b16 %v1304
    %v2752 = vunpack.c.h.b16 %v1304
    %v2753 = vunpack.c.l.b16 %v1305
    %v2754 = vunpack.c.h.b16 %v1305
    %v2755 = vunpack.c.l.b16 %v1306
    %v2756 = vunpack.c.h.b16 %v1306
    %v2757 = vunpack.c.l.b16 %v1307
    %v2758 = vunpack.c.h.b16 %v1307
    %v2759 = vunpack.c.l.b16 %v1308
    %v2760 = vunpack.c.h.b16 %v1308
    %v2761 = vunpack.c.l.b16 %v1309
    %v2762 = vunpack.c.h.b16 %v1309
    %v2763 = vunpack.c.l.b16 %v1310
    %v2764 = vunpack.c.h.b16 %v1310
    %v2765 = vunpack.c.l.b16 %v1311
    %v2766 = vunpack.c.h.b16 %v1311
    %v2767 = vunpack.c.l.b16 %v1312
    %v2768 = vunpack.c.h.b16 %v1312
    %v2769 = vunpack.c.l.b16 %v1313
    %v2770 = vunpack.c.h.b16 %v1313
    %v2771 = vunpack.c.l.b16 %v1314
    %v2772 = vunpack.c.h.b16 %v1314
    %v2773 = vunpack.c.l.b16 %v1315
    %v2774 = vunpack.c.h.b16 %v1315
    %v2775 = vunpack.c.l.b16 %v1316
    %v2776 = vunpack.c.h.b16 %v1316
    %v2777 = vunpack.c.l.b16 %v1317
    %v2778 = vunpack.c.h.b16 %v1317
    %v2779 = vunpack.c.l.b16 %v1318
    %v2780 = vunpack.c.h.b16 %v1318
    %v2781 = vunpack.c.l.b16 %v1319
    %v2782 = vunpack.c.h.b16 %v1319
    %v2783 = vunpack.c.l.b16 %v1320
    %v2784 = vunpack.c.h.b16 %v1320
    %v2785 = vunpack.c.l.b16 %v1321
    %v2786 = vunpack.c.h.b16 %v1321
    %v2787 = vunpack.c.l.b16 %v1322
    %v2788 = vunpack.c.h.b16 %v1322
    %v2789 = vunpack.c.l.b16 %v1323
    %v2790 = vunpack.c.h.b16 %v1323
    %v2791 = vunpack.c.l.b16 %v1324
    %v2792 = vunpack.c.h.b16 %v1324
    %v2793 = vunpack.c.l.b16 %v1325
    %v2794 = vunpack.c.h.b16 %v1325
    %v2795 = vunpack.c.l.b16 %v1326
    %v2796 = vunpack.c.h.b16 %v1326
    %v2797 = vunpack.c.l.b16 %v1327
    %v2798 = vunpack.c.h.b16 %v1327
    %v2799 = vunpack.c.l.b16 %v1328
    %v2800 = vunpack.c.h.b16 %v1328
    %v2801 = vunpack.c.l.b16 %v1329
    %v2802 = vunpack.c.h.b16 %v1329
    %v2803 = vunpack.c.l.b16 %v1330
    %v2804 = vunpack.c.h.b16 %v1330
    %v2805 = vunpack.c.l.b16 %v1331
    %v2806 = vunpack.c.h.b16 %v1331
    %v2807 = vunpack.c.l.b16 %v1332
    %v2808 = vunpack.c.h.b16 %v1332
    %v2809 = vunpack.c.l.b16 %v1333
    %v2810 = vunpack.c.h.b16 %v1333
    %v2811 = vunpack.c.l.b16 %v1334
    %v2812 = vunpack.c.h.b16 %v1334
    %v2813 = vunpack.c.l.b16 %v1335
    %v2814 = vunpack.c.h.b16 %v1335
    %v2815 = vunpack.c.l.b16 %v1336
    %v2816 = vunpack.c.h.b16 %v1336
    %v2817 = vunpack.c.l.b16 %v1337
    %v2818 = vunpack.c.h.b16 %v1337
    %v2819 = vunpack.c.l.b16 %v1338
    %v2820 = vunpack.c.h.b16 %v1338
    %v2821 = vunpack.c.l.b16 %v1339
    %v2822 = vunpack.c.h.b16 %v1339
    %v2823 = vunpack.c.l.b16 %v1340
    %v2824 = vunpack.c.h.b16 %v1340
    %v2825 = vunpack.c.l.b16 %v1341
    %v2826 = vunpack.c.h.b16 %v1341
    %v2827 = vunpack.c.l.b16 %v1342
    %v2828 = vunpack.c.h.b16 %v1342
    %v2829 = vunpack.c.l.b16 %v1343
    %v2830 = vunpack.c.h.b16 %v1343
    %v2831 = vunpack.c.l.b16 %v1344
    %v2832 = vunpack.c.h.b16 %v1344
    %v2833 = vunpack.c.l.b16 %v1345
    %v2834 = vunpack.c.h.b16 %v1345
    %v2835 = vunpack.c.l.b16 %v1346
    %v2836 = vunpack.c.h.b16 %v1346
    %v2837 = vunpack.c.l.b16 %v1347
    %v2838 = vunpack.c.h.b16 %v1347
    %v2839 = vunpack.c.l.b16 %v1348
    %v2840 = vunpack.c.h.b16 %v1348
    %v2841 = vunpack.c.l.b16 %v1349
    %v2842 = vunpack.c.h.b16 %v1349
    %v2843 = vunpack.c.l.b16 %v1350
    %v2844 = vunpack.c.h.b16 %v1350
    %v2845 = vunpack.c.l.b16 %v1351
    %v2846 = vunpack.c.h.b16 %v1351
    %v2847 = vunpack.c.l.b16 %v1352
    %v2848 = vunpack.c.h.b16 %v1352
    %v2849 = vunpack.c.l.b16 %v1353
    %v2850 = vunpack.c.h.b16 %v1353
    %v2851 = vunpack.c.l.b16 %v1354
    %v2852 = vunpack.c.h.b16 %v1354
    %v2853 = vunpack.c.l.b16 %v1355
    %v2854 = vunpack.c.h.b16 %v1355
    %v2855 = vunpack.c.l.b16 %v1356
    %v2856 = vunpack.c.h.b16 %v1356
    %v2857 = vunpack.c.l.b16 %v1357
    %v2858 = vunpack.c.h.b16 %v1357
    %v2859 = vunpack.c.l.b16 %v1358
    %v2860 = vunpack.c.h.b16 %v1358
    %v2861 = vunpack.c.l.b16 %v1359
    %v2862 = vunpack.c.h.b16 %v1359
    %v2863 = vunpack.c.l.b16 %v1360
    %v2864 = vunpack.c.h.b16 %v1360
    %v2865 = vunpack.c.l.b16 %v1361
    %v2866 = vunpack.c.h.b16 %v1361
    %v2867 = vunpack.c.l.b16 %v1362
    %v2868 = vunpack.c.h.b16 %v1362
    %v2869 = vunpack.c.l.b16 %v1363
    %v2870 = vunpack.c.h.b16 %v1363
    %v2871 = vunpack.c.l.b16 %v1364
    %v2872 = vunpack.c.h.b16 %v1364
    %v2873 = vunpack.c.l.b16 %v1365
    %v2874 = vunpack.c.h.b16 %v1365
    %v2875 = vunpack.c.l.b16 %v1366
    %v2876 = vunpack.c.h.b16 %v1366
    %v2877 = vunpack.c.l.b16 %v1367
    %v2878 = vunpack.c.h.b16 %v1367
    %v2879 = vunpack.c.l.b16 %v1368
    %v2880 = vunpack.c.h.b16 %v1368
    %v2881 = vunpack.c.l.b16 %v1369
    %v2882 = vunpack.c.h.b16 %v1369
    %v2883 = vunpack.c.l.b16 %v1370
    %v2884 = vunpack.c.h.b16 %v1370
    %v2885 = vunpack.c.l.b16 %v1371
    %v2886 = vunpack.c.h.b16 %v1371
    %v2887 = vunpack.c.l.b16 %v1372
    %v2888 = vunpack.c.h.b16 %v1372
    %v2889 = vunpack.c.l.b16 %v1373
    %v2890 = vunpack.c.h.b16 %v1373
    %v2891 = vunpack.c.l.b16 %v1374
    %v2892 = vunpack.c.h.b16 %v1374
    %v2893 = vunpack.c.l.b16 %v1375
    %v2894 = vunpack.c.h.b16 %v1375
    %v2895 = vunpack.c.l.b16 %v1376
    %v2896 = vunpack.c.h.b16 %v1376
    %v2897 = vunpack.c.l.b16 %v1377
    %v2898 = vunpack.c.h.b16 %v1377
    %v2899 = vunpack.c.l.b16 %v1378
    %v2900 = vunpack.c.h.b16 %v1378
    %v2901 = vunpack.c.l.b16 %v1379
    %v2902 = vunpack.c.h.b16 %v1379
    %v2903 = vunpack.c.l.b16 %v1380
    %v2904 = vunpack.c.h.b16 %v1380
    %v2905 = vunpack.c.l.b16 %v1381
    %v2906 = vunpack.c.h.b16 %v1381
    %v2907 = vunpack.c.l.b16 %v1382
    %v2908 = vunpack.c.h.b16 %v1382
    %v2909 = vunpack.c.l.b16 %v1383
    %v2910 = vunpack.c.h.b16 %v1383
    %v2911 = vunpack.c.l.b16 %v1384
    %v2912 = vunpack.c.h.b16 %v1384
    %v2913 = vunpack.c.l.b16 %v1385
    %v2914 = vunpack.c.h.b16 %v1385
    %v2915 = vunpack.c.l.b16 %v1386
    %v2916 = vunpack.c.h.b16 %v1386
    %v2917 = vunpack.c.l.b16 %v1387
    %v2918 = vunpack.c.h.b16 %v1387
    %v2919 = vunpack.c.l.b16 %v1388
    %v2920 = vunpack.c.h.b16 %v1388
    %v2921 = vunpack.c.l.b16 %v1389
    %v2922 = vunpack.c.h.b16 %v1389
    %v2923 = vunpack.c.l.b16 %v1390
    %v2924 = vunpack.c.h.b16 %v1390
    %v2925 = vunpack.c.l.b16 %v1391
    %v2926 = vunpack.c.h.b16 %v1391
    %v2927 = vunpack.c.l.b16 %v1392
    %v2928 = vunpack.c.h.b16 %v1392
    %v2929 = vunpack.c.l.b16 %v1393
    %v2930 = vunpack.c.h.b16 %v1393
    %v2931 = vunpack.c.l.b16 %v1394
    %v2932 = vunpack.c.h.b16 %v1394
    %v2933 = vunpack.c.l.b16 %v1395
    %v2934 = vunpack.c.h.b16 %v1395
    %v2935 = vunpack.c.l.b16 %v1396
    %v2936 = vunpack.c.h.b16 %v1396
    %v2937 = vunpack.c.l.b16 %v1397
    %v2938 = vunpack.c.h.b16 %v1397
    %v2939 = vunpack.c.l.b16 %v1398
    %v2940 = vunpack.c.h.b16 %v1398
    %v2941 = vunpack.c.l.b16 %v1399
    %v2942 = vunpack.c.h.b16 %v1399
    %v2943 = vunpack.c.l.b16 %v1400
    %v2944 = vunpack.c.h.b16 %v1400
    %v2945 = vunpack.c.l.b16 %v1401
    %v2946 = vunpack.c.h.b16 %v1401
    %v2947 = vunpack.c.l.b16 %v1402
    %v2948 = vunpack.c.h.b16 %v1402
    %v2949 = vunpack.c.l.b16 %v1403
    %v2950 = vunpack.c.h.b16 %v1403
    %v2951 = vunpack.c.l.b16 %v1404
    %v2952 = vunpack.c.h.b16 %v1404
    %v2953 = vunpack.c.l.b16 %v1405
    %v2954 = vunpack.c.h.b16 %v1405
    %v2955 = vunpack.c.l.b16 %v1406
    %v2956 = vunpack.c.h.b16 %v1406
    %v2957 = vunpack.c.l.b16 %v1407
    %v2958 = vunpack.c.h.b16 %v1407
    %v2959 = vunpack.c.l.b16 %v1408
    %v2960 = vunpack.c.h.b16 %v1408
    %v2961 = vunpack.c.l.b16 %v1409
    %v2962 = vunpack.c.h.b16 %v1409
    %v2963 = vunpack.c.l.b16 %v1410
    %v2964 = vunpack.c.h.b16 %v1410
    %v2965 = vpack.c.b16 %v1949, %v1941
    %v2966 = vpack.c.b16 %v1950, %v1942
    %v2967 = vpack.c.b16 %v1951, %v1943
    %v2968 = vpack.c.b16 %v1952, %v1944
    %v2969 = vpack.c.b16 %v1953, %v1945
    %v2970 = vpack.c.b16 %v1954, %v1946
    %v2971 = vpack.c.b16 %v1955, %v1947
    %v2972 = vpack.c.b16 %v1956, %v1948
    %v2973 = vpack.c.b16 %v1965, %v1957
    %v2974 = vpack.c.b16 %v1966, %v1958
    %v2975 = vpack.c.b16 %v1967, %v1959
    %v2976 = vpack.c.b16 %v1968, %v1960
    %v2977 = vpack.c.b16 %v1969, %v1961
    %v2978 = vpack.c.b16 %v1970, %v1962
    %v2979 = vpack.c.b16 %v1971, %v1963
    %v2980 = vpack.c.b16 %v1972, %v1964
    %v2981 = vpack.c.b16 %v1981, %v1973
    %v2982 = vpack.c.b16 %v1982, %v1974
    %v2983 = vpack.c.b16 %v1983, %v1975
    %v2984 = vpack.c.b16 %v1984, %v1976
    %v2985 = vpack.c.b16 %v1985, %v1977
    %v2986 = vpack.c.b16 %v1986, %v1978
    %v2987 = vpack.c.b16 %v1987, %v1979
    %v2988 = vpack.c.b16 %v1988, %v1980
    %v2989 = vpack.c.b16 %v1997, %v1989
    %v2990 = vpack.c.b16 %v1998, %v1990
    %v2991 = vpack.c.b16 %v1999, %v1991
    %v2992 = vpack.c.b16 %v2000, %v1992
    %v2993 = vpack.c.b16 %v2001, %v1993
    %v2994 = vpack.c.b16 %v2002, %v1994
    %v2995 = vpack.c.b16 %v2003, %v1995
    %v2996 = vpack.c.b16 %v2004, %v1996
    %v2997 = vpack.c.b16 %v2013, %v2005
    %v2998 = vpack.c.b16 %v2014, %v2006
    %v2999 = vpack.c.b16 %v2015, %v2007
    %v3000 = vpack.c.b16 %v2016, %v2008
    %v3001 = vpack.c.b16 %v2017, %v2009
    %v3002 = vpack.c.b16 %v2018, %v2010
    %v3003 = vpack.c.b16 %v2019, %v2011
    %v3004 = vpack.c.b16 %v2020, %v2012
    %v3005 = vpack.c.b16 %v2029, %v2021
    %v3006 = vpack.c.b16 %v2030, %v2022
    %v3007 = vpack.c.b16 %v2031, %v2023
    %v3008 = vpack.c.b16 %v2032, %v2024
    %v3009 = vpack.c.b16 %v2033, %v2025
    %v3010 = vpack.c.b16 %v2034, %v2026
    %v3011 = vpack.c.b16 %v2035, %v2027
    %v3012 = vpack.c.b16 %v2036, %v2028
    %v3013 = vpack.c.b16 %v2045, %v2037
    %v3014 = vpack.c.b16 %v2046, %v2038
    %v3015 = vpack.c.b16 %v2047, %v2039
    %v3016 = vpack.c.b16 %v2048, %v2040
    %v3017 = vpack.c.b16 %v2049, %v2041
    %v3018 = vpack.c.b16 %v2050, %v2042
    %v3019 = vpack.c.b16 %v2051, %v2043
    %v3020 = vpack.c.b16 %v2052, %v2044
    %v3021 = vpack.c.b16 %v2061, %v2053
    %v3022 = vpack.c.b16 %v2062, %v2054
    %v3023 = vpack.c.b16 %v2063, %v2055
    %v3024 = vpack.c.b16 %v2064, %v2056
    %v3025 = vpack.c.b16 %v2065, %v2057
    %v3026 = vpack.c.b16 %v2066, %v2058
    %v3027 = vpack.c.b16 %v2067, %v2059
    %v3028 = vpack.c.b16 %v2068, %v2060
    %v3029 = vpack.c.b16 %v2077, %v2069
    %v3030 = vpack.c.b16 %v2078, %v2070
    %v3031 = vpack.c.b16 %v2079, %v2071
    %v3032 = vpack.c.b16 %v2080, %v2072
    %v3033 = vpack.c.b16 %v2081, %v2073
    %v3034 = vpack.c.b16 %v2082, %v2074
    %v3035 = vpack.c.b16 %v2083, %v2075
    %v3036 = vpack.c.b16 %v2084, %v2076
    %v3037 = vpack.c.b16 %v2093, %v2085
    %v3038 = vpack.c.b16 %v2094, %v2086
    %v3039 = vpack.c.b16 %v2095, %v2087
    %v3040 = vpack.c.b16 %v2096, %v2088
    %v3041 = vpack.c.b16 %v2097, %v2089
    %v3042 = vpack.c.b16 %v2098, %v2090
    %v3043 = vpack.c.b16 %v2099, %v2091
    %v3044 = vpack.c.b16 %v2100, %v2092
    %v3045 = vpack.c.b16 %v2109, %v2101
    %v3046 = vpack.c.b16 %v2110, %v2102
    %v3047 = vpack.c.b16 %v2111, %v2103
    %v3048 = vpack.c.b16 %v2112, %v2104
    %v3049 = vpack.c.b16 %v2113, %v2105
    %v3050 = vpack.c.b16 %v2114, %v2106
    %v3051 = vpack.c.b16 %v2115, %v2107
    %v3052 = vpack.c.b16 %v2116, %v2108
    %v3053 = vpack.c.b16 %v2125, %v2117
    %v3054 = vpack.c.b16 %v2126, %v2118
    %v3055 = vpack.c.b16 %v2127, %v2119
    %v3056 = vpack.c.b16 %v2128, %v2120
    %v3057 = vpack.c.b16 %v2129, %v2121
    %v3058 = vpack.c.b16 %v2130, %v2122
    %v3059 = vpack.c.b16 %v2131, %v2123
    %v3060 = vpack.c.b16 %v2132, %v2124
    %v3061 = vpack.c.b16 %v2141, %v2133
    %v3062 = vpack.c.b16 %v2142, %v2134
    %v3063 = vpack.c.b16 %v2143, %v2135
    %v3064 = vpack.c.b16 %v2144, %v2136
    %v3065 = vpack.c.b16 %v2145, %v2137
    %v3066 = vpack.c.b16 %v2146, %v2138
    %v3067 = vpack.c.b16 %v2147, %v2139
    %v3068 = vpack.c.b16 %v2148, %v2140
    %v3069 = vpack.c.b16 %v2157, %v2149
    %v3070 = vpack.c.b16 %v2158, %v2150
    %v3071 = vpack.c.b16 %v2159, %v2151
    %v3072 = vpack.c.b16 %v2160, %v2152
    %v3073 = vpack.c.b16 %v2161, %v2153
    %v3074 = vpack.c.b16 %v2162, %v2154
    %v3075 = vpack.c.b16 %v2163, %v2155
    %v3076 = vpack.c.b16 %v2164, %v2156
    %v3077 = vpack.c.b16 %v2173, %v2165
    %v3078 = vpack.c.b16 %v2174, %v2166
    %v3079 = vpack.c.b16 %v2175, %v2167
    %v3080 = vpack.c.b16 %v2176, %v2168
    %v3081 = vpack.c.b16 %v2177, %v2169
    %v3082 = vpack.c.b16 %v2178, %v2170
    %v3083 = vpack.c.b16 %v2179, %v2171
    %v3084 = vpack.c.b16 %v2180, %v2172
    %v3085 = vpack.c.b16 %v2189, %v2181
    %v3086 = vpack.c.b16 %v2190, %v2182
    %v3087 = vpack.c.b16 %v2191, %v2183
    %v3088 = vpack.c.b16 %v2192, %v2184
    %v3089 = vpack.c.b16 %v2193, %v2185
    %v3090 = vpack.c.b16 %v2194, %v2186
    %v3091 = vpack.c.b16 %v2195, %v2187
    %v3092 = vpack.c.b16 %v2196, %v2188
    %v3093 = vpack.c.b16 %v2205, %v2197
    %v3094 = vpack.c.b16 %v2206, %v2198
    %v3095 = vpack.c.b16 %v2207, %v2199
    %v3096 = vpack.c.b16 %v2208, %v2200
    %v3097 = vpack.c.b16 %v2209, %v2201
    %v3098 = vpack.c.b16 %v2210, %v2202
    %v3099 = vpack.c.b16 %v2211, %v2203
    %v3100 = vpack.c.b16 %v2212, %v2204
    %v3101 = vpack.c.b16 %v2221, %v2213
    %v3102 = vpack.c.b16 %v2222, %v2214
    %v3103 = vpack.c.b16 %v2223, %v2215
    %v3104 = vpack.c.b16 %v2224, %v2216
    %v3105 = vpack.c.b16 %v2225, %v2217
    %v3106 = vpack.c.b16 %v2226, %v2218
    %v3107 = vpack.c.b16 %v2227, %v2219
    %v3108 = vpack.c.b16 %v2228, %v2220
    %v3109 = vpack.c.b16 %v2237, %v2229
    %v3110 = vpack.c.b16 %v2238, %v2230
    %v3111 = vpack.c.b16 %v2239, %v2231
    %v3112 = vpack.c.b16 %v2240, %v2232
    %v3113 = vpack.c.b16 %v2241, %v2233
    %v3114 = vpack.c.b16 %v2242, %v2234
    %v3115 = vpack.c.b16 %v2243, %v2235
    %v3116 = vpack.c.b16 %v2244, %v2236
    %v3117 = vpack.c.b16 %v2253, %v2245
    %v3118 = vpack.c.b16 %v2254, %v2246
    %v3119 = vpack.c.b16 %v2255, %v2247
    %v3120 = vpack.c.b16 %v2256, %v2248
    %v3121 = vpack.c.b16 %v2257, %v2249
    %v3122 = vpack.c.b16 %v2258, %v2250
    %v3123 = vpack.c.b16 %v2259, %v2251
    %v3124 = vpack.c.b16 %v2260, %v2252
    %v3125 = vpack.c.b16 %v2269, %v2261
    %v3126 = vpack.c.b16 %v2270, %v2262
    %v3127 = vpack.c.b16 %v2271, %v2263
    %v3128 = vpack.c.b16 %v2272, %v2264
    %v3129 = vpack.c.b16 %v2273, %v2265
    %v3130 = vpack.c.b16 %v2274, %v2266
    %v3131 = vpack.c.b16 %v2275, %v2267
    %v3132 = vpack.c.b16 %v2276, %v2268
    %v3133 = vpack.c.b16 %v2285, %v2277
    %v3134 = vpack.c.b16 %v2286, %v2278
    %v3135 = vpack.c.b16 %v2287, %v2279
    %v3136 = vpack.c.b16 %v2288, %v2280
    %v3137 = vpack.c.b16 %v2289, %v2281
    %v3138 = vpack.c.b16 %v2290, %v2282
    %v3139 = vpack.c.b16 %v2291, %v2283
    %v3140 = vpack.c.b16 %v2292, %v2284
    %v3141 = vpack.c.b16 %v2301, %v2293
    %v3142 = vpack.c.b16 %v2302, %v2294
    %v3143 = vpack.c.b16 %v2303, %v2295
    %v3144 = vpack.c.b16 %v2304, %v2296
    %v3145 = vpack.c.b16 %v2305, %v2297
    %v3146 = vpack.c.b16 %v2306, %v2298
    %v3147 = vpack.c.b16 %v2307, %v2299
    %v3148 = vpack.c.b16 %v2308, %v2300
    %v3149 = vpack.c.b16 %v2317, %v2309
    %v3150 = vpack.c.b16 %v2318, %v2310
    %v3151 = vpack.c.b16 %v2319, %v2311
    %v3152 = vpack.c.b16 %v2320, %v2312
    %v3153 = vpack.c.b16 %v2321, %v2313
    %v3154 = vpack.c.b16 %v2322, %v2314
    %v3155 = vpack.c.b16 %v2323, %v2315
    %v3156 = vpack.c.b16 %v2324, %v2316
    %v3157 = vpack.c.b16 %v2333, %v2325
    %v3158 = vpack.c.b16 %v2334, %v2326
    %v3159 = vpack.c.b16 %v2335, %v2327
    %v3160 = vpack.c.b16 %v2336, %v2328
    %v3161 = vpack.c.b16 %v2337, %v2329
    %v3162 = vpack.c.b16 %v2338, %v2330
    %v3163 = vpack.c.b16 %v2339, %v2331
    %v3164 = vpack.c.b16 %v2340, %v2332
    %v3165 = vpack.c.b16 %v2349, %v2341
    %v3166 = vpack.c.b16 %v2350, %v2342
    %v3167 = vpack.c.b16 %v2351, %v2343
    %v3168 = vpack.c.b16 %v2352, %v2344
    %v3169 = vpack.c.b16 %v2353, %v2345
    %v3170 = vpack.c.b16 %v2354, %v2346
    %v3171 = vpack.c.b16 %v2355, %v2347
    %v3172 = vpack.c.b16 %v2356, %v2348
    %v3173 = vpack.c.b16 %v2365, %v2357
    %v3174 = vpack.c.b16 %v2366, %v2358
    %v3175 = vpack.c.b16 %v2367, %v2359
    %v3176 = vpack.c.b16 %v2368, %v2360
    %v3177 = vpack.c.b16 %v2369, %v2361
    %v3178 = vpack.c.b16 %v2370, %v2362
    %v3179 = vpack.c.b16 %v2371, %v2363
    %v3180 = vpack.c.b16 %v2372, %v2364
    %v3181 = vpack.c.b16 %v2381, %v2373
    %v3182 = vpack.c.b16 %v2382, %v2374
    %v3183 = vpack.c.b16 %v2383, %v2375
    %v3184 = vpack.c.b16 %v2384, %v2376
    %v3185 = vpack.c.b16 %v2385, %v2377
    %v3186 = vpack.c.b16 %v2386, %v2378
    %v3187 = vpack.c.b16 %v2387, %v2379
    %v3188 = vpack.c.b16 %v2388, %v2380
    %v3189 = vpack.c.b16 %v2397, %v2389
    %v3190 = vpack.c.b16 %v2398, %v2390
    %v3191 = vpack.c.b16 %v2399, %v2391
    %v3192 = vpack.c.b16 %v2400, %v2392
    %v3193 = vpack.c.b16 %v2401, %v2393
    %v3194 = vpack.c.b16 %v2402, %v2394
    %v3195 = vpack.c.b16 %v2403, %v2395
    %v3196 = vpack.c.b16 %v2404, %v2396
    %v3197 = vpack.c.b16 %v2413, %v2405
    %v3198 = vpack.c.b16 %v2414, %v2406
    %v3199 = vpack.c.b16 %v2415, %v2407
    %v3200 = vpack.c.b16 %v2416, %v2408
    %v3201 = vpack.c.b16 %v2417, %v2409
    %v3202 = vpack.c.b16 %v2418, %v2410
    %v3203 = vpack.c.b16 %v2419, %v2411
    %v3204 = vpack.c.b16 %v2420, %v2412
    %v3205 = vpack.c.b16 %v2429, %v2421
    %v3206 = vpack.c.b16 %v2430, %v2422
    %v3207 = vpack.c.b16 %v2431, %v2423
    %v3208 = vpack.c.b16 %v2432, %v2424
    %v3209 = vpack.c.b16 %v2433, %v2425
    %v3210 = vpack.c.b16 %v2434, %v2426
    %v3211 = vpack.c.b16 %v2435, %v2427
    %v3212 = vpack.c.b16 %v2436, %v2428
    %v3213 = vpack.c.b16 %v2445, %v2437
    %v3214 = vpack.c.b16 %v2446, %v2438
    %v3215 = vpack.c.b16 %v2447, %v2439
    %v3216 = vpack.c.b16 %v2448, %v2440
    %v3217 = vpack.c.b16 %v2449, %v2441
    %v3218 = vpack.c.b16 %v2450, %v2442
    %v3219 = vpack.c.b16 %v2451, %v2443
    %v3220 = vpack.c.b16 %v2452, %v2444
    %v3221 = vpack.c.b16 %v2461, %v2453
    %v3222 = vpack.c.b16 %v2462, %v2454
    %v3223 = vpack.c.b16 %v2463, %v2455
    %v3224 = vpack.c.b16 %v2464, %v2456
    %v3225 = vpack.c.b16 %v2465, %v2457
    %v3226 = vpack.c.b16 %v2466, %v2458
    %v3227 = vpack.c.b16 %v2467, %v2459
    %v3228 = vpack.c.b16 %v2468, %v2460
    %v3229 = vpack.c.b16 %v2477, %v2469
    %v3230 = vpack.c.b16 %v2478, %v2470
    %v3231 = vpack.c.b16 %v2479, %v2471
    %v3232 = vpack.c.b16 %v2480, %v2472
    %v3233 = vpack.c.b16 %v2481, %v2473
    %v3234 = vpack.c.b16 %v2482, %v2474
    %v3235 = vpack.c.b16 %v2483, %v2475
    %v3236 = vpack.c.b16 %v2484, %v2476
    %v3237 = vpack.c.b16 %v2493, %v2485
    %v3238 = vpack.c.b16 %v2494, %v2486
    %v3239 = vpack.c.b16 %v2495, %v2487
    %v3240 = vpack.c.b16 %v2496, %v2488
    %v3241 = vpack.c.b16 %v2497, %v2489
    %v3242 = vpack.c.b16 %v2498, %v2490
    %v3243 = vpack.c.b16 %v2499, %v2491
    %v3244 = vpack.c.b16 %v2500, %v2492
    %v3245 = vpack.c.b16 %v2509, %v2501
    %v3246 = vpack.c.b16 %v2510, %v2502
    %v3247 = vpack.c.b16 %v2511, %v2503
    %v3248 = vpack.c.b16 %v2512, %v2504
    %v3249 = vpack.c.b16 %v2513, %v2505
    %v3250 = vpack.c.b16 %v2514, %v2506
    %v3251 = vpack.c.b16 %v2515, %v2507
    %v3252 = vpack.c.b16 %v2516, %v2508
    %v3253 = vpack.c.b16 %v2525, %v2517
    %v3254 = vpack.c.b16 %v2526, %v2518
    %v3255 = vpack.c.b16 %v2527, %v2519
    %v3256 = vpack.c.b16 %v2528, %v2520
    %v3257 = vpack.c.b16 %v2529, %v2521
    %v3258 = vpack.c.b16 %v2530, %v2522
    %v3259 = vpack.c.b16 %v2531, %v2523
    %v3260 = vpack.c.b16 %v2532, %v2524
    %v3261 = vpack.c.b16 %v2541, %v2533
    %v3262 = vpack.c.b16 %v2542, %v2534
    %v3263 = vpack.c.b16 %v2543, %v2535
    %v3264 = vpack.c.b16 %v2544, %v2536
    %v3265 = vpack.c.b16 %v2545, %v2537
    %v3266 = vpack.c.b16 %v2546, %v2538
    %v3267 = vpack.c.b16 %v2547, %v2539
    %v3268 = vpack.c.b16 %v2548, %v2540
    %v3269 = vpack.c.b16 %v2557, %v2549
    %v3270 = vpack.c.b16 %v2558, %v2550
    %v3271 = vpack.c.b16 %v2559, %v2551
    %v3272 = vpack.c.b16 %v2560, %v2552
    %v3273 = vpack.c.b16 %v2561, %v2553
    %v3274 = vpack.c.b16 %v2562, %v2554
    %v3275 = vpack.c.b16 %v2563, %v2555
    %v3276 = vpack.c.b16 %v2564, %v2556
    %v3277 = vpack.c.b16 %v2573, %v2565
    %v3278 = vpack.c.b16 %v2574, %v2566
    %v3279 = vpack.c.b16 %v2575, %v2567
    %v3280 = vpack.c.b16 %v2576, %v2568
    %v3281 = vpack.c.b16 %v2577, %v2569
    %v3282 = vpack.c.b16 %v2578, %v2570
    %v3283 = vpack.c.b16 %v2579, %v2571
    %v3284 = vpack.c.b16 %v2580, %v2572
    %v3285 = vpack.c.b16 %v2589, %v2581
    %v3286 = vpack.c.b16 %v2590, %v2582
    %v3287 = vpack.c.b16 %v2591, %v2583
    %v3288 = vpack.c.b16 %v2592, %v2584
    %v3289 = vpack.c.b16 %v2593, %v2585
    %v3290 = vpack.c.b16 %v2594, %v2586
    %v3291 = vpack.c.b16 %v2595, %v2587
    %v3292 = vpack.c.b16 %v2596, %v2588
    %v3293 = vpack.c.b16 %v2605, %v2597
    %v3294 = vpack.c.b16 %v2606, %v2598
    %v3295 = vpack.c.b16 %v2607, %v2599
    %v3296 = vpack.c.b16 %v2608, %v2600
    %v3297 = vpack.c.b16 %v2609, %v2601
    %v3298 = vpack.c.b16 %v2610, %v2602
    %v3299 = vpack.c.b16 %v2611, %v2603
    %v3300 = vpack.c.b16 %v2612, %v2604
    %v3301 = vpack.c.b16 %v2621, %v2613
    %v3302 = vpack.c.b16 %v2622, %v2614
    %v3303 = vpack.c.b16 %v2623, %v2615
    %v3304 = vpack.c.b16 %v2624, %v2616
    %v3305 = vpack.c.b16 %v2625, %v2617
    %v3306 = vpack.c.b16 %v2626, %v2618
    %v3307 = vpack.c.b16 %v2627, %v2619
    %v3308 = vpack.c.b16 %v2628, %v2620
    %v3309 = vpack.c.b16 %v2637, %v2629
    %v3310 = vpack.c.b16 %v2638, %v2630
    %v3311 = vpack.c.b16 %v2639, %v2631
    %v3312 = vpack.c.b16 %v2640, %v2632
    %v3313 = vpack.c.b16 %v2641, %v2633
    %v3314 = vpack.c.b16 %v2642, %v2634
    %v3315 = vpack.c.b16 %v2643, %v2635
    %v3316 = vpack.c.b16 %v2644, %v2636
    %v3317 = vpack.c.b16 %v2653, %v2645
    %v3318 = vpack.c.b16 %v2654, %v2646
    %v3319 = vpack.c.b16 %v2655, %v2647
    %v3320 = vpack.c.b16 %v2656, %v2648
    %v3321 = vpack.c.b16 %v2657, %v2649
    %v3322 = vpack.c.b16 %v2658, %v2650
    %v3323 = vpack.c.b16 %v2659, %v2651
    %v3324 = vpack.c.b16 %v2660, %v2652
    %v3325 = vpack.c.b16 %v2669, %v2661
    %v3326 = vpack.c.b16 %v2670, %v2662
    %v3327 = vpack.c.b16 %v2671, %v2663
    %v3328 = vpack.c.b16 %v2672, %v2664
    %v3329 = vpack.c.b16 %v2673, %v2665
    %v3330 = vpack.c.b16 %v2674, %v2666
    %v3331 = vpack.c.b16 %v2675, %v2667
    %v3332 = vpack.c.b16 %v2676, %v2668
    %v3333 = vpack.c.b16 %v2685, %v2677
    %v3334 = vpack.c.b16 %v2686, %v2678
    %v3335 = vpack.c.b16 %v2687, %v2679
    %v3336 = vpack.c.b16 %v2688, %v2680
    %v3337 = vpack.c.b16 %v2689, %v2681
    %v3338 = vpack.c.b16 %v2690, %v2682
    %v3339 = vpack.c.b16 %v2691, %v2683
    %v3340 = vpack.c.b16 %v2692, %v2684
    %v3341 = vpack.c.b16 %v2701, %v2693
    %v3342 = vpack.c.b16 %v2702, %v2694
    %v3343 = vpack.c.b16 %v2703, %v2695
    %v3344 = vpack.c.b16 %v2704, %v2696
    %v3345 = vpack.c.b16 %v2705, %v2697
    %v3346 = vpack.c.b16 %v2706, %v2698
    %v3347 = vpack.c.b16 %v2707, %v2699
    %v3348 = vpack.c.b16 %v2708, %v2700
    %v3349 = vpack.c.b16 %v2717, %v2709
    %v3350 = vpack.c.b16 %v2718, %v2710
    %v3351 = vpack.c.b16 %v2719, %v2711
    %v3352 = vpack.c.b16 %v2720, %v2712
    %v3353 = vpack.c.b16 %v2721, %v2713
    %v3354 = vpack.c.b16 %v2722, %v2714
    %v3355 = vpack.c.b16 %v2723, %v2715
    %v3356 = vpack.c.b16 %v2724, %v2716
    %v3357 = vpack.c.b16 %v2733, %v2725
    %v3358 = vpack.c.b16 %v2734, %v2726
    %v3359 = vpack.c.b16 %v2735, %v2727
    %v3360 = vpack.c.b16 %v2736, %v2728
    %v3361 = vpack.c.b16 %v2737, %v2729
    %v3362 = vpack.c.b16 %v2738, %v2730
    %v3363 = vpack.c.b16 %v2739, %v2731
    %v3364 = vpack.c.b16 %v2740, %v2732
    %v3365 = vpack.c.b16 %v2749, %v2741
    %v3366 = vpack.c.b16 %v2750, %v2742
    %v3367 = vpack.c.b16 %v2751, %v2743
    %v3368 = vpack.c.b16 %v2752, %v2744
    %v3369 = vpack.c.b16 %v2753, %v2745
    %v3370 = vpack.c.b16 %v2754, %v2746
    %v3371 = vpack.c.b16 %v2755, %v2747
    %v3372 = vpack.c.b16 %v2756, %v2748
    %v3373 = vpack.c.b16 %v2765, %v2757
    %v3374 = vpack.c.b16 %v2766, %v2758
    %v3375 = vpack.c.b16 %v2767, %v2759
    %v3376 = vpack.c.b16 %v2768, %v2760
    %v3377 = vpack.c.b16 %v2769, %v2761
    %v3378 = vpack.c.b16 %v2770, %v2762
    %v3379 = vpack.c.b16 %v2771, %v2763
    %v3380 = vpack.c.b16 %v2772, %v2764
    %v3381 = vpack.c.b16 %v2781, %v2773
    %v3382 = vpack.c.b16 %v2782, %v2774
    %v3383 = vpack.c.b16 %v2783, %v2775
    %v3384 = vpack.c.b16 %v2784, %v2776
    %v3385 = vpack.c.b16 %v2785, %v2777
    %v3386 = vpack.c.b16 %v2786, %v2778
    %v3387 = vpack.c.b16 %v2787, %v2779
    %v3388 = vpack.c.b16 %v2788, %v2780
    %v3389 = vpack.c.b16 %v2797, %v2789
    %v3390 = vpack.c.b16 %v2798, %v2790
    %v3391 = vpack.c.b16 %v2799, %v2791
    %v3392 = vpack.c.b16 %v2800, %v2792
    %v3393 = vpack.c.b16 %v2801, %v2793
    %v3394 = vpack.c.b16 %v2802, %v2794
    %v3395 = vpack.c.b16 %v2803, %v2795
    %v3396 = vpack.c.b16 %v2804, %v2796
    %v3397 = vpack.c.b16 %v2813, %v2805
    %v3398 = vpack.c.b16 %v2814, %v2806
    %v3399 = vpack.c.b16 %v2815, %v2807
    %v3400 = vpack.c.b16 %v2816, %v2808
    %v3401 = vpack.c.b16 %v2817, %v2809
    %v3402 = vpack.c.b16 %v2818, %v2810
    %v3403 = vpack.c.b16 %v2819, %v2811
    %v3404 = vpack.c.b16 %v2820, %v2812
    %v3405 = vpack.c.b16 %v2829, %v2821
    %v3406 = vpack.c.b16 %v2830, %v2822
    %v3407 = vpack.c.b16 %v2831, %v2823
    %v3408 = vpack.c.b16 %v2832, %v2824
    %v3409 = vpack.c.b16 %v2833, %v2825
    %v3410 = vpack.c.b16 %v2834, %v2826
    %v3411 = vpack.c.b16 %v2835, %v2827
    %v3412 = vpack.c.b16 %v2836, %v2828
    %v3413 = vpack.c.b16 %v2845, %v2837
    %v3414 = vpack.c.b16 %v2846, %v2838
    %v3415 = vpack.c.b16 %v2847, %v2839
    %v3416 = vpack.c.b16 %v2848, %v2840
    %v3417 = vpack.c.b16 %v2849, %v2841
    %v3418 = vpack.c.b16 %v2850, %v2842
    %v3419 = vpack.c.b16 %v2851, %v2843
    %v3420 = vpack.c.b16 %v2852, %v2844
    %v3421 = vpack.c.b16 %v2861, %v2853
    %v3422 = vpack.c.b16 %v2862, %v2854
    %v3423 = vpack.c.b16 %v2863, %v2855
    %v3424 = vpack.c.b16 %v2864, %v2856
    %v3425 = vpack.c.b16 %v2865, %v2857
    %v3426 = vpack.c.b16 %v2866, %v2858
    %v3427 = vpack.c.b16 %v2867, %v2859
    %v3428 = vpack.c.b16 %v2868, %v2860
    %v3429 = vpack.c.b16 %v2877, %v2869
    %v3430 = vpack.c.b16 %v2878, %v2870
    %v3431 = vpack.c.b16 %v2879, %v2871
    %v3432 = vpack.c.b16 %v2880, %v2872
    %v3433 = vpack.c.b16 %v2881, %v2873
    %v3434 = vpack.c.b16 %v2882, %v2874
    %v3435 = vpack.c.b16 %v2883, %v2875
    %v3436 = vpack.c.b16 %v2884, %v2876
    %v3437 = vpack.c.b16 %v2893, %v2885
    %v3438 = vpack.c.b16 %v2894, %v2886
    %v3439 = vpack.c.b16 %v2895, %v2887
    %v3440 = vpack.c.b16 %v2896, %v2888
    %v3441 = vpack.c.b16 %v2897, %v2889
    %v3442 = vpack.c.b16 %v2898, %v2890
    %v3443 = vpack.c.b16 %v2899, %v2891
    %v3444 = vpack.c.b16 %v2900, %v2892
    %v3445 = vpack.c.b16 %v2909, %v2901
    %v3446 = vpack.c.b16 %v2910, %v2902
    %v3447 = vpack.c.b16 %v2911, %v2903
    %v3448 = vpack.c.b16 %v2912, %v2904
    %v3449 = vpack.c.b16 %v2913, %v2905
    %v3450 = vpack.c.b16 %v2914, %v2906
    %v3451 = vpack.c.b16 %v2915, %v2907
    %v3452 = vpack.c.b16 %v2916, %v2908
    %v3453 = vpack.c.b16 %v2925, %v2917
    %v3454 = vpack.c.b16 %v2926, %v2918
    %v3455 = vpack.c.b16 %v2927, %v2919
    %v3456 = vpack.c.b16 %v2928, %v2920
    %v3457 = vpack.c.b16 %v2929, %v2921
    %v3458 = vpack.c.b16 %v2930, %v2922
    %v3459 = vpack.c.b16 %v2931, %v2923
    %v3460 = vpack.c.b16 %v2932, %v2924
    %v3461 = vpack.c.b16 %v2941, %v2933
    %v3462 = vpack.c.b16 %v2942, %v2934
    %v3463 = vpack.c.b16 %v2943, %v2935
    %v3464 = vpack.c.b16 %v2944, %v2936
    %v3465 = vpack.c.b16 %v2945, %v2937
    %v3466 = vpack.c.b16 %v2946, %v2938
    %v3467 = vpack.c.b16 %v2947, %v2939
    %v3468 = vpack.c.b16 %v2948, %v2940
    %v3469 = vpack.c.b16 %v2957, %v2949
    %v3470 = vpack.c.b16 %v2958, %v2950
    %v3471 = vpack.c.b16 %v2959, %v2951
    %v3472 = vpack.c.b16 %v2960, %v2952
    %v3473 = vpack.c.b16 %v2961, %v2953
    %v3474 = vpack.c.b16 %v2962, %v2954
    %v3475 = vpack.c.b16 %v2963, %v2955
    %v3476 = vpack.c.b16 %v2964, %v2956
    %3989 = vmatpush.bf16.msra.mxu0 %v3021
    %3990 = vmatpush.bf16.msra.mxu0 %v3013
    %3991 = vmatpush.bf16.msra.mxu0 %v3005
    %3992 = vmatpush.bf16.msra.mxu0 %v2997
    %3993 = vmatpush.bf16.msra.mxu0 %v2989
    %3994 = vmatpush.bf16.msra.mxu0 %v2981
    %3995 = vmatpush.bf16.msra.mxu0 %v2973
    %3996 = vmatpush.bf16.msra.mxu0 %v2965
    %3997 = vmatmul.bf16.gmra.mxu0 %v835
    %v3998 = vpop.f32.mrf.mxu0
    %v3999 = vadd.f32 %v1413, %v3998
    %v4000 = vpop.f32.mrf.mxu0
    %v4001 = vadd.f32 %v1413, %v4000
    %4002 = vmatmul.bf16.gmra.mxu0 %v843
    %v4003 = vpop.f32.mrf.mxu0
    %v4004 = vadd.f32 %v1413, %v4003
    %v4005 = vpop.f32.mrf.mxu0
    %v4006 = vadd.f32 %v1413, %v4005
    %4007 = vmatmul.bf16.gmra.mxu0 %v851
    %v4008 = vpop.f32.mrf.mxu0
    %v4009 = vadd.f32 %v1413, %v4008
    %v4010 = vpop.f32.mrf.mxu0
    %v4011 = vadd.f32 %v1413, %v4010
    %4012 = vmatmul.bf16.gmra.mxu0 %v859
    %v4013 = vpop.f32.mrf.mxu0
    %v4014 = vadd.f32 %v1413, %v4013
    %v4015 = vpop.f32.mrf.mxu0
    %v4016 = vadd.f32 %v1413, %v4015
    %4017 = vmatmul.bf16.gmra.mxu0 %v867
    %v4018 = vpop.f32.mrf.mxu0
    %v4019 = vadd.f32 %v1413, %v4018
    %v4020 = vpop.f32.mrf.mxu0
    %v4021 = vadd.f32 %v1413, %v4020
    %4022 = vmatmul.bf16.gmra.mxu0 %v875
    %v4023 = vpop.f32.mrf.mxu0
    %v4024 = vadd.f32 %v1413, %v4023
    %v4025 = vpop.f32.mrf.mxu0
    %v4026 = vadd.f32 %v1413, %v4025
    %4027 = vmatmul.bf16.gmra.mxu0 %v883
    %v4028 = vpop.f32.mrf.mxu0
    %v4029 = vadd.f32 %v1413, %v4028
    %v4030 = vpop.f32.mrf.mxu0
    %v4031 = vadd.f32 %v1413, %v4030
    %4032 = vmatmul.bf16.gmra.mxu0 %v891
    %v4033 = vpop.f32.mrf.mxu0
    %v4034 = vadd.f32 %v1413, %v4033
    %v4035 = vpop.f32.mrf.mxu0
    %v4036 = vadd.f32 %v1413, %v4035
    %4037 = vdwg.mxu0
    %4038 = vmatpush.bf16.msra.mxu0 %v3085
    %4039 = vmatpush.bf16.msra.mxu0 %v3077
    %4040 = vmatpush.bf16.msra.mxu0 %v3069
    %4041 = vmatpush.bf16.msra.mxu0 %v3061
    %4042 = vmatpush.bf16.msra.mxu0 %v3053
    %4043 = vmatpush.bf16.msra.mxu0 %v3045
    %4044 = vmatpush.bf16.msra.mxu0 %v3037
    %4045 = vmatpush.bf16.msra.mxu0 %v3029
    %4046 = vmatmul.bf16.gmra.mxu0 %v836
    %v4047 = vpop.f32.mrf.mxu0
    %v4048 = vadd.f32 %v3999, %v4047
    %v4049 = vpop.f32.mrf.mxu0
    %v4050 = vadd.f32 %v4001, %v4049
    %4051 = vmatmul.bf16.gmra.mxu0 %v844
    %v4052 = vpop.f32.mrf.mxu0
    %v4053 = vadd.f32 %v4004, %v4052
    %v4054 = vpop.f32.mrf.mxu0
    %v4055 = vadd.f32 %v4006, %v4054
    %4056 = vmatmul.bf16.gmra.mxu0 %v852
    %v4057 = vpop.f32.mrf.mxu0
    %v4058 = vadd.f32 %v4009, %v4057
    %v4059 = vpop.f32.mrf.mxu0
    %v4060 = vadd.f32 %v4011, %v4059
    %4061 = vmatmul.bf16.gmra.mxu0 %v860
    %v4062 = vpop.f32.mrf.mxu0
    %v4063 = vadd.f32 %v4014, %v4062
    %v4064 = vpop.f32.mrf.mxu0
    %v4065 = vadd.f32 %v4016, %v4064
    %4066 = vmatmul.bf16.gmra.mxu0 %v868
    %v4067 = vpop.f32.mrf.mxu0
    %v4068 = vadd.f32 %v4019, %v4067
    %v4069 = vpop.f32.mrf.mxu0
    %v4070 = vadd.f32 %v4021, %v4069
    %4071 = vmatmul.bf16.gmra.mxu0 %v876
    %v4072 = vpop.f32.mrf.mxu0
    %v4073 = vadd.f32 %v4024, %v4072
    %v4074 = vpop.f32.mrf.mxu0
    %v4075 = vadd.f32 %v4026, %v4074
    %4076 = vmatmul.bf16.gmra.mxu0 %v884
    %v4077 = vpop.f32.mrf.mxu0
    %v4078 = vadd.f32 %v4029, %v4077
    %v4079 = vpop.f32.mrf.mxu0
    %v4080 = vadd.f32 %v4031, %v4079
    %4081 = vmatmul.bf16.gmra.mxu0 %v892
    %v4082 = vpop.f32.mrf.mxu0
    %v4083 = vadd.f32 %v4034, %v4082
    %v4084 = vpop.f32.mrf.mxu0
    %v4085 = vadd.f32 %v4036, %v4084
    %4086 = vdwg.mxu0
    %4087 = vmatpush.bf16.msra.mxu0 %v3149
    %4088 = vmatpush.bf16.msra.mxu0 %v3141
    %4089 = vmatpush.bf16.msra.mxu0 %v3133
    %4090 = vmatpush.bf16.msra.mxu0 %v3125
    %4091 = vmatpush.bf16.msra.mxu0 %v3117
    %4092 = vmatpush.bf16.msra.mxu0 %v3109
    %4093 = vmatpush.bf16.msra.mxu0 %v3101
    %4094 = vmatpush.bf16.msra.mxu0 %v3093
    %4095 = vmatmul.bf16.gmra.mxu0 %v837
    %v4096 = vpop.f32.mrf.mxu0
    %v4097 = vadd.f32 %v4048, %v4096
    %v4098 = vpop.f32.mrf.mxu0
    %v4099 = vadd.f32 %v4050, %v4098
    %4100 = vmatmul.bf16.gmra.mxu0 %v845
    %v4101 = vpop.f32.mrf.mxu0
    %v4102 = vadd.f32 %v4053, %v4101
    %v4103 = vpop.f32.mrf.mxu0
    %v4104 = vadd.f32 %v4055, %v4103
    %4105 = vmatmul.bf16.gmra.mxu0 %v853
    %v4106 = vpop.f32.mrf.mxu0
    %v4107 = vadd.f32 %v4058, %v4106
    %v4108 = vpop.f32.mrf.mxu0
    %v4109 = vadd.f32 %v4060, %v4108
    %4110 = vmatmul.bf16.gmra.mxu0 %v861
    %v4111 = vpop.f32.mrf.mxu0
    %v4112 = vadd.f32 %v4063, %v4111
    %v4113 = vpop.f32.mrf.mxu0
    %v4114 = vadd.f32 %v4065, %v4113
    %4115 = vmatmul.bf16.gmra.mxu0 %v869
    %v4116 = vpop.f32.mrf.mxu0
    %v4117 = vadd.f32 %v4068, %v4116
    %v4118 = vpop.f32.mrf.mxu0
    %v4119 = vadd.f32 %v4070, %v4118
    %4120 = vmatmul.bf16.gmra.mxu0 %v877
    %v4121 = vpop.f32.mrf.mxu0
    %v4122 = vadd.f32 %v4073, %v4121
    %v4123 = vpop.f32.mrf.mxu0
    %v4124 = vadd.f32 %v4075, %v4123
    %4125 = vmatmul.bf16.gmra.mxu0 %v885
    %v4126 = vpop.f32.mrf.mxu0
    %v4127 = vadd.f32 %v4078, %v4126
    %v4128 = vpop.f32.mrf.mxu0
    %v4129 = vadd.f32 %v4080, %v4128
    %4130 = vmatmul.bf16.gmra.mxu0 %v893
    %v4131 = vpop.f32.mrf.mxu0
    %v4132 = vadd.f32 %v4083, %v4131
    %v4133 = vpop.f32.mrf.mxu0
    %v4134 = vadd.f32 %v4085, %v4133
    %4135 = vdwg.mxu0
    %4136 = vmatpush.bf16.msra.mxu0 %v3213
    %4137 = vmatpush.bf16.msra.mxu0 %v3205
    %4138 = vmatpush.bf16.msra.mxu0 %v3197
    %4139 = vmatpush.bf16.msra.mxu0 %v3189
    %4140 = vmatpush.bf16.msra.mxu0 %v3181
    %4141 = vmatpush.bf16.msra.mxu0 %v3173
    %4142 = vmatpush.bf16.msra.mxu0 %v3165
    %4143 = vmatpush.bf16.msra.mxu0 %v3157
    %4144 = vmatmul.bf16.gmra.mxu0 %v838
    %v4145 = vpop.f32.mrf.mxu0
    %v4146 = vadd.f32 %v4097, %v4145
    %v4147 = vpop.f32.mrf.mxu0
    %v4148 = vadd.f32 %v4099, %v4147
    %4149 = vmatmul.bf16.gmra.mxu0 %v846
    %v4150 = vpop.f32.mrf.mxu0
    %v4151 = vadd.f32 %v4102, %v4150
    %v4152 = vpop.f32.mrf.mxu0
    %v4153 = vadd.f32 %v4104, %v4152
    %4154 = vmatmul.bf16.gmra.mxu0 %v854
    %v4155 = vpop.f32.mrf.mxu0
    %v4156 = vadd.f32 %v4107, %v4155
    %v4157 = vpop.f32.mrf.mxu0
    %v4158 = vadd.f32 %v4109, %v4157
    %4159 = vmatmul.bf16.gmra.mxu0 %v862
    %v4160 = vpop.f32.mrf.mxu0
    %v4161 = vadd.f32 %v4112, %v4160
    %v4162 = vpop.f32.mrf.mxu0
    %v4163 = vadd.f32 %v4114, %v4162
    %4164 = vmatmul.bf16.gmra.mxu0 %v870
    %v4165 = vpop.f32.mrf.mxu0
    %v4166 = vadd.f32 %v4117, %v4165
    %v4167 = vpop.f32.mrf.mxu0
    %v4168 = vadd.f32 %v4119, %v4167
    %4169 = vmatmul.bf16.gmra.mxu0 %v878
    %v4170 = vpop.f32.mrf.mxu0
    %v4171 = vadd.f32 %v4122, %v4170
    %v4172 = vpop.f32.mrf.mxu0
    %v4173 = vadd.f32 %v4124, %v4172
    %4174 = vmatmul.bf16.gmra.mxu0 %v886
    %v4175 = vpop.f32.mrf.mxu0
    %v4176 = vadd.f32 %v4127, %v4175
    %v4177 = vpop.f32.mrf.mxu0
    %v4178 = vadd.f32 %v4129, %v4177
    %4179 = vmatmul.bf16.gmra.mxu0 %v894
    %v4180 = vpop.f32.mrf.mxu0
    %v4181 = vadd.f32 %v4132, %v4180
    %v4182 = vpop.f32.mrf.mxu0
    %v4183 = vadd.f32 %v4134, %v4182
    %4184 = vdwg.mxu0
    %4185 = vmatpush.bf16.msra.mxu0 %v3277
    %4186 = vmatpush.bf16.msra.mxu0 %v3269
    %4187 = vmatpush.bf16.msra.mxu0 %v3261
    %4188 = vmatpush.bf16.msra.mxu0 %v3253
    %4189 = vmatpush.bf16.msra.mxu0 %v3245
    %4190 = vmatpush.bf16.msra.mxu0 %v3237
    %4191 = vmatpush.bf16.msra.mxu0 %v3229
    %4192 = vmatpush.bf16.msra.mxu0 %v3221
    %4193 = vmatmul.bf16.gmra.mxu0 %v839
    %v4194 = vpop.f32.mrf.mxu0
    %v4195 = vadd.f32 %v4146, %v4194
    %v4196 = vpop.f32.mrf.mxu0
    %v4197 = vadd.f32 %v4148, %v4196
    %4198 = vmatmul.bf16.gmra.mxu0 %v847
    %v4199 = vpop.f32.mrf.mxu0
    %v4200 = vadd.f32 %v4151, %v4199
    %v4201 = vpop.f32.mrf.mxu0
    %v4202 = vadd.f32 %v4153, %v4201
    %4203 = vmatmul.bf16.gmra.mxu0 %v855
    %v4204 = vpop.f32.mrf.mxu0
    %v4205 = vadd.f32 %v4156, %v4204
    %v4206 = vpop.f32.mrf.mxu0
    %v4207 = vadd.f32 %v4158, %v4206
    %4208 = vmatmul.bf16.gmra.mxu0 %v863
    %v4209 = vpop.f32.mrf.mxu0
    %v4210 = vadd.f32 %v4161, %v4209
    %v4211 = vpop.f32.mrf.mxu0
    %v4212 = vadd.f32 %v4163, %v4211
    %4213 = vmatmul.bf16.gmra.mxu0 %v871
    %v4214 = vpop.f32.mrf.mxu0
    %v4215 = vadd.f32 %v4166, %v4214
    %v4216 = vpop.f32.mrf.mxu0
    %v4217 = vadd.f32 %v4168, %v4216
    %4218 = vmatmul.bf16.gmra.mxu0 %v879
    %v4219 = vpop.f32.mrf.mxu0
    %v4220 = vadd.f32 %v4171, %v4219
    %v4221 = vpop.f32.mrf.mxu0
    %v4222 = vadd.f32 %v4173, %v4221
    %4223 = vmatmul.bf16.gmra.mxu0 %v887
    %v4224 = vpop.f32.mrf.mxu0
    %v4225 = vadd.f32 %v4176, %v4224
    %v4226 = vpop.f32.mrf.mxu0
    %v4227 = vadd.f32 %v4178, %v4226
    %4228 = vmatmul.bf16.gmra.mxu0 %v895
    %v4229 = vpop.f32.mrf.mxu0
    %v4230 = vadd.f32 %v4181, %v4229
    %v4231 = vpop.f32.mrf.mxu0
    %v4232 = vadd.f32 %v4183, %v4231
    %4233 = vdwg.mxu0
    %4234 = vmatpush.bf16.msra.mxu0 %v3341
    %4235 = vmatpush.bf16.msra.mxu0 %v3333
    %4236 = vmatpush.bf16.msra.mxu0 %v3325
    %4237 = vmatpush.bf16.msra.mxu0 %v3317
    %4238 = vmatpush.bf16.msra.mxu0 %v3309
    %4239 = vmatpush.bf16.msra.mxu0 %v3301
    %4240 = vmatpush.bf16.msra.mxu0 %v3293
    %4241 = vmatpush.bf16.msra.mxu0 %v3285
    %4242 = vmatmul.bf16.gmra.mxu0 %v840
    %v4243 = vpop.f32.mrf.mxu0
    %v4244 = vadd.f32 %v4195, %v4243
    %v4245 = vpop.f32.mrf.mxu0
    %v4246 = vadd.f32 %v4197, %v4245
    %4247 = vmatmul.bf16.gmra.mxu0 %v848
    %v4248 = vpop.f32.mrf.mxu0
    %v4249 = vadd.f32 %v4200, %v4248
    %v4250 = vpop.f32.mrf.mxu0
    %v4251 = vadd.f32 %v4202, %v4250
    %4252 = vmatmul.bf16.gmra.mxu0 %v856
    %v4253 = vpop.f32.mrf.mxu0
    %v4254 = vadd.f32 %v4205, %v4253
    %v4255 = vpop.f32.mrf.mxu0
    %v4256 = vadd.f32 %v4207, %v4255
    %4257 = vmatmul.bf16.gmra.mxu0 %v864
    %v4258 = vpop.f32.mrf.mxu0
    %v4259 = vadd.f32 %v4210, %v4258
    %v4260 = vpop.f32.mrf.mxu0
    %v4261 = vadd.f32 %v4212, %v4260
    %4262 = vmatmul.bf16.gmra.mxu0 %v872
    %v4263 = vpop.f32.mrf.mxu0
    %v4264 = vadd.f32 %v4215, %v4263
    %v4265 = vpop.f32.mrf.mxu0
    %v4266 = vadd.f32 %v4217, %v4265
    %4267 = vmatmul.bf16.gmra.mxu0 %v880
    %v4268 = vpop.f32.mrf.mxu0
    %v4269 = vadd.f32 %v4220, %v4268
    %v4270 = vpop.f32.mrf.mxu0
    %v4271 = vadd.f32 %v4222, %v4270
    %4272 = vmatmul.bf16.gmra.mxu0 %v888
    %v4273 = vpop.f32.mrf.mxu0
    %v4274 = vadd.f32 %v4225, %v4273
    %v4275 = vpop.f32.mrf.mxu0
    %v4276 = vadd.f32 %v4227, %v4275
    %4277 = vmatmul.bf16.gmra.mxu0 %v896
    %v4278 = vpop.f32.mrf.mxu0
    %v4279 = vadd.f32 %v4230, %v4278
    %v4280 = vpop.f32.mrf.mxu0
    %v4281 = vadd.f32 %v4232, %v4280
    %4282 = vdwg.mxu0
    %4283 = vmatpush.bf16.msra.mxu0 %v3405
    %4284 = vmatpush.bf16.msra.mxu0 %v3397
    %4285 = vmatpush.bf16.msra.mxu0 %v3389
    %4286 = vmatpush.bf16.msra.mxu0 %v3381
    %4287 = vmatpush.bf16.msra.mxu0 %v3373
    %4288 = vmatpush.bf16.msra.mxu0 %v3365
    %4289 = vmatpush.bf16.msra.mxu0 %v3357
    %4290 = vmatpush.bf16.msra.mxu0 %v3349
    %4291 = vmatmul.bf16.gmra.mxu0 %v841
    %v4292 = vpop.f32.mrf.mxu0
    %v4293 = vadd.f32 %v4244, %v4292
    %v4294 = vpop.f32.mrf.mxu0
    %v4295 = vadd.f32 %v4246, %v4294
    %4296 = vmatmul.bf16.gmra.mxu0 %v849
    %v4297 = vpop.f32.mrf.mxu0
    %v4298 = vadd.f32 %v4249, %v4297
    %v4299 = vpop.f32.mrf.mxu0
    %v4300 = vadd.f32 %v4251, %v4299
    %4301 = vmatmul.bf16.gmra.mxu0 %v857
    %v4302 = vpop.f32.mrf.mxu0
    %v4303 = vadd.f32 %v4254, %v4302
    %v4304 = vpop.f32.mrf.mxu0
    %v4305 = vadd.f32 %v4256, %v4304
    %4306 = vmatmul.bf16.gmra.mxu0 %v865
    %v4307 = vpop.f32.mrf.mxu0
    %v4308 = vadd.f32 %v4259, %v4307
    %v4309 = vpop.f32.mrf.mxu0
    %v4310 = vadd.f32 %v4261, %v4309
    %4311 = vmatmul.bf16.gmra.mxu0 %v873
    %v4312 = vpop.f32.mrf.mxu0
    %v4313 = vadd.f32 %v4264, %v4312
    %v4314 = vpop.f32.mrf.mxu0
    %v4315 = vadd.f32 %v4266, %v4314
    %4316 = vmatmul.bf16.gmra.mxu0 %v881
    %v4317 = vpop.f32.mrf.mxu0
    %v4318 = vadd.f32 %v4269, %v4317
    %v4319 = vpop.f32.mrf.mxu0
    %v4320 = vadd.f32 %v4271, %v4319
    %4321 = vmatmul.bf16.gmra.mxu0 %v889
    %v4322 = vpop.f32.mrf.mxu0
    %v4323 = vadd.f32 %v4274, %v4322
    %v4324 = vpop.f32.mrf.mxu0
    %v4325 = vadd.f32 %v4276, %v4324
    %4326 = vmatmul.bf16.gmra.mxu0 %v897
    %v4327 = vpop.f32.mrf.mxu0
    %v4328 = vadd.f32 %v4279, %v4327
    %v4329 = vpop.f32.mrf.mxu0
    %v4330 = vadd.f32 %v4281, %v4329
    %4331 = vdwg.mxu0
    %4332 = vmatpush.bf16.msra.mxu0 %v3469
    %4333 = vmatpush.bf16.msra.mxu0 %v3461
    %4334 = vmatpush.bf16.msra.mxu0 %v3453
    %4335 = vmatpush.bf16.msra.mxu0 %v3445
    %4336 = vmatpush.bf16.msra.mxu0 %v3437
    %4337 = vmatpush.bf16.msra.mxu0 %v3429
    %4338 = vmatpush.bf16.msra.mxu0 %v3421
    %4339 = vmatpush.bf16.msra.mxu0 %v3413
    %4340 = vmatmul.bf16.gmra.mxu0 %v842
    %v4341 = vpop.f32.mrf.mxu0
    %v4342 = vadd.f32 %v4293, %v4341
    %v4343 = vpop.f32.mrf.mxu0
    %v4344 = vadd.f32 %v4295, %v4343
    %4345 = vmatmul.bf16.gmra.mxu0 %v850
    %v4346 = vpop.f32.mrf.mxu0
    %v4347 = vadd.f32 %v4298, %v4346
    %v4348 = vpop.f32.mrf.mxu0
    %v4349 = vadd.f32 %v4300, %v4348
    %4350 = vmatmul.bf16.gmra.mxu0 %v858
    %v4351 = vpop.f32.mrf.mxu0
    %v4352 = vadd.f32 %v4303, %v4351
    %v4353 = vpop.f32.mrf.mxu0
    %v4354 = vadd.f32 %v4305, %v4353
    %4355 = vmatmul.bf16.gmra.mxu0 %v866
    %v4356 = vpop.f32.mrf.mxu0
    %v4357 = vadd.f32 %v4308, %v4356
    %v4358 = vpop.f32.mrf.mxu0
    %v4359 = vadd.f32 %v4310, %v4358
    %4360 = vmatmul.bf16.gmra.mxu0 %v874
    %v4361 = vpop.f32.mrf.mxu0
    %v4362 = vadd.f32 %v4313, %v4361
    %v4363 = vpop.f32.mrf.mxu0
    %v4364 = vadd.f32 %v4315, %v4363
    %4365 = vmatmul.bf16.gmra.mxu0 %v882
    %v4366 = vpop.f32.mrf.mxu0
    %v4367 = vadd.f32 %v4318, %v4366
    %v4368 = vpop.f32.mrf.mxu0
    %v4369 = vadd.f32 %v4320, %v4368
    %4370 = vmatmul.bf16.gmra.mxu0 %v890
    %v4371 = vpop.f32.mrf.mxu0
    %v4372 = vadd.f32 %v4323, %v4371
    %v4373 = vpop.f32.mrf.mxu0
    %v4374 = vadd.f32 %v4325, %v4373
    %4375 = vmatmul.bf16.gmra.mxu0 %v898
    %v4376 = vpop.f32.mrf.mxu0
    %v4377 = vadd.f32 %v4328, %v4376
    %v4378 = vpop.f32.mrf.mxu0
    %v4379 = vadd.f32 %v4330, %v4378
    %4380 = vdwg.mxu0
    %4381 = vmatpush.bf16.msra.mxu0 %v3022
    %4382 = vmatpush.bf16.msra.mxu0 %v3014
    %4383 = vmatpush.bf16.msra.mxu0 %v3006
    %4384 = vmatpush.bf16.msra.mxu0 %v2998
    %4385 = vmatpush.bf16.msra.mxu0 %v2990
    %4386 = vmatpush.bf16.msra.mxu0 %v2982
    %4387 = vmatpush.bf16.msra.mxu0 %v2974
    %4388 = vmatpush.bf16.msra.mxu0 %v2966
    %4389 = vmatmul.bf16.gmra.mxu0 %v835
    %v4390 = vpop.f32.mrf.mxu0
    %v4391 = vadd.f32 %v1414, %v4390
    %v4392 = vpop.f32.mrf.mxu0
    %v4393 = vadd.f32 %v1414, %v4392
    %4394 = vmatmul.bf16.gmra.mxu0 %v843
    %v4395 = vpop.f32.mrf.mxu0
    %v4396 = vadd.f32 %v1414, %v4395
    %v4397 = vpop.f32.mrf.mxu0
    %v4398 = vadd.f32 %v1414, %v4397
    %4399 = vmatmul.bf16.gmra.mxu0 %v851
    %v4400 = vpop.f32.mrf.mxu0
    %v4401 = vadd.f32 %v1414, %v4400
    %v4402 = vpop.f32.mrf.mxu0
    %v4403 = vadd.f32 %v1414, %v4402
    %4404 = vmatmul.bf16.gmra.mxu0 %v859
    %v4405 = vpop.f32.mrf.mxu0
    %v4406 = vadd.f32 %v1414, %v4405
    %v4407 = vpop.f32.mrf.mxu0
    %v4408 = vadd.f32 %v1414, %v4407
    %4409 = vmatmul.bf16.gmra.mxu0 %v867
    %v4410 = vpop.f32.mrf.mxu0
    %v4411 = vadd.f32 %v1414, %v4410
    %v4412 = vpop.f32.mrf.mxu0
    %v4413 = vadd.f32 %v1414, %v4412
    %4414 = vmatmul.bf16.gmra.mxu0 %v875
    %v4415 = vpop.f32.mrf.mxu0
    %v4416 = vadd.f32 %v1414, %v4415
    %v4417 = vpop.f32.mrf.mxu0
    %v4418 = vadd.f32 %v1414, %v4417
    %4419 = vmatmul.bf16.gmra.mxu0 %v883
    %v4420 = vpop.f32.mrf.mxu0
    %v4421 = vadd.f32 %v1414, %v4420
    %v4422 = vpop.f32.mrf.mxu0
    %v4423 = vadd.f32 %v1414, %v4422
    %4424 = vmatmul.bf16.gmra.mxu0 %v891
    %v4425 = vpop.f32.mrf.mxu0
    %v4426 = vadd.f32 %v1414, %v4425
    %v4427 = vpop.f32.mrf.mxu0
    %v4428 = vadd.f32 %v1414, %v4427
    %4429 = vdwg.mxu0
    %4430 = vmatpush.bf16.msra.mxu0 %v3086
    %4431 = vmatpush.bf16.msra.mxu0 %v3078
    %4432 = vmatpush.bf16.msra.mxu0 %v3070
    %4433 = vmatpush.bf16.msra.mxu0 %v3062
    %4434 = vmatpush.bf16.msra.mxu0 %v3054
    %4435 = vmatpush.bf16.msra.mxu0 %v3046
    %4436 = vmatpush.bf16.msra.mxu0 %v3038
    %4437 = vmatpush.bf16.msra.mxu0 %v3030
    %4438 = vmatmul.bf16.gmra.mxu0 %v836
    %v4439 = vpop.f32.mrf.mxu0
    %v4440 = vadd.f32 %v4391, %v4439
    %v4441 = vpop.f32.mrf.mxu0
    %v4442 = vadd.f32 %v4393, %v4441
    %4443 = vmatmul.bf16.gmra.mxu0 %v844
    %v4444 = vpop.f32.mrf.mxu0
    %v4445 = vadd.f32 %v4396, %v4444
    %v4446 = vpop.f32.mrf.mxu0
    %v4447 = vadd.f32 %v4398, %v4446
    %4448 = vmatmul.bf16.gmra.mxu0 %v852
    %v4449 = vpop.f32.mrf.mxu0
    %v4450 = vadd.f32 %v4401, %v4449
    %v4451 = vpop.f32.mrf.mxu0
    %v4452 = vadd.f32 %v4403, %v4451
    %4453 = vmatmul.bf16.gmra.mxu0 %v860
    %v4454 = vpop.f32.mrf.mxu0
    %v4455 = vadd.f32 %v4406, %v4454
    %v4456 = vpop.f32.mrf.mxu0
    %v4457 = vadd.f32 %v4408, %v4456
    %4458 = vmatmul.bf16.gmra.mxu0 %v868
    %v4459 = vpop.f32.mrf.mxu0
    %v4460 = vadd.f32 %v4411, %v4459
    %v4461 = vpop.f32.mrf.mxu0
    %v4462 = vadd.f32 %v4413, %v4461
    %4463 = vmatmul.bf16.gmra.mxu0 %v876
    %v4464 = vpop.f32.mrf.mxu0
    %v4465 = vadd.f32 %v4416, %v4464
    %v4466 = vpop.f32.mrf.mxu0
    %v4467 = vadd.f32 %v4418, %v4466
    %4468 = vmatmul.bf16.gmra.mxu0 %v884
    %v4469 = vpop.f32.mrf.mxu0
    %v4470 = vadd.f32 %v4421, %v4469
    %v4471 = vpop.f32.mrf.mxu0
    %v4472 = vadd.f32 %v4423, %v4471
    %4473 = vmatmul.bf16.gmra.mxu0 %v892
    %v4474 = vpop.f32.mrf.mxu0
    %v4475 = vadd.f32 %v4426, %v4474
    %v4476 = vpop.f32.mrf.mxu0
    %v4477 = vadd.f32 %v4428, %v4476
    %4478 = vdwg.mxu0
    %4479 = vmatpush.bf16.msra.mxu0 %v3150
    %4480 = vmatpush.bf16.msra.mxu0 %v3142
    %4481 = vmatpush.bf16.msra.mxu0 %v3134
    %4482 = vmatpush.bf16.msra.mxu0 %v3126
    %4483 = vmatpush.bf16.msra.mxu0 %v3118
    %4484 = vmatpush.bf16.msra.mxu0 %v3110
    %4485 = vmatpush.bf16.msra.mxu0 %v3102
    %4486 = vmatpush.bf16.msra.mxu0 %v3094
    %4487 = vmatmul.bf16.gmra.mxu0 %v837
    %v4488 = vpop.f32.mrf.mxu0
    %v4489 = vadd.f32 %v4440, %v4488
    %v4490 = vpop.f32.mrf.mxu0
    %v4491 = vadd.f32 %v4442, %v4490
    %4492 = vmatmul.bf16.gmra.mxu0 %v845
    %v4493 = vpop.f32.mrf.mxu0
    %v4494 = vadd.f32 %v4445, %v4493
    %v4495 = vpop.f32.mrf.mxu0
    %v4496 = vadd.f32 %v4447, %v4495
    %4497 = vmatmul.bf16.gmra.mxu0 %v853
    %v4498 = vpop.f32.mrf.mxu0
    %v4499 = vadd.f32 %v4450, %v4498
    %v4500 = vpop.f32.mrf.mxu0
    %v4501 = vadd.f32 %v4452, %v4500
    %4502 = vmatmul.bf16.gmra.mxu0 %v861
    %v4503 = vpop.f32.mrf.mxu0
    %v4504 = vadd.f32 %v4455, %v4503
    %v4505 = vpop.f32.mrf.mxu0
    %v4506 = vadd.f32 %v4457, %v4505
    %4507 = vmatmul.bf16.gmra.mxu0 %v869
    %v4508 = vpop.f32.mrf.mxu0
    %v4509 = vadd.f32 %v4460, %v4508
    %v4510 = vpop.f32.mrf.mxu0
    %v4511 = vadd.f32 %v4462, %v4510
    %4512 = vmatmul.bf16.gmra.mxu0 %v877
    %v4513 = vpop.f32.mrf.mxu0
    %v4514 = vadd.f32 %v4465, %v4513
    %v4515 = vpop.f32.mrf.mxu0
    %v4516 = vadd.f32 %v4467, %v4515
    %4517 = vmatmul.bf16.gmra.mxu0 %v885
    %v4518 = vpop.f32.mrf.mxu0
    %v4519 = vadd.f32 %v4470, %v4518
    %v4520 = vpop.f32.mrf.mxu0
    %v4521 = vadd.f32 %v4472, %v4520
    %4522 = vmatmul.bf16.gmra.mxu0 %v893
    %v4523 = vpop.f32.mrf.mxu0
    %v4524 = vadd.f32 %v4475, %v4523
    %v4525 = vpop.f32.mrf.mxu0
    %v4526 = vadd.f32 %v4477, %v4525
    %4527 = vdwg.mxu0
    %4528 = vmatpush.bf16.msra.mxu0 %v3214
    %4529 = vmatpush.bf16.msra.mxu0 %v3206
    %4530 = vmatpush.bf16.msra.mxu0 %v3198
    %4531 = vmatpush.bf16.msra.mxu0 %v3190
    %4532 = vmatpush.bf16.msra.mxu0 %v3182
    %4533 = vmatpush.bf16.msra.mxu0 %v3174
    %4534 = vmatpush.bf16.msra.mxu0 %v3166
    %4535 = vmatpush.bf16.msra.mxu0 %v3158
    %4536 = vmatmul.bf16.gmra.mxu0 %v838
    %v4537 = vpop.f32.mrf.mxu0
    %v4538 = vadd.f32 %v4489, %v4537
    %v4539 = vpop.f32.mrf.mxu0
    %v4540 = vadd.f32 %v4491, %v4539
    %4541 = vmatmul.bf16.gmra.mxu0 %v846
    %v4542 = vpop.f32.mrf.mxu0
    %v4543 = vadd.f32 %v4494, %v4542
    %v4544 = vpop.f32.mrf.mxu0
    %v4545 = vadd.f32 %v4496, %v4544
    %4546 = vmatmul.bf16.gmra.mxu0 %v854
    %v4547 = vpop.f32.mrf.mxu0
    %v4548 = vadd.f32 %v4499, %v4547
    %v4549 = vpop.f32.mrf.mxu0
    %v4550 = vadd.f32 %v4501, %v4549
    %4551 = vmatmul.bf16.gmra.mxu0 %v862
    %v4552 = vpop.f32.mrf.mxu0
    %v4553 = vadd.f32 %v4504, %v4552
    %v4554 = vpop.f32.mrf.mxu0
    %v4555 = vadd.f32 %v4506, %v4554
    %4556 = vmatmul.bf16.gmra.mxu0 %v870
    %v4557 = vpop.f32.mrf.mxu0
    %v4558 = vadd.f32 %v4509, %v4557
    %v4559 = vpop.f32.mrf.mxu0
    %v4560 = vadd.f32 %v4511, %v4559
    %4561 = vmatmul.bf16.gmra.mxu0 %v878
    %v4562 = vpop.f32.mrf.mxu0
    %v4563 = vadd.f32 %v4514, %v4562
    %v4564 = vpop.f32.mrf.mxu0
    %v4565 = vadd.f32 %v4516, %v4564
    %4566 = vmatmul.bf16.gmra.mxu0 %v886
    %v4567 = vpop.f32.mrf.mxu0
    %v4568 = vadd.f32 %v4519, %v4567
    %v4569 = vpop.f32.mrf.mxu0
    %v4570 = vadd.f32 %v4521, %v4569
    %4571 = vmatmul.bf16.gmra.mxu0 %v894
    %v4572 = vpop.f32.mrf.mxu0
    %v4573 = vadd.f32 %v4524, %v4572
    %v4574 = vpop.f32.mrf.mxu0
    %v4575 = vadd.f32 %v4526, %v4574
    %4576 = vdwg.mxu0
    %4577 = vmatpush.bf16.msra.mxu0 %v3278
    %4578 = vmatpush.bf16.msra.mxu0 %v3270
    %4579 = vmatpush.bf16.msra.mxu0 %v3262
    %4580 = vmatpush.bf16.msra.mxu0 %v3254
    %4581 = vmatpush.bf16.msra.mxu0 %v3246
    %4582 = vmatpush.bf16.msra.mxu0 %v3238
    %4583 = vmatpush.bf16.msra.mxu0 %v3230
    %4584 = vmatpush.bf16.msra.mxu0 %v3222
    %4585 = vmatmul.bf16.gmra.mxu0 %v839
    %v4586 = vpop.f32.mrf.mxu0
    %v4587 = vadd.f32 %v4538, %v4586
    %v4588 = vpop.f32.mrf.mxu0
    %v4589 = vadd.f32 %v4540, %v4588
    %4590 = vmatmul.bf16.gmra.mxu0 %v847
    %v4591 = vpop.f32.mrf.mxu0
    %v4592 = vadd.f32 %v4543, %v4591
    %v4593 = vpop.f32.mrf.mxu0
    %v4594 = vadd.f32 %v4545, %v4593
    %4595 = vmatmul.bf16.gmra.mxu0 %v855
    %v4596 = vpop.f32.mrf.mxu0
    %v4597 = vadd.f32 %v4548, %v4596
    %v4598 = vpop.f32.mrf.mxu0
    %v4599 = vadd.f32 %v4550, %v4598
    %4600 = vmatmul.bf16.gmra.mxu0 %v863
    %v4601 = vpop.f32.mrf.mxu0
    %v4602 = vadd.f32 %v4553, %v4601
    %v4603 = vpop.f32.mrf.mxu0
    %v4604 = vadd.f32 %v4555, %v4603
    %4605 = vmatmul.bf16.gmra.mxu0 %v871
    %v4606 = vpop.f32.mrf.mxu0
    %v4607 = vadd.f32 %v4558, %v4606
    %v4608 = vpop.f32.mrf.mxu0
    %v4609 = vadd.f32 %v4560, %v4608
    %4610 = vmatmul.bf16.gmra.mxu0 %v879
    %v4611 = vpop.f32.mrf.mxu0
    %v4612 = vadd.f32 %v4563, %v4611
    %v4613 = vpop.f32.mrf.mxu0
    %v4614 = vadd.f32 %v4565, %v4613
    %4615 = vmatmul.bf16.gmra.mxu0 %v887
    %v4616 = vpop.f32.mrf.mxu0
    %v4617 = vadd.f32 %v4568, %v4616
    %v4618 = vpop.f32.mrf.mxu0
    %v4619 = vadd.f32 %v4570, %v4618
    %4620 = vmatmul.bf16.gmra.mxu0 %v895
    %v4621 = vpop.f32.mrf.mxu0
    %v4622 = vadd.f32 %v4573, %v4621
    %v4623 = vpop.f32.mrf.mxu0
    %v4624 = vadd.f32 %v4575, %v4623
    %4625 = vdwg.mxu0
    %4626 = vmatpush.bf16.msra.mxu0 %v3342
    %4627 = vmatpush.bf16.msra.mxu0 %v3334
    %4628 = vmatpush.bf16.msra.mxu0 %v3326
    %4629 = vmatpush.bf16.msra.mxu0 %v3318
    %4630 = vmatpush.bf16.msra.mxu0 %v3310
    %4631 = vmatpush.bf16.msra.mxu0 %v3302
    %4632 = vmatpush.bf16.msra.mxu0 %v3294
    %4633 = vmatpush.bf16.msra.mxu0 %v3286
    %4634 = vmatmul.bf16.gmra.mxu0 %v840
    %v4635 = vpop.f32.mrf.mxu0
    %v4636 = vadd.f32 %v4587, %v4635
    %v4637 = vpop.f32.mrf.mxu0
    %v4638 = vadd.f32 %v4589, %v4637
    %4639 = vmatmul.bf16.gmra.mxu0 %v848
    %v4640 = vpop.f32.mrf.mxu0
    %v4641 = vadd.f32 %v4592, %v4640
    %v4642 = vpop.f32.mrf.mxu0
    %v4643 = vadd.f32 %v4594, %v4642
    %4644 = vmatmul.bf16.gmra.mxu0 %v856
    %v4645 = vpop.f32.mrf.mxu0
    %v4646 = vadd.f32 %v4597, %v4645
    %v4647 = vpop.f32.mrf.mxu0
    %v4648 = vadd.f32 %v4599, %v4647
    %4649 = vmatmul.bf16.gmra.mxu0 %v864
    %v4650 = vpop.f32.mrf.mxu0
    %v4651 = vadd.f32 %v4602, %v4650
    %v4652 = vpop.f32.mrf.mxu0
    %v4653 = vadd.f32 %v4604, %v4652
    %4654 = vmatmul.bf16.gmra.mxu0 %v872
    %v4655 = vpop.f32.mrf.mxu0
    %v4656 = vadd.f32 %v4607, %v4655
    %v4657 = vpop.f32.mrf.mxu0
    %v4658 = vadd.f32 %v4609, %v4657
    %4659 = vmatmul.bf16.gmra.mxu0 %v880
    %v4660 = vpop.f32.mrf.mxu0
    %v4661 = vadd.f32 %v4612, %v4660
    %v4662 = vpop.f32.mrf.mxu0
    %v4663 = vadd.f32 %v4614, %v4662
    %4664 = vmatmul.bf16.gmra.mxu0 %v888
    %v4665 = vpop.f32.mrf.mxu0
    %v4666 = vadd.f32 %v4617, %v4665
    %v4667 = vpop.f32.mrf.mxu0
    %v4668 = vadd.f32 %v4619, %v4667
    %4669 = vmatmul.bf16.gmra.mxu0 %v896
    %v4670 = vpop.f32.mrf.mxu0
    %v4671 = vadd.f32 %v4622, %v4670
    %v4672 = vpop.f32.mrf.mxu0
    %v4673 = vadd.f32 %v4624, %v4672
    %4674 = vdwg.mxu0
    %4675 = vmatpush.bf16.msra.mxu0 %v3406
    %4676 = vmatpush.bf16.msra.mxu0 %v3398
    %4677 = vmatpush.bf16.msra.mxu0 %v3390
    %4678 = vmatpush.bf16.msra.mxu0 %v3382
    %4679 = vmatpush.bf16.msra.mxu0 %v3374
    %4680 = vmatpush.bf16.msra.mxu0 %v3366
    %4681 = vmatpush.bf16.msra.mxu0 %v3358
    %4682 = vmatpush.bf16.msra.mxu0 %v3350
    %4683 = vmatmul.bf16.gmra.mxu0 %v841
    %v4684 = vpop.f32.mrf.mxu0
    %v4685 = vadd.f32 %v4636, %v4684
    %v4686 = vpop.f32.mrf.mxu0
    %v4687 = vadd.f32 %v4638, %v4686
    %4688 = vmatmul.bf16.gmra.mxu0 %v849
    %v4689 = vpop.f32.mrf.mxu0
    %v4690 = vadd.f32 %v4641, %v4689
    %v4691 = vpop.f32.mrf.mxu0
    %v4692 = vadd.f32 %v4643, %v4691
    %4693 = vmatmul.bf16.gmra.mxu0 %v857
    %v4694 = vpop.f32.mrf.mxu0
    %v4695 = vadd.f32 %v4646, %v4694
    %v4696 = vpop.f32.mrf.mxu0
    %v4697 = vadd.f32 %v4648, %v4696
    %4698 = vmatmul.bf16.gmra.mxu0 %v865
    %v4699 = vpop.f32.mrf.mxu0
    %v4700 = vadd.f32 %v4651, %v4699
    %v4701 = vpop.f32.mrf.mxu0
    %v4702 = vadd.f32 %v4653, %v4701
    %4703 = vmatmul.bf16.gmra.mxu0 %v873
    %v4704 = vpop.f32.mrf.mxu0
    %v4705 = vadd.f32 %v4656, %v4704
    %v4706 = vpop.f32.mrf.mxu0
    %v4707 = vadd.f32 %v4658, %v4706
    %4708 = vmatmul.bf16.gmra.mxu0 %v881
    %v4709 = vpop.f32.mrf.mxu0
    %v4710 = vadd.f32 %v4661, %v4709
    %v4711 = vpop.f32.mrf.mxu0
    %v4712 = vadd.f32 %v4663, %v4711
    %4713 = vmatmul.bf16.gmra.mxu0 %v889
    %v4714 = vpop.f32.mrf.mxu0
    %v4715 = vadd.f32 %v4666, %v4714
    %v4716 = vpop.f32.mrf.mxu0
    %v4717 = vadd.f32 %v4668, %v4716
    %4718 = vmatmul.bf16.gmra.mxu0 %v897
    %v4719 = vpop.f32.mrf.mxu0
    %v4720 = vadd.f32 %v4671, %v4719
    %v4721 = vpop.f32.mrf.mxu0
    %v4722 = vadd.f32 %v4673, %v4721
    %4723 = vdwg.mxu0
    %4724 = vmatpush.bf16.msra.mxu0 %v3470
    %4725 = vmatpush.bf16.msra.mxu0 %v3462
    %4726 = vmatpush.bf16.msra.mxu0 %v3454
    %4727 = vmatpush.bf16.msra.mxu0 %v3446
    %4728 = vmatpush.bf16.msra.mxu0 %v3438
    %4729 = vmatpush.bf16.msra.mxu0 %v3430
    %4730 = vmatpush.bf16.msra.mxu0 %v3422
    %4731 = vmatpush.bf16.msra.mxu0 %v3414
    %4732 = vmatmul.bf16.gmra.mxu0 %v842
    %v4733 = vpop.f32.mrf.mxu0
    %v4734 = vadd.f32 %v4685, %v4733
    %v4735 = vpop.f32.mrf.mxu0
    %v4736 = vadd.f32 %v4687, %v4735
    %4737 = vmatmul.bf16.gmra.mxu0 %v850
    %v4738 = vpop.f32.mrf.mxu0
    %v4739 = vadd.f32 %v4690, %v4738
    %v4740 = vpop.f32.mrf.mxu0
    %v4741 = vadd.f32 %v4692, %v4740
    %4742 = vmatmul.bf16.gmra.mxu0 %v858
    %v4743 = vpop.f32.mrf.mxu0
    %v4744 = vadd.f32 %v4695, %v4743
    %v4745 = vpop.f32.mrf.mxu0
    %v4746 = vadd.f32 %v4697, %v4745
    %4747 = vmatmul.bf16.gmra.mxu0 %v866
    %v4748 = vpop.f32.mrf.mxu0
    %v4749 = vadd.f32 %v4700, %v4748
    %v4750 = vpop.f32.mrf.mxu0
    %v4751 = vadd.f32 %v4702, %v4750
    %4752 = vmatmul.bf16.gmra.mxu0 %v874
    %v4753 = vpop.f32.mrf.mxu0
    %v4754 = vadd.f32 %v4705, %v4753
    %v4755 = vpop.f32.mrf.mxu0
    %v4756 = vadd.f32 %v4707, %v4755
    %4757 = vmatmul.bf16.gmra.mxu0 %v882
    %v4758 = vpop.f32.mrf.mxu0
    %v4759 = vadd.f32 %v4710, %v4758
    %v4760 = vpop.f32.mrf.mxu0
    %v4761 = vadd.f32 %v4712, %v4760
    %4762 = vmatmul.bf16.gmra.mxu0 %v890
    %v4763 = vpop.f32.mrf.mxu0
    %v4764 = vadd.f32 %v4715, %v4763
    %v4765 = vpop.f32.mrf.mxu0
    %v4766 = vadd.f32 %v4717, %v4765
    %4767 = vmatmul.bf16.gmra.mxu0 %v898
    %v4768 = vpop.f32.mrf.mxu0
    %v4769 = vadd.f32 %v4720, %v4768
    %v4770 = vpop.f32.mrf.mxu0
    %v4771 = vadd.f32 %v4722, %v4770
    %4772 = vdwg.mxu0
    %4773 = vmatpush.bf16.msra.mxu0 %v3023
    %4774 = vmatpush.bf16.msra.mxu0 %v3015
    %4775 = vmatpush.bf16.msra.mxu0 %v3007
    %4776 = vmatpush.bf16.msra.mxu0 %v2999
    %4777 = vmatpush.bf16.msra.mxu0 %v2991
    %4778 = vmatpush.bf16.msra.mxu0 %v2983
    %4779 = vmatpush.bf16.msra.mxu0 %v2975
    %4780 = vmatpush.bf16.msra.mxu0 %v2967
    %4781 = vmatmul.bf16.gmra.mxu0 %v835
    %v4782 = vpop.f32.mrf.mxu0
    %v4783 = vadd.f32 %v1415, %v4782
    %v4784 = vpop.f32.mrf.mxu0
    %v4785 = vadd.f32 %v1415, %v4784
    %4786 = vmatmul.bf16.gmra.mxu0 %v843
    %v4787 = vpop.f32.mrf.mxu0
    %v4788 = vadd.f32 %v1415, %v4787
    %v4789 = vpop.f32.mrf.mxu0
    %v4790 = vadd.f32 %v1415, %v4789
    %4791 = vmatmul.bf16.gmra.mxu0 %v851
    %v4792 = vpop.f32.mrf.mxu0
    %v4793 = vadd.f32 %v1415, %v4792
    %v4794 = vpop.f32.mrf.mxu0
    %v4795 = vadd.f32 %v1415, %v4794
    %4796 = vmatmul.bf16.gmra.mxu0 %v859
    %v4797 = vpop.f32.mrf.mxu0
    %v4798 = vadd.f32 %v1415, %v4797
    %v4799 = vpop.f32.mrf.mxu0
    %v4800 = vadd.f32 %v1415, %v4799
    %4801 = vmatmul.bf16.gmra.mxu0 %v867
    %v4802 = vpop.f32.mrf.mxu0
    %v4803 = vadd.f32 %v1415, %v4802
    %v4804 = vpop.f32.mrf.mxu0
    %v4805 = vadd.f32 %v1415, %v4804
    %4806 = vmatmul.bf16.gmra.mxu0 %v875
    %v4807 = vpop.f32.mrf.mxu0
    %v4808 = vadd.f32 %v1415, %v4807
    %v4809 = vpop.f32.mrf.mxu0
    %v4810 = vadd.f32 %v1415, %v4809
    %4811 = vmatmul.bf16.gmra.mxu0 %v883
    %v4812 = vpop.f32.mrf.mxu0
    %v4813 = vadd.f32 %v1415, %v4812
    %v4814 = vpop.f32.mrf.mxu0
    %v4815 = vadd.f32 %v1415, %v4814
    %4816 = vmatmul.bf16.gmra.mxu0 %v891
    %v4817 = vpop.f32.mrf.mxu0
    %v4818 = vadd.f32 %v1415, %v4817
    %v4819 = vpop.f32.mrf.mxu0
    %v4820 = vadd.f32 %v1415, %v4819
    %4821 = vdwg.mxu0
    %4822 = vmatpush.bf16.msra.mxu0 %v3087
    %4823 = vmatpush.bf16.msra.mxu0 %v3079
    %4824 = vmatpush.bf16.msra.mxu0 %v3071
    %4825 = vmatpush.bf16.msra.mxu0 %v3063
    %4826 = vmatpush.bf16.msra.mxu0 %v3055
    %4827 = vmatpush.bf16.msra.mxu0 %v3047
    %4828 = vmatpush.bf16.msra.mxu0 %v3039
    %4829 = vmatpush.bf16.msra.mxu0 %v3031
    %4830 = vmatmul.bf16.gmra.mxu0 %v836
    %v4831 = vpop.f32.mrf.mxu0
    %v4832 = vadd.f32 %v4783, %v4831
    %v4833 = vpop.f32.mrf.mxu0
    %v4834 = vadd.f32 %v4785, %v4833
    %4835 = vmatmul.bf16.gmra.mxu0 %v844
    %v4836 = vpop.f32.mrf.mxu0
    %v4837 = vadd.f32 %v4788, %v4836
    %v4838 = vpop.f32.mrf.mxu0
    %v4839 = vadd.f32 %v4790, %v4838
    %4840 = vmatmul.bf16.gmra.mxu0 %v852
    %v4841 = vpop.f32.mrf.mxu0
    %v4842 = vadd.f32 %v4793, %v4841
    %v4843 = vpop.f32.mrf.mxu0
    %v4844 = vadd.f32 %v4795, %v4843
    %4845 = vmatmul.bf16.gmra.mxu0 %v860
    %v4846 = vpop.f32.mrf.mxu0
    %v4847 = vadd.f32 %v4798, %v4846
    %v4848 = vpop.f32.mrf.mxu0
    %v4849 = vadd.f32 %v4800, %v4848
    %4850 = vmatmul.bf16.gmra.mxu0 %v868
    %v4851 = vpop.f32.mrf.mxu0
    %v4852 = vadd.f32 %v4803, %v4851
    %v4853 = vpop.f32.mrf.mxu0
    %v4854 = vadd.f32 %v4805, %v4853
    %4855 = vmatmul.bf16.gmra.mxu0 %v876
    %v4856 = vpop.f32.mrf.mxu0
    %v4857 = vadd.f32 %v4808, %v4856
    %v4858 = vpop.f32.mrf.mxu0
    %v4859 = vadd.f32 %v4810, %v4858
    %4860 = vmatmul.bf16.gmra.mxu0 %v884
    %v4861 = vpop.f32.mrf.mxu0
    %v4862 = vadd.f32 %v4813, %v4861
    %v4863 = vpop.f32.mrf.mxu0
    %v4864 = vadd.f32 %v4815, %v4863
    %4865 = vmatmul.bf16.gmra.mxu0 %v892
    %v4866 = vpop.f32.mrf.mxu0
    %v4867 = vadd.f32 %v4818, %v4866
    %v4868 = vpop.f32.mrf.mxu0
    %v4869 = vadd.f32 %v4820, %v4868
    %4870 = vdwg.mxu0
    %4871 = vmatpush.bf16.msra.mxu0 %v3151
    %4872 = vmatpush.bf16.msra.mxu0 %v3143
    %4873 = vmatpush.bf16.msra.mxu0 %v3135
    %4874 = vmatpush.bf16.msra.mxu0 %v3127
    %4875 = vmatpush.bf16.msra.mxu0 %v3119
    %4876 = vmatpush.bf16.msra.mxu0 %v3111
    %4877 = vmatpush.bf16.msra.mxu0 %v3103
    %4878 = vmatpush.bf16.msra.mxu0 %v3095
    %4879 = vmatmul.bf16.gmra.mxu0 %v837
    %v4880 = vpop.f32.mrf.mxu0
    %v4881 = vadd.f32 %v4832, %v4880
    %v4882 = vpop.f32.mrf.mxu0
    %v4883 = vadd.f32 %v4834, %v4882
    %4884 = vmatmul.bf16.gmra.mxu0 %v845
    %v4885 = vpop.f32.mrf.mxu0
    %v4886 = vadd.f32 %v4837, %v4885
    %v4887 = vpop.f32.mrf.mxu0
    %v4888 = vadd.f32 %v4839, %v4887
    %4889 = vmatmul.bf16.gmra.mxu0 %v853
    %v4890 = vpop.f32.mrf.mxu0
    %v4891 = vadd.f32 %v4842, %v4890
    %v4892 = vpop.f32.mrf.mxu0
    %v4893 = vadd.f32 %v4844, %v4892
    %4894 = vmatmul.bf16.gmra.mxu0 %v861
    %v4895 = vpop.f32.mrf.mxu0
    %v4896 = vadd.f32 %v4847, %v4895
    %v4897 = vpop.f32.mrf.mxu0
    %v4898 = vadd.f32 %v4849, %v4897
    %4899 = vmatmul.bf16.gmra.mxu0 %v869
    %v4900 = vpop.f32.mrf.mxu0
    %v4901 = vadd.f32 %v4852, %v4900
    %v4902 = vpop.f32.mrf.mxu0
    %v4903 = vadd.f32 %v4854, %v4902
    %4904 = vmatmul.bf16.gmra.mxu0 %v877
    %v4905 = vpop.f32.mrf.mxu0
    %v4906 = vadd.f32 %v4857, %v4905
    %v4907 = vpop.f32.mrf.mxu0
    %v4908 = vadd.f32 %v4859, %v4907
    %4909 = vmatmul.bf16.gmra.mxu0 %v885
    %v4910 = vpop.f32.mrf.mxu0
    %v4911 = vadd.f32 %v4862, %v4910
    %v4912 = vpop.f32.mrf.mxu0
    %v4913 = vadd.f32 %v4864, %v4912
    %4914 = vmatmul.bf16.gmra.mxu0 %v893
    %v4915 = vpop.f32.mrf.mxu0
    %v4916 = vadd.f32 %v4867, %v4915
    %v4917 = vpop.f32.mrf.mxu0
    %v4918 = vadd.f32 %v4869, %v4917
    %4919 = vdwg.mxu0
    %4920 = vmatpush.bf16.msra.mxu0 %v3215
    %4921 = vmatpush.bf16.msra.mxu0 %v3207
    %4922 = vmatpush.bf16.msra.mxu0 %v3199
    %4923 = vmatpush.bf16.msra.mxu0 %v3191
    %4924 = vmatpush.bf16.msra.mxu0 %v3183
    %4925 = vmatpush.bf16.msra.mxu0 %v3175
    %4926 = vmatpush.bf16.msra.mxu0 %v3167
    %4927 = vmatpush.bf16.msra.mxu0 %v3159
    %4928 = vmatmul.bf16.gmra.mxu0 %v838
    %v4929 = vpop.f32.mrf.mxu0
    %v4930 = vadd.f32 %v4881, %v4929
    %v4931 = vpop.f32.mrf.mxu0
    %v4932 = vadd.f32 %v4883, %v4931
    %4933 = vmatmul.bf16.gmra.mxu0 %v846
    %v4934 = vpop.f32.mrf.mxu0
    %v4935 = vadd.f32 %v4886, %v4934
    %v4936 = vpop.f32.mrf.mxu0
    %v4937 = vadd.f32 %v4888, %v4936
    %4938 = vmatmul.bf16.gmra.mxu0 %v854
    %v4939 = vpop.f32.mrf.mxu0
    %v4940 = vadd.f32 %v4891, %v4939
    %v4941 = vpop.f32.mrf.mxu0
    %v4942 = vadd.f32 %v4893, %v4941
    %4943 = vmatmul.bf16.gmra.mxu0 %v862
    %v4944 = vpop.f32.mrf.mxu0
    %v4945 = vadd.f32 %v4896, %v4944
    %v4946 = vpop.f32.mrf.mxu0
    %v4947 = vadd.f32 %v4898, %v4946
    %4948 = vmatmul.bf16.gmra.mxu0 %v870
    %v4949 = vpop.f32.mrf.mxu0
    %v4950 = vadd.f32 %v4901, %v4949
    %v4951 = vpop.f32.mrf.mxu0
    %v4952 = vadd.f32 %v4903, %v4951
    %4953 = vmatmul.bf16.gmra.mxu0 %v878
    %v4954 = vpop.f32.mrf.mxu0
    %v4955 = vadd.f32 %v4906, %v4954
    %v4956 = vpop.f32.mrf.mxu0
    %v4957 = vadd.f32 %v4908, %v4956
    %4958 = vmatmul.bf16.gmra.mxu0 %v886
    %v4959 = vpop.f32.mrf.mxu0
    %v4960 = vadd.f32 %v4911, %v4959
    %v4961 = vpop.f32.mrf.mxu0
    %v4962 = vadd.f32 %v4913, %v4961
    %4963 = vmatmul.bf16.gmra.mxu0 %v894
    %v4964 = vpop.f32.mrf.mxu0
    %v4965 = vadd.f32 %v4916, %v4964
    %v4966 = vpop.f32.mrf.mxu0
    %v4967 = vadd.f32 %v4918, %v4966
    %4968 = vdwg.mxu0
    %4969 = vmatpush.bf16.msra.mxu0 %v3279
    %4970 = vmatpush.bf16.msra.mxu0 %v3271
    %4971 = vmatpush.bf16.msra.mxu0 %v3263
    %4972 = vmatpush.bf16.msra.mxu0 %v3255
    %4973 = vmatpush.bf16.msra.mxu0 %v3247
    %4974 = vmatpush.bf16.msra.mxu0 %v3239
    %4975 = vmatpush.bf16.msra.mxu0 %v3231
    %4976 = vmatpush.bf16.msra.mxu0 %v3223
    %4977 = vmatmul.bf16.gmra.mxu0 %v839
    %v4978 = vpop.f32.mrf.mxu0
    %v4979 = vadd.f32 %v4930, %v4978
    %v4980 = vpop.f32.mrf.mxu0
    %v4981 = vadd.f32 %v4932, %v4980
    %4982 = vmatmul.bf16.gmra.mxu0 %v847
    %v4983 = vpop.f32.mrf.mxu0
    %v4984 = vadd.f32 %v4935, %v4983
    %v4985 = vpop.f32.mrf.mxu0
    %v4986 = vadd.f32 %v4937, %v4985
    %4987 = vmatmul.bf16.gmra.mxu0 %v855
    %v4988 = vpop.f32.mrf.mxu0
    %v4989 = vadd.f32 %v4940, %v4988
    %v4990 = vpop.f32.mrf.mxu0
    %v4991 = vadd.f32 %v4942, %v4990
    %4992 = vmatmul.bf16.gmra.mxu0 %v863
    %v4993 = vpop.f32.mrf.mxu0
    %v4994 = vadd.f32 %v4945, %v4993
    %v4995 = vpop.f32.mrf.mxu0
    %v4996 = vadd.f32 %v4947, %v4995
    %4997 = vmatmul.bf16.gmra.mxu0 %v871
    %v4998 = vpop.f32.mrf.mxu0
    %v4999 = vadd.f32 %v4950, %v4998
    %v5000 = vpop.f32.mrf.mxu0
    %v5001 = vadd.f32 %v4952, %v5000
    %5002 = vmatmul.bf16.gmra.mxu0 %v879
    %v5003 = vpop.f32.mrf.mxu0
    %v5004 = vadd.f32 %v4955, %v5003
    %v5005 = vpop.f32.mrf.mxu0
    %v5006 = vadd.f32 %v4957, %v5005
    %5007 = vmatmul.bf16.gmra.mxu0 %v887
    %v5008 = vpop.f32.mrf.mxu0
    %v5009 = vadd.f32 %v4960, %v5008
    %v5010 = vpop.f32.mrf.mxu0
    %v5011 = vadd.f32 %v4962, %v5010
    %5012 = vmatmul.bf16.gmra.mxu0 %v895
    %v5013 = vpop.f32.mrf.mxu0
    %v5014 = vadd.f32 %v4965, %v5013
    %v5015 = vpop.f32.mrf.mxu0
    %v5016 = vadd.f32 %v4967, %v5015
    %5017 = vdwg.mxu0
    %5018 = vmatpush.bf16.msra.mxu0 %v3343
    %5019 = vmatpush.bf16.msra.mxu0 %v3335
    %5020 = vmatpush.bf16.msra.mxu0 %v3327
    %5021 = vmatpush.bf16.msra.mxu0 %v3319
    %5022 = vmatpush.bf16.msra.mxu0 %v3311
    %5023 = vmatpush.bf16.msra.mxu0 %v3303
    %5024 = vmatpush.bf16.msra.mxu0 %v3295
    %5025 = vmatpush.bf16.msra.mxu0 %v3287
    %5026 = vmatmul.bf16.gmra.mxu0 %v840
    %v5027 = vpop.f32.mrf.mxu0
    %v5028 = vadd.f32 %v4979, %v5027
    %v5029 = vpop.f32.mrf.mxu0
    %v5030 = vadd.f32 %v4981, %v5029
    %5031 = vmatmul.bf16.gmra.mxu0 %v848
    %v5032 = vpop.f32.mrf.mxu0
    %v5033 = vadd.f32 %v4984, %v5032
    %v5034 = vpop.f32.mrf.mxu0
    %v5035 = vadd.f32 %v4986, %v5034
    %5036 = vmatmul.bf16.gmra.mxu0 %v856
    %v5037 = vpop.f32.mrf.mxu0
    %v5038 = vadd.f32 %v4989, %v5037
    %v5039 = vpop.f32.mrf.mxu0
    %v5040 = vadd.f32 %v4991, %v5039
    %5041 = vmatmul.bf16.gmra.mxu0 %v864
    %v5042 = vpop.f32.mrf.mxu0
    %v5043 = vadd.f32 %v4994, %v5042
    %v5044 = vpop.f32.mrf.mxu0
    %v5045 = vadd.f32 %v4996, %v5044
    %5046 = vmatmul.bf16.gmra.mxu0 %v872
    %v5047 = vpop.f32.mrf.mxu0
    %v5048 = vadd.f32 %v4999, %v5047
    %v5049 = vpop.f32.mrf.mxu0
    %v5050 = vadd.f32 %v5001, %v5049
    %5051 = vmatmul.bf16.gmra.mxu0 %v880
    %v5052 = vpop.f32.mrf.mxu0
    %v5053 = vadd.f32 %v5004, %v5052
    %v5054 = vpop.f32.mrf.mxu0
    %v5055 = vadd.f32 %v5006, %v5054
    %5056 = vmatmul.bf16.gmra.mxu0 %v888
    %v5057 = vpop.f32.mrf.mxu0
    %v5058 = vadd.f32 %v5009, %v5057
    %v5059 = vpop.f32.mrf.mxu0
    %v5060 = vadd.f32 %v5011, %v5059
    %5061 = vmatmul.bf16.gmra.mxu0 %v896
    %v5062 = vpop.f32.mrf.mxu0
    %v5063 = vadd.f32 %v5014, %v5062
    %v5064 = vpop.f32.mrf.mxu0
    %v5065 = vadd.f32 %v5016, %v5064
    %5066 = vdwg.mxu0
    %5067 = vmatpush.bf16.msra.mxu0 %v3407
    %5068 = vmatpush.bf16.msra.mxu0 %v3399
    %5069 = vmatpush.bf16.msra.mxu0 %v3391
    %5070 = vmatpush.bf16.msra.mxu0 %v3383
    %5071 = vmatpush.bf16.msra.mxu0 %v3375
    %5072 = vmatpush.bf16.msra.mxu0 %v3367
    %5073 = vmatpush.bf16.msra.mxu0 %v3359
    %5074 = vmatpush.bf16.msra.mxu0 %v3351
    %5075 = vmatmul.bf16.gmra.mxu0 %v841
    %v5076 = vpop.f32.mrf.mxu0
    %v5077 = vadd.f32 %v5028, %v5076
    %v5078 = vpop.f32.mrf.mxu0
    %v5079 = vadd.f32 %v5030, %v5078
    %5080 = vmatmul.bf16.gmra.mxu0 %v849
    %v5081 = vpop.f32.mrf.mxu0
    %v5082 = vadd.f32 %v5033, %v5081
    %v5083 = vpop.f32.mrf.mxu0
    %v5084 = vadd.f32 %v5035, %v5083
    %5085 = vmatmul.bf16.gmra.mxu0 %v857
    %v5086 = vpop.f32.mrf.mxu0
    %v5087 = vadd.f32 %v5038, %v5086
    %v5088 = vpop.f32.mrf.mxu0
    %v5089 = vadd.f32 %v5040, %v5088
    %5090 = vmatmul.bf16.gmra.mxu0 %v865
    %v5091 = vpop.f32.mrf.mxu0
    %v5092 = vadd.f32 %v5043, %v5091
    %v5093 = vpop.f32.mrf.mxu0
    %v5094 = vadd.f32 %v5045, %v5093
    %5095 = vmatmul.bf16.gmra.mxu0 %v873
    %v5096 = vpop.f32.mrf.mxu0
    %v5097 = vadd.f32 %v5048, %v5096
    %v5098 = vpop.f32.mrf.mxu0
    %v5099 = vadd.f32 %v5050, %v5098
    %5100 = vmatmul.bf16.gmra.mxu0 %v881
    %v5101 = vpop.f32.mrf.mxu0
    %v5102 = vadd.f32 %v5053, %v5101
    %v5103 = vpop.f32.mrf.mxu0
    %v5104 = vadd.f32 %v5055, %v5103
    %5105 = vmatmul.bf16.gmra.mxu0 %v889
    %v5106 = vpop.f32.mrf.mxu0
    %v5107 = vadd.f32 %v5058, %v5106
    %v5108 = vpop.f32.mrf.mxu0
    %v5109 = vadd.f32 %v5060, %v5108
    %5110 = vmatmul.bf16.gmra.mxu0 %v897
    %v5111 = vpop.f32.mrf.mxu0
    %v5112 = vadd.f32 %v5063, %v5111
    %v5113 = vpop.f32.mrf.mxu0
    %v5114 = vadd.f32 %v5065, %v5113
    %5115 = vdwg.mxu0
    %5116 = vmatpush.bf16.msra.mxu0 %v3471
    %5117 = vmatpush.bf16.msra.mxu0 %v3463
    %5118 = vmatpush.bf16.msra.mxu0 %v3455
    %5119 = vmatpush.bf16.msra.mxu0 %v3447
    %5120 = vmatpush.bf16.msra.mxu0 %v3439
    %5121 = vmatpush.bf16.msra.mxu0 %v3431
    %5122 = vmatpush.bf16.msra.mxu0 %v3423
    %5123 = vmatpush.bf16.msra.mxu0 %v3415
    %5124 = vmatmul.bf16.gmra.mxu0 %v842
    %v5125 = vpop.f32.mrf.mxu0
    %v5126 = vadd.f32 %v5077, %v5125
    %v5127 = vpop.f32.mrf.mxu0
    %v5128 = vadd.f32 %v5079, %v5127
    %5129 = vmatmul.bf16.gmra.mxu0 %v850
    %v5130 = vpop.f32.mrf.mxu0
    %v5131 = vadd.f32 %v5082, %v5130
    %v5132 = vpop.f32.mrf.mxu0
    %v5133 = vadd.f32 %v5084, %v5132
    %5134 = vmatmul.bf16.gmra.mxu0 %v858
    %v5135 = vpop.f32.mrf.mxu0
    %v5136 = vadd.f32 %v5087, %v5135
    %v5137 = vpop.f32.mrf.mxu0
    %v5138 = vadd.f32 %v5089, %v5137
    %5139 = vmatmul.bf16.gmra.mxu0 %v866
    %v5140 = vpop.f32.mrf.mxu0
    %v5141 = vadd.f32 %v5092, %v5140
    %v5142 = vpop.f32.mrf.mxu0
    %v5143 = vadd.f32 %v5094, %v5142
    %5144 = vmatmul.bf16.gmra.mxu0 %v874
    %v5145 = vpop.f32.mrf.mxu0
    %v5146 = vadd.f32 %v5097, %v5145
    %v5147 = vpop.f32.mrf.mxu0
    %v5148 = vadd.f32 %v5099, %v5147
    %5149 = vmatmul.bf16.gmra.mxu0 %v882
    %v5150 = vpop.f32.mrf.mxu0
    %v5151 = vadd.f32 %v5102, %v5150
    %v5152 = vpop.f32.mrf.mxu0
    %v5153 = vadd.f32 %v5104, %v5152
    %5154 = vmatmul.bf16.gmra.mxu0 %v890
    %v5155 = vpop.f32.mrf.mxu0
    %v5156 = vadd.f32 %v5107, %v5155
    %v5157 = vpop.f32.mrf.mxu0
    %v5158 = vadd.f32 %v5109, %v5157
    %5159 = vmatmul.bf16.gmra.mxu0 %v898
    %v5160 = vpop.f32.mrf.mxu0
    %v5161 = vadd.f32 %v5112, %v5160
    %v5162 = vpop.f32.mrf.mxu0
    %v5163 = vadd.f32 %v5114, %v5162
    %5164 = vdwg.mxu0
    %5165 = vmatpush.bf16.msra.mxu0 %v3024
    %5166 = vmatpush.bf16.msra.mxu0 %v3016
    %5167 = vmatpush.bf16.msra.mxu0 %v3008
    %5168 = vmatpush.bf16.msra.mxu0 %v3000
    %5169 = vmatpush.bf16.msra.mxu0 %v2992
    %5170 = vmatpush.bf16.msra.mxu0 %v2984
    %5171 = vmatpush.bf16.msra.mxu0 %v2976
    %5172 = vmatpush.bf16.msra.mxu0 %v2968
    %5173 = vmatmul.bf16.gmra.mxu0 %v835
    %v5174 = vpop.f32.mrf.mxu0
    %v5175 = vadd.f32 %v1416, %v5174
    %v5176 = vpop.f32.mrf.mxu0
    %v5177 = vadd.f32 %v1416, %v5176
    %5178 = vmatmul.bf16.gmra.mxu0 %v843
    %v5179 = vpop.f32.mrf.mxu0
    %v5180 = vadd.f32 %v1416, %v5179
    %v5181 = vpop.f32.mrf.mxu0
    %v5182 = vadd.f32 %v1416, %v5181
    %5183 = vmatmul.bf16.gmra.mxu0 %v851
    %v5184 = vpop.f32.mrf.mxu0
    %v5185 = vadd.f32 %v1416, %v5184
    %v5186 = vpop.f32.mrf.mxu0
    %v5187 = vadd.f32 %v1416, %v5186
    %5188 = vmatmul.bf16.gmra.mxu0 %v859
    %v5189 = vpop.f32.mrf.mxu0
    %v5190 = vadd.f32 %v1416, %v5189
    %v5191 = vpop.f32.mrf.mxu0
    %v5192 = vadd.f32 %v1416, %v5191
    %5193 = vmatmul.bf16.gmra.mxu0 %v867
    %v5194 = vpop.f32.mrf.mxu0
    %v5195 = vadd.f32 %v1416, %v5194
    %v5196 = vpop.f32.mrf.mxu0
    %v5197 = vadd.f32 %v1416, %v5196
    %5198 = vmatmul.bf16.gmra.mxu0 %v875
    %v5199 = vpop.f32.mrf.mxu0
    %v5200 = vadd.f32 %v1416, %v5199
    %v5201 = vpop.f32.mrf.mxu0
    %v5202 = vadd.f32 %v1416, %v5201
    %5203 = vmatmul.bf16.gmra.mxu0 %v883
    %v5204 = vpop.f32.mrf.mxu0
    %v5205 = vadd.f32 %v1416, %v5204
    %v5206 = vpop.f32.mrf.mxu0
    %v5207 = vadd.f32 %v1416, %v5206
    %5208 = vmatmul.bf16.gmra.mxu0 %v891
    %v5209 = vpop.f32.mrf.mxu0
    %v5210 = vadd.f32 %v1416, %v5209
    %v5211 = vpop.f32.mrf.mxu0
    %v5212 = vadd.f32 %v1416, %v5211
    %5213 = vdwg.mxu0
    %5214 = vmatpush.bf16.msra.mxu0 %v3088
    %5215 = vmatpush.bf16.msra.mxu0 %v3080
    %5216 = vmatpush.bf16.msra.mxu0 %v3072
    %5217 = vmatpush.bf16.msra.mxu0 %v3064
    %5218 = vmatpush.bf16.msra.mxu0 %v3056
    %5219 = vmatpush.bf16.msra.mxu0 %v3048
    %5220 = vmatpush.bf16.msra.mxu0 %v3040
    %5221 = vmatpush.bf16.msra.mxu0 %v3032
    %5222 = vmatmul.bf16.gmra.mxu0 %v836
    %v5223 = vpop.f32.mrf.mxu0
    %v5224 = vadd.f32 %v5175, %v5223
    %v5225 = vpop.f32.mrf.mxu0
    %v5226 = vadd.f32 %v5177, %v5225
    %5227 = vmatmul.bf16.gmra.mxu0 %v844
    %v5228 = vpop.f32.mrf.mxu0
    %v5229 = vadd.f32 %v5180, %v5228
    %v5230 = vpop.f32.mrf.mxu0
    %v5231 = vadd.f32 %v5182, %v5230
    %5232 = vmatmul.bf16.gmra.mxu0 %v852
    %v5233 = vpop.f32.mrf.mxu0
    %v5234 = vadd.f32 %v5185, %v5233
    %v5235 = vpop.f32.mrf.mxu0
    %v5236 = vadd.f32 %v5187, %v5235
    %5237 = vmatmul.bf16.gmra.mxu0 %v860
    %v5238 = vpop.f32.mrf.mxu0
    %v5239 = vadd.f32 %v5190, %v5238
    %v5240 = vpop.f32.mrf.mxu0
    %v5241 = vadd.f32 %v5192, %v5240
    %5242 = vmatmul.bf16.gmra.mxu0 %v868
    %v5243 = vpop.f32.mrf.mxu0
    %v5244 = vadd.f32 %v5195, %v5243
    %v5245 = vpop.f32.mrf.mxu0
    %v5246 = vadd.f32 %v5197, %v5245
    %5247 = vmatmul.bf16.gmra.mxu0 %v876
    %v5248 = vpop.f32.mrf.mxu0
    %v5249 = vadd.f32 %v5200, %v5248
    %v5250 = vpop.f32.mrf.mxu0
    %v5251 = vadd.f32 %v5202, %v5250
    %5252 = vmatmul.bf16.gmra.mxu0 %v884
    %v5253 = vpop.f32.mrf.mxu0
    %v5254 = vadd.f32 %v5205, %v5253
    %v5255 = vpop.f32.mrf.mxu0
    %v5256 = vadd.f32 %v5207, %v5255
    %5257 = vmatmul.bf16.gmra.mxu0 %v892
    %v5258 = vpop.f32.mrf.mxu0
    %v5259 = vadd.f32 %v5210, %v5258
    %v5260 = vpop.f32.mrf.mxu0
    %v5261 = vadd.f32 %v5212, %v5260
    %5262 = vdwg.mxu0
    %5263 = vmatpush.bf16.msra.mxu0 %v3152
    %5264 = vmatpush.bf16.msra.mxu0 %v3144
    %5265 = vmatpush.bf16.msra.mxu0 %v3136
    %5266 = vmatpush.bf16.msra.mxu0 %v3128
    %5267 = vmatpush.bf16.msra.mxu0 %v3120
    %5268 = vmatpush.bf16.msra.mxu0 %v3112
    %5269 = vmatpush.bf16.msra.mxu0 %v3104
    %5270 = vmatpush.bf16.msra.mxu0 %v3096
    %5271 = vmatmul.bf16.gmra.mxu0 %v837
    %v5272 = vpop.f32.mrf.mxu0
    %v5273 = vadd.f32 %v5224, %v5272
    %v5274 = vpop.f32.mrf.mxu0
    %v5275 = vadd.f32 %v5226, %v5274
    %5276 = vmatmul.bf16.gmra.mxu0 %v845
    %v5277 = vpop.f32.mrf.mxu0
    %v5278 = vadd.f32 %v5229, %v5277
    %v5279 = vpop.f32.mrf.mxu0
    %v5280 = vadd.f32 %v5231, %v5279
    %5281 = vmatmul.bf16.gmra.mxu0 %v853
    %v5282 = vpop.f32.mrf.mxu0
    %v5283 = vadd.f32 %v5234, %v5282
    %v5284 = vpop.f32.mrf.mxu0
    %v5285 = vadd.f32 %v5236, %v5284
    %5286 = vmatmul.bf16.gmra.mxu0 %v861
    %v5287 = vpop.f32.mrf.mxu0
    %v5288 = vadd.f32 %v5239, %v5287
    %v5289 = vpop.f32.mrf.mxu0
    %v5290 = vadd.f32 %v5241, %v5289
    %5291 = vmatmul.bf16.gmra.mxu0 %v869
    %v5292 = vpop.f32.mrf.mxu0
    %v5293 = vadd.f32 %v5244, %v5292
    %v5294 = vpop.f32.mrf.mxu0
    %v5295 = vadd.f32 %v5246, %v5294
    %5296 = vmatmul.bf16.gmra.mxu0 %v877
    %v5297 = vpop.f32.mrf.mxu0
    %v5298 = vadd.f32 %v5249, %v5297
    %v5299 = vpop.f32.mrf.mxu0
    %v5300 = vadd.f32 %v5251, %v5299
    %5301 = vmatmul.bf16.gmra.mxu0 %v885
    %v5302 = vpop.f32.mrf.mxu0
    %v5303 = vadd.f32 %v5254, %v5302
    %v5304 = vpop.f32.mrf.mxu0
    %v5305 = vadd.f32 %v5256, %v5304
    %5306 = vmatmul.bf16.gmra.mxu0 %v893
    %v5307 = vpop.f32.mrf.mxu0
    %v5308 = vadd.f32 %v5259, %v5307
    %v5309 = vpop.f32.mrf.mxu0
    %v5310 = vadd.f32 %v5261, %v5309
    %5311 = vdwg.mxu0
    %5312 = vmatpush.bf16.msra.mxu0 %v3216
    %5313 = vmatpush.bf16.msra.mxu0 %v3208
    %5314 = vmatpush.bf16.msra.mxu0 %v3200
    %5315 = vmatpush.bf16.msra.mxu0 %v3192
    %5316 = vmatpush.bf16.msra.mxu0 %v3184
    %5317 = vmatpush.bf16.msra.mxu0 %v3176
    %5318 = vmatpush.bf16.msra.mxu0 %v3168
    %5319 = vmatpush.bf16.msra.mxu0 %v3160
    %5320 = vmatmul.bf16.gmra.mxu0 %v838
    %v5321 = vpop.f32.mrf.mxu0
    %v5322 = vadd.f32 %v5273, %v5321
    %v5323 = vpop.f32.mrf.mxu0
    %v5324 = vadd.f32 %v5275, %v5323
    %5325 = vmatmul.bf16.gmra.mxu0 %v846
    %v5326 = vpop.f32.mrf.mxu0
    %v5327 = vadd.f32 %v5278, %v5326
    %v5328 = vpop.f32.mrf.mxu0
    %v5329 = vadd.f32 %v5280, %v5328
    %5330 = vmatmul.bf16.gmra.mxu0 %v854
    %v5331 = vpop.f32.mrf.mxu0
    %v5332 = vadd.f32 %v5283, %v5331
    %v5333 = vpop.f32.mrf.mxu0
    %v5334 = vadd.f32 %v5285, %v5333
    %5335 = vmatmul.bf16.gmra.mxu0 %v862
    %v5336 = vpop.f32.mrf.mxu0
    %v5337 = vadd.f32 %v5288, %v5336
    %v5338 = vpop.f32.mrf.mxu0
    %v5339 = vadd.f32 %v5290, %v5338
    %5340 = vmatmul.bf16.gmra.mxu0 %v870
    %v5341 = vpop.f32.mrf.mxu0
    %v5342 = vadd.f32 %v5293, %v5341
    %v5343 = vpop.f32.mrf.mxu0
    %v5344 = vadd.f32 %v5295, %v5343
    %5345 = vmatmul.bf16.gmra.mxu0 %v878
    %v5346 = vpop.f32.mrf.mxu0
    %v5347 = vadd.f32 %v5298, %v5346
    %v5348 = vpop.f32.mrf.mxu0
    %v5349 = vadd.f32 %v5300, %v5348
    %5350 = vmatmul.bf16.gmra.mxu0 %v886
    %v5351 = vpop.f32.mrf.mxu0
    %v5352 = vadd.f32 %v5303, %v5351
    %v5353 = vpop.f32.mrf.mxu0
    %v5354 = vadd.f32 %v5305, %v5353
    %5355 = vmatmul.bf16.gmra.mxu0 %v894
    %v5356 = vpop.f32.mrf.mxu0
    %v5357 = vadd.f32 %v5308, %v5356
    %v5358 = vpop.f32.mrf.mxu0
    %v5359 = vadd.f32 %v5310, %v5358
    %5360 = vdwg.mxu0
    %5361 = vmatpush.bf16.msra.mxu0 %v3280
    %5362 = vmatpush.bf16.msra.mxu0 %v3272
    %5363 = vmatpush.bf16.msra.mxu0 %v3264
    %5364 = vmatpush.bf16.msra.mxu0 %v3256
    %5365 = vmatpush.bf16.msra.mxu0 %v3248
    %5366 = vmatpush.bf16.msra.mxu0 %v3240
    %5367 = vmatpush.bf16.msra.mxu0 %v3232
    %5368 = vmatpush.bf16.msra.mxu0 %v3224
    %5369 = vmatmul.bf16.gmra.mxu0 %v839
    %v5370 = vpop.f32.mrf.mxu0
    %v5371 = vadd.f32 %v5322, %v5370
    %v5372 = vpop.f32.mrf.mxu0
    %v5373 = vadd.f32 %v5324, %v5372
    %5374 = vmatmul.bf16.gmra.mxu0 %v847
    %v5375 = vpop.f32.mrf.mxu0
    %v5376 = vadd.f32 %v5327, %v5375
    %v5377 = vpop.f32.mrf.mxu0
    %v5378 = vadd.f32 %v5329, %v5377
    %5379 = vmatmul.bf16.gmra.mxu0 %v855
    %v5380 = vpop.f32.mrf.mxu0
    %v5381 = vadd.f32 %v5332, %v5380
    %v5382 = vpop.f32.mrf.mxu0
    %v5383 = vadd.f32 %v5334, %v5382
    %5384 = vmatmul.bf16.gmra.mxu0 %v863
    %v5385 = vpop.f32.mrf.mxu0
    %v5386 = vadd.f32 %v5337, %v5385
    %v5387 = vpop.f32.mrf.mxu0
    %v5388 = vadd.f32 %v5339, %v5387
    %5389 = vmatmul.bf16.gmra.mxu0 %v871
    %v5390 = vpop.f32.mrf.mxu0
    %v5391 = vadd.f32 %v5342, %v5390
    %v5392 = vpop.f32.mrf.mxu0
    %v5393 = vadd.f32 %v5344, %v5392
    %5394 = vmatmul.bf16.gmra.mxu0 %v879
    %v5395 = vpop.f32.mrf.mxu0
    %v5396 = vadd.f32 %v5347, %v5395
    %v5397 = vpop.f32.mrf.mxu0
    %v5398 = vadd.f32 %v5349, %v5397
    %5399 = vmatmul.bf16.gmra.mxu0 %v887
    %v5400 = vpop.f32.mrf.mxu0
    %v5401 = vadd.f32 %v5352, %v5400
    %v5402 = vpop.f32.mrf.mxu0
    %v5403 = vadd.f32 %v5354, %v5402
    %5404 = vmatmul.bf16.gmra.mxu0 %v895
    %v5405 = vpop.f32.mrf.mxu0
    %v5406 = vadd.f32 %v5357, %v5405
    %v5407 = vpop.f32.mrf.mxu0
    %v5408 = vadd.f32 %v5359, %v5407
    %5409 = vdwg.mxu0
    %5410 = vmatpush.bf16.msra.mxu0 %v3344
    %5411 = vmatpush.bf16.msra.mxu0 %v3336
    %5412 = vmatpush.bf16.msra.mxu0 %v3328
    %5413 = vmatpush.bf16.msra.mxu0 %v3320
    %5414 = vmatpush.bf16.msra.mxu0 %v3312
    %5415 = vmatpush.bf16.msra.mxu0 %v3304
    %5416 = vmatpush.bf16.msra.mxu0 %v3296
    %5417 = vmatpush.bf16.msra.mxu0 %v3288
    %5418 = vmatmul.bf16.gmra.mxu0 %v840
    %v5419 = vpop.f32.mrf.mxu0
    %v5420 = vadd.f32 %v5371, %v5419
    %v5421 = vpop.f32.mrf.mxu0
    %v5422 = vadd.f32 %v5373, %v5421
    %5423 = vmatmul.bf16.gmra.mxu0 %v848
    %v5424 = vpop.f32.mrf.mxu0
    %v5425 = vadd.f32 %v5376, %v5424
    %v5426 = vpop.f32.mrf.mxu0
    %v5427 = vadd.f32 %v5378, %v5426
    %5428 = vmatmul.bf16.gmra.mxu0 %v856
    %v5429 = vpop.f32.mrf.mxu0
    %v5430 = vadd.f32 %v5381, %v5429
    %v5431 = vpop.f32.mrf.mxu0
    %v5432 = vadd.f32 %v5383, %v5431
    %5433 = vmatmul.bf16.gmra.mxu0 %v864
    %v5434 = vpop.f32.mrf.mxu0
    %v5435 = vadd.f32 %v5386, %v5434
    %v5436 = vpop.f32.mrf.mxu0
    %v5437 = vadd.f32 %v5388, %v5436
    %5438 = vmatmul.bf16.gmra.mxu0 %v872
    %v5439 = vpop.f32.mrf.mxu0
    %v5440 = vadd.f32 %v5391, %v5439
    %v5441 = vpop.f32.mrf.mxu0
    %v5442 = vadd.f32 %v5393, %v5441
    %5443 = vmatmul.bf16.gmra.mxu0 %v880
    %v5444 = vpop.f32.mrf.mxu0
    %v5445 = vadd.f32 %v5396, %v5444
    %v5446 = vpop.f32.mrf.mxu0
    %v5447 = vadd.f32 %v5398, %v5446
    %5448 = vmatmul.bf16.gmra.mxu0 %v888
    %v5449 = vpop.f32.mrf.mxu0
    %v5450 = vadd.f32 %v5401, %v5449
    %v5451 = vpop.f32.mrf.mxu0
    %v5452 = vadd.f32 %v5403, %v5451
    %5453 = vmatmul.bf16.gmra.mxu0 %v896
    %v5454 = vpop.f32.mrf.mxu0
    %v5455 = vadd.f32 %v5406, %v5454
    %v5456 = vpop.f32.mrf.mxu0
    %v5457 = vadd.f32 %v5408, %v5456
    %5458 = vdwg.mxu0
    %5459 = vmatpush.bf16.msra.mxu0 %v3408
    %5460 = vmatpush.bf16.msra.mxu0 %v3400
    %5461 = vmatpush.bf16.msra.mxu0 %v3392
    %5462 = vmatpush.bf16.msra.mxu0 %v3384
    %5463 = vmatpush.bf16.msra.mxu0 %v3376
    %5464 = vmatpush.bf16.msra.mxu0 %v3368
    %5465 = vmatpush.bf16.msra.mxu0 %v3360
    %5466 = vmatpush.bf16.msra.mxu0 %v3352
    %5467 = vmatmul.bf16.gmra.mxu0 %v841
    %v5468 = vpop.f32.mrf.mxu0
    %v5469 = vadd.f32 %v5420, %v5468
    %v5470 = vpop.f32.mrf.mxu0
    %v5471 = vadd.f32 %v5422, %v5470
    %5472 = vmatmul.bf16.gmra.mxu0 %v849
    %v5473 = vpop.f32.mrf.mxu0
    %v5474 = vadd.f32 %v5425, %v5473
    %v5475 = vpop.f32.mrf.mxu0
    %v5476 = vadd.f32 %v5427, %v5475
    %5477 = vmatmul.bf16.gmra.mxu0 %v857
    %v5478 = vpop.f32.mrf.mxu0
    %v5479 = vadd.f32 %v5430, %v5478
    %v5480 = vpop.f32.mrf.mxu0
    %v5481 = vadd.f32 %v5432, %v5480
    %5482 = vmatmul.bf16.gmra.mxu0 %v865
    %v5483 = vpop.f32.mrf.mxu0
    %v5484 = vadd.f32 %v5435, %v5483
    %v5485 = vpop.f32.mrf.mxu0
    %v5486 = vadd.f32 %v5437, %v5485
    %5487 = vmatmul.bf16.gmra.mxu0 %v873
    %v5488 = vpop.f32.mrf.mxu0
    %v5489 = vadd.f32 %v5440, %v5488
    %v5490 = vpop.f32.mrf.mxu0
    %v5491 = vadd.f32 %v5442, %v5490
    %5492 = vmatmul.bf16.gmra.mxu0 %v881
    %v5493 = vpop.f32.mrf.mxu0
    %v5494 = vadd.f32 %v5445, %v5493
    %v5495 = vpop.f32.mrf.mxu0
    %v5496 = vadd.f32 %v5447, %v5495
    %5497 = vmatmul.bf16.gmra.mxu0 %v889
    %v5498 = vpop.f32.mrf.mxu0
    %v5499 = vadd.f32 %v5450, %v5498
    %v5500 = vpop.f32.mrf.mxu0
    %v5501 = vadd.f32 %v5452, %v5500
    %5502 = vmatmul.bf16.gmra.mxu0 %v897
    %v5503 = vpop.f32.mrf.mxu0
    %v5504 = vadd.f32 %v5455, %v5503
    %v5505 = vpop.f32.mrf.mxu0
    %v5506 = vadd.f32 %v5457, %v5505
    %5507 = vdwg.mxu0
    %5508 = vmatpush.bf16.msra.mxu0 %v3472
    %5509 = vmatpush.bf16.msra.mxu0 %v3464
    %5510 = vmatpush.bf16.msra.mxu0 %v3456
    %5511 = vmatpush.bf16.msra.mxu0 %v3448
    %5512 = vmatpush.bf16.msra.mxu0 %v3440
    %5513 = vmatpush.bf16.msra.mxu0 %v3432
    %5514 = vmatpush.bf16.msra.mxu0 %v3424
    %5515 = vmatpush.bf16.msra.mxu0 %v3416
    %5516 = vmatmul.bf16.gmra.mxu0 %v842
    %v5517 = vpop.f32.mrf.mxu0
    %v5518 = vadd.f32 %v5469, %v5517
    %v5519 = vpop.f32.mrf.mxu0
    %v5520 = vadd.f32 %v5471, %v5519
    %5521 = vmatmul.bf16.gmra.mxu0 %v850
    %v5522 = vpop.f32.mrf.mxu0
    %v5523 = vadd.f32 %v5474, %v5522
    %v5524 = vpop.f32.mrf.mxu0
    %v5525 = vadd.f32 %v5476, %v5524
    %5526 = vmatmul.bf16.gmra.mxu0 %v858
    %v5527 = vpop.f32.mrf.mxu0
    %v5528 = vadd.f32 %v5479, %v5527
    %v5529 = vpop.f32.mrf.mxu0
    %v5530 = vadd.f32 %v5481, %v5529
    %5531 = vmatmul.bf16.gmra.mxu0 %v866
    %v5532 = vpop.f32.mrf.mxu0
    %v5533 = vadd.f32 %v5484, %v5532
    %v5534 = vpop.f32.mrf.mxu0
    %v5535 = vadd.f32 %v5486, %v5534
    %5536 = vmatmul.bf16.gmra.mxu0 %v874
    %v5537 = vpop.f32.mrf.mxu0
    %v5538 = vadd.f32 %v5489, %v5537
    %v5539 = vpop.f32.mrf.mxu0
    %v5540 = vadd.f32 %v5491, %v5539
    %5541 = vmatmul.bf16.gmra.mxu0 %v882
    %v5542 = vpop.f32.mrf.mxu0
    %v5543 = vadd.f32 %v5494, %v5542
    %v5544 = vpop.f32.mrf.mxu0
    %v5545 = vadd.f32 %v5496, %v5544
    %5546 = vmatmul.bf16.gmra.mxu0 %v890
    %v5547 = vpop.f32.mrf.mxu0
    %v5548 = vadd.f32 %v5499, %v5547
    %v5549 = vpop.f32.mrf.mxu0
    %v5550 = vadd.f32 %v5501, %v5549
    %5551 = vmatmul.bf16.gmra.mxu0 %v898
    %v5552 = vpop.f32.mrf.mxu0
    %v5553 = vadd.f32 %v5504, %v5552
    %v5554 = vpop.f32.mrf.mxu0
    %v5555 = vadd.f32 %v5506, %v5554
    %5556 = vdwg.mxu0
    %5557 = vmatpush.bf16.msra.mxu0 %v3025
    %5558 = vmatpush.bf16.msra.mxu0 %v3017
    %5559 = vmatpush.bf16.msra.mxu0 %v3009
    %5560 = vmatpush.bf16.msra.mxu0 %v3001
    %5561 = vmatpush.bf16.msra.mxu0 %v2993
    %5562 = vmatpush.bf16.msra.mxu0 %v2985
    %5563 = vmatpush.bf16.msra.mxu0 %v2977
    %5564 = vmatpush.bf16.msra.mxu0 %v2969
    %5565 = vmatmul.bf16.gmra.mxu0 %v835
    %v5566 = vpop.f32.mrf.mxu0
    %v5567 = vadd.f32 %v1417, %v5566
    %v5568 = vpop.f32.mrf.mxu0
    %v5569 = vadd.f32 %v1417, %v5568
    %5570 = vmatmul.bf16.gmra.mxu0 %v843
    %v5571 = vpop.f32.mrf.mxu0
    %v5572 = vadd.f32 %v1417, %v5571
    %v5573 = vpop.f32.mrf.mxu0
    %v5574 = vadd.f32 %v1417, %v5573
    %5575 = vmatmul.bf16.gmra.mxu0 %v851
    %v5576 = vpop.f32.mrf.mxu0
    %v5577 = vadd.f32 %v1417, %v5576
    %v5578 = vpop.f32.mrf.mxu0
    %v5579 = vadd.f32 %v1417, %v5578
    %5580 = vmatmul.bf16.gmra.mxu0 %v859
    %v5581 = vpop.f32.mrf.mxu0
    %v5582 = vadd.f32 %v1417, %v5581
    %v5583 = vpop.f32.mrf.mxu0
    %v5584 = vadd.f32 %v1417, %v5583
    %5585 = vmatmul.bf16.gmra.mxu0 %v867
    %v5586 = vpop.f32.mrf.mxu0
    %v5587 = vadd.f32 %v1417, %v5586
    %v5588 = vpop.f32.mrf.mxu0
    %v5589 = vadd.f32 %v1417, %v5588
    %5590 = vmatmul.bf16.gmra.mxu0 %v875
    %v5591 = vpop.f32.mrf.mxu0
    %v5592 = vadd.f32 %v1417, %v5591
    %v5593 = vpop.f32.mrf.mxu0
    %v5594 = vadd.f32 %v1417, %v5593
    %5595 = vmatmul.bf16.gmra.mxu0 %v883
    %v5596 = vpop.f32.mrf.mxu0
    %v5597 = vadd.f32 %v1417, %v5596
    %v5598 = vpop.f32.mrf.mxu0
    %v5599 = vadd.f32 %v1417, %v5598
    %5600 = vmatmul.bf16.gmra.mxu0 %v891
    %v5601 = vpop.f32.mrf.mxu0
    %v5602 = vadd.f32 %v1417, %v5601
    %v5603 = vpop.f32.mrf.mxu0
    %v5604 = vadd.f32 %v1417, %v5603
    %5605 = vdwg.mxu0
    %5606 = vmatpush.bf16.msra.mxu0 %v3089
    %5607 = vmatpush.bf16.msra.mxu0 %v3081
    %5608 = vmatpush.bf16.msra.mxu0 %v3073
    %5609 = vmatpush.bf16.msra.mxu0 %v3065
    %5610 = vmatpush.bf16.msra.mxu0 %v3057
    %5611 = vmatpush.bf16.msra.mxu0 %v3049
    %5612 = vmatpush.bf16.msra.mxu0 %v3041
    %5613 = vmatpush.bf16.msra.mxu0 %v3033
    %5614 = vmatmul.bf16.gmra.mxu0 %v836
    %v5615 = vpop.f32.mrf.mxu0
    %v5616 = vadd.f32 %v5567, %v5615
    %v5617 = vpop.f32.mrf.mxu0
    %v5618 = vadd.f32 %v5569, %v5617
    %5619 = vmatmul.bf16.gmra.mxu0 %v844
    %v5620 = vpop.f32.mrf.mxu0
    %v5621 = vadd.f32 %v5572, %v5620
    %v5622 = vpop.f32.mrf.mxu0
    %v5623 = vadd.f32 %v5574, %v5622
    %5624 = vmatmul.bf16.gmra.mxu0 %v852
    %v5625 = vpop.f32.mrf.mxu0
    %v5626 = vadd.f32 %v5577, %v5625
    %v5627 = vpop.f32.mrf.mxu0
    %v5628 = vadd.f32 %v5579, %v5627
    %5629 = vmatmul.bf16.gmra.mxu0 %v860
    %v5630 = vpop.f32.mrf.mxu0
    %v5631 = vadd.f32 %v5582, %v5630
    %v5632 = vpop.f32.mrf.mxu0
    %v5633 = vadd.f32 %v5584, %v5632
    %5634 = vmatmul.bf16.gmra.mxu0 %v868
    %v5635 = vpop.f32.mrf.mxu0
    %v5636 = vadd.f32 %v5587, %v5635
    %v5637 = vpop.f32.mrf.mxu0
    %v5638 = vadd.f32 %v5589, %v5637
    %5639 = vmatmul.bf16.gmra.mxu0 %v876
    %v5640 = vpop.f32.mrf.mxu0
    %v5641 = vadd.f32 %v5592, %v5640
    %v5642 = vpop.f32.mrf.mxu0
    %v5643 = vadd.f32 %v5594, %v5642
    %5644 = vmatmul.bf16.gmra.mxu0 %v884
    %v5645 = vpop.f32.mrf.mxu0
    %v5646 = vadd.f32 %v5597, %v5645
    %v5647 = vpop.f32.mrf.mxu0
    %v5648 = vadd.f32 %v5599, %v5647
    %5649 = vmatmul.bf16.gmra.mxu0 %v892
    %v5650 = vpop.f32.mrf.mxu0
    %v5651 = vadd.f32 %v5602, %v5650
    %v5652 = vpop.f32.mrf.mxu0
    %v5653 = vadd.f32 %v5604, %v5652
    %5654 = vdwg.mxu0
    %5655 = vmatpush.bf16.msra.mxu0 %v3153
    %5656 = vmatpush.bf16.msra.mxu0 %v3145
    %5657 = vmatpush.bf16.msra.mxu0 %v3137
    %5658 = vmatpush.bf16.msra.mxu0 %v3129
    %5659 = vmatpush.bf16.msra.mxu0 %v3121
    %5660 = vmatpush.bf16.msra.mxu0 %v3113
    %5661 = vmatpush.bf16.msra.mxu0 %v3105
    %5662 = vmatpush.bf16.msra.mxu0 %v3097
    %5663 = vmatmul.bf16.gmra.mxu0 %v837
    %v5664 = vpop.f32.mrf.mxu0
    %v5665 = vadd.f32 %v5616, %v5664
    %v5666 = vpop.f32.mrf.mxu0
    %v5667 = vadd.f32 %v5618, %v5666
    %5668 = vmatmul.bf16.gmra.mxu0 %v845
    %v5669 = vpop.f32.mrf.mxu0
    %v5670 = vadd.f32 %v5621, %v5669
    %v5671 = vpop.f32.mrf.mxu0
    %v5672 = vadd.f32 %v5623, %v5671
    %5673 = vmatmul.bf16.gmra.mxu0 %v853
    %v5674 = vpop.f32.mrf.mxu0
    %v5675 = vadd.f32 %v5626, %v5674
    %v5676 = vpop.f32.mrf.mxu0
    %v5677 = vadd.f32 %v5628, %v5676
    %5678 = vmatmul.bf16.gmra.mxu0 %v861
    %v5679 = vpop.f32.mrf.mxu0
    %v5680 = vadd.f32 %v5631, %v5679
    %v5681 = vpop.f32.mrf.mxu0
    %v5682 = vadd.f32 %v5633, %v5681
    %5683 = vmatmul.bf16.gmra.mxu0 %v869
    %v5684 = vpop.f32.mrf.mxu0
    %v5685 = vadd.f32 %v5636, %v5684
    %v5686 = vpop.f32.mrf.mxu0
    %v5687 = vadd.f32 %v5638, %v5686
    %5688 = vmatmul.bf16.gmra.mxu0 %v877
    %v5689 = vpop.f32.mrf.mxu0
    %v5690 = vadd.f32 %v5641, %v5689
    %v5691 = vpop.f32.mrf.mxu0
    %v5692 = vadd.f32 %v5643, %v5691
    %5693 = vmatmul.bf16.gmra.mxu0 %v885
    %v5694 = vpop.f32.mrf.mxu0
    %v5695 = vadd.f32 %v5646, %v5694
    %v5696 = vpop.f32.mrf.mxu0
    %v5697 = vadd.f32 %v5648, %v5696
    %5698 = vmatmul.bf16.gmra.mxu0 %v893
    %v5699 = vpop.f32.mrf.mxu0
    %v5700 = vadd.f32 %v5651, %v5699
    %v5701 = vpop.f32.mrf.mxu0
    %v5702 = vadd.f32 %v5653, %v5701
    %5703 = vdwg.mxu0
    %5704 = vmatpush.bf16.msra.mxu0 %v3217
    %5705 = vmatpush.bf16.msra.mxu0 %v3209
    %5706 = vmatpush.bf16.msra.mxu0 %v3201
    %5707 = vmatpush.bf16.msra.mxu0 %v3193
    %5708 = vmatpush.bf16.msra.mxu0 %v3185
    %5709 = vmatpush.bf16.msra.mxu0 %v3177
    %5710 = vmatpush.bf16.msra.mxu0 %v3169
    %5711 = vmatpush.bf16.msra.mxu0 %v3161
    %5712 = vmatmul.bf16.gmra.mxu0 %v838
    %v5713 = vpop.f32.mrf.mxu0
    %v5714 = vadd.f32 %v5665, %v5713
    %v5715 = vpop.f32.mrf.mxu0
    %v5716 = vadd.f32 %v5667, %v5715
    %5717 = vmatmul.bf16.gmra.mxu0 %v846
    %v5718 = vpop.f32.mrf.mxu0
    %v5719 = vadd.f32 %v5670, %v5718
    %v5720 = vpop.f32.mrf.mxu0
    %v5721 = vadd.f32 %v5672, %v5720
    %5722 = vmatmul.bf16.gmra.mxu0 %v854
    %v5723 = vpop.f32.mrf.mxu0
    %v5724 = vadd.f32 %v5675, %v5723
    %v5725 = vpop.f32.mrf.mxu0
    %v5726 = vadd.f32 %v5677, %v5725
    %5727 = vmatmul.bf16.gmra.mxu0 %v862
    %v5728 = vpop.f32.mrf.mxu0
    %v5729 = vadd.f32 %v5680, %v5728
    %v5730 = vpop.f32.mrf.mxu0
    %v5731 = vadd.f32 %v5682, %v5730
    %5732 = vmatmul.bf16.gmra.mxu0 %v870
    %v5733 = vpop.f32.mrf.mxu0
    %v5734 = vadd.f32 %v5685, %v5733
    %v5735 = vpop.f32.mrf.mxu0
    %v5736 = vadd.f32 %v5687, %v5735
    %5737 = vmatmul.bf16.gmra.mxu0 %v878
    %v5738 = vpop.f32.mrf.mxu0
    %v5739 = vadd.f32 %v5690, %v5738
    %v5740 = vpop.f32.mrf.mxu0
    %v5741 = vadd.f32 %v5692, %v5740
    %5742 = vmatmul.bf16.gmra.mxu0 %v886
    %v5743 = vpop.f32.mrf.mxu0
    %v5744 = vadd.f32 %v5695, %v5743
    %v5745 = vpop.f32.mrf.mxu0
    %v5746 = vadd.f32 %v5697, %v5745
    %5747 = vmatmul.bf16.gmra.mxu0 %v894
    %v5748 = vpop.f32.mrf.mxu0
    %v5749 = vadd.f32 %v5700, %v5748
    %v5750 = vpop.f32.mrf.mxu0
    %v5751 = vadd.f32 %v5702, %v5750
    %5752 = vdwg.mxu0
    %5753 = vmatpush.bf16.msra.mxu0 %v3281
    %5754 = vmatpush.bf16.msra.mxu0 %v3273
    %5755 = vmatpush.bf16.msra.mxu0 %v3265
    %5756 = vmatpush.bf16.msra.mxu0 %v3257
    %5757 = vmatpush.bf16.msra.mxu0 %v3249
    %5758 = vmatpush.bf16.msra.mxu0 %v3241
    %5759 = vmatpush.bf16.msra.mxu0 %v3233
    %5760 = vmatpush.bf16.msra.mxu0 %v3225
    %5761 = vmatmul.bf16.gmra.mxu0 %v839
    %v5762 = vpop.f32.mrf.mxu0
    %v5763 = vadd.f32 %v5714, %v5762
    %v5764 = vpop.f32.mrf.mxu0
    %v5765 = vadd.f32 %v5716, %v5764
    %5766 = vmatmul.bf16.gmra.mxu0 %v847
    %v5767 = vpop.f32.mrf.mxu0
    %v5768 = vadd.f32 %v5719, %v5767
    %v5769 = vpop.f32.mrf.mxu0
    %v5770 = vadd.f32 %v5721, %v5769
    %5771 = vmatmul.bf16.gmra.mxu0 %v855
    %v5772 = vpop.f32.mrf.mxu0
    %v5773 = vadd.f32 %v5724, %v5772
    %v5774 = vpop.f32.mrf.mxu0
    %v5775 = vadd.f32 %v5726, %v5774
    %5776 = vmatmul.bf16.gmra.mxu0 %v863
    %v5777 = vpop.f32.mrf.mxu0
    %v5778 = vadd.f32 %v5729, %v5777
    %v5779 = vpop.f32.mrf.mxu0
    %v5780 = vadd.f32 %v5731, %v5779
    %5781 = vmatmul.bf16.gmra.mxu0 %v871
    %v5782 = vpop.f32.mrf.mxu0
    %v5783 = vadd.f32 %v5734, %v5782
    %v5784 = vpop.f32.mrf.mxu0
    %v5785 = vadd.f32 %v5736, %v5784
    %5786 = vmatmul.bf16.gmra.mxu0 %v879
    %v5787 = vpop.f32.mrf.mxu0
    %v5788 = vadd.f32 %v5739, %v5787
    %v5789 = vpop.f32.mrf.mxu0
    %v5790 = vadd.f32 %v5741, %v5789
    %5791 = vmatmul.bf16.gmra.mxu0 %v887
    %v5792 = vpop.f32.mrf.mxu0
    %v5793 = vadd.f32 %v5744, %v5792
    %v5794 = vpop.f32.mrf.mxu0
    %v5795 = vadd.f32 %v5746, %v5794
    %5796 = vmatmul.bf16.gmra.mxu0 %v895
    %v5797 = vpop.f32.mrf.mxu0
    %v5798 = vadd.f32 %v5749, %v5797
    %v5799 = vpop.f32.mrf.mxu0
    %v5800 = vadd.f32 %v5751, %v5799
    %5801 = vdwg.mxu0
    %5802 = vmatpush.bf16.msra.mxu0 %v3345
    %5803 = vmatpush.bf16.msra.mxu0 %v3337
    %5804 = vmatpush.bf16.msra.mxu0 %v3329
    %5805 = vmatpush.bf16.msra.mxu0 %v3321
    %5806 = vmatpush.bf16.msra.mxu0 %v3313
    %5807 = vmatpush.bf16.msra.mxu0 %v3305
    %5808 = vmatpush.bf16.msra.mxu0 %v3297
    %5809 = vmatpush.bf16.msra.mxu0 %v3289
    %5810 = vmatmul.bf16.gmra.mxu0 %v840
    %v5811 = vpop.f32.mrf.mxu0
    %v5812 = vadd.f32 %v5763, %v5811
    %v5813 = vpop.f32.mrf.mxu0
    %v5814 = vadd.f32 %v5765, %v5813
    %5815 = vmatmul.bf16.gmra.mxu0 %v848
    %v5816 = vpop.f32.mrf.mxu0
    %v5817 = vadd.f32 %v5768, %v5816
    %v5818 = vpop.f32.mrf.mxu0
    %v5819 = vadd.f32 %v5770, %v5818
    %5820 = vmatmul.bf16.gmra.mxu0 %v856
    %v5821 = vpop.f32.mrf.mxu0
    %v5822 = vadd.f32 %v5773, %v5821
    %v5823 = vpop.f32.mrf.mxu0
    %v5824 = vadd.f32 %v5775, %v5823
    %5825 = vmatmul.bf16.gmra.mxu0 %v864
    %v5826 = vpop.f32.mrf.mxu0
    %v5827 = vadd.f32 %v5778, %v5826
    %v5828 = vpop.f32.mrf.mxu0
    %v5829 = vadd.f32 %v5780, %v5828
    %5830 = vmatmul.bf16.gmra.mxu0 %v872
    %v5831 = vpop.f32.mrf.mxu0
    %v5832 = vadd.f32 %v5783, %v5831
    %v5833 = vpop.f32.mrf.mxu0
    %v5834 = vadd.f32 %v5785, %v5833
    %5835 = vmatmul.bf16.gmra.mxu0 %v880
    %v5836 = vpop.f32.mrf.mxu0
    %v5837 = vadd.f32 %v5788, %v5836
    %v5838 = vpop.f32.mrf.mxu0
    %v5839 = vadd.f32 %v5790, %v5838
    %5840 = vmatmul.bf16.gmra.mxu0 %v888
    %v5841 = vpop.f32.mrf.mxu0
    %v5842 = vadd.f32 %v5793, %v5841
    %v5843 = vpop.f32.mrf.mxu0
    %v5844 = vadd.f32 %v5795, %v5843
    %5845 = vmatmul.bf16.gmra.mxu0 %v896
    %v5846 = vpop.f32.mrf.mxu0
    %v5847 = vadd.f32 %v5798, %v5846
    %v5848 = vpop.f32.mrf.mxu0
    %v5849 = vadd.f32 %v5800, %v5848
    %5850 = vdwg.mxu0
    %5851 = vmatpush.bf16.msra.mxu0 %v3409
    %5852 = vmatpush.bf16.msra.mxu0 %v3401
    %5853 = vmatpush.bf16.msra.mxu0 %v3393
    %5854 = vmatpush.bf16.msra.mxu0 %v3385
    %5855 = vmatpush.bf16.msra.mxu0 %v3377
    %5856 = vmatpush.bf16.msra.mxu0 %v3369
    %5857 = vmatpush.bf16.msra.mxu0 %v3361
    %5858 = vmatpush.bf16.msra.mxu0 %v3353
    %5859 = vmatmul.bf16.gmra.mxu0 %v841
    %v5860 = vpop.f32.mrf.mxu0
    %v5861 = vadd.f32 %v5812, %v5860
    %v5862 = vpop.f32.mrf.mxu0
    %v5863 = vadd.f32 %v5814, %v5862
    %5864 = vmatmul.bf16.gmra.mxu0 %v849
    %v5865 = vpop.f32.mrf.mxu0
    %v5866 = vadd.f32 %v5817, %v5865
    %v5867 = vpop.f32.mrf.mxu0
    %v5868 = vadd.f32 %v5819, %v5867
    %5869 = vmatmul.bf16.gmra.mxu0 %v857
    %v5870 = vpop.f32.mrf.mxu0
    %v5871 = vadd.f32 %v5822, %v5870
    %v5872 = vpop.f32.mrf.mxu0
    %v5873 = vadd.f32 %v5824, %v5872
    %5874 = vmatmul.bf16.gmra.mxu0 %v865
    %v5875 = vpop.f32.mrf.mxu0
    %v5876 = vadd.f32 %v5827, %v5875
    %v5877 = vpop.f32.mrf.mxu0
    %v5878 = vadd.f32 %v5829, %v5877
    %5879 = vmatmul.bf16.gmra.mxu0 %v873
    %v5880 = vpop.f32.mrf.mxu0
    %v5881 = vadd.f32 %v5832, %v5880
    %v5882 = vpop.f32.mrf.mxu0
    %v5883 = vadd.f32 %v5834, %v5882
    %5884 = vmatmul.bf16.gmra.mxu0 %v881
    %v5885 = vpop.f32.mrf.mxu0
    %v5886 = vadd.f32 %v5837, %v5885
    %v5887 = vpop.f32.mrf.mxu0
    %v5888 = vadd.f32 %v5839, %v5887
    %5889 = vmatmul.bf16.gmra.mxu0 %v889
    %v5890 = vpop.f32.mrf.mxu0
    %v5891 = vadd.f32 %v5842, %v5890
    %v5892 = vpop.f32.mrf.mxu0
    %v5893 = vadd.f32 %v5844, %v5892
    %5894 = vmatmul.bf16.gmra.mxu0 %v897
    %v5895 = vpop.f32.mrf.mxu0
    %v5896 = vadd.f32 %v5847, %v5895
    %v5897 = vpop.f32.mrf.mxu0
    %v5898 = vadd.f32 %v5849, %v5897
    %5899 = vdwg.mxu0
    %5900 = vmatpush.bf16.msra.mxu0 %v3473
    %5901 = vmatpush.bf16.msra.mxu0 %v3465
    %5902 = vmatpush.bf16.msra.mxu0 %v3457
    %5903 = vmatpush.bf16.msra.mxu0 %v3449
    %5904 = vmatpush.bf16.msra.mxu0 %v3441
    %5905 = vmatpush.bf16.msra.mxu0 %v3433
    %5906 = vmatpush.bf16.msra.mxu0 %v3425
    %5907 = vmatpush.bf16.msra.mxu0 %v3417
    %5908 = vmatmul.bf16.gmra.mxu0 %v842
    %v5909 = vpop.f32.mrf.mxu0
    %v5910 = vadd.f32 %v5861, %v5909
    %v5911 = vpop.f32.mrf.mxu0
    %v5912 = vadd.f32 %v5863, %v5911
    %5913 = vmatmul.bf16.gmra.mxu0 %v850
    %v5914 = vpop.f32.mrf.mxu0
    %v5915 = vadd.f32 %v5866, %v5914
    %v5916 = vpop.f32.mrf.mxu0
    %v5917 = vadd.f32 %v5868, %v5916
    %5918 = vmatmul.bf16.gmra.mxu0 %v858
    %v5919 = vpop.f32.mrf.mxu0
    %v5920 = vadd.f32 %v5871, %v5919
    %v5921 = vpop.f32.mrf.mxu0
    %v5922 = vadd.f32 %v5873, %v5921
    %5923 = vmatmul.bf16.gmra.mxu0 %v866
    %v5924 = vpop.f32.mrf.mxu0
    %v5925 = vadd.f32 %v5876, %v5924
    %v5926 = vpop.f32.mrf.mxu0
    %v5927 = vadd.f32 %v5878, %v5926
    %5928 = vmatmul.bf16.gmra.mxu0 %v874
    %v5929 = vpop.f32.mrf.mxu0
    %v5930 = vadd.f32 %v5881, %v5929
    %v5931 = vpop.f32.mrf.mxu0
    %v5932 = vadd.f32 %v5883, %v5931
    %5933 = vmatmul.bf16.gmra.mxu0 %v882
    %v5934 = vpop.f32.mrf.mxu0
    %v5935 = vadd.f32 %v5886, %v5934
    %v5936 = vpop.f32.mrf.mxu0
    %v5937 = vadd.f32 %v5888, %v5936
    %5938 = vmatmul.bf16.gmra.mxu0 %v890
    %v5939 = vpop.f32.mrf.mxu0
    %v5940 = vadd.f32 %v5891, %v5939
    %v5941 = vpop.f32.mrf.mxu0
    %v5942 = vadd.f32 %v5893, %v5941
    %5943 = vmatmul.bf16.gmra.mxu0 %v898
    %v5944 = vpop.f32.mrf.mxu0
    %v5945 = vadd.f32 %v5896, %v5944
    %v5946 = vpop.f32.mrf.mxu0
    %v5947 = vadd.f32 %v5898, %v5946
    %5948 = vdwg.mxu0
    %5949 = vmatpush.bf16.msra.mxu0 %v3026
    %5950 = vmatpush.bf16.msra.mxu0 %v3018
    %5951 = vmatpush.bf16.msra.mxu0 %v3010
    %5952 = vmatpush.bf16.msra.mxu0 %v3002
    %5953 = vmatpush.bf16.msra.mxu0 %v2994
    %5954 = vmatpush.bf16.msra.mxu0 %v2986
    %5955 = vmatpush.bf16.msra.mxu0 %v2978
    %5956 = vmatpush.bf16.msra.mxu0 %v2970
    %5957 = vmatmul.bf16.gmra.mxu0 %v835
    %v5958 = vpop.f32.mrf.mxu0
    %v5959 = vadd.f32 %v1418, %v5958
    %v5960 = vpop.f32.mrf.mxu0
    %v5961 = vadd.f32 %v1418, %v5960
    %5962 = vmatmul.bf16.gmra.mxu0 %v843
    %v5963 = vpop.f32.mrf.mxu0
    %v5964 = vadd.f32 %v1418, %v5963
    %v5965 = vpop.f32.mrf.mxu0
    %v5966 = vadd.f32 %v1418, %v5965
    %5967 = vmatmul.bf16.gmra.mxu0 %v851
    %v5968 = vpop.f32.mrf.mxu0
    %v5969 = vadd.f32 %v1418, %v5968
    %v5970 = vpop.f32.mrf.mxu0
    %v5971 = vadd.f32 %v1418, %v5970
    %5972 = vmatmul.bf16.gmra.mxu0 %v859
    %v5973 = vpop.f32.mrf.mxu0
    %v5974 = vadd.f32 %v1418, %v5973
    %v5975 = vpop.f32.mrf.mxu0
    %v5976 = vadd.f32 %v1418, %v5975
    %5977 = vmatmul.bf16.gmra.mxu0 %v867
    %v5978 = vpop.f32.mrf.mxu0
    %v5979 = vadd.f32 %v1418, %v5978
    %v5980 = vpop.f32.mrf.mxu0
    %v5981 = vadd.f32 %v1418, %v5980
    %5982 = vmatmul.bf16.gmra.mxu0 %v875
    %v5983 = vpop.f32.mrf.mxu0
    %v5984 = vadd.f32 %v1418, %v5983
    %v5985 = vpop.f32.mrf.mxu0
    %v5986 = vadd.f32 %v1418, %v5985
    %5987 = vmatmul.bf16.gmra.mxu0 %v883
    %v5988 = vpop.f32.mrf.mxu0
    %v5989 = vadd.f32 %v1418, %v5988
    %v5990 = vpop.f32.mrf.mxu0
    %v5991 = vadd.f32 %v1418, %v5990
    %5992 = vmatmul.bf16.gmra.mxu0 %v891
    %v5993 = vpop.f32.mrf.mxu0
    %v5994 = vadd.f32 %v1418, %v5993
    %v5995 = vpop.f32.mrf.mxu0
    %v5996 = vadd.f32 %v1418, %v5995
    %5997 = vdwg.mxu0
    %5998 = vmatpush.bf16.msra.mxu0 %v3090
    %5999 = vmatpush.bf16.msra.mxu0 %v3082
    %6000 = vmatpush.bf16.msra.mxu0 %v3074
    %6001 = vmatpush.bf16.msra.mxu0 %v3066
    %6002 = vmatpush.bf16.msra.mxu0 %v3058
    %6003 = vmatpush.bf16.msra.mxu0 %v3050
    %6004 = vmatpush.bf16.msra.mxu0 %v3042
    %6005 = vmatpush.bf16.msra.mxu0 %v3034
    %6006 = vmatmul.bf16.gmra.mxu0 %v836
    %v6007 = vpop.f32.mrf.mxu0
    %v6008 = vadd.f32 %v5959, %v6007
    %v6009 = vpop.f32.mrf.mxu0
    %v6010 = vadd.f32 %v5961, %v6009
    %6011 = vmatmul.bf16.gmra.mxu0 %v844
    %v6012 = vpop.f32.mrf.mxu0
    %v6013 = vadd.f32 %v5964, %v6012
    %v6014 = vpop.f32.mrf.mxu0
    %v6015 = vadd.f32 %v5966, %v6014
    %6016 = vmatmul.bf16.gmra.mxu0 %v852
    %v6017 = vpop.f32.mrf.mxu0
    %v6018 = vadd.f32 %v5969, %v6017
    %v6019 = vpop.f32.mrf.mxu0
    %v6020 = vadd.f32 %v5971, %v6019
    %6021 = vmatmul.bf16.gmra.mxu0 %v860
    %v6022 = vpop.f32.mrf.mxu0
    %v6023 = vadd.f32 %v5974, %v6022
    %v6024 = vpop.f32.mrf.mxu0
    %v6025 = vadd.f32 %v5976, %v6024
    %6026 = vmatmul.bf16.gmra.mxu0 %v868
    %v6027 = vpop.f32.mrf.mxu0
    %v6028 = vadd.f32 %v5979, %v6027
    %v6029 = vpop.f32.mrf.mxu0
    %v6030 = vadd.f32 %v5981, %v6029
    %6031 = vmatmul.bf16.gmra.mxu0 %v876
    %v6032 = vpop.f32.mrf.mxu0
    %v6033 = vadd.f32 %v5984, %v6032
    %v6034 = vpop.f32.mrf.mxu0
    %v6035 = vadd.f32 %v5986, %v6034
    %6036 = vmatmul.bf16.gmra.mxu0 %v884
    %v6037 = vpop.f32.mrf.mxu0
    %v6038 = vadd.f32 %v5989, %v6037
    %v6039 = vpop.f32.mrf.mxu0
    %v6040 = vadd.f32 %v5991, %v6039
    %6041 = vmatmul.bf16.gmra.mxu0 %v892
    %v6042 = vpop.f32.mrf.mxu0
    %v6043 = vadd.f32 %v5994, %v6042
    %v6044 = vpop.f32.mrf.mxu0
    %v6045 = vadd.f32 %v5996, %v6044
    %6046 = vdwg.mxu0
    %6047 = vmatpush.bf16.msra.mxu0 %v3154
    %6048 = vmatpush.bf16.msra.mxu0 %v3146
    %6049 = vmatpush.bf16.msra.mxu0 %v3138
    %6050 = vmatpush.bf16.msra.mxu0 %v3130
    %6051 = vmatpush.bf16.msra.mxu0 %v3122
    %6052 = vmatpush.bf16.msra.mxu0 %v3114
    %6053 = vmatpush.bf16.msra.mxu0 %v3106
    %6054 = vmatpush.bf16.msra.mxu0 %v3098
    %6055 = vmatmul.bf16.gmra.mxu0 %v837
    %v6056 = vpop.f32.mrf.mxu0
    %v6057 = vadd.f32 %v6008, %v6056
    %v6058 = vpop.f32.mrf.mxu0
    %v6059 = vadd.f32 %v6010, %v6058
    %6060 = vmatmul.bf16.gmra.mxu0 %v845
    %v6061 = vpop.f32.mrf.mxu0
    %v6062 = vadd.f32 %v6013, %v6061
    %v6063 = vpop.f32.mrf.mxu0
    %v6064 = vadd.f32 %v6015, %v6063
    %6065 = vmatmul.bf16.gmra.mxu0 %v853
    %v6066 = vpop.f32.mrf.mxu0
    %v6067 = vadd.f32 %v6018, %v6066
    %v6068 = vpop.f32.mrf.mxu0
    %v6069 = vadd.f32 %v6020, %v6068
    %6070 = vmatmul.bf16.gmra.mxu0 %v861
    %v6071 = vpop.f32.mrf.mxu0
    %v6072 = vadd.f32 %v6023, %v6071
    %v6073 = vpop.f32.mrf.mxu0
    %v6074 = vadd.f32 %v6025, %v6073
    %6075 = vmatmul.bf16.gmra.mxu0 %v869
    %v6076 = vpop.f32.mrf.mxu0
    %v6077 = vadd.f32 %v6028, %v6076
    %v6078 = vpop.f32.mrf.mxu0
    %v6079 = vadd.f32 %v6030, %v6078
    %6080 = vmatmul.bf16.gmra.mxu0 %v877
    %v6081 = vpop.f32.mrf.mxu0
    %v6082 = vadd.f32 %v6033, %v6081
    %v6083 = vpop.f32.mrf.mxu0
    %v6084 = vadd.f32 %v6035, %v6083
    %6085 = vmatmul.bf16.gmra.mxu0 %v885
    %v6086 = vpop.f32.mrf.mxu0
    %v6087 = vadd.f32 %v6038, %v6086
    %v6088 = vpop.f32.mrf.mxu0
    %v6089 = vadd.f32 %v6040, %v6088
    %6090 = vmatmul.bf16.gmra.mxu0 %v893
    %v6091 = vpop.f32.mrf.mxu0
    %v6092 = vadd.f32 %v6043, %v6091
    %v6093 = vpop.f32.mrf.mxu0
    %v6094 = vadd.f32 %v6045, %v6093
    %6095 = vdwg.mxu0
    %6096 = vmatpush.bf16.msra.mxu0 %v3218
    %6097 = vmatpush.bf16.msra.mxu0 %v3210
    %6098 = vmatpush.bf16.msra.mxu0 %v3202
    %6099 = vmatpush.bf16.msra.mxu0 %v3194
    %6100 = vmatpush.bf16.msra.mxu0 %v3186
    %6101 = vmatpush.bf16.msra.mxu0 %v3178
    %6102 = vmatpush.bf16.msra.mxu0 %v3170
    %6103 = vmatpush.bf16.msra.mxu0 %v3162
    %6104 = vmatmul.bf16.gmra.mxu0 %v838
    %v6105 = vpop.f32.mrf.mxu0
    %v6106 = vadd.f32 %v6057, %v6105
    %v6107 = vpop.f32.mrf.mxu0
    %v6108 = vadd.f32 %v6059, %v6107
    %6109 = vmatmul.bf16.gmra.mxu0 %v846
    %v6110 = vpop.f32.mrf.mxu0
    %v6111 = vadd.f32 %v6062, %v6110
    %v6112 = vpop.f32.mrf.mxu0
    %v6113 = vadd.f32 %v6064, %v6112
    %6114 = vmatmul.bf16.gmra.mxu0 %v854
    %v6115 = vpop.f32.mrf.mxu0
    %v6116 = vadd.f32 %v6067, %v6115
    %v6117 = vpop.f32.mrf.mxu0
    %v6118 = vadd.f32 %v6069, %v6117
    %6119 = vmatmul.bf16.gmra.mxu0 %v862
    %v6120 = vpop.f32.mrf.mxu0
    %v6121 = vadd.f32 %v6072, %v6120
    %v6122 = vpop.f32.mrf.mxu0
    %v6123 = vadd.f32 %v6074, %v6122
    %6124 = vmatmul.bf16.gmra.mxu0 %v870
    %v6125 = vpop.f32.mrf.mxu0
    %v6126 = vadd.f32 %v6077, %v6125
    %v6127 = vpop.f32.mrf.mxu0
    %v6128 = vadd.f32 %v6079, %v6127
    %6129 = vmatmul.bf16.gmra.mxu0 %v878
    %v6130 = vpop.f32.mrf.mxu0
    %v6131 = vadd.f32 %v6082, %v6130
    %v6132 = vpop.f32.mrf.mxu0
    %v6133 = vadd.f32 %v6084, %v6132
    %6134 = vmatmul.bf16.gmra.mxu0 %v886
    %v6135 = vpop.f32.mrf.mxu0
    %v6136 = vadd.f32 %v6087, %v6135
    %v6137 = vpop.f32.mrf.mxu0
    %v6138 = vadd.f32 %v6089, %v6137
    %6139 = vmatmul.bf16.gmra.mxu0 %v894
    %v6140 = vpop.f32.mrf.mxu0
    %v6141 = vadd.f32 %v6092, %v6140
    %v6142 = vpop.f32.mrf.mxu0
    %v6143 = vadd.f32 %v6094, %v6142
    %6144 = vdwg.mxu0
    %6145 = vmatpush.bf16.msra.mxu0 %v3282
    %6146 = vmatpush.bf16.msra.mxu0 %v3274
    %6147 = vmatpush.bf16.msra.mxu0 %v3266
    %6148 = vmatpush.bf16.msra.mxu0 %v3258
    %6149 = vmatpush.bf16.msra.mxu0 %v3250
    %6150 = vmatpush.bf16.msra.mxu0 %v3242
    %6151 = vmatpush.bf16.msra.mxu0 %v3234
    %6152 = vmatpush.bf16.msra.mxu0 %v3226
    %6153 = vmatmul.bf16.gmra.mxu0 %v839
    %v6154 = vpop.f32.mrf.mxu0
    %v6155 = vadd.f32 %v6106, %v6154
    %v6156 = vpop.f32.mrf.mxu0
    %v6157 = vadd.f32 %v6108, %v6156
    %6158 = vmatmul.bf16.gmra.mxu0 %v847
    %v6159 = vpop.f32.mrf.mxu0
    %v6160 = vadd.f32 %v6111, %v6159
    %v6161 = vpop.f32.mrf.mxu0
    %v6162 = vadd.f32 %v6113, %v6161
    %6163 = vmatmul.bf16.gmra.mxu0 %v855
    %v6164 = vpop.f32.mrf.mxu0
    %v6165 = vadd.f32 %v6116, %v6164
    %v6166 = vpop.f32.mrf.mxu0
    %v6167 = vadd.f32 %v6118, %v6166
    %6168 = vmatmul.bf16.gmra.mxu0 %v863
    %v6169 = vpop.f32.mrf.mxu0
    %v6170 = vadd.f32 %v6121, %v6169
    %v6171 = vpop.f32.mrf.mxu0
    %v6172 = vadd.f32 %v6123, %v6171
    %6173 = vmatmul.bf16.gmra.mxu0 %v871
    %v6174 = vpop.f32.mrf.mxu0
    %v6175 = vadd.f32 %v6126, %v6174
    %v6176 = vpop.f32.mrf.mxu0
    %v6177 = vadd.f32 %v6128, %v6176
    %6178 = vmatmul.bf16.gmra.mxu0 %v879
    %v6179 = vpop.f32.mrf.mxu0
    %v6180 = vadd.f32 %v6131, %v6179
    %v6181 = vpop.f32.mrf.mxu0
    %v6182 = vadd.f32 %v6133, %v6181
    %6183 = vmatmul.bf16.gmra.mxu0 %v887
    %v6184 = vpop.f32.mrf.mxu0
    %v6185 = vadd.f32 %v6136, %v6184
    %v6186 = vpop.f32.mrf.mxu0
    %v6187 = vadd.f32 %v6138, %v6186
    %6188 = vmatmul.bf16.gmra.mxu0 %v895
    %v6189 = vpop.f32.mrf.mxu0
    %v6190 = vadd.f32 %v6141, %v6189
    %v6191 = vpop.f32.mrf.mxu0
    %v6192 = vadd.f32 %v6143, %v6191
    %6193 = vdwg.mxu0
    %6194 = vmatpush.bf16.msra.mxu0 %v3346
    %6195 = vmatpush.bf16.msra.mxu0 %v3338
    %6196 = vmatpush.bf16.msra.mxu0 %v3330
    %6197 = vmatpush.bf16.msra.mxu0 %v3322
    %6198 = vmatpush.bf16.msra.mxu0 %v3314
    %6199 = vmatpush.bf16.msra.mxu0 %v3306
    %6200 = vmatpush.bf16.msra.mxu0 %v3298
    %6201 = vmatpush.bf16.msra.mxu0 %v3290
    %6202 = vmatmul.bf16.gmra.mxu0 %v840
    %v6203 = vpop.f32.mrf.mxu0
    %v6204 = vadd.f32 %v6155, %v6203
    %v6205 = vpop.f32.mrf.mxu0
    %v6206 = vadd.f32 %v6157, %v6205
    %6207 = vmatmul.bf16.gmra.mxu0 %v848
    %v6208 = vpop.f32.mrf.mxu0
    %v6209 = vadd.f32 %v6160, %v6208
    %v6210 = vpop.f32.mrf.mxu0
    %v6211 = vadd.f32 %v6162, %v6210
    %6212 = vmatmul.bf16.gmra.mxu0 %v856
    %v6213 = vpop.f32.mrf.mxu0
    %v6214 = vadd.f32 %v6165, %v6213
    %v6215 = vpop.f32.mrf.mxu0
    %v6216 = vadd.f32 %v6167, %v6215
    %6217 = vmatmul.bf16.gmra.mxu0 %v864
    %v6218 = vpop.f32.mrf.mxu0
    %v6219 = vadd.f32 %v6170, %v6218
    %v6220 = vpop.f32.mrf.mxu0
    %v6221 = vadd.f32 %v6172, %v6220
    %6222 = vmatmul.bf16.gmra.mxu0 %v872
    %v6223 = vpop.f32.mrf.mxu0
    %v6224 = vadd.f32 %v6175, %v6223
    %v6225 = vpop.f32.mrf.mxu0
    %v6226 = vadd.f32 %v6177, %v6225
    %6227 = vmatmul.bf16.gmra.mxu0 %v880
    %v6228 = vpop.f32.mrf.mxu0
    %v6229 = vadd.f32 %v6180, %v6228
    %v6230 = vpop.f32.mrf.mxu0
    %v6231 = vadd.f32 %v6182, %v6230
    %6232 = vmatmul.bf16.gmra.mxu0 %v888
    %v6233 = vpop.f32.mrf.mxu0
    %v6234 = vadd.f32 %v6185, %v6233
    %v6235 = vpop.f32.mrf.mxu0
    %v6236 = vadd.f32 %v6187, %v6235
    %6237 = vmatmul.bf16.gmra.mxu0 %v896
    %v6238 = vpop.f32.mrf.mxu0
    %v6239 = vadd.f32 %v6190, %v6238
    %v6240 = vpop.f32.mrf.mxu0
    %v6241 = vadd.f32 %v6192, %v6240
    %6242 = vdwg.mxu0
    %6243 = vmatpush.bf16.msra.mxu0 %v3410
    %6244 = vmatpush.bf16.msra.mxu0 %v3402
    %6245 = vmatpush.bf16.msra.mxu0 %v3394
    %6246 = vmatpush.bf16.msra.mxu0 %v3386
    %6247 = vmatpush.bf16.msra.mxu0 %v3378
    %6248 = vmatpush.bf16.msra.mxu0 %v3370
    %6249 = vmatpush.bf16.msra.mxu0 %v3362
    %6250 = vmatpush.bf16.msra.mxu0 %v3354
    %6251 = vmatmul.bf16.gmra.mxu0 %v841
    %v6252 = vpop.f32.mrf.mxu0
    %v6253 = vadd.f32 %v6204, %v6252
    %v6254 = vpop.f32.mrf.mxu0
    %v6255 = vadd.f32 %v6206, %v6254
    %6256 = vmatmul.bf16.gmra.mxu0 %v849
    %v6257 = vpop.f32.mrf.mxu0
    %v6258 = vadd.f32 %v6209, %v6257
    %v6259 = vpop.f32.mrf.mxu0
    %v6260 = vadd.f32 %v6211, %v6259
    %6261 = vmatmul.bf16.gmra.mxu0 %v857
    %v6262 = vpop.f32.mrf.mxu0
    %v6263 = vadd.f32 %v6214, %v6262
    %v6264 = vpop.f32.mrf.mxu0
    %v6265 = vadd.f32 %v6216, %v6264
    %6266 = vmatmul.bf16.gmra.mxu0 %v865
    %v6267 = vpop.f32.mrf.mxu0
    %v6268 = vadd.f32 %v6219, %v6267
    %v6269 = vpop.f32.mrf.mxu0
    %v6270 = vadd.f32 %v6221, %v6269
    %6271 = vmatmul.bf16.gmra.mxu0 %v873
    %v6272 = vpop.f32.mrf.mxu0
    %v6273 = vadd.f32 %v6224, %v6272
    %v6274 = vpop.f32.mrf.mxu0
    %v6275 = vadd.f32 %v6226, %v6274
    %6276 = vmatmul.bf16.gmra.mxu0 %v881
    %v6277 = vpop.f32.mrf.mxu0
    %v6278 = vadd.f32 %v6229, %v6277
    %v6279 = vpop.f32.mrf.mxu0
    %v6280 = vadd.f32 %v6231, %v6279
    %6281 = vmatmul.bf16.gmra.mxu0 %v889
    %v6282 = vpop.f32.mrf.mxu0
    %v6283 = vadd.f32 %v6234, %v6282
    %v6284 = vpop.f32.mrf.mxu0
    %v6285 = vadd.f32 %v6236, %v6284
    %6286 = vmatmul.bf16.gmra.mxu0 %v897
    %v6287 = vpop.f32.mrf.mxu0
    %v6288 = vadd.f32 %v6239, %v6287
    %v6289 = vpop.f32.mrf.mxu0
    %v6290 = vadd.f32 %v6241, %v6289
    %6291 = vdwg.mxu0
    %6292 = vmatpush.bf16.msra.mxu0 %v3474
    %6293 = vmatpush.bf16.msra.mxu0 %v3466
    %6294 = vmatpush.bf16.msra.mxu0 %v3458
    %6295 = vmatpush.bf16.msra.mxu0 %v3450
    %6296 = vmatpush.bf16.msra.mxu0 %v3442
    %6297 = vmatpush.bf16.msra.mxu0 %v3434
    %6298 = vmatpush.bf16.msra.mxu0 %v3426
    %6299 = vmatpush.bf16.msra.mxu0 %v3418
    %6300 = vmatmul.bf16.gmra.mxu0 %v842
    %v6301 = vpop.f32.mrf.mxu0
    %v6302 = vadd.f32 %v6253, %v6301
    %v6303 = vpop.f32.mrf.mxu0
    %v6304 = vadd.f32 %v6255, %v6303
    %6305 = vmatmul.bf16.gmra.mxu0 %v850
    %v6306 = vpop.f32.mrf.mxu0
    %v6307 = vadd.f32 %v6258, %v6306
    %v6308 = vpop.f32.mrf.mxu0
    %v6309 = vadd.f32 %v6260, %v6308
    %6310 = vmatmul.bf16.gmra.mxu0 %v858
    %v6311 = vpop.f32.mrf.mxu0
    %v6312 = vadd.f32 %v6263, %v6311
    %v6313 = vpop.f32.mrf.mxu0
    %v6314 = vadd.f32 %v6265, %v6313
    %6315 = vmatmul.bf16.gmra.mxu0 %v866
    %v6316 = vpop.f32.mrf.mxu0
    %v6317 = vadd.f32 %v6268, %v6316
    %v6318 = vpop.f32.mrf.mxu0
    %v6319 = vadd.f32 %v6270, %v6318
    %6320 = vmatmul.bf16.gmra.mxu0 %v874
    %v6321 = vpop.f32.mrf.mxu0
    %v6322 = vadd.f32 %v6273, %v6321
    %v6323 = vpop.f32.mrf.mxu0
    %v6324 = vadd.f32 %v6275, %v6323
    %6325 = vmatmul.bf16.gmra.mxu0 %v882
    %v6326 = vpop.f32.mrf.mxu0
    %v6327 = vadd.f32 %v6278, %v6326
    %v6328 = vpop.f32.mrf.mxu0
    %v6329 = vadd.f32 %v6280, %v6328
    %6330 = vmatmul.bf16.gmra.mxu0 %v890
    %v6331 = vpop.f32.mrf.mxu0
    %v6332 = vadd.f32 %v6283, %v6331
    %v6333 = vpop.f32.mrf.mxu0
    %v6334 = vadd.f32 %v6285, %v6333
    %6335 = vmatmul.bf16.gmra.mxu0 %v898
    %v6336 = vpop.f32.mrf.mxu0
    %v6337 = vadd.f32 %v6288, %v6336
    %v6338 = vpop.f32.mrf.mxu0
    %v6339 = vadd.f32 %v6290, %v6338
    %6340 = vdwg.mxu0
    %6341 = vmatpush.bf16.msra.mxu0 %v3027
    %6342 = vmatpush.bf16.msra.mxu0 %v3019
    %6343 = vmatpush.bf16.msra.mxu0 %v3011
    %6344 = vmatpush.bf16.msra.mxu0 %v3003
    %6345 = vmatpush.bf16.msra.mxu0 %v2995
    %6346 = vmatpush.bf16.msra.mxu0 %v2987
    %6347 = vmatpush.bf16.msra.mxu0 %v2979
    %6348 = vmatpush.bf16.msra.mxu0 %v2971
    %6349 = vmatmul.bf16.gmra.mxu0 %v835
    %v6350 = vpop.f32.mrf.mxu0
    %v6351 = vadd.f32 %v1419, %v6350
    %v6352 = vpop.f32.mrf.mxu0
    %v6353 = vadd.f32 %v1419, %v6352
    %6354 = vmatmul.bf16.gmra.mxu0 %v843
    %v6355 = vpop.f32.mrf.mxu0
    %v6356 = vadd.f32 %v1419, %v6355
    %v6357 = vpop.f32.mrf.mxu0
    %v6358 = vadd.f32 %v1419, %v6357
    %6359 = vmatmul.bf16.gmra.mxu0 %v851
    %v6360 = vpop.f32.mrf.mxu0
    %v6361 = vadd.f32 %v1419, %v6360
    %v6362 = vpop.f32.mrf.mxu0
    %v6363 = vadd.f32 %v1419, %v6362
    %6364 = vmatmul.bf16.gmra.mxu0 %v859
    %v6365 = vpop.f32.mrf.mxu0
    %v6366 = vadd.f32 %v1419, %v6365
    %v6367 = vpop.f32.mrf.mxu0
    %v6368 = vadd.f32 %v1419, %v6367
    %6369 = vmatmul.bf16.gmra.mxu0 %v867
    %v6370 = vpop.f32.mrf.mxu0
    %v6371 = vadd.f32 %v1419, %v6370
    %v6372 = vpop.f32.mrf.mxu0
    %v6373 = vadd.f32 %v1419, %v6372
    %6374 = vmatmul.bf16.gmra.mxu0 %v875
    %v6375 = vpop.f32.mrf.mxu0
    %v6376 = vadd.f32 %v1419, %v6375
    %v6377 = vpop.f32.mrf.mxu0
    %v6378 = vadd.f32 %v1419, %v6377
    %6379 = vmatmul.bf16.gmra.mxu0 %v883
    %v6380 = vpop.f32.mrf.mxu0
    %v6381 = vadd.f32 %v1419, %v6380
    %v6382 = vpop.f32.mrf.mxu0
    %v6383 = vadd.f32 %v1419, %v6382
    %6384 = vmatmul.bf16.gmra.mxu0 %v891
    %v6385 = vpop.f32.mrf.mxu0
    %v6386 = vadd.f32 %v1419, %v6385
    %v6387 = vpop.f32.mrf.mxu0
    %v6388 = vadd.f32 %v1419, %v6387
    %6389 = vdwg.mxu0
    %6390 = vmatpush.bf16.msra.mxu0 %v3091
    %6391 = vmatpush.bf16.msra.mxu0 %v3083
    %6392 = vmatpush.bf16.msra.mxu0 %v3075
    %6393 = vmatpush.bf16.msra.mxu0 %v3067
    %6394 = vmatpush.bf16.msra.mxu0 %v3059
    %6395 = vmatpush.bf16.msra.mxu0 %v3051
    %6396 = vmatpush.bf16.msra.mxu0 %v3043
    %6397 = vmatpush.bf16.msra.mxu0 %v3035
    %6398 = vmatmul.bf16.gmra.mxu0 %v836
    %v6399 = vpop.f32.mrf.mxu0
    %v6400 = vadd.f32 %v6351, %v6399
    %v6401 = vpop.f32.mrf.mxu0
    %v6402 = vadd.f32 %v6353, %v6401
    %6403 = vmatmul.bf16.gmra.mxu0 %v844
    %v6404 = vpop.f32.mrf.mxu0
    %v6405 = vadd.f32 %v6356, %v6404
    %v6406 = vpop.f32.mrf.mxu0
    %v6407 = vadd.f32 %v6358, %v6406
    %6408 = vmatmul.bf16.gmra.mxu0 %v852
    %v6409 = vpop.f32.mrf.mxu0
    %v6410 = vadd.f32 %v6361, %v6409
    %v6411 = vpop.f32.mrf.mxu0
    %v6412 = vadd.f32 %v6363, %v6411
    %6413 = vmatmul.bf16.gmra.mxu0 %v860
    %v6414 = vpop.f32.mrf.mxu0
    %v6415 = vadd.f32 %v6366, %v6414
    %v6416 = vpop.f32.mrf.mxu0
    %v6417 = vadd.f32 %v6368, %v6416
    %6418 = vmatmul.bf16.gmra.mxu0 %v868
    %v6419 = vpop.f32.mrf.mxu0
    %v6420 = vadd.f32 %v6371, %v6419
    %v6421 = vpop.f32.mrf.mxu0
    %v6422 = vadd.f32 %v6373, %v6421
    %6423 = vmatmul.bf16.gmra.mxu0 %v876
    %v6424 = vpop.f32.mrf.mxu0
    %v6425 = vadd.f32 %v6376, %v6424
    %v6426 = vpop.f32.mrf.mxu0
    %v6427 = vadd.f32 %v6378, %v6426
    %6428 = vmatmul.bf16.gmra.mxu0 %v884
    %v6429 = vpop.f32.mrf.mxu0
    %v6430 = vadd.f32 %v6381, %v6429
    %v6431 = vpop.f32.mrf.mxu0
    %v6432 = vadd.f32 %v6383, %v6431
    %6433 = vmatmul.bf16.gmra.mxu0 %v892
    %v6434 = vpop.f32.mrf.mxu0
    %v6435 = vadd.f32 %v6386, %v6434
    %v6436 = vpop.f32.mrf.mxu0
    %v6437 = vadd.f32 %v6388, %v6436
    %6438 = vdwg.mxu0
    %6439 = vmatpush.bf16.msra.mxu0 %v3155
    %6440 = vmatpush.bf16.msra.mxu0 %v3147
    %6441 = vmatpush.bf16.msra.mxu0 %v3139
    %6442 = vmatpush.bf16.msra.mxu0 %v3131
    %6443 = vmatpush.bf16.msra.mxu0 %v3123
    %6444 = vmatpush.bf16.msra.mxu0 %v3115
    %6445 = vmatpush.bf16.msra.mxu0 %v3107
    %6446 = vmatpush.bf16.msra.mxu0 %v3099
    %6447 = vmatmul.bf16.gmra.mxu0 %v837
    %v6448 = vpop.f32.mrf.mxu0
    %v6449 = vadd.f32 %v6400, %v6448
    %v6450 = vpop.f32.mrf.mxu0
    %v6451 = vadd.f32 %v6402, %v6450
    %6452 = vmatmul.bf16.gmra.mxu0 %v845
    %v6453 = vpop.f32.mrf.mxu0
    %v6454 = vadd.f32 %v6405, %v6453
    %v6455 = vpop.f32.mrf.mxu0
    %v6456 = vadd.f32 %v6407, %v6455
    %6457 = vmatmul.bf16.gmra.mxu0 %v853
    %v6458 = vpop.f32.mrf.mxu0
    %v6459 = vadd.f32 %v6410, %v6458
    %v6460 = vpop.f32.mrf.mxu0
    %v6461 = vadd.f32 %v6412, %v6460
    %6462 = vmatmul.bf16.gmra.mxu0 %v861
    %v6463 = vpop.f32.mrf.mxu0
    %v6464 = vadd.f32 %v6415, %v6463
    %v6465 = vpop.f32.mrf.mxu0
    %v6466 = vadd.f32 %v6417, %v6465
    %6467 = vmatmul.bf16.gmra.mxu0 %v869
    %v6468 = vpop.f32.mrf.mxu0
    %v6469 = vadd.f32 %v6420, %v6468
    %v6470 = vpop.f32.mrf.mxu0
    %v6471 = vadd.f32 %v6422, %v6470
    %6472 = vmatmul.bf16.gmra.mxu0 %v877
    %v6473 = vpop.f32.mrf.mxu0
    %v6474 = vadd.f32 %v6425, %v6473
    %v6475 = vpop.f32.mrf.mxu0
    %v6476 = vadd.f32 %v6427, %v6475
    %6477 = vmatmul.bf16.gmra.mxu0 %v885
    %v6478 = vpop.f32.mrf.mxu0
    %v6479 = vadd.f32 %v6430, %v6478
    %v6480 = vpop.f32.mrf.mxu0
    %v6481 = vadd.f32 %v6432, %v6480
    %6482 = vmatmul.bf16.gmra.mxu0 %v893
    %v6483 = vpop.f32.mrf.mxu0
    %v6484 = vadd.f32 %v6435, %v6483
    %v6485 = vpop.f32.mrf.mxu0
    %v6486 = vadd.f32 %v6437, %v6485
    %6487 = vdwg.mxu0
    %6488 = vmatpush.bf16.msra.mxu0 %v3219
    %6489 = vmatpush.bf16.msra.mxu0 %v3211
    %6490 = vmatpush.bf16.msra.mxu0 %v3203
    %6491 = vmatpush.bf16.msra.mxu0 %v3195
    %6492 = vmatpush.bf16.msra.mxu0 %v3187
    %6493 = vmatpush.bf16.msra.mxu0 %v3179
    %6494 = vmatpush.bf16.msra.mxu0 %v3171
    %6495 = vmatpush.bf16.msra.mxu0 %v3163
    %6496 = vmatmul.bf16.gmra.mxu0 %v838
    %v6497 = vpop.f32.mrf.mxu0
    %v6498 = vadd.f32 %v6449, %v6497
    %v6499 = vpop.f32.mrf.mxu0
    %v6500 = vadd.f32 %v6451, %v6499
    %6501 = vmatmul.bf16.gmra.mxu0 %v846
    %v6502 = vpop.f32.mrf.mxu0
    %v6503 = vadd.f32 %v6454, %v6502
    %v6504 = vpop.f32.mrf.mxu0
    %v6505 = vadd.f32 %v6456, %v6504
    %6506 = vmatmul.bf16.gmra.mxu0 %v854
    %v6507 = vpop.f32.mrf.mxu0
    %v6508 = vadd.f32 %v6459, %v6507
    %v6509 = vpop.f32.mrf.mxu0
    %v6510 = vadd.f32 %v6461, %v6509
    %6511 = vmatmul.bf16.gmra.mxu0 %v862
    %v6512 = vpop.f32.mrf.mxu0
    %v6513 = vadd.f32 %v6464, %v6512
    %v6514 = vpop.f32.mrf.mxu0
    %v6515 = vadd.f32 %v6466, %v6514
    %6516 = vmatmul.bf16.gmra.mxu0 %v870
    %v6517 = vpop.f32.mrf.mxu0
    %v6518 = vadd.f32 %v6469, %v6517
    %v6519 = vpop.f32.mrf.mxu0
    %v6520 = vadd.f32 %v6471, %v6519
    %6521 = vmatmul.bf16.gmra.mxu0 %v878
    %v6522 = vpop.f32.mrf.mxu0
    %v6523 = vadd.f32 %v6474, %v6522
    %v6524 = vpop.f32.mrf.mxu0
    %v6525 = vadd.f32 %v6476, %v6524
    %6526 = vmatmul.bf16.gmra.mxu0 %v886
    %v6527 = vpop.f32.mrf.mxu0
    %v6528 = vadd.f32 %v6479, %v6527
    %v6529 = vpop.f32.mrf.mxu0
    %v6530 = vadd.f32 %v6481, %v6529
    %6531 = vmatmul.bf16.gmra.mxu0 %v894
    %v6532 = vpop.f32.mrf.mxu0
    %v6533 = vadd.f32 %v6484, %v6532
    %v6534 = vpop.f32.mrf.mxu0
    %v6535 = vadd.f32 %v6486, %v6534
    %6536 = vdwg.mxu0
    %6537 = vmatpush.bf16.msra.mxu0 %v3283
    %6538 = vmatpush.bf16.msra.mxu0 %v3275
    %6539 = vmatpush.bf16.msra.mxu0 %v3267
    %6540 = vmatpush.bf16.msra.mxu0 %v3259
    %6541 = vmatpush.bf16.msra.mxu0 %v3251
    %6542 = vmatpush.bf16.msra.mxu0 %v3243
    %6543 = vmatpush.bf16.msra.mxu0 %v3235
    %6544 = vmatpush.bf16.msra.mxu0 %v3227
    %6545 = vmatmul.bf16.gmra.mxu0 %v839
    %v6546 = vpop.f32.mrf.mxu0
    %v6547 = vadd.f32 %v6498, %v6546
    %v6548 = vpop.f32.mrf.mxu0
    %v6549 = vadd.f32 %v6500, %v6548
    %6550 = vmatmul.bf16.gmra.mxu0 %v847
    %v6551 = vpop.f32.mrf.mxu0
    %v6552 = vadd.f32 %v6503, %v6551
    %v6553 = vpop.f32.mrf.mxu0
    %v6554 = vadd.f32 %v6505, %v6553
    %6555 = vmatmul.bf16.gmra.mxu0 %v855
    %v6556 = vpop.f32.mrf.mxu0
    %v6557 = vadd.f32 %v6508, %v6556
    %v6558 = vpop.f32.mrf.mxu0
    %v6559 = vadd.f32 %v6510, %v6558
    %6560 = vmatmul.bf16.gmra.mxu0 %v863
    %v6561 = vpop.f32.mrf.mxu0
    %v6562 = vadd.f32 %v6513, %v6561
    %v6563 = vpop.f32.mrf.mxu0
    %v6564 = vadd.f32 %v6515, %v6563
    %6565 = vmatmul.bf16.gmra.mxu0 %v871
    %v6566 = vpop.f32.mrf.mxu0
    %v6567 = vadd.f32 %v6518, %v6566
    %v6568 = vpop.f32.mrf.mxu0
    %v6569 = vadd.f32 %v6520, %v6568
    %6570 = vmatmul.bf16.gmra.mxu0 %v879
    %v6571 = vpop.f32.mrf.mxu0
    %v6572 = vadd.f32 %v6523, %v6571
    %v6573 = vpop.f32.mrf.mxu0
    %v6574 = vadd.f32 %v6525, %v6573
    %6575 = vmatmul.bf16.gmra.mxu0 %v887
    %v6576 = vpop.f32.mrf.mxu0
    %v6577 = vadd.f32 %v6528, %v6576
    %v6578 = vpop.f32.mrf.mxu0
    %v6579 = vadd.f32 %v6530, %v6578
    %6580 = vmatmul.bf16.gmra.mxu0 %v895
    %v6581 = vpop.f32.mrf.mxu0
    %v6582 = vadd.f32 %v6533, %v6581
    %v6583 = vpop.f32.mrf.mxu0
    %v6584 = vadd.f32 %v6535, %v6583
    %6585 = vdwg.mxu0
    %6586 = vmatpush.bf16.msra.mxu0 %v3347
    %6587 = vmatpush.bf16.msra.mxu0 %v3339
    %6588 = vmatpush.bf16.msra.mxu0 %v3331
    %6589 = vmatpush.bf16.msra.mxu0 %v3323
    %6590 = vmatpush.bf16.msra.mxu0 %v3315
    %6591 = vmatpush.bf16.msra.mxu0 %v3307
    %6592 = vmatpush.bf16.msra.mxu0 %v3299
    %6593 = vmatpush.bf16.msra.mxu0 %v3291
    %6594 = vmatmul.bf16.gmra.mxu0 %v840
    %v6595 = vpop.f32.mrf.mxu0
    %v6596 = vadd.f32 %v6547, %v6595
    %v6597 = vpop.f32.mrf.mxu0
    %v6598 = vadd.f32 %v6549, %v6597
    %6599 = vmatmul.bf16.gmra.mxu0 %v848
    %v6600 = vpop.f32.mrf.mxu0
    %v6601 = vadd.f32 %v6552, %v6600
    %v6602 = vpop.f32.mrf.mxu0
    %v6603 = vadd.f32 %v6554, %v6602
    %6604 = vmatmul.bf16.gmra.mxu0 %v856
    %v6605 = vpop.f32.mrf.mxu0
    %v6606 = vadd.f32 %v6557, %v6605
    %v6607 = vpop.f32.mrf.mxu0
    %v6608 = vadd.f32 %v6559, %v6607
    %6609 = vmatmul.bf16.gmra.mxu0 %v864
    %v6610 = vpop.f32.mrf.mxu0
    %v6611 = vadd.f32 %v6562, %v6610
    %v6612 = vpop.f32.mrf.mxu0
    %v6613 = vadd.f32 %v6564, %v6612
    %6614 = vmatmul.bf16.gmra.mxu0 %v872
    %v6615 = vpop.f32.mrf.mxu0
    %v6616 = vadd.f32 %v6567, %v6615
    %v6617 = vpop.f32.mrf.mxu0
    %v6618 = vadd.f32 %v6569, %v6617
    %6619 = vmatmul.bf16.gmra.mxu0 %v880
    %v6620 = vpop.f32.mrf.mxu0
    %v6621 = vadd.f32 %v6572, %v6620
    %v6622 = vpop.f32.mrf.mxu0
    %v6623 = vadd.f32 %v6574, %v6622
    %6624 = vmatmul.bf16.gmra.mxu0 %v888
    %v6625 = vpop.f32.mrf.mxu0
    %v6626 = vadd.f32 %v6577, %v6625
    %v6627 = vpop.f32.mrf.mxu0
    %v6628 = vadd.f32 %v6579, %v6627
    %6629 = vmatmul.bf16.gmra.mxu0 %v896
    %v6630 = vpop.f32.mrf.mxu0
    %v6631 = vadd.f32 %v6582, %v6630
    %v6632 = vpop.f32.mrf.mxu0
    %v6633 = vadd.f32 %v6584, %v6632
    %6634 = vdwg.mxu0
    %6635 = vmatpush.bf16.msra.mxu0 %v3411
    %6636 = vmatpush.bf16.msra.mxu0 %v3403
    %6637 = vmatpush.bf16.msra.mxu0 %v3395
    %6638 = vmatpush.bf16.msra.mxu0 %v3387
    %6639 = vmatpush.bf16.msra.mxu0 %v3379
    %6640 = vmatpush.bf16.msra.mxu0 %v3371
    %6641 = vmatpush.bf16.msra.mxu0 %v3363
    %6642 = vmatpush.bf16.msra.mxu0 %v3355
    %6643 = vmatmul.bf16.gmra.mxu0 %v841
    %v6644 = vpop.f32.mrf.mxu0
    %v6645 = vadd.f32 %v6596, %v6644
    %v6646 = vpop.f32.mrf.mxu0
    %v6647 = vadd.f32 %v6598, %v6646
    %6648 = vmatmul.bf16.gmra.mxu0 %v849
    %v6649 = vpop.f32.mrf.mxu0
    %v6650 = vadd.f32 %v6601, %v6649
    %v6651 = vpop.f32.mrf.mxu0
    %v6652 = vadd.f32 %v6603, %v6651
    %6653 = vmatmul.bf16.gmra.mxu0 %v857
    %v6654 = vpop.f32.mrf.mxu0
    %v6655 = vadd.f32 %v6606, %v6654
    %v6656 = vpop.f32.mrf.mxu0
    %v6657 = vadd.f32 %v6608, %v6656
    %6658 = vmatmul.bf16.gmra.mxu0 %v865
    %v6659 = vpop.f32.mrf.mxu0
    %v6660 = vadd.f32 %v6611, %v6659
    %v6661 = vpop.f32.mrf.mxu0
    %v6662 = vadd.f32 %v6613, %v6661
    %6663 = vmatmul.bf16.gmra.mxu0 %v873
    %v6664 = vpop.f32.mrf.mxu0
    %v6665 = vadd.f32 %v6616, %v6664
    %v6666 = vpop.f32.mrf.mxu0
    %v6667 = vadd.f32 %v6618, %v6666
    %6668 = vmatmul.bf16.gmra.mxu0 %v881
    %v6669 = vpop.f32.mrf.mxu0
    %v6670 = vadd.f32 %v6621, %v6669
    %v6671 = vpop.f32.mrf.mxu0
    %v6672 = vadd.f32 %v6623, %v6671
    %6673 = vmatmul.bf16.gmra.mxu0 %v889
    %v6674 = vpop.f32.mrf.mxu0
    %v6675 = vadd.f32 %v6626, %v6674
    %v6676 = vpop.f32.mrf.mxu0
    %v6677 = vadd.f32 %v6628, %v6676
    %6678 = vmatmul.bf16.gmra.mxu0 %v897
    %v6679 = vpop.f32.mrf.mxu0
    %v6680 = vadd.f32 %v6631, %v6679
    %v6681 = vpop.f32.mrf.mxu0
    %v6682 = vadd.f32 %v6633, %v6681
    %6683 = vdwg.mxu0
    %6684 = vmatpush.bf16.msra.mxu0 %v3475
    %6685 = vmatpush.bf16.msra.mxu0 %v3467
    %6686 = vmatpush.bf16.msra.mxu0 %v3459
    %6687 = vmatpush.bf16.msra.mxu0 %v3451
    %6688 = vmatpush.bf16.msra.mxu0 %v3443
    %6689 = vmatpush.bf16.msra.mxu0 %v3435
    %6690 = vmatpush.bf16.msra.mxu0 %v3427
    %6691 = vmatpush.bf16.msra.mxu0 %v3419
    %6692 = vmatmul.bf16.gmra.mxu0 %v842
    %v6693 = vpop.f32.mrf.mxu0
    %v6694 = vadd.f32 %v6645, %v6693
    %v6695 = vpop.f32.mrf.mxu0
    %v6696 = vadd.f32 %v6647, %v6695
    %6697 = vmatmul.bf16.gmra.mxu0 %v850
    %v6698 = vpop.f32.mrf.mxu0
    %v6699 = vadd.f32 %v6650, %v6698
    %v6700 = vpop.f32.mrf.mxu0
    %v6701 = vadd.f32 %v6652, %v6700
    %6702 = vmatmul.bf16.gmra.mxu0 %v858
    %v6703 = vpop.f32.mrf.mxu0
    %v6704 = vadd.f32 %v6655, %v6703
    %v6705 = vpop.f32.mrf.mxu0
    %v6706 = vadd.f32 %v6657, %v6705
    %6707 = vmatmul.bf16.gmra.mxu0 %v866
    %v6708 = vpop.f32.mrf.mxu0
    %v6709 = vadd.f32 %v6660, %v6708
    %v6710 = vpop.f32.mrf.mxu0
    %v6711 = vadd.f32 %v6662, %v6710
    %6712 = vmatmul.bf16.gmra.mxu0 %v874
    %v6713 = vpop.f32.mrf.mxu0
    %v6714 = vadd.f32 %v6665, %v6713
    %v6715 = vpop.f32.mrf.mxu0
    %v6716 = vadd.f32 %v6667, %v6715
    %6717 = vmatmul.bf16.gmra.mxu0 %v882
    %v6718 = vpop.f32.mrf.mxu0
    %v6719 = vadd.f32 %v6670, %v6718
    %v6720 = vpop.f32.mrf.mxu0
    %v6721 = vadd.f32 %v6672, %v6720
    %6722 = vmatmul.bf16.gmra.mxu0 %v890
    %v6723 = vpop.f32.mrf.mxu0
    %v6724 = vadd.f32 %v6675, %v6723
    %v6725 = vpop.f32.mrf.mxu0
    %v6726 = vadd.f32 %v6677, %v6725
    %6727 = vmatmul.bf16.gmra.mxu0 %v898
    %v6728 = vpop.f32.mrf.mxu0
    %v6729 = vadd.f32 %v6680, %v6728
    %v6730 = vpop.f32.mrf.mxu0
    %v6731 = vadd.f32 %v6682, %v6730
    %6732 = vdwg.mxu0
    %6733 = vmatpush.bf16.msra.mxu0 %v3028
    %6734 = vmatpush.bf16.msra.mxu0 %v3020
    %6735 = vmatpush.bf16.msra.mxu0 %v3012
    %6736 = vmatpush.bf16.msra.mxu0 %v3004
    %6737 = vmatpush.bf16.msra.mxu0 %v2996
    %6738 = vmatpush.bf16.msra.mxu0 %v2988
    %6739 = vmatpush.bf16.msra.mxu0 %v2980
    %6740 = vmatpush.bf16.msra.mxu0 %v2972
    %6741 = vmatmul.bf16.gmra.mxu0 %v835
    %v6742 = vpop.f32.mrf.mxu0
    %v6743 = vadd.f32 %v1420, %v6742
    %v6744 = vpop.f32.mrf.mxu0
    %v6745 = vadd.f32 %v1420, %v6744
    %6746 = vmatmul.bf16.gmra.mxu0 %v843
    %v6747 = vpop.f32.mrf.mxu0
    %v6748 = vadd.f32 %v1420, %v6747
    %v6749 = vpop.f32.mrf.mxu0
    %v6750 = vadd.f32 %v1420, %v6749
    %6751 = vmatmul.bf16.gmra.mxu0 %v851
    %v6752 = vpop.f32.mrf.mxu0
    %v6753 = vadd.f32 %v1420, %v6752
    %v6754 = vpop.f32.mrf.mxu0
    %v6755 = vadd.f32 %v1420, %v6754
    %6756 = vmatmul.bf16.gmra.mxu0 %v859
    %v6757 = vpop.f32.mrf.mxu0
    %v6758 = vadd.f32 %v1420, %v6757
    %v6759 = vpop.f32.mrf.mxu0
    %v6760 = vadd.f32 %v1420, %v6759
    %6761 = vmatmul.bf16.gmra.mxu0 %v867
    %v6762 = vpop.f32.mrf.mxu0
    %v6763 = vadd.f32 %v1420, %v6762
    %v6764 = vpop.f32.mrf.mxu0
    %v6765 = vadd.f32 %v1420, %v6764
    %6766 = vmatmul.bf16.gmra.mxu0 %v875
    %v6767 = vpop.f32.mrf.mxu0
    %v6768 = vadd.f32 %v1420, %v6767
    %v6769 = vpop.f32.mrf.mxu0
    %v6770 = vadd.f32 %v1420, %v6769
    %6771 = vmatmul.bf16.gmra.mxu0 %v883
    %v6772 = vpop.f32.mrf.mxu0
    %v6773 = vadd.f32 %v1420, %v6772
    %v6774 = vpop.f32.mrf.mxu0
    %v6775 = vadd.f32 %v1420, %v6774
    %6776 = vmatmul.bf16.gmra.mxu0 %v891
    %v6777 = vpop.f32.mrf.mxu0
    %v6778 = vadd.f32 %v1420, %v6777
    %v6779 = vpop.f32.mrf.mxu0
    %v6780 = vadd.f32 %v1420, %v6779
    %6781 = vdwg.mxu0
    %6782 = vmatpush.bf16.msra.mxu0 %v3092
    %6783 = vmatpush.bf16.msra.mxu0 %v3084
    %6784 = vmatpush.bf16.msra.mxu0 %v3076
    %6785 = vmatpush.bf16.msra.mxu0 %v3068
    %6786 = vmatpush.bf16.msra.mxu0 %v3060
    %6787 = vmatpush.bf16.msra.mxu0 %v3052
    %6788 = vmatpush.bf16.msra.mxu0 %v3044
    %6789 = vmatpush.bf16.msra.mxu0 %v3036
    %6790 = vmatmul.bf16.gmra.mxu0 %v836
    %v6791 = vpop.f32.mrf.mxu0
    %v6792 = vadd.f32 %v6743, %v6791
    %v6793 = vpop.f32.mrf.mxu0
    %v6794 = vadd.f32 %v6745, %v6793
    %6795 = vmatmul.bf16.gmra.mxu0 %v844
    %v6796 = vpop.f32.mrf.mxu0
    %v6797 = vadd.f32 %v6748, %v6796
    %v6798 = vpop.f32.mrf.mxu0
    %v6799 = vadd.f32 %v6750, %v6798
    %6800 = vmatmul.bf16.gmra.mxu0 %v852
    %v6801 = vpop.f32.mrf.mxu0
    %v6802 = vadd.f32 %v6753, %v6801
    %v6803 = vpop.f32.mrf.mxu0
    %v6804 = vadd.f32 %v6755, %v6803
    %6805 = vmatmul.bf16.gmra.mxu0 %v860
    %v6806 = vpop.f32.mrf.mxu0
    %v6807 = vadd.f32 %v6758, %v6806
    %v6808 = vpop.f32.mrf.mxu0
    %v6809 = vadd.f32 %v6760, %v6808
    %6810 = vmatmul.bf16.gmra.mxu0 %v868
    %v6811 = vpop.f32.mrf.mxu0
    %v6812 = vadd.f32 %v6763, %v6811
    %v6813 = vpop.f32.mrf.mxu0
    %v6814 = vadd.f32 %v6765, %v6813
    %6815 = vmatmul.bf16.gmra.mxu0 %v876
    %v6816 = vpop.f32.mrf.mxu0
    %v6817 = vadd.f32 %v6768, %v6816
    %v6818 = vpop.f32.mrf.mxu0
    %v6819 = vadd.f32 %v6770, %v6818
    %6820 = vmatmul.bf16.gmra.mxu0 %v884
    %v6821 = vpop.f32.mrf.mxu0
    %v6822 = vadd.f32 %v6773, %v6821
    %v6823 = vpop.f32.mrf.mxu0
    %v6824 = vadd.f32 %v6775, %v6823
    %6825 = vmatmul.bf16.gmra.mxu0 %v892
    %v6826 = vpop.f32.mrf.mxu0
    %v6827 = vadd.f32 %v6778, %v6826
    %v6828 = vpop.f32.mrf.mxu0
    %v6829 = vadd.f32 %v6780, %v6828
    %6830 = vdwg.mxu0
    %6831 = vmatpush.bf16.msra.mxu0 %v3156
    %6832 = vmatpush.bf16.msra.mxu0 %v3148
    %6833 = vmatpush.bf16.msra.mxu0 %v3140
    %6834 = vmatpush.bf16.msra.mxu0 %v3132
    %6835 = vmatpush.bf16.msra.mxu0 %v3124
    %6836 = vmatpush.bf16.msra.mxu0 %v3116
    %6837 = vmatpush.bf16.msra.mxu0 %v3108
    %6838 = vmatpush.bf16.msra.mxu0 %v3100
    %6839 = vmatmul.bf16.gmra.mxu0 %v837
    %v6840 = vpop.f32.mrf.mxu0
    %v6841 = vadd.f32 %v6792, %v6840
    %v6842 = vpop.f32.mrf.mxu0
    %v6843 = vadd.f32 %v6794, %v6842
    %6844 = vmatmul.bf16.gmra.mxu0 %v845
    %v6845 = vpop.f32.mrf.mxu0
    %v6846 = vadd.f32 %v6797, %v6845
    %v6847 = vpop.f32.mrf.mxu0
    %v6848 = vadd.f32 %v6799, %v6847
    %6849 = vmatmul.bf16.gmra.mxu0 %v853
    %v6850 = vpop.f32.mrf.mxu0
    %v6851 = vadd.f32 %v6802, %v6850
    %v6852 = vpop.f32.mrf.mxu0
    %v6853 = vadd.f32 %v6804, %v6852
    %6854 = vmatmul.bf16.gmra.mxu0 %v861
    %v6855 = vpop.f32.mrf.mxu0
    %v6856 = vadd.f32 %v6807, %v6855
    %v6857 = vpop.f32.mrf.mxu0
    %v6858 = vadd.f32 %v6809, %v6857
    %6859 = vmatmul.bf16.gmra.mxu0 %v869
    %v6860 = vpop.f32.mrf.mxu0
    %v6861 = vadd.f32 %v6812, %v6860
    %v6862 = vpop.f32.mrf.mxu0
    %v6863 = vadd.f32 %v6814, %v6862
    %6864 = vmatmul.bf16.gmra.mxu0 %v877
    %v6865 = vpop.f32.mrf.mxu0
    %v6866 = vadd.f32 %v6817, %v6865
    %v6867 = vpop.f32.mrf.mxu0
    %v6868 = vadd.f32 %v6819, %v6867
    %6869 = vmatmul.bf16.gmra.mxu0 %v885
    %v6870 = vpop.f32.mrf.mxu0
    %v6871 = vadd.f32 %v6822, %v6870
    %v6872 = vpop.f32.mrf.mxu0
    %v6873 = vadd.f32 %v6824, %v6872
    %6874 = vmatmul.bf16.gmra.mxu0 %v893
    %v6875 = vpop.f32.mrf.mxu0
    %v6876 = vadd.f32 %v6827, %v6875
    %v6877 = vpop.f32.mrf.mxu0
    %v6878 = vadd.f32 %v6829, %v6877
    %6879 = vdwg.mxu0
    %6880 = vmatpush.bf16.msra.mxu0 %v3220
    %6881 = vmatpush.bf16.msra.mxu0 %v3212
    %6882 = vmatpush.bf16.msra.mxu0 %v3204
    %6883 = vmatpush.bf16.msra.mxu0 %v3196
    %6884 = vmatpush.bf16.msra.mxu0 %v3188
    %6885 = vmatpush.bf16.msra.mxu0 %v3180
    %6886 = vmatpush.bf16.msra.mxu0 %v3172
    %6887 = vmatpush.bf16.msra.mxu0 %v3164
    %6888 = vmatmul.bf16.gmra.mxu0 %v838
    %v6889 = vpop.f32.mrf.mxu0
    %v6890 = vadd.f32 %v6841, %v6889
    %v6891 = vpop.f32.mrf.mxu0
    %v6892 = vadd.f32 %v6843, %v6891
    %6893 = vmatmul.bf16.gmra.mxu0 %v846
    %v6894 = vpop.f32.mrf.mxu0
    %v6895 = vadd.f32 %v6846, %v6894
    %v6896 = vpop.f32.mrf.mxu0
    %v6897 = vadd.f32 %v6848, %v6896
    %6898 = vmatmul.bf16.gmra.mxu0 %v854
    %v6899 = vpop.f32.mrf.mxu0
    %v6900 = vadd.f32 %v6851, %v6899
    %v6901 = vpop.f32.mrf.mxu0
    %v6902 = vadd.f32 %v6853, %v6901
    %6903 = vmatmul.bf16.gmra.mxu0 %v862
    %v6904 = vpop.f32.mrf.mxu0
    %v6905 = vadd.f32 %v6856, %v6904
    %v6906 = vpop.f32.mrf.mxu0
    %v6907 = vadd.f32 %v6858, %v6906
    %6908 = vmatmul.bf16.gmra.mxu0 %v870
    %v6909 = vpop.f32.mrf.mxu0
    %v6910 = vadd.f32 %v6861, %v6909
    %v6911 = vpop.f32.mrf.mxu0
    %v6912 = vadd.f32 %v6863, %v6911
    %6913 = vmatmul.bf16.gmra.mxu0 %v878
    %v6914 = vpop.f32.mrf.mxu0
    %v6915 = vadd.f32 %v6866, %v6914
    %v6916 = vpop.f32.mrf.mxu0
    %v6917 = vadd.f32 %v6868, %v6916
    %6918 = vmatmul.bf16.gmra.mxu0 %v886
    %v6919 = vpop.f32.mrf.mxu0
    %v6920 = vadd.f32 %v6871, %v6919
    %v6921 = vpop.f32.mrf.mxu0
    %v6922 = vadd.f32 %v6873, %v6921
    %6923 = vmatmul.bf16.gmra.mxu0 %v894
    %v6924 = vpop.f32.mrf.mxu0
    %v6925 = vadd.f32 %v6876, %v6924
    %v6926 = vpop.f32.mrf.mxu0
    %v6927 = vadd.f32 %v6878, %v6926
    %6928 = vdwg.mxu0
    %6929 = vmatpush.bf16.msra.mxu0 %v3284
    %6930 = vmatpush.bf16.msra.mxu0 %v3276
    %6931 = vmatpush.bf16.msra.mxu0 %v3268
    %6932 = vmatpush.bf16.msra.mxu0 %v3260
    %6933 = vmatpush.bf16.msra.mxu0 %v3252
    %6934 = vmatpush.bf16.msra.mxu0 %v3244
    %6935 = vmatpush.bf16.msra.mxu0 %v3236
    %6936 = vmatpush.bf16.msra.mxu0 %v3228
    %6937 = vmatmul.bf16.gmra.mxu0 %v839
    %v6938 = vpop.f32.mrf.mxu0
    %v6939 = vadd.f32 %v6890, %v6938
    %v6940 = vpop.f32.mrf.mxu0
    %v6941 = vadd.f32 %v6892, %v6940
    %6942 = vmatmul.bf16.gmra.mxu0 %v847
    %v6943 = vpop.f32.mrf.mxu0
    %v6944 = vadd.f32 %v6895, %v6943
    %v6945 = vpop.f32.mrf.mxu0
    %v6946 = vadd.f32 %v6897, %v6945
    %6947 = vmatmul.bf16.gmra.mxu0 %v855
    %v6948 = vpop.f32.mrf.mxu0
    %v6949 = vadd.f32 %v6900, %v6948
    %v6950 = vpop.f32.mrf.mxu0
    %v6951 = vadd.f32 %v6902, %v6950
    %6952 = vmatmul.bf16.gmra.mxu0 %v863
    %v6953 = vpop.f32.mrf.mxu0
    %v6954 = vadd.f32 %v6905, %v6953
    %v6955 = vpop.f32.mrf.mxu0
    %v6956 = vadd.f32 %v6907, %v6955
    %6957 = vmatmul.bf16.gmra.mxu0 %v871
    %v6958 = vpop.f32.mrf.mxu0
    %v6959 = vadd.f32 %v6910, %v6958
    %v6960 = vpop.f32.mrf.mxu0
    %v6961 = vadd.f32 %v6912, %v6960
    %6962 = vmatmul.bf16.gmra.mxu0 %v879
    %v6963 = vpop.f32.mrf.mxu0
    %v6964 = vadd.f32 %v6915, %v6963
    %v6965 = vpop.f32.mrf.mxu0
    %v6966 = vadd.f32 %v6917, %v6965
    %6967 = vmatmul.bf16.gmra.mxu0 %v887
    %v6968 = vpop.f32.mrf.mxu0
    %v6969 = vadd.f32 %v6920, %v6968
    %v6970 = vpop.f32.mrf.mxu0
    %v6971 = vadd.f32 %v6922, %v6970
    %6972 = vmatmul.bf16.gmra.mxu0 %v895
    %v6973 = vpop.f32.mrf.mxu0
    %v6974 = vadd.f32 %v6925, %v6973
    %v6975 = vpop.f32.mrf.mxu0
    %v6976 = vadd.f32 %v6927, %v6975
    %6977 = vdwg.mxu0
    %6978 = vmatpush.bf16.msra.mxu0 %v3348
    %6979 = vmatpush.bf16.msra.mxu0 %v3340
    %6980 = vmatpush.bf16.msra.mxu0 %v3332
    %6981 = vmatpush.bf16.msra.mxu0 %v3324
    %6982 = vmatpush.bf16.msra.mxu0 %v3316
    %6983 = vmatpush.bf16.msra.mxu0 %v3308
    %6984 = vmatpush.bf16.msra.mxu0 %v3300
    %6985 = vmatpush.bf16.msra.mxu0 %v3292
    %6986 = vmatmul.bf16.gmra.mxu0 %v840
    %v6987 = vpop.f32.mrf.mxu0
    %v6988 = vadd.f32 %v6939, %v6987
    %v6989 = vpop.f32.mrf.mxu0
    %v6990 = vadd.f32 %v6941, %v6989
    %6991 = vmatmul.bf16.gmra.mxu0 %v848
    %v6992 = vpop.f32.mrf.mxu0
    %v6993 = vadd.f32 %v6944, %v6992
    %v6994 = vpop.f32.mrf.mxu0
    %v6995 = vadd.f32 %v6946, %v6994
    %6996 = vmatmul.bf16.gmra.mxu0 %v856
    %v6997 = vpop.f32.mrf.mxu0
    %v6998 = vadd.f32 %v6949, %v6997
    %v6999 = vpop.f32.mrf.mxu0
    %v7000 = vadd.f32 %v6951, %v6999
    %7001 = vmatmul.bf16.gmra.mxu0 %v864
    %v7002 = vpop.f32.mrf.mxu0
    %v7003 = vadd.f32 %v6954, %v7002
    %v7004 = vpop.f32.mrf.mxu0
    %v7005 = vadd.f32 %v6956, %v7004
    %7006 = vmatmul.bf16.gmra.mxu0 %v872
    %v7007 = vpop.f32.mrf.mxu0
    %v7008 = vadd.f32 %v6959, %v7007
    %v7009 = vpop.f32.mrf.mxu0
    %v7010 = vadd.f32 %v6961, %v7009
    %7011 = vmatmul.bf16.gmra.mxu0 %v880
    %v7012 = vpop.f32.mrf.mxu0
    %v7013 = vadd.f32 %v6964, %v7012
    %v7014 = vpop.f32.mrf.mxu0
    %v7015 = vadd.f32 %v6966, %v7014
    %7016 = vmatmul.bf16.gmra.mxu0 %v888
    %v7017 = vpop.f32.mrf.mxu0
    %v7018 = vadd.f32 %v6969, %v7017
    %v7019 = vpop.f32.mrf.mxu0
    %v7020 = vadd.f32 %v6971, %v7019
    %7021 = vmatmul.bf16.gmra.mxu0 %v896
    %v7022 = vpop.f32.mrf.mxu0
    %v7023 = vadd.f32 %v6974, %v7022
    %v7024 = vpop.f32.mrf.mxu0
    %v7025 = vadd.f32 %v6976, %v7024
    %7026 = vdwg.mxu0
    %7027 = vmatpush.bf16.msra.mxu0 %v3412
    %7028 = vmatpush.bf16.msra.mxu0 %v3404
    %7029 = vmatpush.bf16.msra.mxu0 %v3396
    %7030 = vmatpush.bf16.msra.mxu0 %v3388
    %7031 = vmatpush.bf16.msra.mxu0 %v3380
    %7032 = vmatpush.bf16.msra.mxu0 %v3372
    %7033 = vmatpush.bf16.msra.mxu0 %v3364
    %7034 = vmatpush.bf16.msra.mxu0 %v3356
    %7035 = vmatmul.bf16.gmra.mxu0 %v841
    %v7036 = vpop.f32.mrf.mxu0
    %v7037 = vadd.f32 %v6988, %v7036
    %v7038 = vpop.f32.mrf.mxu0
    %v7039 = vadd.f32 %v6990, %v7038
    %7040 = vmatmul.bf16.gmra.mxu0 %v849
    %v7041 = vpop.f32.mrf.mxu0
    %v7042 = vadd.f32 %v6993, %v7041
    %v7043 = vpop.f32.mrf.mxu0
    %v7044 = vadd.f32 %v6995, %v7043
    %7045 = vmatmul.bf16.gmra.mxu0 %v857
    %v7046 = vpop.f32.mrf.mxu0
    %v7047 = vadd.f32 %v6998, %v7046
    %v7048 = vpop.f32.mrf.mxu0
    %v7049 = vadd.f32 %v7000, %v7048
    %7050 = vmatmul.bf16.gmra.mxu0 %v865
    %v7051 = vpop.f32.mrf.mxu0
    %v7052 = vadd.f32 %v7003, %v7051
    %v7053 = vpop.f32.mrf.mxu0
    %v7054 = vadd.f32 %v7005, %v7053
    %7055 = vmatmul.bf16.gmra.mxu0 %v873
    %v7056 = vpop.f32.mrf.mxu0
    %v7057 = vadd.f32 %v7008, %v7056
    %v7058 = vpop.f32.mrf.mxu0
    %v7059 = vadd.f32 %v7010, %v7058
    %7060 = vmatmul.bf16.gmra.mxu0 %v881
    %v7061 = vpop.f32.mrf.mxu0
    %v7062 = vadd.f32 %v7013, %v7061
    %v7063 = vpop.f32.mrf.mxu0
    %v7064 = vadd.f32 %v7015, %v7063
    %7065 = vmatmul.bf16.gmra.mxu0 %v889
    %v7066 = vpop.f32.mrf.mxu0
    %v7067 = vadd.f32 %v7018, %v7066
    %v7068 = vpop.f32.mrf.mxu0
    %v7069 = vadd.f32 %v7020, %v7068
    %7070 = vmatmul.bf16.gmra.mxu0 %v897
    %v7071 = vpop.f32.mrf.mxu0
    %v7072 = vadd.f32 %v7023, %v7071
    %v7073 = vpop.f32.mrf.mxu0
    %v7074 = vadd.f32 %v7025, %v7073
    %7075 = vdwg.mxu0
    %7076 = vmatpush.bf16.msra.mxu0 %v3476
    %7077 = vmatpush.bf16.msra.mxu0 %v3468
    %7078 = vmatpush.bf16.msra.mxu0 %v3460
    %7079 = vmatpush.bf16.msra.mxu0 %v3452
    %7080 = vmatpush.bf16.msra.mxu0 %v3444
    %7081 = vmatpush.bf16.msra.mxu0 %v3436
    %7082 = vmatpush.bf16.msra.mxu0 %v3428
    %7083 = vmatpush.bf16.msra.mxu0 %v3420
    %7084 = vmatmul.bf16.gmra.mxu0 %v842
    %v7085 = vpop.f32.mrf.mxu0
    %v7086 = vadd.f32 %v7037, %v7085
    %v7087 = vpop.f32.mrf.mxu0
    %v7088 = vadd.f32 %v7039, %v7087
    %7089 = vmatmul.bf16.gmra.mxu0 %v850
    %v7090 = vpop.f32.mrf.mxu0
    %v7091 = vadd.f32 %v7042, %v7090
    %v7092 = vpop.f32.mrf.mxu0
    %v7093 = vadd.f32 %v7044, %v7092
    %7094 = vmatmul.bf16.gmra.mxu0 %v858
    %v7095 = vpop.f32.mrf.mxu0
    %v7096 = vadd.f32 %v7047, %v7095
    %v7097 = vpop.f32.mrf.mxu0
    %v7098 = vadd.f32 %v7049, %v7097
    %7099 = vmatmul.bf16.gmra.mxu0 %v866
    %v7100 = vpop.f32.mrf.mxu0
    %v7101 = vadd.f32 %v7052, %v7100
    %v7102 = vpop.f32.mrf.mxu0
    %v7103 = vadd.f32 %v7054, %v7102
    %7104 = vmatmul.bf16.gmra.mxu0 %v874
    %v7105 = vpop.f32.mrf.mxu0
    %v7106 = vadd.f32 %v7057, %v7105
    %v7107 = vpop.f32.mrf.mxu0
    %v7108 = vadd.f32 %v7059, %v7107
    %7109 = vmatmul.bf16.gmra.mxu0 %v882
    %v7110 = vpop.f32.mrf.mxu0
    %v7111 = vadd.f32 %v7062, %v7110
    %v7112 = vpop.f32.mrf.mxu0
    %v7113 = vadd.f32 %v7064, %v7112
    %7114 = vmatmul.bf16.gmra.mxu0 %v890
    %v7115 = vpop.f32.mrf.mxu0
    %v7116 = vadd.f32 %v7067, %v7115
    %v7117 = vpop.f32.mrf.mxu0
    %v7118 = vadd.f32 %v7069, %v7117
    %7119 = vmatmul.bf16.gmra.mxu0 %v898
    %v7120 = vpop.f32.mrf.mxu0
    %v7121 = vadd.f32 %v7072, %v7120
    %v7122 = vpop.f32.mrf.mxu0
    %v7123 = vadd.f32 %v7074, %v7122
    %7124 = vdwg.mxu0
    %v7125 = vmax.f32 %v4342, 0.0
    %v7126 = vmax.f32 %v4734, 0.0
    %v7127 = vmax.f32 %v5126, 0.0
    %v7128 = vmax.f32 %v5518, 0.0
    %v7129 = vmax.f32 %v5910, 0.0
    %v7130 = vmax.f32 %v6302, 0.0
    %v7131 = vmax.f32 %v6694, 0.0
    %v7132 = vmax.f32 %v7086, 0.0
    %v7133 = vmax.f32 %v4344, 0.0
    %v7134 = vmax.f32 %v4736, 0.0
    %v7135 = vmax.f32 %v5128, 0.0
    %v7136 = vmax.f32 %v5520, 0.0
    %v7137 = vmax.f32 %v5912, 0.0
    %v7138 = vmax.f32 %v6304, 0.0
    %v7139 = vmax.f32 %v6696, 0.0
    %v7140 = vmax.f32 %v7088, 0.0
    %v7141 = vmax.f32 %v4347, 0.0
    %v7142 = vmax.f32 %v4739, 0.0
    %v7143 = vmax.f32 %v5131, 0.0
    %v7144 = vmax.f32 %v5523, 0.0
    %v7145 = vmax.f32 %v5915, 0.0
    %v7146 = vmax.f32 %v6307, 0.0
    %v7147 = vmax.f32 %v6699, 0.0
    %v7148 = vmax.f32 %v7091, 0.0
    %v7149 = vmax.f32 %v4349, 0.0
    %v7150 = vmax.f32 %v4741, 0.0
    %v7151 = vmax.f32 %v5133, 0.0
    %v7152 = vmax.f32 %v5525, 0.0
    %v7153 = vmax.f32 %v5917, 0.0
    %v7154 = vmax.f32 %v6309, 0.0
    %v7155 = vmax.f32 %v6701, 0.0
    %v7156 = vmax.f32 %v7093, 0.0
    %v7157 = vmax.f32 %v4352, 0.0
    %v7158 = vmax.f32 %v4744, 0.0
    %v7159 = vmax.f32 %v5136, 0.0
    %v7160 = vmax.f32 %v5528, 0.0
    %v7161 = vmax.f32 %v5920, 0.0
    %v7162 = vmax.f32 %v6312, 0.0
    %v7163 = vmax.f32 %v6704, 0.0
    %v7164 = vmax.f32 %v7096, 0.0
    %v7165 = vmax.f32 %v4354, 0.0
    %v7166 = vmax.f32 %v4746, 0.0
    %v7167 = vmax.f32 %v5138, 0.0
    %v7168 = vmax.f32 %v5530, 0.0
    %v7169 = vmax.f32 %v5922, 0.0
    %v7170 = vmax.f32 %v6314, 0.0
    %v7171 = vmax.f32 %v6706, 0.0
    %v7172 = vmax.f32 %v7098, 0.0
    %v7173 = vmax.f32 %v4357, 0.0
    %v7174 = vmax.f32 %v4749, 0.0
    %v7175 = vmax.f32 %v5141, 0.0
    %v7176 = vmax.f32 %v5533, 0.0
    %v7177 = vmax.f32 %v5925, 0.0
    %v7178 = vmax.f32 %v6317, 0.0
    %v7179 = vmax.f32 %v6709, 0.0
    %v7180 = vmax.f32 %v7101, 0.0
    %v7181 = vmax.f32 %v4359, 0.0
    %v7182 = vmax.f32 %v4751, 0.0
    %v7183 = vmax.f32 %v5143, 0.0
    %v7184 = vmax.f32 %v5535, 0.0
    %v7185 = vmax.f32 %v5927, 0.0
    %v7186 = vmax.f32 %v6319, 0.0
    %v7187 = vmax.f32 %v6711, 0.0
    %v7188 = vmax.f32 %v7103, 0.0
    %v7189 = vmax.f32 %v4362, 0.0
    %v7190 = vmax.f32 %v4754, 0.0
    %v7191 = vmax.f32 %v5146, 0.0
    %v7192 = vmax.f32 %v5538, 0.0
    %v7193 = vmax.f32 %v5930, 0.0
    %v7194 = vmax.f32 %v6322, 0.0
    %v7195 = vmax.f32 %v6714, 0.0
    %v7196 = vmax.f32 %v7106, 0.0
    %v7197 = vmax.f32 %v4364, 0.0
    %v7198 = vmax.f32 %v4756, 0.0
    %v7199 = vmax.f32 %v5148, 0.0
    %v7200 = vmax.f32 %v5540, 0.0
    %v7201 = vmax.f32 %v5932, 0.0
    %v7202 = vmax.f32 %v6324, 0.0
    %v7203 = vmax.f32 %v6716, 0.0
    %v7204 = vmax.f32 %v7108, 0.0
    %v7205 = vmax.f32 %v4367, 0.0
    %v7206 = vmax.f32 %v4759, 0.0
    %v7207 = vmax.f32 %v5151, 0.0
    %v7208 = vmax.f32 %v5543, 0.0
    %v7209 = vmax.f32 %v5935, 0.0
    %v7210 = vmax.f32 %v6327, 0.0
    %v7211 = vmax.f32 %v6719, 0.0
    %v7212 = vmax.f32 %v7111, 0.0
    %v7213 = vmax.f32 %v4369, 0.0
    %v7214 = vmax.f32 %v4761, 0.0
    %v7215 = vmax.f32 %v5153, 0.0
    %v7216 = vmax.f32 %v5545, 0.0
    %v7217 = vmax.f32 %v5937, 0.0
    %v7218 = vmax.f32 %v6329, 0.0
    %v7219 = vmax.f32 %v6721, 0.0
    %v7220 = vmax.f32 %v7113, 0.0
    %v7221 = vmax.f32 %v4372, 0.0
    %v7222 = vmax.f32 %v4764, 0.0
    %v7223 = vmax.f32 %v5156, 0.0
    %v7224 = vmax.f32 %v5548, 0.0
    %v7225 = vmax.f32 %v5940, 0.0
    %v7226 = vmax.f32 %v6332, 0.0
    %v7227 = vmax.f32 %v6724, 0.0
    %v7228 = vmax.f32 %v7116, 0.0
    %v7229 = vmax.f32 %v4374, 0.0
    %v7230 = vmax.f32 %v4766, 0.0
    %v7231 = vmax.f32 %v5158, 0.0
    %v7232 = vmax.f32 %v5550, 0.0
    %v7233 = vmax.f32 %v5942, 0.0
    %v7234 = vmax.f32 %v6334, 0.0
    %v7235 = vmax.f32 %v6726, 0.0
    %v7236 = vmax.f32 %v7118, 0.0
    %v7237 = vmax.f32 %v4377, 0.0
    %v7238 = vmax.f32 %v4769, 0.0
    %v7239 = vmax.f32 %v5161, 0.0
    %v7240 = vmax.f32 %v5553, 0.0
    %v7241 = vmax.f32 %v5945, 0.0
    %v7242 = vmax.f32 %v6337, 0.0
    %v7243 = vmax.f32 %v6729, 0.0
    %v7244 = vmax.f32 %v7121, 0.0
    %v7245 = vmax.f32 %v4379, 0.0
    %v7246 = vmax.f32 %v4771, 0.0
    %v7247 = vmax.f32 %v5163, 0.0
    %v7248 = vmax.f32 %v5555, 0.0
    %v7249 = vmax.f32 %v5947, 0.0
    %v7250 = vmax.f32 %v6339, 0.0
    %v7251 = vmax.f32 %v6731, 0.0
    %v7252 = vmax.f32 %v7123, 0.0
    %v7253 = vpack.c.bf16 %v7133, %v7125
    %v7254 = vpack.c.bf16 %v7134, %v7126
    %v7255 = vpack.c.bf16 %v7135, %v7127
    %v7256 = vpack.c.bf16 %v7136, %v7128
    %v7257 = vpack.c.bf16 %v7137, %v7129
    %v7258 = vpack.c.bf16 %v7138, %v7130
    %v7259 = vpack.c.bf16 %v7139, %v7131
    %v7260 = vpack.c.bf16 %v7140, %v7132
    %v7261 = vpack.c.bf16 %v7149, %v7141
    %v7262 = vpack.c.bf16 %v7150, %v7142
    %v7263 = vpack.c.bf16 %v7151, %v7143
    %v7264 = vpack.c.bf16 %v7152, %v7144
    %v7265 = vpack.c.bf16 %v7153, %v7145
    %v7266 = vpack.c.bf16 %v7154, %v7146
    %v7267 = vpack.c.bf16 %v7155, %v7147
    %v7268 = vpack.c.bf16 %v7156, %v7148
    %v7269 = vpack.c.bf16 %v7165, %v7157
    %v7270 = vpack.c.bf16 %v7166, %v7158
    %v7271 = vpack.c.bf16 %v7167, %v7159
    %v7272 = vpack.c.bf16 %v7168, %v7160
    %v7273 = vpack.c.bf16 %v7169, %v7161
    %v7274 = vpack.c.bf16 %v7170, %v7162
    %v7275 = vpack.c.bf16 %v7171, %v7163
    %v7276 = vpack.c.bf16 %v7172, %v7164
    %v7277 = vpack.c.bf16 %v7181, %v7173
    %v7278 = vpack.c.bf16 %v7182, %v7174
    %v7279 = vpack.c.bf16 %v7183, %v7175
    %v7280 = vpack.c.bf16 %v7184, %v7176
    %v7281 = vpack.c.bf16 %v7185, %v7177
    %v7282 = vpack.c.bf16 %v7186, %v7178
    %v7283 = vpack.c.bf16 %v7187, %v7179
    %v7284 = vpack.c.bf16 %v7188, %v7180
    %v7285 = vpack.c.bf16 %v7197, %v7189
    %v7286 = vpack.c.bf16 %v7198, %v7190
    %v7287 = vpack.c.bf16 %v7199, %v7191
    %v7288 = vpack.c.bf16 %v7200, %v7192
    %v7289 = vpack.c.bf16 %v7201, %v7193
    %v7290 = vpack.c.bf16 %v7202, %v7194
    %v7291 = vpack.c.bf16 %v7203, %v7195
    %v7292 = vpack.c.bf16 %v7204, %v7196
    %v7293 = vpack.c.bf16 %v7213, %v7205
    %v7294 = vpack.c.bf16 %v7214, %v7206
    %v7295 = vpack.c.bf16 %v7215, %v7207
    %v7296 = vpack.c.bf16 %v7216, %v7208
    %v7297 = vpack.c.bf16 %v7217, %v7209
    %v7298 = vpack.c.bf16 %v7218, %v7210
    %v7299 = vpack.c.bf16 %v7219, %v7211
    %v7300 = vpack.c.bf16 %v7220, %v7212
    %v7301 = vpack.c.bf16 %v7229, %v7221
    %v7302 = vpack.c.bf16 %v7230, %v7222
    %v7303 = vpack.c.bf16 %v7231, %v7223
    %v7304 = vpack.c.bf16 %v7232, %v7224
    %v7305 = vpack.c.bf16 %v7233, %v7225
    %v7306 = vpack.c.bf16 %v7234, %v7226
    %v7307 = vpack.c.bf16 %v7235, %v7227
    %v7308 = vpack.c.bf16 %v7236, %v7228
    %v7309 = vpack.c.bf16 %v7245, %v7237
    %v7310 = vpack.c.bf16 %v7246, %v7238
    %v7311 = vpack.c.bf16 %v7247, %v7239
    %v7312 = vpack.c.bf16 %v7248, %v7240
    %v7313 = vpack.c.bf16 %v7249, %v7241
    %v7314 = vpack.c.bf16 %v7250, %v7242
    %v7315 = vpack.c.bf16 %v7251, %v7243
    %v7316 = vpack.c.bf16 %v7252, %v7244
    %v7317 = vld [vmem:[#allocation11] sm:$0xf]
    %v7318 = vld [vmem:[#allocation11 + $0x4] sm:$0xf]
    %v7319 = vld [vmem:[#allocation11 + $0x8] sm:$0xf]
    %v7320 = vld [vmem:[#allocation11 + $0xc] sm:$0xf]
    %v7321 = vld [vmem:[#allocation11 + $0x10] sm:$0xf]
    %v7322 = vld [vmem:[#allocation11 + $0x14] sm:$0xf]
    %v7323 = vld [vmem:[#allocation11 + $0x18] sm:$0xf]
    %v7324 = vld [vmem:[#allocation11 + $0x1c] sm:$0xf]
    %v7325 = vld [vmem:[#allocation11 + $0x20] sm:$0xf]
    %v7326 = vld [vmem:[#allocation11 + $0x24] sm:$0xf]
    %v7327 = vld [vmem:[#allocation11 + $0x28] sm:$0xf]
    %v7328 = vld [vmem:[#allocation11 + $0x2c] sm:$0xf]
    %v7329 = vld [vmem:[#allocation11 + $0x30] sm:$0xf]
    %v7330 = vld [vmem:[#allocation11 + $0x34] sm:$0xf]
    %v7331 = vld [vmem:[#allocation11 + $0x38] sm:$0xf]
    %v7332 = vld [vmem:[#allocation11 + $0x3c] sm:$0xf]
    %v7333 = vld [vmem:[#allocation11 + $0x40] sm:$0xf]
    %v7334 = vld [vmem:[#allocation11 + $0x44] sm:$0xf]
    %v7335 = vld [vmem:[#allocation11 + $0x48] sm:$0xf]
    %v7336 = vld [vmem:[#allocation11 + $0x4c] sm:$0xf]
    %v7337 = vld [vmem:[#allocation11 + $0x50] sm:$0xf]
    %v7338 = vld [vmem:[#allocation11 + $0x54] sm:$0xf]
    %v7339 = vld [vmem:[#allocation11 + $0x58] sm:$0xf]
    %v7340 = vld [vmem:[#allocation11 + $0x5c] sm:$0xf]
    %v7341 = vld [vmem:[#allocation11 + $0x60] sm:$0xf]
    %v7342 = vld [vmem:[#allocation11 + $0x64] sm:$0xf]
    %v7343 = vld [vmem:[#allocation11 + $0x68] sm:$0xf]
    %v7344 = vld [vmem:[#allocation11 + $0x6c] sm:$0xf]
    %v7345 = vld [vmem:[#allocation11 + $0x70] sm:$0xf]
    %v7346 = vld [vmem:[#allocation11 + $0x74] sm:$0xf]
    %v7347 = vld [vmem:[#allocation11 + $0x78] sm:$0xf]
    %v7348 = vld [vmem:[#allocation11 + $0x7c] sm:$0xf]
    %v7349 = vld [vmem:[#allocation11 + $0x80] sm:$0xf]
    %v7350 = vld [vmem:[#allocation11 + $0x84] sm:$0xf]
    %v7351 = vld [vmem:[#allocation11 + $0x88] sm:$0xf]
    %v7352 = vld [vmem:[#allocation11 + $0x8c] sm:$0xf]
    %v7353 = vld [vmem:[#allocation11 + $0x90] sm:$0xf]
    %v7354 = vld [vmem:[#allocation11 + $0x94] sm:$0xf]
    %v7355 = vld [vmem:[#allocation11 + $0x98] sm:$0xf]
    %v7356 = vld [vmem:[#allocation11 + $0x9c] sm:$0xf]
    %v7357 = vld [vmem:[#allocation11 + $0xa0] sm:$0xf]
    %v7358 = vld [vmem:[#allocation11 + $0xa4] sm:$0xf]
    %v7359 = vld [vmem:[#allocation11 + $0xa8] sm:$0xf]
    %v7360 = vld [vmem:[#allocation11 + $0xac] sm:$0xf]
    %v7361 = vld [vmem:[#allocation11 + $0xb0] sm:$0xf]
    %v7362 = vld [vmem:[#allocation11 + $0xb4] sm:$0xf]
    %v7363 = vld [vmem:[#allocation11 + $0xb8] sm:$0xf]
    %v7364 = vld [vmem:[#allocation11 + $0xbc] sm:$0xf]
    %v7365 = vld [vmem:[#allocation11 + $0xc0] sm:$0xf]
    %v7366 = vld [vmem:[#allocation11 + $0xc4] sm:$0xf]
    %v7367 = vld [vmem:[#allocation11 + $0xc8] sm:$0xf]
    %v7368 = vld [vmem:[#allocation11 + $0xcc] sm:$0xf]
    %v7369 = vld [vmem:[#allocation11 + $0xd0] sm:$0xf]
    %v7370 = vld [vmem:[#allocation11 + $0xd4] sm:$0xf]
    %v7371 = vld [vmem:[#allocation11 + $0xd8] sm:$0xf]
    %v7372 = vld [vmem:[#allocation11 + $0xdc] sm:$0xf]
    %v7373 = vld [vmem:[#allocation11 + $0xe0] sm:$0xf]
    %v7374 = vld [vmem:[#allocation11 + $0xe4] sm:$0xf]
    %v7375 = vld [vmem:[#allocation11 + $0xe8] sm:$0xf]
    %v7376 = vld [vmem:[#allocation11 + $0xec] sm:$0xf]
    %v7377 = vld [vmem:[#allocation11 + $0xf0] sm:$0xf]
    %v7378 = vld [vmem:[#allocation11 + $0xf4] sm:$0xf]
    %v7379 = vld [vmem:[#allocation11 + $0xf8] sm:$0xf]
    %v7380 = vld [vmem:[#allocation11 + $0xfc] sm:$0xf]
    %v7381 = vld [vmem:[#allocation11 + $0x100] sm:$0xf]
    %v7382 = vld [vmem:[#allocation11 + $0x104] sm:$0xf]
    %v7383 = vld [vmem:[#allocation11 + $0x108] sm:$0xf]
    %v7384 = vld [vmem:[#allocation11 + $0x10c] sm:$0xf]
    %v7385 = vld [vmem:[#allocation11 + $0x110] sm:$0xf]
    %v7386 = vld [vmem:[#allocation11 + $0x114] sm:$0xf]
    %v7387 = vld [vmem:[#allocation11 + $0x118] sm:$0xf]
    %v7388 = vld [vmem:[#allocation11 + $0x11c] sm:$0xf]
    %v7389 = vld [vmem:[#allocation11 + $0x120] sm:$0xf]
    %v7390 = vld [vmem:[#allocation11 + $0x124] sm:$0xf]
    %v7391 = vld [vmem:[#allocation11 + $0x128] sm:$0xf]
    %v7392 = vld [vmem:[#allocation11 + $0x12c] sm:$0xf]
    %v7393 = vld [vmem:[#allocation11 + $0x130] sm:$0xf]
    %v7394 = vld [vmem:[#allocation11 + $0x134] sm:$0xf]
    %v7395 = vld [vmem:[#allocation11 + $0x138] sm:$0xf]
    %v7396 = vld [vmem:[#allocation11 + $0x13c] sm:$0xf]
    %v7397 = vld [vmem:[#allocation11 + $0x140] sm:$0xf]
    %v7398 = vld [vmem:[#allocation11 + $0x144] sm:$0xf]
    %v7399 = vld [vmem:[#allocation11 + $0x148] sm:$0xf]
    %v7400 = vld [vmem:[#allocation11 + $0x14c] sm:$0xf]
    %v7401 = vld [vmem:[#allocation11 + $0x150] sm:$0xf]
    %v7402 = vld [vmem:[#allocation11 + $0x154] sm:$0xf]
    %v7403 = vld [vmem:[#allocation11 + $0x158] sm:$0xf]
    %v7404 = vld [vmem:[#allocation11 + $0x15c] sm:$0xf]
    %v7405 = vld [vmem:[#allocation11 + $0x160] sm:$0xf]
    %v7406 = vld [vmem:[#allocation11 + $0x164] sm:$0xf]
    %v7407 = vld [vmem:[#allocation11 + $0x168] sm:$0xf]
    %v7408 = vld [vmem:[#allocation11 + $0x16c] sm:$0xf]
    %v7409 = vld [vmem:[#allocation11 + $0x170] sm:$0xf]
    %v7410 = vld [vmem:[#allocation11 + $0x174] sm:$0xf]
    %v7411 = vld [vmem:[#allocation11 + $0x178] sm:$0xf]
    %v7412 = vld [vmem:[#allocation11 + $0x17c] sm:$0xf]
    %v7413 = vld [vmem:[#allocation11 + $0x180] sm:$0xf]
    %v7414 = vld [vmem:[#allocation11 + $0x184] sm:$0xf]
    %v7415 = vld [vmem:[#allocation11 + $0x188] sm:$0xf]
    %v7416 = vld [vmem:[#allocation11 + $0x18c] sm:$0xf]
    %v7417 = vld [vmem:[#allocation11 + $0x190] sm:$0xf]
    %v7418 = vld [vmem:[#allocation11 + $0x194] sm:$0xf]
    %v7419 = vld [vmem:[#allocation11 + $0x198] sm:$0xf]
    %v7420 = vld [vmem:[#allocation11 + $0x19c] sm:$0xf]
    %v7421 = vld [vmem:[#allocation11 + $0x1a0] sm:$0xf]
    %v7422 = vld [vmem:[#allocation11 + $0x1a4] sm:$0xf]
    %v7423 = vld [vmem:[#allocation11 + $0x1a8] sm:$0xf]
    %v7424 = vld [vmem:[#allocation11 + $0x1ac] sm:$0xf]
    %v7425 = vld [vmem:[#allocation11 + $0x1b0] sm:$0xf]
    %v7426 = vld [vmem:[#allocation11 + $0x1b4] sm:$0xf]
    %v7427 = vld [vmem:[#allocation11 + $0x1b8] sm:$0xf]
    %v7428 = vld [vmem:[#allocation11 + $0x1bc] sm:$0xf]
    %v7429 = vld [vmem:[#allocation11 + $0x1c0] sm:$0xf]
    %v7430 = vld [vmem:[#allocation11 + $0x1c4] sm:$0xf]
    %v7431 = vld [vmem:[#allocation11 + $0x1c8] sm:$0xf]
    %v7432 = vld [vmem:[#allocation11 + $0x1cc] sm:$0xf]
    %v7433 = vld [vmem:[#allocation11 + $0x1d0] sm:$0xf]
    %v7434 = vld [vmem:[#allocation11 + $0x1d4] sm:$0xf]
    %v7435 = vld [vmem:[#allocation11 + $0x1d8] sm:$0xf]
    %v7436 = vld [vmem:[#allocation11 + $0x1dc] sm:$0xf]
    %v7437 = vld [vmem:[#allocation11 + $0x1e0] sm:$0xf]
    %v7438 = vld [vmem:[#allocation11 + $0x1e4] sm:$0xf]
    %v7439 = vld [vmem:[#allocation11 + $0x1e8] sm:$0xf]
    %v7440 = vld [vmem:[#allocation11 + $0x1ec] sm:$0xf]
    %v7441 = vld [vmem:[#allocation11 + $0x1f0] sm:$0xf]
    %v7442 = vld [vmem:[#allocation11 + $0x1f4] sm:$0xf]
    %v7443 = vld [vmem:[#allocation11 + $0x1f8] sm:$0xf]
    %v7444 = vld [vmem:[#allocation11 + $0x1fc] sm:$0xf]
    %v7445 = vld [vmem:[#allocation12] sm:$0x1]
    %v7447 = vperm.slane %v7445, 0
    %v7577 = vunpack.c.l.b16 %v7317
    %v7578 = vunpack.c.l.b16 %v7318
    %v7579 = vunpack.c.l.b16 %v7319
    %v7580 = vunpack.c.l.b16 %v7320
    %v7581 = vunpack.c.l.b16 %v7321
    %v7582 = vunpack.c.l.b16 %v7322
    %v7583 = vunpack.c.l.b16 %v7323
    %v7584 = vunpack.c.l.b16 %v7324
    %v7585 = vunpack.c.l.b16 %v7325
    %v7586 = vunpack.c.l.b16 %v7326
    %v7587 = vunpack.c.l.b16 %v7327
    %v7588 = vunpack.c.l.b16 %v7328
    %v7589 = vunpack.c.l.b16 %v7329
    %v7590 = vunpack.c.l.b16 %v7330
    %v7591 = vunpack.c.l.b16 %v7331
    %v7592 = vunpack.c.l.b16 %v7332
    %v7593 = vunpack.c.l.b16 %v7333
    %v7594 = vunpack.c.l.b16 %v7334
    %v7595 = vunpack.c.l.b16 %v7335
    %v7596 = vunpack.c.l.b16 %v7336
    %v7597 = vunpack.c.l.b16 %v7337
    %v7598 = vunpack.c.l.b16 %v7338
    %v7599 = vunpack.c.l.b16 %v7339
    %v7600 = vunpack.c.l.b16 %v7340
    %v7601 = vunpack.c.l.b16 %v7341
    %v7602 = vunpack.c.l.b16 %v7342
    %v7603 = vunpack.c.l.b16 %v7343
    %v7604 = vunpack.c.l.b16 %v7344
    %v7605 = vunpack.c.l.b16 %v7345
    %v7606 = vunpack.c.l.b16 %v7346
    %v7607 = vunpack.c.l.b16 %v7347
    %v7608 = vunpack.c.l.b16 %v7348
    %v7609 = vunpack.c.l.b16 %v7349
    %v7610 = vunpack.c.l.b16 %v7350
    %v7611 = vunpack.c.l.b16 %v7351
    %v7612 = vunpack.c.l.b16 %v7352
    %v7613 = vunpack.c.l.b16 %v7353
    %v7614 = vunpack.c.l.b16 %v7354
    %v7615 = vunpack.c.l.b16 %v7355
    %v7616 = vunpack.c.l.b16 %v7356
    %v7617 = vunpack.c.l.b16 %v7357
    %v7618 = vunpack.c.l.b16 %v7358
    %v7619 = vunpack.c.l.b16 %v7359
    %v7620 = vunpack.c.l.b16 %v7360
    %v7621 = vunpack.c.l.b16 %v7361
    %v7622 = vunpack.c.l.b16 %v7362
    %v7623 = vunpack.c.l.b16 %v7363
    %v7624 = vunpack.c.l.b16 %v7364
    %v7625 = vunpack.c.l.b16 %v7365
    %v7626 = vunpack.c.l.b16 %v7366
    %v7627 = vunpack.c.l.b16 %v7367
    %v7628 = vunpack.c.l.b16 %v7368
    %v7629 = vunpack.c.l.b16 %v7369
    %v7630 = vunpack.c.l.b16 %v7370
    %v7631 = vunpack.c.l.b16 %v7371
    %v7632 = vunpack.c.l.b16 %v7372
    %v7633 = vunpack.c.l.b16 %v7373
    %v7634 = vunpack.c.l.b16 %v7374
    %v7635 = vunpack.c.l.b16 %v7375
    %v7636 = vunpack.c.l.b16 %v7376
    %v7637 = vunpack.c.l.b16 %v7377
    %v7638 = vunpack.c.l.b16 %v7378
    %v7639 = vunpack.c.l.b16 %v7379
    %v7640 = vunpack.c.l.b16 %v7380
    %v7641 = vunpack.c.l.b16 %v7381
    %v7642 = vunpack.c.l.b16 %v7382
    %v7643 = vunpack.c.l.b16 %v7383
    %v7644 = vunpack.c.l.b16 %v7384
    %v7645 = vunpack.c.l.b16 %v7385
    %v7646 = vunpack.c.l.b16 %v7386
    %v7647 = vunpack.c.l.b16 %v7387
    %v7648 = vunpack.c.l.b16 %v7388
    %v7649 = vunpack.c.l.b16 %v7389
    %v7650 = vunpack.c.l.b16 %v7390
    %v7651 = vunpack.c.l.b16 %v7391
    %v7652 = vunpack.c.l.b16 %v7392
    %v7653 = vunpack.c.l.b16 %v7393
    %v7654 = vunpack.c.l.b16 %v7394
    %v7655 = vunpack.c.l.b16 %v7395
    %v7656 = vunpack.c.l.b16 %v7396
    %v7657 = vunpack.c.l.b16 %v7397
    %v7658 = vunpack.c.l.b16 %v7398
    %v7659 = vunpack.c.l.b16 %v7399
    %v7660 = vunpack.c.l.b16 %v7400
    %v7661 = vunpack.c.l.b16 %v7401
    %v7662 = vunpack.c.l.b16 %v7402
    %v7663 = vunpack.c.l.b16 %v7403
    %v7664 = vunpack.c.l.b16 %v7404
    %v7665 = vunpack.c.l.b16 %v7405
    %v7666 = vunpack.c.l.b16 %v7406
    %v7667 = vunpack.c.l.b16 %v7407
    %v7668 = vunpack.c.l.b16 %v7408
    %v7669 = vunpack.c.l.b16 %v7409
    %v7670 = vunpack.c.l.b16 %v7410
    %v7671 = vunpack.c.l.b16 %v7411
    %v7672 = vunpack.c.l.b16 %v7412
    %v7673 = vunpack.c.l.b16 %v7413
    %v7674 = vunpack.c.l.b16 %v7414
    %v7675 = vunpack.c.l.b16 %v7415
    %v7676 = vunpack.c.l.b16 %v7416
    %v7677 = vunpack.c.l.b16 %v7417
    %v7678 = vunpack.c.l.b16 %v7418
    %v7679 = vunpack.c.l.b16 %v7419
    %v7680 = vunpack.c.l.b16 %v7420
    %v7681 = vunpack.c.l.b16 %v7421
    %v7682 = vunpack.c.l.b16 %v7422
    %v7683 = vunpack.c.l.b16 %v7423
    %v7684 = vunpack.c.l.b16 %v7424
    %v7685 = vunpack.c.l.b16 %v7425
    %v7686 = vunpack.c.l.b16 %v7426
    %v7687 = vunpack.c.l.b16 %v7427
    %v7688 = vunpack.c.l.b16 %v7428
    %v7689 = vunpack.c.l.b16 %v7429
    %v7690 = vunpack.c.l.b16 %v7430
    %v7691 = vunpack.c.l.b16 %v7431
    %v7692 = vunpack.c.l.b16 %v7432
    %v7693 = vunpack.c.l.b16 %v7433
    %v7694 = vunpack.c.l.b16 %v7434
    %v7695 = vunpack.c.l.b16 %v7435
    %v7696 = vunpack.c.l.b16 %v7436
    %v7697 = vunpack.c.l.b16 %v7437
    %v7698 = vunpack.c.l.b16 %v7438
    %v7699 = vunpack.c.l.b16 %v7439
    %v7700 = vunpack.c.l.b16 %v7440
    %v7701 = vunpack.c.l.b16 %v7441
    %v7702 = vunpack.c.l.b16 %v7442
    %v7703 = vunpack.c.l.b16 %v7443
    %v7704 = vunpack.c.l.b16 %v7444
    %v7705 = vpack.c.b16 %v7578, %v7577
    %v7706 = vpack.c.b16 %v7580, %v7579
    %v7707 = vpack.c.b16 %v7582, %v7581
    %v7708 = vpack.c.b16 %v7584, %v7583
    %v7709 = vpack.c.b16 %v7586, %v7585
    %v7710 = vpack.c.b16 %v7588, %v7587
    %v7711 = vpack.c.b16 %v7590, %v7589
    %v7712 = vpack.c.b16 %v7592, %v7591
    %v7713 = vpack.c.b16 %v7594, %v7593
    %v7714 = vpack.c.b16 %v7596, %v7595
    %v7715 = vpack.c.b16 %v7598, %v7597
    %v7716 = vpack.c.b16 %v7600, %v7599
    %v7717 = vpack.c.b16 %v7602, %v7601
    %v7718 = vpack.c.b16 %v7604, %v7603
    %v7719 = vpack.c.b16 %v7606, %v7605
    %v7720 = vpack.c.b16 %v7608, %v7607
    %v7721 = vpack.c.b16 %v7610, %v7609
    %v7722 = vpack.c.b16 %v7612, %v7611
    %v7723 = vpack.c.b16 %v7614, %v7613
    %v7724 = vpack.c.b16 %v7616, %v7615
    %v7725 = vpack.c.b16 %v7618, %v7617
    %v7726 = vpack.c.b16 %v7620, %v7619
    %v7727 = vpack.c.b16 %v7622, %v7621
    %v7728 = vpack.c.b16 %v7624, %v7623
    %v7729 = vpack.c.b16 %v7626, %v7625
    %v7730 = vpack.c.b16 %v7628, %v7627
    %v7731 = vpack.c.b16 %v7630, %v7629
    %v7732 = vpack.c.b16 %v7632, %v7631
    %v7733 = vpack.c.b16 %v7634, %v7633
    %v7734 = vpack.c.b16 %v7636, %v7635
    %v7735 = vpack.c.b16 %v7638, %v7637
    %v7736 = vpack.c.b16 %v7640, %v7639
    %v7737 = vpack.c.b16 %v7642, %v7641
    %v7738 = vpack.c.b16 %v7644, %v7643
    %v7739 = vpack.c.b16 %v7646, %v7645
    %v7740 = vpack.c.b16 %v7648, %v7647
    %v7741 = vpack.c.b16 %v7650, %v7649
    %v7742 = vpack.c.b16 %v7652, %v7651
    %v7743 = vpack.c.b16 %v7654, %v7653
    %v7744 = vpack.c.b16 %v7656, %v7655
    %v7745 = vpack.c.b16 %v7658, %v7657
    %v7746 = vpack.c.b16 %v7660, %v7659
    %v7747 = vpack.c.b16 %v7662, %v7661
    %v7748 = vpack.c.b16 %v7664, %v7663
    %v7749 = vpack.c.b16 %v7666, %v7665
    %v7750 = vpack.c.b16 %v7668, %v7667
    %v7751 = vpack.c.b16 %v7670, %v7669
    %v7752 = vpack.c.b16 %v7672, %v7671
    %v7753 = vpack.c.b16 %v7674, %v7673
    %v7754 = vpack.c.b16 %v7676, %v7675
    %v7755 = vpack.c.b16 %v7678, %v7677
    %v7756 = vpack.c.b16 %v7680, %v7679
    %v7757 = vpack.c.b16 %v7682, %v7681
    %v7758 = vpack.c.b16 %v7684, %v7683
    %v7759 = vpack.c.b16 %v7686, %v7685
    %v7760 = vpack.c.b16 %v7688, %v7687
    %v7761 = vpack.c.b16 %v7690, %v7689
    %v7762 = vpack.c.b16 %v7692, %v7691
    %v7763 = vpack.c.b16 %v7694, %v7693
    %v7764 = vpack.c.b16 %v7696, %v7695
    %v7765 = vpack.c.b16 %v7698, %v7697
    %v7766 = vpack.c.b16 %v7700, %v7699
    %v7767 = vpack.c.b16 %v7702, %v7701
    %v7768 = vpack.c.b16 %v7704, %v7703
    %7833 = vmatpush.bf16.msra.mxu0 %v7712
    %7834 = vmatpush.bf16.msra.mxu0 %v7711
    %7835 = vmatpush.bf16.msra.mxu0 %v7710
    %7836 = vmatpush.bf16.msra.mxu0 %v7709
    %7837 = vmatpush.bf16.msra.mxu0 %v7708
    %7838 = vmatpush.bf16.msra.mxu0 %v7707
    %7839 = vmatpush.bf16.msra.mxu0 %v7706
    %7840 = vmatpush.bf16.msra.mxu0 %v7705
    %7841 = vmatmul.bf16.gmra.mxu0 %v7253
    %v7842 = vpop.f32.mrf.mxu0
    %v7843 = vadd.f32 %v7447, %v7842
    %v7844 = vpop.f32.mrf.mxu0
    %v7845 = vadd.f32 %v7447, %v7844
    %7846 = vmatmul.bf16.gmra.mxu0 %v7261
    %v7847 = vpop.f32.mrf.mxu0
    %v7848 = vadd.f32 %v7447, %v7847
    %v7849 = vpop.f32.mrf.mxu0
    %v7850 = vadd.f32 %v7447, %v7849
    %7851 = vmatmul.bf16.gmra.mxu0 %v7269
    %v7852 = vpop.f32.mrf.mxu0
    %v7853 = vadd.f32 %v7447, %v7852
    %v7854 = vpop.f32.mrf.mxu0
    %v7855 = vadd.f32 %v7447, %v7854
    %7856 = vmatmul.bf16.gmra.mxu0 %v7277
    %v7857 = vpop.f32.mrf.mxu0
    %v7858 = vadd.f32 %v7447, %v7857
    %v7859 = vpop.f32.mrf.mxu0
    %v7860 = vadd.f32 %v7447, %v7859
    %7861 = vmatmul.bf16.gmra.mxu0 %v7285
    %v7862 = vpop.f32.mrf.mxu0
    %v7863 = vadd.f32 %v7447, %v7862
    %v7864 = vpop.f32.mrf.mxu0
    %v7865 = vadd.f32 %v7447, %v7864
    %7866 = vmatmul.bf16.gmra.mxu0 %v7293
    %v7867 = vpop.f32.mrf.mxu0
    %v7868 = vadd.f32 %v7447, %v7867
    %v7869 = vpop.f32.mrf.mxu0
    %v7870 = vadd.f32 %v7447, %v7869
    %7871 = vmatmul.bf16.gmra.mxu0 %v7301
    %v7872 = vpop.f32.mrf.mxu0
    %v7873 = vadd.f32 %v7447, %v7872
    %v7874 = vpop.f32.mrf.mxu0
    %v7875 = vadd.f32 %v7447, %v7874
    %7876 = vmatmul.bf16.gmra.mxu0 %v7309
    %v7877 = vpop.f32.mrf.mxu0
    %v7878 = vadd.f32 %v7447, %v7877
    %v7879 = vpop.f32.mrf.mxu0
    %v7880 = vadd.f32 %v7447, %v7879
    %7881 = vdwg.mxu0
    %7882 = vmatpush.bf16.msra.mxu0 %v7720
    %7883 = vmatpush.bf16.msra.mxu0 %v7719
    %7884 = vmatpush.bf16.msra.mxu0 %v7718
    %7885 = vmatpush.bf16.msra.mxu0 %v7717
    %7886 = vmatpush.bf16.msra.mxu0 %v7716
    %7887 = vmatpush.bf16.msra.mxu0 %v7715
    %7888 = vmatpush.bf16.msra.mxu0 %v7714
    %7889 = vmatpush.bf16.msra.mxu0 %v7713
    %7890 = vmatmul.bf16.gmra.mxu0 %v7254
    %v7891 = vpop.f32.mrf.mxu0
    %v7892 = vadd.f32 %v7843, %v7891
    %v7893 = vpop.f32.mrf.mxu0
    %v7894 = vadd.f32 %v7845, %v7893
    %7895 = vmatmul.bf16.gmra.mxu0 %v7262
    %v7896 = vpop.f32.mrf.mxu0
    %v7897 = vadd.f32 %v7848, %v7896
    %v7898 = vpop.f32.mrf.mxu0
    %v7899 = vadd.f32 %v7850, %v7898
    %7900 = vmatmul.bf16.gmra.mxu0 %v7270
    %v7901 = vpop.f32.mrf.mxu0
    %v7902 = vadd.f32 %v7853, %v7901
    %v7903 = vpop.f32.mrf.mxu0
    %v7904 = vadd.f32 %v7855, %v7903
    %7905 = vmatmul.bf16.gmra.mxu0 %v7278
    %v7906 = vpop.f32.mrf.mxu0
    %v7907 = vadd.f32 %v7858, %v7906
    %v7908 = vpop.f32.mrf.mxu0
    %v7909 = vadd.f32 %v7860, %v7908
    %7910 = vmatmul.bf16.gmra.mxu0 %v7286
    %v7911 = vpop.f32.mrf.mxu0
    %v7912 = vadd.f32 %v7863, %v7911
    %v7913 = vpop.f32.mrf.mxu0
    %v7914 = vadd.f32 %v7865, %v7913
    %7915 = vmatmul.bf16.gmra.mxu0 %v7294
    %v7916 = vpop.f32.mrf.mxu0
    %v7917 = vadd.f32 %v7868, %v7916
    %v7918 = vpop.f32.mrf.mxu0
    %v7919 = vadd.f32 %v7870, %v7918
    %7920 = vmatmul.bf16.gmra.mxu0 %v7302
    %v7921 = vpop.f32.mrf.mxu0
    %v7922 = vadd.f32 %v7873, %v7921
    %v7923 = vpop.f32.mrf.mxu0
    %v7924 = vadd.f32 %v7875, %v7923
    %7925 = vmatmul.bf16.gmra.mxu0 %v7310
    %v7926 = vpop.f32.mrf.mxu0
    %v7927 = vadd.f32 %v7878, %v7926
    %v7928 = vpop.f32.mrf.mxu0
    %v7929 = vadd.f32 %v7880, %v7928
    %7930 = vdwg.mxu0
    %7931 = vmatpush.bf16.msra.mxu0 %v7728
    %7932 = vmatpush.bf16.msra.mxu0 %v7727
    %7933 = vmatpush.bf16.msra.mxu0 %v7726
    %7934 = vmatpush.bf16.msra.mxu0 %v7725
    %7935 = vmatpush.bf16.msra.mxu0 %v7724
    %7936 = vmatpush.bf16.msra.mxu0 %v7723
    %7937 = vmatpush.bf16.msra.mxu0 %v7722
    %7938 = vmatpush.bf16.msra.mxu0 %v7721
    %7939 = vmatmul.bf16.gmra.mxu0 %v7255
    %v7940 = vpop.f32.mrf.mxu0
    %v7941 = vadd.f32 %v7892, %v7940
    %v7942 = vpop.f32.mrf.mxu0
    %v7943 = vadd.f32 %v7894, %v7942
    %7944 = vmatmul.bf16.gmra.mxu0 %v7263
    %v7945 = vpop.f32.mrf.mxu0
    %v7946 = vadd.f32 %v7897, %v7945
    %v7947 = vpop.f32.mrf.mxu0
    %v7948 = vadd.f32 %v7899, %v7947
    %7949 = vmatmul.bf16.gmra.mxu0 %v7271
    %v7950 = vpop.f32.mrf.mxu0
    %v7951 = vadd.f32 %v7902, %v7950
    %v7952 = vpop.f32.mrf.mxu0
    %v7953 = vadd.f32 %v7904, %v7952
    %7954 = vmatmul.bf16.gmra.mxu0 %v7279
    %v7955 = vpop.f32.mrf.mxu0
    %v7956 = vadd.f32 %v7907, %v7955
    %v7957 = vpop.f32.mrf.mxu0
    %v7958 = vadd.f32 %v7909, %v7957
    %7959 = vmatmul.bf16.gmra.mxu0 %v7287
    %v7960 = vpop.f32.mrf.mxu0
    %v7961 = vadd.f32 %v7912, %v7960
    %v7962 = vpop.f32.mrf.mxu0
    %v7963 = vadd.f32 %v7914, %v7962
    %7964 = vmatmul.bf16.gmra.mxu0 %v7295
    %v7965 = vpop.f32.mrf.mxu0
    %v7966 = vadd.f32 %v7917, %v7965
    %v7967 = vpop.f32.mrf.mxu0
    %v7968 = vadd.f32 %v7919, %v7967
    %7969 = vmatmul.bf16.gmra.mxu0 %v7303
    %v7970 = vpop.f32.mrf.mxu0
    %v7971 = vadd.f32 %v7922, %v7970
    %v7972 = vpop.f32.mrf.mxu0
    %v7973 = vadd.f32 %v7924, %v7972
    %7974 = vmatmul.bf16.gmra.mxu0 %v7311
    %v7975 = vpop.f32.mrf.mxu0
    %v7976 = vadd.f32 %v7927, %v7975
    %v7977 = vpop.f32.mrf.mxu0
    %v7978 = vadd.f32 %v7929, %v7977
    %7979 = vdwg.mxu0
    %7980 = vmatpush.bf16.msra.mxu0 %v7736
    %7981 = vmatpush.bf16.msra.mxu0 %v7735
    %7982 = vmatpush.bf16.msra.mxu0 %v7734
    %7983 = vmatpush.bf16.msra.mxu0 %v7733
    %7984 = vmatpush.bf16.msra.mxu0 %v7732
    %7985 = vmatpush.bf16.msra.mxu0 %v7731
    %7986 = vmatpush.bf16.msra.mxu0 %v7730
    %7987 = vmatpush.bf16.msra.mxu0 %v7729
    %7988 = vmatmul.bf16.gmra.mxu0 %v7256
    %v7989 = vpop.f32.mrf.mxu0
    %v7990 = vadd.f32 %v7941, %v7989
    %v7991 = vpop.f32.mrf.mxu0
    %v7992 = vadd.f32 %v7943, %v7991
    %7993 = vmatmul.bf16.gmra.mxu0 %v7264
    %v7994 = vpop.f32.mrf.mxu0
    %v7995 = vadd.f32 %v7946, %v7994
    %v7996 = vpop.f32.mrf.mxu0
    %v7997 = vadd.f32 %v7948, %v7996
    %7998 = vmatmul.bf16.gmra.mxu0 %v7272
    %v7999 = vpop.f32.mrf.mxu0
    %v8000 = vadd.f32 %v7951, %v7999
    %v8001 = vpop.f32.mrf.mxu0
    %v8002 = vadd.f32 %v7953, %v8001
    %8003 = vmatmul.bf16.gmra.mxu0 %v7280
    %v8004 = vpop.f32.mrf.mxu0
    %v8005 = vadd.f32 %v7956, %v8004
    %v8006 = vpop.f32.mrf.mxu0
    %v8007 = vadd.f32 %v7958, %v8006
    %8008 = vmatmul.bf16.gmra.mxu0 %v7288
    %v8009 = vpop.f32.mrf.mxu0
    %v8010 = vadd.f32 %v7961, %v8009
    %v8011 = vpop.f32.mrf.mxu0
    %v8012 = vadd.f32 %v7963, %v8011
    %8013 = vmatmul.bf16.gmra.mxu0 %v7296
    %v8014 = vpop.f32.mrf.mxu0
    %v8015 = vadd.f32 %v7966, %v8014
    %v8016 = vpop.f32.mrf.mxu0
    %v8017 = vadd.f32 %v7968, %v8016
    %8018 = vmatmul.bf16.gmra.mxu0 %v7304
    %v8019 = vpop.f32.mrf.mxu0
    %v8020 = vadd.f32 %v7971, %v8019
    %v8021 = vpop.f32.mrf.mxu0
    %v8022 = vadd.f32 %v7973, %v8021
    %8023 = vmatmul.bf16.gmra.mxu0 %v7312
    %v8024 = vpop.f32.mrf.mxu0
    %v8025 = vadd.f32 %v7976, %v8024
    %v8026 = vpop.f32.mrf.mxu0
    %v8027 = vadd.f32 %v7978, %v8026
    %8028 = vdwg.mxu0
    %8029 = vmatpush.bf16.msra.mxu0 %v7744
    %8030 = vmatpush.bf16.msra.mxu0 %v7743
    %8031 = vmatpush.bf16.msra.mxu0 %v7742
    %8032 = vmatpush.bf16.msra.mxu0 %v7741
    %8033 = vmatpush.bf16.msra.mxu0 %v7740
    %8034 = vmatpush.bf16.msra.mxu0 %v7739
    %8035 = vmatpush.bf16.msra.mxu0 %v7738
    %8036 = vmatpush.bf16.msra.mxu0 %v7737
    %8037 = vmatmul.bf16.gmra.mxu0 %v7257
    %v8038 = vpop.f32.mrf.mxu0
    %v8039 = vadd.f32 %v7990, %v8038
    %v8040 = vpop.f32.mrf.mxu0
    %v8041 = vadd.f32 %v7992, %v8040
    %8042 = vmatmul.bf16.gmra.mxu0 %v7265
    %v8043 = vpop.f32.mrf.mxu0
    %v8044 = vadd.f32 %v7995, %v8043
    %v8045 = vpop.f32.mrf.mxu0
    %v8046 = vadd.f32 %v7997, %v8045
    %8047 = vmatmul.bf16.gmra.mxu0 %v7273
    %v8048 = vpop.f32.mrf.mxu0
    %v8049 = vadd.f32 %v8000, %v8048
    %v8050 = vpop.f32.mrf.mxu0
    %v8051 = vadd.f32 %v8002, %v8050
    %8052 = vmatmul.bf16.gmra.mxu0 %v7281
    %v8053 = vpop.f32.mrf.mxu0
    %v8054 = vadd.f32 %v8005, %v8053
    %v8055 = vpop.f32.mrf.mxu0
    %v8056 = vadd.f32 %v8007, %v8055
    %8057 = vmatmul.bf16.gmra.mxu0 %v7289
    %v8058 = vpop.f32.mrf.mxu0
    %v8059 = vadd.f32 %v8010, %v8058
    %v8060 = vpop.f32.mrf.mxu0
    %v8061 = vadd.f32 %v8012, %v8060
    %8062 = vmatmul.bf16.gmra.mxu0 %v7297
    %v8063 = vpop.f32.mrf.mxu0
    %v8064 = vadd.f32 %v8015, %v8063
    %v8065 = vpop.f32.mrf.mxu0
    %v8066 = vadd.f32 %v8017, %v8065
    %8067 = vmatmul.bf16.gmra.mxu0 %v7305
    %v8068 = vpop.f32.mrf.mxu0
    %v8069 = vadd.f32 %v8020, %v8068
    %v8070 = vpop.f32.mrf.mxu0
    %v8071 = vadd.f32 %v8022, %v8070
    %8072 = vmatmul.bf16.gmra.mxu0 %v7313
    %v8073 = vpop.f32.mrf.mxu0
    %v8074 = vadd.f32 %v8025, %v8073
    %v8075 = vpop.f32.mrf.mxu0
    %v8076 = vadd.f32 %v8027, %v8075
    %8077 = vdwg.mxu0
    %8078 = vmatpush.bf16.msra.mxu0 %v7752
    %8079 = vmatpush.bf16.msra.mxu0 %v7751
    %8080 = vmatpush.bf16.msra.mxu0 %v7750
    %8081 = vmatpush.bf16.msra.mxu0 %v7749
    %8082 = vmatpush.bf16.msra.mxu0 %v7748
    %8083 = vmatpush.bf16.msra.mxu0 %v7747
    %8084 = vmatpush.bf16.msra.mxu0 %v7746
    %8085 = vmatpush.bf16.msra.mxu0 %v7745
    %8086 = vmatmul.bf16.gmra.mxu0 %v7258
    %v8087 = vpop.f32.mrf.mxu0
    %v8088 = vadd.f32 %v8039, %v8087
    %v8089 = vpop.f32.mrf.mxu0
    %v8090 = vadd.f32 %v8041, %v8089
    %8091 = vmatmul.bf16.gmra.mxu0 %v7266
    %v8092 = vpop.f32.mrf.mxu0
    %v8093 = vadd.f32 %v8044, %v8092
    %v8094 = vpop.f32.mrf.mxu0
    %v8095 = vadd.f32 %v8046, %v8094
    %8096 = vmatmul.bf16.gmra.mxu0 %v7274
    %v8097 = vpop.f32.mrf.mxu0
    %v8098 = vadd.f32 %v8049, %v8097
    %v8099 = vpop.f32.mrf.mxu0
    %v8100 = vadd.f32 %v8051, %v8099
    %8101 = vmatmul.bf16.gmra.mxu0 %v7282
    %v8102 = vpop.f32.mrf.mxu0
    %v8103 = vadd.f32 %v8054, %v8102
    %v8104 = vpop.f32.mrf.mxu0
    %v8105 = vadd.f32 %v8056, %v8104
    %8106 = vmatmul.bf16.gmra.mxu0 %v7290
    %v8107 = vpop.f32.mrf.mxu0
    %v8108 = vadd.f32 %v8059, %v8107
    %v8109 = vpop.f32.mrf.mxu0
    %v8110 = vadd.f32 %v8061, %v8109
    %8111 = vmatmul.bf16.gmra.mxu0 %v7298
    %v8112 = vpop.f32.mrf.mxu0
    %v8113 = vadd.f32 %v8064, %v8112
    %v8114 = vpop.f32.mrf.mxu0
    %v8115 = vadd.f32 %v8066, %v8114
    %8116 = vmatmul.bf16.gmra.mxu0 %v7306
    %v8117 = vpop.f32.mrf.mxu0
    %v8118 = vadd.f32 %v8069, %v8117
    %v8119 = vpop.f32.mrf.mxu0
    %v8120 = vadd.f32 %v8071, %v8119
    %8121 = vmatmul.bf16.gmra.mxu0 %v7314
    %v8122 = vpop.f32.mrf.mxu0
    %v8123 = vadd.f32 %v8074, %v8122
    %v8124 = vpop.f32.mrf.mxu0
    %v8125 = vadd.f32 %v8076, %v8124
    %8126 = vdwg.mxu0
    %8127 = vmatpush.bf16.msra.mxu0 %v7760
    %8128 = vmatpush.bf16.msra.mxu0 %v7759
    %8129 = vmatpush.bf16.msra.mxu0 %v7758
    %8130 = vmatpush.bf16.msra.mxu0 %v7757
    %8131 = vmatpush.bf16.msra.mxu0 %v7756
    %8132 = vmatpush.bf16.msra.mxu0 %v7755
    %8133 = vmatpush.bf16.msra.mxu0 %v7754
    %8134 = vmatpush.bf16.msra.mxu0 %v7753
    %8135 = vmatmul.bf16.gmra.mxu0 %v7259
    %v8136 = vpop.f32.mrf.mxu0
    %v8137 = vadd.f32 %v8088, %v8136
    %v8138 = vpop.f32.mrf.mxu0
    %v8139 = vadd.f32 %v8090, %v8138
    %8140 = vmatmul.bf16.gmra.mxu0 %v7267
    %v8141 = vpop.f32.mrf.mxu0
    %v8142 = vadd.f32 %v8093, %v8141
    %v8143 = vpop.f32.mrf.mxu0
    %v8144 = vadd.f32 %v8095, %v8143
    %8145 = vmatmul.bf16.gmra.mxu0 %v7275
    %v8146 = vpop.f32.mrf.mxu0
    %v8147 = vadd.f32 %v8098, %v8146
    %v8148 = vpop.f32.mrf.mxu0
    %v8149 = vadd.f32 %v8100, %v8148
    %8150 = vmatmul.bf16.gmra.mxu0 %v7283
    %v8151 = vpop.f32.mrf.mxu0
    %v8152 = vadd.f32 %v8103, %v8151
    %v8153 = vpop.f32.mrf.mxu0
    %v8154 = vadd.f32 %v8105, %v8153
    %8155 = vmatmul.bf16.gmra.mxu0 %v7291
    %v8156 = vpop.f32.mrf.mxu0
    %v8157 = vadd.f32 %v8108, %v8156
    %v8158 = vpop.f32.mrf.mxu0
    %v8159 = vadd.f32 %v8110, %v8158
    %8160 = vmatmul.bf16.gmra.mxu0 %v7299
    %v8161 = vpop.f32.mrf.mxu0
    %v8162 = vadd.f32 %v8113, %v8161
    %v8163 = vpop.f32.mrf.mxu0
    %v8164 = vadd.f32 %v8115, %v8163
    %8165 = vmatmul.bf16.gmra.mxu0 %v7307
    %v8166 = vpop.f32.mrf.mxu0
    %v8167 = vadd.f32 %v8118, %v8166
    %v8168 = vpop.f32.mrf.mxu0
    %v8169 = vadd.f32 %v8120, %v8168
    %8170 = vmatmul.bf16.gmra.mxu0 %v7315
    %v8171 = vpop.f32.mrf.mxu0
    %v8172 = vadd.f32 %v8123, %v8171
    %v8173 = vpop.f32.mrf.mxu0
    %v8174 = vadd.f32 %v8125, %v8173
    %8175 = vdwg.mxu0
    %8176 = vmatpush.bf16.msra.mxu0 %v7768
    %8177 = vmatpush.bf16.msra.mxu0 %v7767
    %8178 = vmatpush.bf16.msra.mxu0 %v7766
    %8179 = vmatpush.bf16.msra.mxu0 %v7765
    %8180 = vmatpush.bf16.msra.mxu0 %v7764
    %8181 = vmatpush.bf16.msra.mxu0 %v7763
    %8182 = vmatpush.bf16.msra.mxu0 %v7762
    %8183 = vmatpush.bf16.msra.mxu0 %v7761
    %8184 = vmatmul.bf16.gmra.mxu0 %v7260
    %v8185 = vpop.f32.mrf.mxu0
    %v8186 = vadd.f32 %v8137, %v8185
    %v8187 = vpop.f32.mrf.mxu0
    %v8188 = vadd.f32 %v8139, %v8187
    %8189 = vmatmul.bf16.gmra.mxu0 %v7268
    %v8190 = vpop.f32.mrf.mxu0
    %v8191 = vadd.f32 %v8142, %v8190
    %v8192 = vpop.f32.mrf.mxu0
    %v8193 = vadd.f32 %v8144, %v8192
    %8194 = vmatmul.bf16.gmra.mxu0 %v7276
    %v8195 = vpop.f32.mrf.mxu0
    %v8196 = vadd.f32 %v8147, %v8195
    %v8197 = vpop.f32.mrf.mxu0
    %v8198 = vadd.f32 %v8149, %v8197
    %8199 = vmatmul.bf16.gmra.mxu0 %v7284
    %v8200 = vpop.f32.mrf.mxu0
    %v8201 = vadd.f32 %v8152, %v8200
    %v8202 = vpop.f32.mrf.mxu0
    %v8203 = vadd.f32 %v8154, %v8202
    %8204 = vmatmul.bf16.gmra.mxu0 %v7292
    %v8205 = vpop.f32.mrf.mxu0
    %v8206 = vadd.f32 %v8157, %v8205
    %v8207 = vpop.f32.mrf.mxu0
    %v8208 = vadd.f32 %v8159, %v8207
    %8209 = vmatmul.bf16.gmra.mxu0 %v7300
    %v8210 = vpop.f32.mrf.mxu0
    %v8211 = vadd.f32 %v8162, %v8210
    %v8212 = vpop.f32.mrf.mxu0
    %v8213 = vadd.f32 %v8164, %v8212
    %8214 = vmatmul.bf16.gmra.mxu0 %v7308
    %v8215 = vpop.f32.mrf.mxu0
    %v8216 = vadd.f32 %v8167, %v8215
    %v8217 = vpop.f32.mrf.mxu0
    %v8218 = vadd.f32 %v8169, %v8217
    %8219 = vmatmul.bf16.gmra.mxu0 %v7316
    %v8220 = vpop.f32.mrf.mxu0
    %v8221 = vadd.f32 %v8172, %v8220
    %v8222 = vpop.f32.mrf.mxu0
    %v8223 = vadd.f32 %v8174, %v8222
    %8224 = vdwg.mxu0
    %8225 = vst [vmem:[#allocation14] sm:$0xff] %v8186
    %8226 = vst [vmem:[#allocation14 + $0x8] sm:$0xff] %v8188
    %8227 = vst [vmem:[#allocation14 + $0x10] sm:$0xff] %v8191
    %8228 = vst [vmem:[#allocation14 + $0x18] sm:$0xff] %v8193
    %8229 = vst [vmem:[#allocation14 + $0x20] sm:$0xff] %v8196
    %8230 = vst [vmem:[#allocation14 + $0x28] sm:$0xff] %v8198
    %8231 = vst [vmem:[#allocation14 + $0x30] sm:$0xff] %v8201
    %8232 = vst [vmem:[#allocation14 + $0x38] sm:$0xff] %v8203
    %8233 = vst [vmem:[#allocation14 + $0x40] sm:$0xff] %v8206
    %8234 = vst [vmem:[#allocation14 + $0x48] sm:$0xff] %v8208
    %8235 = vst [vmem:[#allocation14 + $0x50] sm:$0xff] %v8211
    %8236 = vst [vmem:[#allocation14 + $0x58] sm:$0xff] %v8213
    %8237 = vst [vmem:[#allocation14 + $0x60] sm:$0xff] %v8216
    %8238 = vst [vmem:[#allocation14 + $0x68] sm:$0xff] %v8218
    %8239 = vst [vmem:[#allocation14 + $0x70] sm:$0xff] %v8221
    %8240 = vst [vmem:[#allocation14 + $0x78] sm:$0xff] %v8223
    // Predicated region
    $region58: #{tpu_custom_call.1} parent=1 // pred_check
      _
    $region59: #{tpu_custom_call.1} parent=1 // pred_check_branch
      %8242 = sbr.rel (0) target = $region61
    $region60: #{tpu_custom_call.1} parent=1 // pred_region
      %8244 = vsyncadd [#allocation5], 0
      %s8245 = sshll.u32 [#allocation14], 4
      %s8246 = int_to_ptr.vmem [resolvable:$true] %s8245
      %s8247 = sshll.u32 %s8, 4
      %s8248 = int_to_ptr.hbm [resolvable:$true] %s8247
      %8253 = dma.vmem_to_hbm [thread:$0]  %s8246, 2048, %s8248, [#allocation5], 128, 128, 8
    $region61: #{tpu_custom_call.1} parent=1 // pred_fallthru
      _
    // Predicated region
    $region62: #{tpu_custom_call.1} parent=1 // pred_check
      _
    $region63: #{tpu_custom_call.1} parent=1 // pred_check_branch
      %8255 = sbr.rel (0) target = $region65
    $region64: #{tpu_custom_call.1} parent=1 // pred_region
      %8257 = dma.done [#allocation5], 2048
    $region65: #{tpu_custom_call.1} parent=1 // pred_fallthru
      _
    %8258 = vsyncpa [#allocation4], 1
    %8259 = vsyncpa [#allocation7], 1
    %8260 = vsyncpa [#allocation10], 1
    %8261 = vsyncpa [#allocation13], 1
    %8262 = vsyncpa [#allocation5], 1

</llo_original>
